<compile_context>
chip_gen: v6e
topology: v6e:2x2x1
jax: 0.10.0
libtpu: 0.0.40
codegen_flags: <defaults>
</compile_context>

<pallas_src>
import functools

import jax
import jax.numpy as jnp
from jax.experimental import pallas as pl
from jax.experimental.pallas import tpu as pltpu

MODES1, MODES2, MODES3 = 4, 4, 3
WIDTH = 8
HIDDEN = 128
PADDING = 6

_SQRT1_2 = 0.7071067811865476
_TILE_CANDIDATES = (2048, 1792, 1536, 1280, 1024, 896, 768, 640, 512, 384, 256, 128)


# ------------------------------ small helpers ------------------------------ #
def _round_up(n, m):
    return -(-n // m) * m


def _choose_tile(n, max_tile=2048):
    """Pick a lane tile for an N-token stream.

    n is a multiple of 128.  Prefer a tile that (a) divides n, (b) keeps the
    grid at >=2 steps (so v7x can shard across its two TensorCores), and
    (c) is as large as possible (per-grid-step overhead ~0.35us).
    """
    for t in _TILE_CANDIDATES:
        if t <= max_tile and t * 2 <= n and n % t == 0:
            return t
    return n


# ----------------------------- in-kernel math ------------------------------ #
def _erf(x):
    # Abramowitz & Stegun 7.1.26 polynomial erf (max abs err ~1.5e-7, f32-ulp level)
    # TODO(synk): switch to jax.scipy.special.erf once erf lowering is guaranteed in Mosaic.
    p = 0.3275911
    a1, a2, a3, a4, a5 = (0.254829592, -0.284496736, 1.421413741,
                          -1.453152027, 1.061405429)
    s = jnp.where(x >= 0.0, 1.0, -1.0)
    z = jnp.abs(x)
    t = 1.0 / (1.0 + p * z)
    poly = t * (a1 + t * (a2 + t * (a3 + t * (a4 + t * a5))))
    return s * (1.0 - poly * jnp.exp(-z * z))


def _gelu(x):
    # exact (erf-based) GELU, matching torch.nn.functional.gelu default
    return 0.5 * x * (1.0 + _erf(x * _SQRT1_2))


# ------------------------------- kernels ----------------------------------- #
def _cf_linear_kernel(x_ref, w_ref, b_ref, o_ref, *, apply_gelu):
    # channel-first linear: (Co,Ci) @ (Ci,TN) + (Co,1)
    y = jnp.dot(w_ref[...], x_ref[...], preferred_element_type=jnp.float32)
    y = y + b_ref[...]
    if apply_gelu:
        y = _gelu(y)
    o_ref[...] = y


def _cf_wk_kernel(x_ref, x1_ref, w_ref, b_ref, o_ref, *, apply_gelu):
    # spectral branch x1 + 1x1x1 conv (channel matmul) + bias, then GELU
    y = jnp.dot(w_ref[...], x_ref[...], preferred_element_type=jnp.float32)
    y = x1_ref[...] + y + b_ref[...]
    if apply_gelu:
        y = _gelu(y)
    o_ref[...] = y


def _head_kernel(x_ref, w1_ref, b1_ref, w2_ref, b2_ref, o_ref, *, chunk):
    # fused fc1 (Ci->H, GELU) + fc2 (H->1); hidden (H, chunk) stays in vregs.
    tn = x_ref.shape[1]
    w1 = w1_ref[...]          # (H, Ci)
    b1 = b1_ref[...]          # (H, 1)
    w2 = w2_ref[...]          # (1, H)
    b2 = b2_ref[...]          # (1, 1)
    for c in range(tn // chunk):
        cs = slice(c * chunk, (c + 1) * chunk)
        xc = x_ref[:, cs]                                               # (Ci, chunk)
        hg = jnp.dot(w1, xc, preferred_element_type=jnp.float32) + b1  # (H, chunk)
        hg = _gelu(hg)
        o_ref[:, cs] = jnp.dot(w2, hg, preferred_element_type=jnp.float32) + b2


def _spectral_mul_kernel(xr_ref, xi_ref, wr_ref, wi_ref, or_ref, oi_ref):
    # complex 'bim,iom->bom' per frequency corner; explicit accumulation over Ci
    xr = xr_ref[0]            # (B, Ci, M)
    xi = xi_ref[0]
    wr = wr_ref[0]            # (Ci, Co, M)
    wi = wi_ref[0]
    b, ci, m = xr.shape
    co = wr.shape[1]
    acc_r = jnp.zeros((b, co, m), jnp.float32)
    acc_i = jnp.zeros((b, co, m), jnp.float32)
    for i in range(ci):
        xr_i = xr[:, i, :][:, None, :]        # (B, 1, M)
        xi_i = xi[:, i, :][:, None, :]
        wr_i = wr[i][None, :, :]              # (1, Co, M)
        wi_i = wi[i][None, :, :]
        acc_r = acc_r + xr_i * wr_i - xi_i * wi_i
        acc_i = acc_i + xr_i * wi_i + xi_i * wr_i
    or_ref[0] = acc_r
    oi_ref[0] = acc_i


# ------------------------------- wrappers ----------------------------------- #
def cf_linear_pallas(x, w, b, apply_gelu=False):
    # x: (Cin, N) channel-first; w: (Cout, Cin); b: (Cout,)
    Cin, N = x.shape
    Cout = w.shape[0]
    Np = _round_up(N, 128)
    if Np != N:
        x = jnp.pad(x, ((0, 0), (0, Np - N)))
    tn = _choose_tile(Np)
    ce = pl.CostEstimate(
        flops=2 * Cin * Cout * Np + (20 * Cout * Np if apply_gelu else 0),
        transcendentals=(Cout * Np if apply_gelu else 0),
        bytes_accessed=4 * (Cin * Np + Cout * Np + Cout * (Cin + 1)))
    out = pl.pallas_call(
        functools.partial(_cf_linear_kernel, apply_gelu=apply_gelu),
        out_shape=jax.ShapeDtypeStruct((Cout, Np), jnp.float32),
        grid=(Np // tn,),
        in_specs=[
            pl.BlockSpec((Cin, tn), lambda i: (0, i)),
            pl.BlockSpec((Cout, Cin), lambda i: (0, 0)),
            pl.BlockSpec((Cout, 1), lambda i: (0, 0)),
        ],
        out_specs=pl.BlockSpec((Cout, tn), lambda i: (0, i)),
        compiler_params=pltpu.CompilerParams(dimension_semantics=("parallel",)),
        cost_estimate=ce,
    )(x, w, b.reshape(Cout, 1))
    return out[:, :N]


def cf_wk_pallas(x, x1, w, b, apply_gelu):
    # x: (Ci, N); x1: (Co, N); w: (Co, Ci); b: (Co,)
    Cin, N = x.shape
    Cout = w.shape[0]
    Np = _round_up(N, 128)
    if Np != N:
        x = jnp.pad(x, ((0, 0), (0, Np - N)))
        x1 = jnp.pad(x1, ((0, 0), (0, Np - N)))
    tn = _choose_tile(Np)
    ce = pl.CostEstimate(
        flops=2 * Cin * Cout * Np + (20 * Cout * Np if apply_gelu else 0),
        transcendentals=(Cout * Np if apply_gelu else 0),
        bytes_accessed=4 * (Cin * Np + 2 * Cout * Np + Cout * (Cin + 1)))
    out = pl.pallas_call(
        functools.partial(_cf_wk_kernel, apply_gelu=apply_gelu),
        out_shape=jax.ShapeDtypeStruct((Cout, Np), jnp.float32),
        grid=(Np // tn,),
        in_specs=[
            pl.BlockSpec((Cin, tn), lambda i: (0, i)),
            pl.BlockSpec((Cout, tn), lambda i: (0, i)),
            pl.BlockSpec((Cout, Cin), lambda i: (0, 0)),
            pl.BlockSpec((Cout, 1), lambda i: (0, 0)),
        ],
        out_specs=pl.BlockSpec((Cout, tn), lambda i: (0, i)),
        compiler_params=pltpu.CompilerParams(dimension_semantics=("parallel",)),
        cost_estimate=ce,
    )(x, x1, w, b.reshape(Cout, 1))
    return out[:, :N]


def head_pallas(x, w1, b1, w2, b2):
    # fused fc1 + GELU + fc2.  x: (Ci, N); w1: (H, Ci); b1: (H,); w2: (1, H); b2: (1,)
    Cin, N = x.shape
    H = w1.shape[0]
    Np = _round_up(N, 128)
    if Np != N:
        x = jnp.pad(x, ((0, 0), (0, Np - N)))
    tn = _choose_tile(Np, max_tile=1024)
    ce = pl.CostEstimate(
        flops=2 * (Cin + 1) * H * Np + 20 * H * Np,
        transcendentals=H * Np,
        bytes_accessed=4 * (Cin * Np + Np + H * (Cin + 2) + 1))
    out = pl.pallas_call(
        functools.partial(_head_kernel, chunk=128),
        out_shape=jax.ShapeDtypeStruct((1, Np), jnp.float32),
        grid=(Np // tn,),
        in_specs=[
            pl.BlockSpec((Cin, tn), lambda i: (0, i)),
            pl.BlockSpec((H, Cin), lambda i: (0, 0)),
            pl.BlockSpec((H, 1), lambda i: (0, 0)),
            pl.BlockSpec((1, H), lambda i: (0, 0)),
            pl.BlockSpec((1, 1), lambda i: (0, 0)),
        ],
        out_specs=pl.BlockSpec((1, tn), lambda i: (0, i)),
        compiler_params=pltpu.CompilerParams(dimension_semantics=("parallel",)),
        cost_estimate=ce,
    )(x, w1, b1.reshape(H, 1), w2.reshape(1, H), b2.reshape(1, 1))
    return out[:, :N]


def spectral_mul_pallas(xr, xi, wr, wi):
    # xr/xi: (4, B, Ci, M)  wr/wi: (4, Ci, Co, M)  ->  (4, B, Co, M) real / imag
    nc, B, Ci, M = xr.shape
    Co = wr.shape[2]
    spec_x = pl.BlockSpec((1, B, Ci, M), lambda k: (k, 0, 0, 0))
    spec_w = pl.BlockSpec((1, Ci, Co, M), lambda k: (k, 0, 0, 0))
    spec_o = pl.BlockSpec((1, B, Co, M), lambda k: (k, 0, 0, 0))
    return pl.pallas_call(
        _spectral_mul_kernel,
        out_shape=(jax.ShapeDtypeStruct((nc, B, Co, M), jnp.float32),
                   jax.ShapeDtypeStruct((nc, B, Co, M), jnp.float32)),
        grid=(nc,),
        in_specs=[spec_x, spec_x, spec_w, spec_w],
        out_specs=(spec_o, spec_o),
        compiler_params=pltpu.CompilerParams(dimension_semantics=("parallel",)),
    )(xr, xi, wr, wi)


# --------------------------- SpectralConv3d -------------------------------- #
def spectral_conv3d_cf(x_cf, wr, wi, m1, m2, m3):
    # x_cf: (C, B, X, Y, Tp) channel-first;  wr/wi: (4, Ci, Co, m1, m2, m3)
    C, B, X, Y, Tp = x_cf.shape
    K = Tp // 2 + 1
    M = m1 * m2 * m3

    x_ft = jnp.fft.rfftn(x_cf, axes=(-3, -2, -1))          # (C, B, X, Y, K) complex64

    c1 = x_ft[:, :, :m1, :m2, :m3]
    c2 = x_ft[:, :, X - m1:, :m2, :m3]
    c3 = x_ft[:, :, :m1, Y - m2:, :m3]
    c4 = x_ft[:, :, X - m1:, Y - m2:, :m3]
    xc = jnp.stack([c1, c2, c3, c4], axis=0).reshape(4, C, B, M)
    xc = jnp.transpose(xc, (0, 2, 1, 3))                    # (4, B, Ci, M)

    wrf = wr.reshape(4, C, C, M)
    wif = wi.reshape(4, C, C, M)

    o_r, o_i = spectral_mul_pallas(jnp.real(xc), jnp.imag(xc), wrf, wif)

    out_c = jax.lax.complex(o_r, o_i)                       # (4, B, Co, M) complex64
    out_c = jnp.transpose(out_c, (0, 2, 1, 3)).reshape(4, C, B, m1, m2, m3)

    out_ft = jnp.zeros((C, B, X, Y, K), dtype=jnp.complex64)
    out_ft = out_ft.at[:, :, :m1, :m2, :m3].set(out_c[0])
    out_ft = out_ft.at[:, :, X - m1:, :m2, :m3].set(out_c[1])
    out_ft = out_ft.at[:, :, :m1, Y - m2:, :m3].set(out_c[2])
    out_ft = out_ft.at[:, :, X - m1:, Y - m2:, :m3].set(out_c[3])

    x_out = jnp.fft.irfftn(out_ft, s=(X, Y, Tp), axes=(-3, -2, -1))
    return x_out.astype(jnp.float32)                        # (Co, B, X, Y, Tp) channel-first


# ------------------------------- FNO3d ------------------------------------- #
def init_params(key):
    keys = jax.random.split(key, 22)
    it = iter(keys)
    nk = lambda: next(it)

    def lin_init(k, fan_in, shape):
        bound = 1.0 / (fan_in ** 0.5)
        return jax.random.uniform(k, shape, jnp.float32, -bound, bound)

    p = {}
    # torch-native shapes: Linear / Conv weights are (out, in)
    p["fc0_w"] = lin_init(nk(), 13, (WIDTH, 13))
    p["fc0_b"] = lin_init(nk(), 13, (WIDTH,))
    scale = 1.0 / (WIDTH * WIDTH)
    for l in range(4):
        shp = (4, WIDTH, WIDTH, MODES1, MODES2, MODES3)     # 4 frequency-corner weight blocks
        p[f"spec{l}_wr"] = scale * jax.random.uniform(nk(), shp, jnp.float32)
        p[f"spec{l}_wi"] = scale * jax.random.uniform(nk(), shp, jnp.float32)
        p[f"w{l}_w"] = lin_init(nk(), WIDTH, (WIDTH, WIDTH))
        p[f"w{l}_b"] = lin_init(nk(), WIDTH, (WIDTH,))
    p["fc1_w"] = lin_init(nk(), WIDTH, (HIDDEN, WIDTH))
    p["fc1_b"] = lin_init(nk(), WIDTH, (HIDDEN,))
    p["fc2_w"] = lin_init(nk(), HIDDEN, (1, HIDDEN))
    p["fc2_b"] = lin_init(nk(), HIDDEN, (1,))
    return p


def fno3d_forward(params, x):
    # x: (B, X, Y, T, 10) float32
    B, X, Y, T, _ = x.shape
    f32 = jnp.float32

    # get_grid + concat, built directly in channel-first layout (C, B, X, Y, T)
    x_cf = jnp.transpose(x, (4, 0, 1, 2, 3)).astype(f32)
    gx = jnp.broadcast_to(jnp.linspace(0.0, 1.0, X, dtype=f32).reshape(1, 1, X, 1, 1),
                          (1, B, X, Y, T))
    gy = jnp.broadcast_to(jnp.linspace(0.0, 1.0, Y, dtype=f32).reshape(1, 1, 1, Y, 1),
                          (1, B, X, Y, T))
    gz = jnp.broadcast_to(jnp.linspace(0.0, 1.0, T, dtype=f32).reshape(1, 1, 1, 1, T),
                          (1, B, X, Y, T))
    x_cf = jnp.concatenate([x_cf, gx, gy, gz], axis=0)       # (13, B, X, Y, T)

    # fc0 lift (channel-first Pallas matmul, lane-dense output)
    N = B * X * Y * T
    h = cf_linear_pallas(x_cf.reshape(13, N), params["fc0_w"], params["fc0_b"])
    h = h.reshape(WIDTH, B, X, Y, T)

    # F.pad(x, [0, padding]) on the time axis (last axis in channel-first layout)
    h = jnp.pad(h, ((0, 0), (0, 0), (0, 0), (0, 0), (0, PADDING)))
    Tp = T + PADDING
    Nw = B * X * Y * Tp

    for l in range(4):
        x1 = spectral_conv3d_cf(h, params[f"spec{l}_wr"], params[f"spec{l}_wi"],
                                MODES1, MODES2, MODES3)
        h = cf_wk_pallas(h.reshape(WIDTH, Nw), x1.reshape(WIDTH, Nw),
                         params[f"w{l}_w"], params[f"w{l}_b"],
                         apply_gelu=(l < 3))
        h = h.reshape(WIDTH, B, X, Y, Tp)

    h = h[..., :T]                                           # strip time padding
    out = head_pallas(h.reshape(WIDTH, N), params["fc1_w"], params["fc1_b"],
                      params["fc2_w"], params["fc2_b"])      # (1, N)
    return jnp.transpose(out.reshape(1, B, X, Y, T), (1, 2, 3, 4, 0))


# --------------------------- pure-JAX reference ----------------------------- #
def reference_forward(params, x):
    B, X, Y, T, _ = x.shape
    f32 = jnp.float32
    gx = jnp.broadcast_to(jnp.linspace(0.0, 1.0, X, dtype=f32).reshape(1, X, 1, 1, 1),
                          (B, X, Y, T, 1))
    gy = jnp.broadcast_to(jnp.linspace(0.0, 1.0, Y, dtype=f32).reshape(1, 1, Y, 1, 1),
                          (B, X, Y, T, 1))
    gz = jnp.broadcast_to(jnp.linspace(0.0, 1.0, T, dtype=f32).reshape(1, 1, 1, T, 1),
                          (B, X, Y, T, 1))
    h = jnp.concatenate([x, gx, gy, gz], axis=-1)
    h = h @ params["fc0_w"].T + params["fc0_b"]
    h = jnp.transpose(h, (0, 4, 1, 2, 3))
    h = jnp.pad(h, ((0, 0), (0, 0), (0, 0), (0, 0), (0, PADDING)))
    Tp = T + PADDING
    m1, m2, m3 = MODES1, MODES2, MODES3
    for l in range(4):
        w = (params[f"spec{l}_wr"] + 1j * params[f"spec{l}_wi"]).astype(jnp.complex64)
        x_ft = jnp.fft.rfftn(h, axes=(-3, -2, -1))
        out_ft = jnp.zeros((B, WIDTH, X, Y, Tp // 2 + 1), jnp.complex64)
        cm = lambda a, wk: jnp.einsum('bixyz,ioxyz->boxyz', a, wk)
        out_ft = out_ft.at[:, :, :m1, :m2, :m3].set(cm(x_ft[:, :, :m1, :m2, :m3], w[0]))
        out_ft = out_ft.at[:, :, X - m1:, :m2, :m3].set(cm(x_ft[:, :, X - m1:, :m2, :m3], w[1]))
        out_ft = out_ft.at[:, :, :m1, Y - m2:, :m3].set(cm(x_ft[:, :, :m1, Y - m2:, :m3], w[2]))
        out_ft = out_ft.at[:, :, X - m1:, Y - m2:, :m3].set(cm(x_ft[:, :, X - m1:, Y - m2:, :m3], w[3]))
        x1 = jnp.fft.irfftn(out_ft, s=(X, Y, Tp), axes=(-3, -2, -1)).astype(f32)
        x2 = jnp.einsum('oi,bixyt->boxyt', params[f"w{l}_w"], h) \
            + params[f"w{l}_b"].reshape(1, WIDTH, 1, 1, 1)
        h = x1 + x2
        if l < 3:
            h = jax.nn.gelu(h, approximate=False)
    h = h[..., :T]
    h = jnp.transpose(h, (0, 2, 3, 4, 1))
    h = jax.nn.gelu(h @ params["fc1_w"].T + params["fc1_b"], approximate=False)
    h = h @ params["fc2_w"].T + params["fc2_b"]
    return h


if __name__ == "__main__":
    key = jax.random.PRNGKey(0)
    pkey, xkey = jax.random.split(key)
    params = init_params(pkey)

    B, X, Y, T = 2, 8, 8, 8
    x = jax.random.normal(xkey, (B, X, Y, T, 10), jnp.float32)

    fwd = jax.jit(fno3d_forward)
    out = jax.block_until_ready(fwd(params, x))

    assert out.shape == (B, X, Y, T, 1), out.shape
    assert bool(jnp.all(jnp.isfinite(out)))

    ref = jax.block_until_ready(jax.jit(reference_forward)(params, x))
    max_err = float(jnp.max(jnp.abs(out - ref)))
    assert max_err < 2e-3, f"mismatch vs reference: max abs err {max_err}"

    print("KERNEL_OK")
</pallas_src>

<mosaic_0001>
module attributes {stable_mosaic.version = 11 : i64} {
  func.func @_cf_linear_kernel(%arg0: i32, %arg1: memref<13x512xf32, #tpu.memory_space<vmem>>, %arg2: memref<8x13xf32, #tpu.memory_space<vmem>>, %arg3: memref<8x1xf32, #tpu.memory_space<vmem>>, %arg4: memref<8x512xf32, #tpu.memory_space<vmem>>) attributes {dimension_semantics = [#tpu.dimension_semantics<parallel>], iteration_bounds = array<i64: 2>, scalar_prefetch = 0 : i64, scratch_operands = 0 : i64, tpu.core_type = #tpu.core_type<tc>, window_params = [{transform_indices = @transform_0, window_bounds = array<i64: 13, 512>}, {pipeline_mode = #tpu.pipeline_mode<synchronous>, transform_indices = @transform_1, window_bounds = array<i64: 8, 13>}, {pipeline_mode = #tpu.pipeline_mode<synchronous>, transform_indices = @transform_2, window_bounds = array<i64: 8, 1>}, {transform_indices = @transform_3, window_bounds = array<i64: 8, 512>}]} {
    %c0 = arith.constant 0 : index
    %c0_0 = arith.constant 0 : index
    %0 = vector.load %arg2[%c0, %c0_0] : memref<8x13xf32, #tpu.memory_space<vmem>>, vector<8x13xf32>
    %c0_1 = arith.constant 0 : index
    %c0_2 = arith.constant 0 : index
    %1 = vector.load %arg1[%c0_1, %c0_2] : memref<13x512xf32, #tpu.memory_space<vmem>>, vector<13x512xf32>
    %cst = arith.constant dense<0.000000e+00> : vector<8x512xf32>
    %2 = tpu.matmul %0, %1, %cst {dimension_numbers = #tpu.dot_dimension_numbers<[1], [0], [0], [1], [0, 0, 1, 1], [], []>} : vector<8x13xf32>, vector<13x512xf32>, vector<8x512xf32> -> vector<8x512xf32>
    %c0_3 = arith.constant 0 : index
    %c0_4 = arith.constant 0 : index
    %3 = vector.load %arg3[%c0_3, %c0_4] : memref<8x1xf32, #tpu.memory_space<vmem>>, vector<8x1xf32>
    %4 = vector.broadcast %3 : vector<8x1xf32> to vector<8x512xf32>
    %5 = arith.addf %2, %4 : vector<8x512xf32>
    %c0_5 = arith.constant 0 : index
    %c0_6 = arith.constant 0 : index
    %6 = vector.load %arg4[%c0_5, %c0_6] : memref<8x512xf32, #tpu.memory_space<vmem>>, vector<8x512xf32>
    tpu.vector_store %arg4[%c0_5, %c0_6], %5 {strides = array<i32>} : memref<8x512xf32, #tpu.memory_space<vmem>>, vector<8x512xf32>,
    return
  }
  func.func @transform_0(%arg0: i32) -> (i32, i32) {
    %c0_i32 = arith.constant 0 : i32
    %c0_i32_0 = arith.constant 0 : i32
    return %c0_i32, %arg0 : i32, i32
  }
  func.func @transform_1(%arg0: i32) -> (i32, i32) {
    %c0_i32 = arith.constant 0 : i32
    %c0_i32_0 = arith.constant 0 : i32
    %c0_i32_1 = arith.constant 0 : i32
    return %c0_i32, %c0_i32_0 : i32, i32
  }
  func.func @transform_2(%arg0: i32) -> (i32, i32) {
    %c0_i32 = arith.constant 0 : i32
    %c0_i32_0 = arith.constant 0 : i32
    %c0_i32_1 = arith.constant 0 : i32
    return %c0_i32, %c0_i32_0 : i32, i32
  }
  func.func @transform_3(%arg0: i32) -> (i32, i32) {
    %c0_i32 = arith.constant 0 : i32
    %c0_i32_0 = arith.constant 0 : i32
    return %c0_i32, %arg0 : i32, i32
  }
}

module attributes {stable_mosaic.version = 11 : i64} {
  func.func @_spectral_mul_kernel(%arg0: i32, %arg1: memref<1x2x8x48xf32, #tpu.memory_space<vmem>>, %arg2: memref<1x2x8x48xf32, #tpu.memory_space<vmem>>, %arg3: memref<1x8x8x48xf32, #tpu.memory_space<vmem>>, %arg4: memref<1x8x8x48xf32, #tpu.memory_space<vmem>>, %arg5: memref<1x2x8x48xf32, #tpu.memory_space<vmem>>, %arg6: memref<1x2x8x48xf32, #tpu.memory_space<vmem>>) attributes {dimension_semantics = [#tpu.dimension_semantics<parallel>], iteration_bounds = array<i64: 4>, scalar_prefetch = 0 : i64, scratch_operands = 0 : i64, tpu.core_type = #tpu.core_type<tc>, window_params = [{transform_indices = @transform_0, window_bounds = array<i64: 1, 2, 8, 48>}, {transform_indices = @transform_1, window_bounds = array<i64: 1, 2, 8, 48>}, {transform_indices = @transform_2, window_bounds = array<i64: 1, 8, 8, 48>}, {transform_indices = @transform_3, window_bounds = array<i64: 1, 8, 8, 48>}, {transform_indices = @transform_4, window_bounds = array<i64: 1, 2, 8, 48>}, {transform_indices = @transform_5, window_bounds = array<i64: 1, 2, 8, 48>}]} {
    %c0 = arith.constant 0 : index
    %c0_0 = arith.constant 0 : index
    %c0_1 = arith.constant 0 : index
    %c0_2 = arith.constant 0 : index
    %0 = vector.load %arg1[%c0, %c0_0, %c0_1, %c0_2] : memref<1x2x8x48xf32, #tpu.memory_space<vmem>>, vector<1x2x8x48xf32>
    %1 = vector.shape_cast %0 : vector<1x2x8x48xf32> to vector<2x8x48xf32>
    %c0_3 = arith.constant 0 : index
    %c0_4 = arith.constant 0 : index
    %c0_5 = arith.constant 0 : index
    %c0_6 = arith.constant 0 : index
    %2 = vector.load %arg2[%c0_3, %c0_4, %c0_5, %c0_6] : memref<1x2x8x48xf32, #tpu.memory_space<vmem>>, vector<1x2x8x48xf32>
    %3 = vector.shape_cast %2 : vector<1x2x8x48xf32> to vector<2x8x48xf32>
    %c0_7 = arith.constant 0 : index
    %c0_8 = arith.constant 0 : index
    %c0_9 = arith.constant 0 : index
    %c0_10 = arith.constant 0 : index
    %4 = vector.load %arg3[%c0_7, %c0_8, %c0_9, %c0_10] : memref<1x8x8x48xf32, #tpu.memory_space<vmem>>, vector<1x8x8x48xf32>
    %5 = vector.shape_cast %4 : vector<1x8x8x48xf32> to vector<8x8x48xf32>
    %c0_11 = arith.constant 0 : index
    %c0_12 = arith.constant 0 : index
    %c0_13 = arith.constant 0 : index
    %c0_14 = arith.constant 0 : index
    %6 = vector.load %arg4[%c0_11, %c0_12, %c0_13, %c0_14] : memref<1x8x8x48xf32, #tpu.memory_space<vmem>>, vector<1x8x8x48xf32>
    %7 = vector.shape_cast %6 : vector<1x8x8x48xf32> to vector<8x8x48xf32>
    %cst = arith.constant 0.000000e+00 : f32
    %8 = vector.broadcast %cst : f32 to vector<2x8x48xf32>
    %cst_15 = arith.constant 0.000000e+00 : f32
    %9 = vector.broadcast %cst_15 : f32 to vector<2x8x48xf32>
    %10 = vector.extract_strided_slice %1 {offsets = [0, 0, 0], sizes = [2, 1, 48], strides = [1, 1, 1]} : vector<2x8x48xf32> to vector<2x1x48xf32>
    %11 = vector.shape_cast %10 : vector<2x1x48xf32> to vector<2x48xf32>
    %12 = vector.shape_cast %11 : vector<2x48xf32> to vector<2x1x48xf32>
    %13 = vector.extract_strided_slice %3 {offsets = [0, 0, 0], sizes = [2, 1, 48], strides = [1, 1, 1]} : vector<2x8x48xf32> to vector<2x1x48xf32>
    %14 = vector.shape_cast %13 : vector<2x1x48xf32> to vector<2x48xf32>
    %15 = vector.shape_cast %14 : vector<2x48xf32> to vector<2x1x48xf32>
    %16 = vector.extract_strided_slice %5 {offsets = [0, 0, 0], sizes = [1, 8, 48], strides = [1, 1, 1]} : vector<8x8x48xf32> to vector<1x8x48xf32>
    %17 = vector.shape_cast %16 : vector<1x8x48xf32> to vector<8x48xf32>
    %18 = vector.shape_cast %17 : vector<8x48xf32> to vector<1x8x48xf32>
    %19 = vector.extract_strided_slice %7 {offsets = [0, 0, 0], sizes = [1, 8, 48], strides = [1, 1, 1]} : vector<8x8x48xf32> to vector<1x8x48xf32>
    %20 = vector.shape_cast %19 : vector<1x8x48xf32> to vector<8x48xf32>
    %21 = vector.shape_cast %20 : vector<8x48xf32> to vector<1x8x48xf32>
    %22 = vector.broadcast %12 : vector<2x1x48xf32> to vector<2x8x48xf32>
    %23 = vector.broadcast %18 : vector<1x8x48xf32> to vector<2x8x48xf32>
    %24 = arith.mulf %22, %23 : vector<2x8x48xf32>
    %25 = arith.addf %8, %24 : vector<2x8x48xf32>
    %26 = vector.broadcast %15 : vector<2x1x48xf32> to vector<2x8x48xf32>
    %27 = vector.broadcast %21 : vector<1x8x48xf32> to vector<2x8x48xf32>
    %28 = arith.mulf %26, %27 : vector<2x8x48xf32>
    %29 = arith.subf %25, %28 : vector<2x8x48xf32>
    %30 = vector.broadcast %12 : vector<2x1x48xf32> to vector<2x8x48xf32>
    %31 = vector.broadcast %21 : vector<1x8x48xf32> to vector<2x8x48xf32>
    %32 = arith.mulf %30, %31 : vector<2x8x48xf32>
    %33 = arith.addf %9, %32 : vector<2x8x48xf32>
    %34 = vector.broadcast %15 : vector<2x1x48xf32> to vector<2x8x48xf32>
    %35 = vector.broadcast %18 : vector<1x8x48xf32> to vector<2x8x48xf32>
    %36 = arith.mulf %34, %35 : vector<2x8x48xf32>
    %37 = arith.addf %33, %36 : vector<2x8x48xf32>
    %38 = vector.extract_strided_slice %1 {offsets = [0, 1, 0], sizes = [2, 1, 48], strides = [1, 1, 1]} : vector<2x8x48xf32> to vector<2x1x48xf32>
    %39 = vector.shape_cast %38 : vector<2x1x48xf32> to vector<2x48xf32>
    %40 = vector.shape_cast %39 : vector<2x48xf32> to vector<2x1x48xf32>
    %41 = vector.extract_strided_slice %3 {offsets = [0, 1, 0], sizes = [2, 1, 48], strides = [1, 1, 1]} : vector<2x8x48xf32> to vector<2x1x48xf32>
    %42 = vector.shape_cast %41 : vector<2x1x48xf32> to vector<2x48xf32>
    %43 = vector.shape_cast %42 : vector<2x48xf32> to vector<2x1x48xf32>
    %44 = vector.extract_strided_slice %5 {offsets = [1, 0, 0], sizes = [1, 8, 48], strides = [1, 1, 1]} : vector<8x8x48xf32> to vector<1x8x48xf32>
    %45 = vector.shape_cast %44 : vector<1x8x48xf32> to vector<8x48xf32>
    %46 = vector.shape_cast %45 : vector<8x48xf32> to vector<1x8x48xf32>
    %47 = vector.extract_strided_slice %7 {offsets = [1, 0, 0], sizes = [1, 8, 48], strides = [1, 1, 1]} : vector<8x8x48xf32> to vector<1x8x48xf32>
    %48 = vector.shape_cast %47 : vector<1x8x48xf32> to vector<8x48xf32>
    %49 = vector.shape_cast %48 : vector<8x48xf32> to vector<1x8x48xf32>
    %50 = vector.broadcast %40 : vector<2x1x48xf32> to vector<2x8x48xf32>
    %51 = vector.broadcast %46 : vector<1x8x48xf32> to vector<2x8x48xf32>
    %52 = arith.mulf %50, %51 : vector<2x8x48xf32>
    %53 = arith.addf %29, %52 : vector<2x8x48xf32>
    %54 = vector.broadcast %43 : vector<2x1x48xf32> to vector<2x8x48xf32>
    %55 = vector.broadcast %49 : vector<1x8x48xf32> to vector<2x8x48xf32>
    %56 = arith.mulf %54, %55 : vector<2x8x48xf32>
    %57 = arith.subf %53, %56 : vector<2x8x48xf32>
    %58 = vector.broadcast %40 : vector<2x1x48xf32> to vector<2x8x48xf32>
    %59 = vector.broadcast %49 : vector<1x8x48xf32> to vector<2x8x48xf32>
    %60 = arith.mulf %58, %59 : vector<2x8x48xf32>
    %61 = arith.addf %37, %60 : vector<2x8x48xf32>
    %62 = vector.broadcast %43 : vector<2x1x48xf32> to vector<2x8x48xf32>
    %63 = vector.broadcast %46 : vector<1x8x48xf32> to vector<2x8x48xf32>
    %64 = arith.mulf %62, %63 : vector<2x8x48xf32>
    %65 = arith.addf %61, %64 : vector<2x8x48xf32>
    %66 = vector.extract_strided_slice %1 {offsets = [0, 2, 0], sizes = [2, 1, 48], strides = [1, 1, 1]} : vector<2x8x48xf32> to vector<2x1x48xf32>
    %67 = vector.shape_cast %66 : vector<2x1x48xf32> to vector<2x48xf32>
    %68 = vector.shape_cast %67 : vector<2x48xf32> to vector<2x1x48xf32>
    %69 = vector.extract_strided_slice %3 {offsets = [0, 2, 0], sizes = [2, 1, 48], strides = [1, 1, 1]} : vector<2x8x48xf32> to vector<2x1x48xf32>
    %70 = vector.shape_cast %69 : vector<2x1x48xf32> to vector<2x48xf32>
    %71 = vector.shape_cast %70 : vector<2x48xf32> to vector<2x1x48xf32>
    %72 = vector.extract_strided_slice %5 {offsets = [2, 0, 0], sizes = [1, 8, 48], strides = [1, 1, 1]} : vector<8x8x48xf32> to vector<1x8x48xf32>
    %73 = vector.shape_cast %72 : vector<1x8x48xf32> to vector<8x48xf32>
    %74 = vector.shape_cast %73 : vector<8x48xf32> to vector<1x8x48xf32>
    %75 = vector.extract_strided_slice %7 {offsets = [2, 0, 0], sizes = [1, 8, 48], strides = [1, 1, 1]} : vector<8x8x48xf32> to vector<1x8x48xf32>
    %76 = vector.shape_cast %75 : vector<1x8x48xf32> to vector<8x48xf32>
    %77 = vector.shape_cast %76 : vector<8x48xf32> to vector<1x8x48xf32>
    %78 = vector.broadcast %68 : vector<2x1x48xf32> to vector<2x8x48xf32>
    %79 = vector.broadcast %74 : vector<1x8x48xf32> to vector<2x8x48xf32>
    %80 = arith.mulf %78, %79 : vector<2x8x48xf32>
    %81 = arith.addf %57, %80 : vector<2x8x48xf32>
    %82 = vector.broadcast %71 : vector<2x1x48xf32> to vector<2x8x48xf32>
    %83 = vector.broadcast %77 : vector<1x8x48xf32> to vector<2x8x48xf32>
    %84 = arith.mulf %82, %83 : vector<2x8x48xf32>
    %85 = arith.subf %81, %84 : vector<2x8x48xf32>
    %86 = vector.broadcast %68 : vector<2x1x48xf32> to vector<2x8x48xf32>
    %87 = vector.broadcast %77 : vector<1x8x48xf32> to vector<2x8x48xf32>
    %88 = arith.mulf %86, %87 : vector<2x8x48xf32>
    %89 = arith.addf %65, %88 : vector<2x8x48xf32>
    %90 = vector.broadcast %71 : vector<2x1x48xf32> to vector<2x8x48xf32>
    %91 = vector.broadcast %74 : vector<1x8x48xf32> to vector<2x8x48xf32>
    %92 = arith.mulf %90, %91 : vector<2x8x48xf32>
    %93 = arith.addf %89, %92 : vector<2x8x48xf32>
    %94 = vector.extract_strided_slice %1 {offsets = [0, 3, 0], sizes = [2, 1, 48], strides = [1, 1, 1]} : vector<2x8x48xf32> to vector<2x1x48xf32>
    %95 = vector.shape_cast %94 : vector<2x1x48xf32> to vector<2x48xf32>
    %96 = vector.shape_cast %95 : vector<2x48xf32> to vector<2x1x48xf32>
    %97 = vector.extract_strided_slice %3 {offsets = [0, 3, 0], sizes = [2, 1, 48], strides = [1, 1, 1]} : vector<2x8x48xf32> to vector<2x1x48xf32>
    %98 = vector.shape_cast %97 : vector<2x1x48xf32> to vector<2x48xf32>
    %99 = vector.shape_cast %98 : vector<2x48xf32> to vector<2x1x48xf32>
    %100 = vector.extract_strided_slice %5 {offsets = [3, 0, 0], sizes = [1, 8, 48], strides = [1, 1, 1]} : vector<8x8x48xf32> to vector<1x8x48xf32>
    %101 = vector.shape_cast %100 : vector<1x8x48xf32> to vector<8x48xf32>
    %102 = vector.shape_cast %101 : vector<8x48xf32> to vector<1x8x48xf32>
    %103 = vector.extract_strided_slice %7 {offsets = [3, 0, 0], sizes = [1, 8, 48], strides = [1, 1, 1]} : vector<8x8x48xf32> to vector<1x8x48xf32>
    %104 = vector.shape_cast %103 : vector<1x8x48xf32> to vector<8x48xf32>
    %105 = vector.shape_cast %104 : vector<8x48xf32> to vector<1x8x48xf32>
    %106 = vector.broadcast %96 : vector<2x1x48xf32> to vector<2x8x48xf32>
    %107 = vector.broadcast %102 : vector<1x8x48xf32> to vector<2x8x48xf32>
    %108 = arith.mulf %106, %107 : vector<2x8x48xf32>
    %109 = arith.addf %85, %108 : vector<2x8x48xf32>
    %110 = vector.broadcast %99 : vector<2x1x48xf32> to vector<2x8x48xf32>
    %111 = vector.broadcast %105 : vector<1x8x48xf32> to vector<2x8x48xf32>
    %112 = arith.mulf %110, %111 : vector<2x8x48xf32>
    %113 = arith.subf %109, %112 : vector<2x8x48xf32>
    %114 = vector.broadcast %96 : vector<2x1x48xf32> to vector<2x8x48xf32>
    %115 = vector.broadcast %105 : vector<1x8x48xf32> to vector<2x8x48xf32>
    %116 = arith.mulf %114, %115 : vector<2x8x48xf32>
    %117 = arith.addf %93, %116 : vector<2x8x48xf32>
    %118 = vector.broadcast %99 : vector<2x1x48xf32> to vector<2x8x48xf32>
    %119 = vector.broadcast %102 : vector<1x8x48xf32> to vector<2x8x48xf32>
    %120 = arith.mulf %118, %119 : vector<2x8x48xf32>
    %121 = arith.addf %117, %120 : vector<2x8x48xf32>
    %122 = vector.extract_strided_slice %1 {offsets = [0, 4, 0], sizes = [2, 1, 48], strides = [1, 1, 1]} : vector<2x8x48xf32> to vector<2x1x48xf32>
    %123 = vector.shape_cast %122 : vector<2x1x48xf32> to vector<2x48xf32>
    %124 = vector.shape_cast %123 : vector<2x48xf32> to vector<2x1x48xf32>
    %125 = vector.extract_strided_slice %3 {offsets = [0, 4, 0], sizes = [2, 1, 48], strides = [1, 1, 1]} : vector<2x8x48xf32> to vector<2x1x48xf32>
    %126 = vector.shape_cast %125 : vector<2x1x48xf32> to vector<2x48xf32>
    %127 = vector.shape_cast %126 : vector<2x48xf32> to vector<2x1x48xf32>
    %128 = vector.extract_strided_slice %5 {offsets = [4, 0, 0], sizes = [1, 8, 48], strides = [1, 1, 1]} : vector<8x8x48xf32> to vector<1x8x48xf32>
    %129 = vector.shape_cast %128 : vector<1x8x48xf32> to vector<8x48xf32>
    %130 = vector.shape_cast %129 : vector<8x48xf32> to vector<1x8x48xf32>
    %131 = vector.extract_strided_slice %7 {offsets = [4, 0, 0], sizes = [1, 8, 48], strides = [1, 1, 1]} : vector<8x8x48xf32> to vector<1x8x48xf32>
    %132 = vector.shape_cast %131 : vector<1x8x48xf32> to vector<8x48xf32>
    %133 = vector.shape_cast %132 : vector<8x48xf32> to vector<1x8x48xf32>
    %134 = vector.broadcast %124 : vector<2x1x48xf32> to vector<2x8x48xf32>
    %135 = vector.broadcast %130 : vector<1x8x48xf32> to vector<2x8x48xf32>
    %136 = arith.mulf %134, %135 : vector<2x8x48xf32>
    %137 = arith.addf %113, %136 : vector<2x8x48xf32>
    %138 = vector.broadcast %127 : vector<2x1x48xf32> to vector<2x8x48xf32>
    %139 = vector.broadcast %133 : vector<1x8x48xf32> to vector<2x8x48xf32>
    %140 = arith.mulf %138, %139 : vector<2x8x48xf32>
    %141 = arith.subf %137, %140 : vector<2x8x48xf32>
    %142 = vector.broadcast %124 : vector<2x1x48xf32> to vector<2x8x48xf32>
    %143 = vector.broadcast %133 : vector<1x8x48xf32> to vector<2x8x48xf32>
    %144 = arith.mulf %142, %143 : vector<2x8x48xf32>
    %145 = arith.addf %121, %144 : vector<2x8x48xf32>
    %146 = vector.broadcast %127 : vector<2x1x48xf32> to vector<2x8x48xf32>
    %147 = vector.broadcast %130 : vector<1x8x48xf32> to vector<2x8x48xf32>
    %148 = arith.mulf %146, %147 : vector<2x8x48xf32>
    %149 = arith.addf %145, %148 : vector<2x8x48xf32>
    %150 = vector.extract_strided_slice %1 {offsets = [0, 5, 0], sizes = [2, 1, 48], strides = [1, 1, 1]} : vector<2x8x48xf32> to vector<2x1x48xf32>
    %151 = vector.shape_cast %150 : vector<2x1x48xf32> to vector<2x48xf32>
    %152 = vector.shape_cast %151 : vector<2x48xf32> to vector<2x1x48xf32>
    %153 = vector.extract_strided_slice %3 {offsets = [0, 5, 0], sizes = [2, 1, 48], strides = [1, 1, 1]} : vector<2x8x48xf32> to vector<2x1x48xf32>
    %154 = vector.shape_cast %153 : vector<2x1x48xf32> to vector<2x48xf32>
    %155 = vector.shape_cast %154 : vector<2x48xf32> to vector<2x1x48xf32>
    %156 = vector.extract_strided_slice %5 {offsets = [5, 0, 0], sizes = [1, 8, 48], strides = [1, 1, 1]} : vector<8x8x48xf32> to vector<1x8x48xf32>
    %157 = vector.shape_cast %156 : vector<1x8x48xf32> to vector<8x48xf32>
    %158 = vector.shape_cast %157 : vector<8x48xf32> to vector<1x8x48xf32>
    %159 = vector.extract_strided_slice %7 {offsets = [5, 0, 0], sizes = [1, 8, 48], strides = [1, 1, 1]} : vector<8x8x48xf32> to vector<1x8x48xf32>
    %160 = vector.shape_cast %159 : vector<1x8x48xf32> to vector<8x48xf32>
    %161 = vector.shape_cast %160 : vector<8x48xf32> to vector<1x8x48xf32>
    %162 = vector.broadcast %152 : vector<2x1x48xf32> to vector<2x8x48xf32>
    %163 = vector.broadcast %158 : vector<1x8x48xf32> to vector<2x8x48xf32>
    %164 = arith.mulf %162, %163 : vector<2x8x48xf32>
    %165 = arith.addf %141, %164 : vector<2x8x48xf32>
    %166 = vector.broadcast %155 : vector<2x1x48xf32> to vector<2x8x48xf32>
    %167 = vector.broadcast %161 : vector<1x8x48xf32> to vector<2x8x48xf32>
    %168 = arith.mulf %166, %167 : vector<2x8x48xf32>
    %169 = arith.subf %165, %168 : vector<2x8x48xf32>
    %170 = vector.broadcast %152 : vector<2x1x48xf32> to vector<2x8x48xf32>
    %171 = vector.broadcast %161 : vector<1x8x48xf32> to vector<2x8x48xf32>
    %172 = arith.mulf %170, %171 : vector<2x8x48xf32>
    %173 = arith.addf %149, %172 : vector<2x8x48xf32>
    %174 = vector.broadcast %155 : vector<2x1x48xf32> to vector<2x8x48xf32>
    %175 = vector.broadcast %158 : vector<1x8x48xf32> to vector<2x8x48xf32>
    %176 = arith.mulf %174, %175 : vector<2x8x48xf32>
    %177 = arith.addf %173, %176 : vector<2x8x48xf32>
    %178 = vector.extract_strided_slice %1 {offsets = [0, 6, 0], sizes = [2, 1, 48], strides = [1, 1, 1]} : vector<2x8x48xf32> to vector<2x1x48xf32>
    %179 = vector.shape_cast %178 : vector<2x1x48xf32> to vector<2x48xf32>
    %180 = vector.shape_cast %179 : vector<2x48xf32> to vector<2x1x48xf32>
    %181 = vector.extract_strided_slice %3 {offsets = [0, 6, 0], sizes = [2, 1, 48], strides = [1, 1, 1]} : vector<2x8x48xf32> to vector<2x1x48xf32>
    %182 = vector.shape_cast %181 : vector<2x1x48xf32> to vector<2x48xf32>
    %183 = vector.shape_cast %182 : vector<2x48xf32> to vector<2x1x48xf32>
    %184 = vector.extract_strided_slice %5 {offsets = [6, 0, 0], sizes = [1, 8, 48], strides = [1, 1, 1]} : vector<8x8x48xf32> to vector<1x8x48xf32>
    %185 = vector.shape_cast %184 : vector<1x8x48xf32> to vector<8x48xf32>
    %186 = vector.shape_cast %185 : vector<8x48xf32> to vector<1x8x48xf32>
    %187 = vector.extract_strided_slice %7 {offsets = [6, 0, 0], sizes = [1, 8, 48], strides = [1, 1, 1]} : vector<8x8x48xf32> to vector<1x8x48xf32>
    %188 = vector.shape_cast %187 : vector<1x8x48xf32> to vector<8x48xf32>
    %189 = vector.shape_cast %188 : vector<8x48xf32> to vector<1x8x48xf32>
    %190 = vector.broadcast %180 : vector<2x1x48xf32> to vector<2x8x48xf32>
    %191 = vector.broadcast %186 : vector<1x8x48xf32> to vector<2x8x48xf32>
    %192 = arith.mulf %190, %191 : vector<2x8x48xf32>
    %193 = arith.addf %169, %192 : vector<2x8x48xf32>
    %194 = vector.broadcast %183 : vector<2x1x48xf32> to vector<2x8x48xf32>
    %195 = vector.broadcast %189 : vector<1x8x48xf32> to vector<2x8x48xf32>
    %196 = arith.mulf %194, %195 : vector<2x8x48xf32>
    %197 = arith.subf %193, %196 : vector<2x8x48xf32>
    %198 = vector.broadcast %180 : vector<2x1x48xf32> to vector<2x8x48xf32>
    %199 = vector.broadcast %189 : vector<1x8x48xf32> to vector<2x8x48xf32>
    %200 = arith.mulf %198, %199 : vector<2x8x48xf32>
    %201 = arith.addf %177, %200 : vector<2x8x48xf32>
    %202 = vector.broadcast %183 : vector<2x1x48xf32> to vector<2x8x48xf32>
    %203 = vector.broadcast %186 : vector<1x8x48xf32> to vector<2x8x48xf32>
    %204 = arith.mulf %202, %203 : vector<2x8x48xf32>
    %205 = arith.addf %201, %204 : vector<2x8x48xf32>
    %206 = vector.extract_strided_slice %1 {offsets = [0, 7, 0], sizes = [2, 1, 48], strides = [1, 1, 1]} : vector<2x8x48xf32> to vector<2x1x48xf32>
    %207 = vector.shape_cast %206 : vector<2x1x48xf32> to vector<2x48xf32>
    %208 = vector.shape_cast %207 : vector<2x48xf32> to vector<2x1x48xf32>
    %209 = vector.extract_strided_slice %3 {offsets = [0, 7, 0], sizes = [2, 1, 48], strides = [1, 1, 1]} : vector<2x8x48xf32> to vector<2x1x48xf32>
    %210 = vector.shape_cast %209 : vector<2x1x48xf32> to vector<2x48xf32>
    %211 = vector.shape_cast %210 : vector<2x48xf32> to vector<2x1x48xf32>
    %212 = vector.extract_strided_slice %5 {offsets = [7, 0, 0], sizes = [1, 8, 48], strides = [1, 1, 1]} : vector<8x8x48xf32> to vector<1x8x48xf32>
    %213 = vector.shape_cast %212 : vector<1x8x48xf32> to vector<8x48xf32>
    %214 = vector.shape_cast %213 : vector<8x48xf32> to vector<1x8x48xf32>
    %215 = vector.extract_strided_slice %7 {offsets = [7, 0, 0], sizes = [1, 8, 48], strides = [1, 1, 1]} : vector<8x8x48xf32> to vector<1x8x48xf32>
    %216 = vector.shape_cast %215 : vector<1x8x48xf32> to vector<8x48xf32>
    %217 = vector.shape_cast %216 : vector<8x48xf32> to vector<1x8x48xf32>
    %218 = vector.broadcast %208 : vector<2x1x48xf32> to vector<2x8x48xf32>
    %219 = vector.broadcast %214 : vector<1x8x48xf32> to vector<2x8x48xf32>
    %220 = arith.mulf %218, %219 : vector<2x8x48xf32>
    %221 = arith.addf %197, %220 : vector<2x8x48xf32>
    %222 = vector.broadcast %211 : vector<2x1x48xf32> to vector<2x8x48xf32>
    %223 = vector.broadcast %217 : vector<1x8x48xf32> to vector<2x8x48xf32>
    %224 = arith.mulf %222, %223 : vector<2x8x48xf32>
    %225 = arith.subf %221, %224 : vector<2x8x48xf32>
    %226 = vector.broadcast %208 : vector<2x1x48xf32> to vector<2x8x48xf32>
    %227 = vector.broadcast %217 : vector<1x8x48xf32> to vector<2x8x48xf32>
    %228 = arith.mulf %226, %227 : vector<2x8x48xf32>
    %229 = arith.addf %205, %228 : vector<2x8x48xf32>
    %230 = vector.broadcast %211 : vector<2x1x48xf32> to vector<2x8x48xf32>
    %231 = vector.broadcast %214 : vector<1x8x48xf32> to vector<2x8x48xf32>
    %232 = arith.mulf %230, %231 : vector<2x8x48xf32>
    %233 = arith.addf %229, %232 : vector<2x8x48xf32>
    %c0_16 = arith.constant 0 : index
    %c0_17 = arith.constant 0 : index
    %c0_18 = arith.constant 0 : index
    %c0_19 = arith.constant 0 : index
    %234 = vector.load %arg5[%c0_16, %c0_17, %c0_18, %c0_19] : memref<1x2x8x48xf32, #tpu.memory_space<vmem>>, vector<1x2x8x48xf32>
    %235 = vector.shape_cast %234 : vector<1x2x8x48xf32> to vector<2x8x48xf32>
    %236 = vector.shape_cast %225 : vector<2x8x48xf32> to vector<1x2x8x48xf32>
    tpu.vector_store %arg5[%c0_16, %c0_17, %c0_18, %c0_19], %236 {strides = array<i32>} : memref<1x2x8x48xf32, #tpu.memory_space<vmem>>, vector<1x2x8x48xf32>,
    %c0_20 = arith.constant 0 : index
    %c0_21 = arith.constant 0 : index
    %c0_22 = arith.constant 0 : index
    %c0_23 = arith.constant 0 : index
    %237 = vector.load %arg6[%c0_20, %c0_21, %c0_22, %c0_23] : memref<1x2x8x48xf32, #tpu.memory_space<vmem>>, vector<1x2x8x48xf32>
    %238 = vector.shape_cast %237 : vector<1x2x8x48xf32> to vector<2x8x48xf32>
    %239 = vector.shape_cast %233 : vector<2x8x48xf32> to vector<1x2x8x48xf32>
    tpu.vector_store %arg6[%c0_20, %c0_21, %c0_22, %c0_23], %239 {strides = array<i32>} : memref<1x2x8x48xf32, #tpu.memory_space<vmem>>, vector<1x2x8x48xf32>,
    return
  }
  func.func @transform_0(%arg0: i32) -> (i32, i32, i32, i32) {
    %c0_i32 = arith.constant 0 : i32
    %c0_i32_0 = arith.constant 0 : i32
    %c0_i32_1 = arith.constant 0 : i32
    %c0_i32_2 = arith.constant 0 : i32
    return %arg0, %c0_i32, %c0_i32_0, %c0_i32_1 : i32, i32, i32, i32
  }
  func.func @transform_1(%arg0: i32) -> (i32, i32, i32, i32) {
    %c0_i32 = arith.constant 0 : i32
    %c0_i32_0 = arith.constant 0 : i32
    %c0_i32_1 = arith.constant 0 : i32
    %c0_i32_2 = arith.constant 0 : i32
    return %arg0, %c0_i32, %c0_i32_0, %c0_i32_1 : i32, i32, i32, i32
  }
  func.func @transform_2(%arg0: i32) -> (i32, i32, i32, i32) {
    %c0_i32 = arith.constant 0 : i32
    %c0_i32_0 = arith.constant 0 : i32
    %c0_i32_1 = arith.constant 0 : i32
    %c0_i32_2 = arith.constant 0 : i32
    return %arg0, %c0_i32, %c0_i32_0, %c0_i32_1 : i32, i32, i32, i32
  }
  func.func @transform_3(%arg0: i32) -> (i32, i32, i32, i32) {
    %c0_i32 = arith.constant 0 : i32
    %c0_i32_0 = arith.constant 0 : i32
    %c0_i32_1 = arith.constant 0 : i32
    %c0_i32_2 = arith.constant 0 : i32
    return %arg0, %c0_i32, %c0_i32_0, %c0_i32_1 : i32, i32, i32, i32
  }
  func.func @transform_4(%arg0: i32) -> (i32, i32, i32, i32) {
    %c0_i32 = arith.constant 0 : i32
    %c0_i32_0 = arith.constant 0 : i32
    %c0_i32_1 = arith.constant 0 : i32
    %c0_i32_2 = arith.constant 0 : i32
    return %arg0, %c0_i32, %c0_i32_0, %c0_i32_1 : i32, i32, i32, i32
  }
  func.func @transform_5(%arg0: i32) -> (i32, i32, i32, i32) {
    %c0_i32 = arith.constant 0 : i32
    %c0_i32_0 = arith.constant 0 : i32
    %c0_i32_1 = arith.constant 0 : i32
    %c0_i32_2 = arith.constant 0 : i32
    return %arg0, %c0_i32, %c0_i32_0, %c0_i32_1 : i32, i32, i32, i32
  }
}

module attributes {stable_mosaic.version = 11 : i64} {
  func.func @_cf_wk_kernel(%arg0: i32, %arg1: memref<8x896xf32, #tpu.memory_space<vmem>>, %arg2: memref<8x896xf32, #tpu.memory_space<vmem>>, %arg3: memref<8x8xf32, #tpu.memory_space<vmem>>, %arg4: memref<8x1xf32, #tpu.memory_space<vmem>>, %arg5: memref<8x896xf32, #tpu.memory_space<vmem>>) attributes {dimension_semantics = [#tpu.dimension_semantics<parallel>], iteration_bounds = array<i64: 2>, scalar_prefetch = 0 : i64, scratch_operands = 0 : i64, tpu.core_type = #tpu.core_type<tc>, window_params = [{transform_indices = @transform_0, window_bounds = array<i64: 8, 896>}, {transform_indices = @transform_1, window_bounds = array<i64: 8, 896>}, {pipeline_mode = #tpu.pipeline_mode<synchronous>, transform_indices = @transform_2, window_bounds = array<i64: 8, 8>}, {pipeline_mode = #tpu.pipeline_mode<synchronous>, transform_indices = @transform_3, window_bounds = array<i64: 8, 1>}, {transform_indices = @transform_4, window_bounds = array<i64: 8, 896>}]} {
    %c0 = arith.constant 0 : index
    %c0_0 = arith.constant 0 : index
    %0 = vector.load %arg3[%c0, %c0_0] : memref<8x8xf32, #tpu.memory_space<vmem>>, vector<8x8xf32>
    %c0_1 = arith.constant 0 : index
    %c0_2 = arith.constant 0 : index
    %1 = vector.load %arg1[%c0_1, %c0_2] : memref<8x896xf32, #tpu.memory_space<vmem>>, vector<8x896xf32>
    %cst = arith.constant dense<0.000000e+00> : vector<8x896xf32>
    %2 = tpu.matmul %0, %1, %cst {dimension_numbers = #tpu.dot_dimension_numbers<[1], [0], [0], [1], [0, 0, 1, 1], [], []>} : vector<8x8xf32>, vector<8x896xf32>, vector<8x896xf32> -> vector<8x896xf32>
    %c0_3 = arith.constant 0 : index
    %c0_4 = arith.constant 0 : index
    %3 = vector.load %arg2[%c0_3, %c0_4] : memref<8x896xf32, #tpu.memory_space<vmem>>, vector<8x896xf32>
    %4 = arith.addf %3, %2 : vector<8x896xf32>
    %c0_5 = arith.constant 0 : index
    %c0_6 = arith.constant 0 : index
    %5 = vector.load %arg4[%c0_5, %c0_6] : memref<8x1xf32, #tpu.memory_space<vmem>>, vector<8x1xf32>
    %6 = vector.broadcast %5 : vector<8x1xf32> to vector<8x896xf32>
    %7 = arith.addf %4, %6 : vector<8x896xf32>
    %cst_7 = arith.constant 5.000000e-01 : f32
    %8 = vector.broadcast %cst_7 : f32 to vector<8x896xf32>
    %9 = arith.mulf %8, %7 : vector<8x896xf32>
    %cst_8 = arith.constant 0.707106769 : f32
    %10 = vector.broadcast %cst_8 : f32 to vector<8x896xf32>
    %11 = arith.mulf %7, %10 : vector<8x896xf32>
    %cst_9 = arith.constant 0.000000e+00 : f32
    %12 = vector.broadcast %cst_9 : f32 to vector<8x896xf32>
    %13 = arith.cmpf oge, %11, %12 : vector<8x896xf32>
    %cst_10 = arith.constant 1.000000e+00 : f32
    %cst_11 = arith.constant -1.000000e+00 : f32
    %14 = vector.broadcast %cst_10 : f32 to vector<8x896xf32>
    %15 = vector.broadcast %cst_11 : f32 to vector<8x896xf32>
    %16 = arith.select %13, %14, %15 : vector<8x896xi1>, vector<8x896xf32>
    %17 = math.absf %11 : vector<8x896xf32>
    %cst_12 = arith.constant 0.327591091 : f32
    %18 = vector.broadcast %cst_12 : f32 to vector<8x896xf32>
    %19 = arith.mulf %18, %17 : vector<8x896xf32>
    %cst_13 = arith.constant 1.000000e+00 : f32
    %20 = vector.broadcast %cst_13 : f32 to vector<8x896xf32>
    %21 = arith.addf %20, %19 : vector<8x896xf32>
    %cst_14 = arith.constant 1.000000e+00 : f32
    %22 = vector.broadcast %cst_14 : f32 to vector<8x896xf32>
    %23 = arith.divf %22, %21 : vector<8x896xf32>
    %cst_15 = arith.constant 1.06140542 : f32
    %24 = vector.broadcast %cst_15 : f32 to vector<8x896xf32>
    %25 = arith.mulf %23, %24 : vector<8x896xf32>
    %cst_16 = arith.constant -1.45315206 : f32
    %26 = vector.broadcast %cst_16 : f32 to vector<8x896xf32>
    %27 = arith.addf %26, %25 : vector<8x896xf32>
    %28 = arith.mulf %23, %27 : vector<8x896xf32>
    %cst_17 = arith.constant 1.42141378 : f32
    %29 = vector.broadcast %cst_17 : f32 to vector<8x896xf32>
    %30 = arith.addf %29, %28 : vector<8x896xf32>
    %31 = arith.mulf %23, %30 : vector<8x896xf32>
    %cst_18 = arith.constant -0.284496725 : f32
    %32 = vector.broadcast %cst_18 : f32 to vector<8x896xf32>
    %33 = arith.addf %32, %31 : vector<8x896xf32>
    %34 = arith.mulf %23, %33 : vector<8x896xf32>
    %cst_19 = arith.constant 0.254829586 : f32
    %35 = vector.broadcast %cst_19 : f32 to vector<8x896xf32>
    %36 = arith.addf %35, %34 : vector<8x896xf32>
    %37 = arith.mulf %23, %36 : vector<8x896xf32>
    %cst_20 = arith.constant 0.000000e+00 : f32
    %38 = vector.broadcast %cst_20 : f32 to vector<8x896xf32>
    %39 = arith.subf %38, %17 : vector<8x896xf32>
    %40 = arith.mulf %39, %17 : vector<8x896xf32>
    %41 = math.exp %40 : vector<8x896xf32>
    %42 = arith.mulf %37, %41 : vector<8x896xf32>
    %cst_21 = arith.constant 1.000000e+00 : f32
    %43 = vector.broadcast %cst_21 : f32 to vector<8x896xf32>
    %44 = arith.subf %43, %42 : vector<8x896xf32>
    %45 = arith.mulf %16, %44 : vector<8x896xf32>
    %cst_22 = arith.constant 1.000000e+00 : f32
    %46 = vector.broadcast %cst_22 : f32 to vector<8x896xf32>
    %47 = arith.addf %46, %45 : vector<8x896xf32>
    %48 = arith.mulf %9, %47 : vector<8x896xf32>
    %c0_23 = arith.constant 0 : index
    %c0_24 = arith.constant 0 : index
    %49 = vector.load %arg5[%c0_23, %c0_24] : memref<8x896xf32, #tpu.memory_space<vmem>>, vector<8x896xf32>
    tpu.vector_store %arg5[%c0_23, %c0_24], %48 {strides = array<i32>} : memref<8x896xf32, #tpu.memory_space<vmem>>, vector<8x896xf32>,
    return
  }
  func.func @transform_0(%arg0: i32) -> (i32, i32) {
    %c0_i32 = arith.constant 0 : i32
    %c0_i32_0 = arith.constant 0 : i32
    return %c0_i32, %arg0 : i32, i32
  }
  func.func @transform_1(%arg0: i32) -> (i32, i32) {
    %c0_i32 = arith.constant 0 : i32
    %c0_i32_0 = arith.constant 0 : i32
    return %c0_i32, %arg0 : i32, i32
  }
  func.func @transform_2(%arg0: i32) -> (i32, i32) {
    %c0_i32 = arith.constant 0 : i32
    %c0_i32_0 = arith.constant 0 : i32
    %c0_i32_1 = arith.constant 0 : i32
    return %c0_i32, %c0_i32_0 : i32, i32
  }
  func.func @transform_3(%arg0: i32) -> (i32, i32) {
    %c0_i32 = arith.constant 0 : i32
    %c0_i32_0 = arith.constant 0 : i32
    %c0_i32_1 = arith.constant 0 : i32
    return %c0_i32, %c0_i32_0 : i32, i32
  }
  func.func @transform_4(%arg0: i32) -> (i32, i32) {
    %c0_i32 = arith.constant 0 : i32
    %c0_i32_0 = arith.constant 0 : i32
    return %c0_i32, %arg0 : i32, i32
  }
}

module attributes {stable_mosaic.version = 11 : i64} {
  func.func @_cf_wk_kernel(%arg0: i32, %arg1: memref<8x896xf32, #tpu.memory_space<vmem>>, %arg2: memref<8x896xf32, #tpu.memory_space<vmem>>, %arg3: memref<8x8xf32, #tpu.memory_space<vmem>>, %arg4: memref<8x1xf32, #tpu.memory_space<vmem>>, %arg5: memref<8x896xf32, #tpu.memory_space<vmem>>) attributes {dimension_semantics = [#tpu.dimension_semantics<parallel>], iteration_bounds = array<i64: 2>, scalar_prefetch = 0 : i64, scratch_operands = 0 : i64, tpu.core_type = #tpu.core_type<tc>, window_params = [{transform_indices = @transform_0, window_bounds = array<i64: 8, 896>}, {transform_indices = @transform_1, window_bounds = array<i64: 8, 896>}, {pipeline_mode = #tpu.pipeline_mode<synchronous>, transform_indices = @transform_2, window_bounds = array<i64: 8, 8>}, {pipeline_mode = #tpu.pipeline_mode<synchronous>, transform_indices = @transform_3, window_bounds = array<i64: 8, 1>}, {transform_indices = @transform_4, window_bounds = array<i64: 8, 896>}]} {
    %c0 = arith.constant 0 : index
    %c0_0 = arith.constant 0 : index
    %0 = vector.load %arg3[%c0, %c0_0] : memref<8x8xf32, #tpu.memory_space<vmem>>, vector<8x8xf32>
    %c0_1 = arith.constant 0 : index
    %c0_2 = arith.constant 0 : index
    %1 = vector.load %arg1[%c0_1, %c0_2] : memref<8x896xf32, #tpu.memory_space<vmem>>, vector<8x896xf32>
    %cst = arith.constant dense<0.000000e+00> : vector<8x896xf32>
    %2 = tpu.matmul %0, %1, %cst {dimension_numbers = #tpu.dot_dimension_numbers<[1], [0], [0], [1], [0, 0, 1, 1], [], []>} : vector<8x8xf32>, vector<8x896xf32>, vector<8x896xf32> -> vector<8x896xf32>
    %c0_3 = arith.constant 0 : index
    %c0_4 = arith.constant 0 : index
    %3 = vector.load %arg2[%c0_3, %c0_4] : memref<8x896xf32, #tpu.memory_space<vmem>>, vector<8x896xf32>
    %4 = arith.addf %3, %2 : vector<8x896xf32>
    %c0_5 = arith.constant 0 : index
    %c0_6 = arith.constant 0 : index
    %5 = vector.load %arg4[%c0_5, %c0_6] : memref<8x1xf32, #tpu.memory_space<vmem>>, vector<8x1xf32>
    %6 = vector.broadcast %5 : vector<8x1xf32> to vector<8x896xf32>
    %7 = arith.addf %4, %6 : vector<8x896xf32>
    %c0_7 = arith.constant 0 : index
    %c0_8 = arith.constant 0 : index
    %8 = vector.load %arg5[%c0_7, %c0_8] : memref<8x896xf32, #tpu.memory_space<vmem>>, vector<8x896xf32>
    tpu.vector_store %arg5[%c0_7, %c0_8], %7 {strides = array<i32>} : memref<8x896xf32, #tpu.memory_space<vmem>>, vector<8x896xf32>,
    return
  }
  func.func @transform_0(%arg0: i32) -> (i32, i32) {
    %c0_i32 = arith.constant 0 : i32
    %c0_i32_0 = arith.constant 0 : i32
    return %c0_i32, %arg0 : i32, i32
  }
  func.func @transform_1(%arg0: i32) -> (i32, i32) {
    %c0_i32 = arith.constant 0 : i32
    %c0_i32_0 = arith.constant 0 : i32
    return %c0_i32, %arg0 : i32, i32
  }
  func.func @transform_2(%arg0: i32) -> (i32, i32) {
    %c0_i32 = arith.constant 0 : i32
    %c0_i32_0 = arith.constant 0 : i32
    %c0_i32_1 = arith.constant 0 : i32
    return %c0_i32, %c0_i32_0 : i32, i32
  }
  func.func @transform_3(%arg0: i32) -> (i32, i32) {
    %c0_i32 = arith.constant 0 : i32
    %c0_i32_0 = arith.constant 0 : i32
    %c0_i32_1 = arith.constant 0 : i32
    return %c0_i32, %c0_i32_0 : i32, i32
  }
  func.func @transform_4(%arg0: i32) -> (i32, i32) {
    %c0_i32 = arith.constant 0 : i32
    %c0_i32_0 = arith.constant 0 : i32
    return %c0_i32, %arg0 : i32, i32
  }
}

module attributes {stable_mosaic.version = 11 : i64} {
  func.func @_head_kernel(%arg0: i32, %arg1: memref<8x512xf32, #tpu.memory_space<vmem>>, %arg2: memref<128x8xf32, #tpu.memory_space<vmem>>, %arg3: memref<128x1xf32, #tpu.memory_space<vmem>>, %arg4: memref<1x128xf32, #tpu.memory_space<vmem>>, %arg5: memref<1x1xf32, #tpu.memory_space<vmem>>, %arg6: memref<1x512xf32, #tpu.memory_space<vmem>>) attributes {dimension_semantics = [#tpu.dimension_semantics<parallel>], iteration_bounds = array<i64: 2>, scalar_prefetch = 0 : i64, scratch_operands = 0 : i64, tpu.core_type = #tpu.core_type<tc>, window_params = [{transform_indices = @transform_0, window_bounds = array<i64: 8, 512>}, {pipeline_mode = #tpu.pipeline_mode<synchronous>, transform_indices = @transform_1, window_bounds = array<i64: 128, 8>}, {pipeline_mode = #tpu.pipeline_mode<synchronous>, transform_indices = @transform_2, window_bounds = array<i64: 128, 1>}, {pipeline_mode = #tpu.pipeline_mode<synchronous>, transform_indices = @transform_3, window_bounds = array<i64: 1, 128>}, {pipeline_mode = #tpu.pipeline_mode<synchronous>, transform_indices = @transform_4, window_bounds = array<i64: 1, 1>}, {transform_indices = @transform_5, window_bounds = array<i64: 1, 512>}]} {
    %c0 = arith.constant 0 : index
    %c0_0 = arith.constant 0 : index
    %0 = vector.load %arg2[%c0, %c0_0] : memref<128x8xf32, #tpu.memory_space<vmem>>, vector<128x8xf32>
    %c0_1 = arith.constant 0 : index
    %c0_2 = arith.constant 0 : index
    %1 = vector.load %arg3[%c0_1, %c0_2] : memref<128x1xf32, #tpu.memory_space<vmem>>, vector<128x1xf32>
    %c0_3 = arith.constant 0 : index
    %c0_4 = arith.constant 0 : index
    %2 = vector.load %arg4[%c0_3, %c0_4] : memref<1x128xf32, #tpu.memory_space<vmem>>, vector<1x128xf32>
    %c0_5 = arith.constant 0 : index
    %c0_6 = arith.constant 0 : index
    %3 = vector.load %arg5[%c0_5, %c0_6] : memref<1x1xf32, #tpu.memory_space<vmem>>, vector<1x1xf32>
    %c0_7 = arith.constant 0 : index
    %c0_8 = arith.constant 0 : index
    %4 = vector.load %arg1[%c0_7, %c0_8] : memref<8x512xf32, #tpu.memory_space<vmem>>, vector<8x128xf32>
    %cst = arith.constant dense<0.000000e+00> : vector<128x128xf32>
    %5 = tpu.matmul %0, %4, %cst {dimension_numbers = #tpu.dot_dimension_numbers<[1], [0], [0], [1], [0, 0, 1, 1], [], []>} : vector<128x8xf32>, vector<8x128xf32>, vector<128x128xf32> -> vector<128x128xf32>
    %6 = vector.broadcast %1 : vector<128x1xf32> to vector<128x128xf32>
    %7 = arith.addf %5, %6 : vector<128x128xf32>
    %cst_9 = arith.constant 5.000000e-01 : f32
    %8 = vector.broadcast %cst_9 : f32 to vector<128x128xf32>
    %9 = arith.mulf %8, %7 : vector<128x128xf32>
    %cst_10 = arith.constant 0.707106769 : f32
    %10 = vector.broadcast %cst_10 : f32 to vector<128x128xf32>
    %11 = arith.mulf %7, %10 : vector<128x128xf32>
    %cst_11 = arith.constant 0.000000e+00 : f32
    %12 = vector.broadcast %cst_11 : f32 to vector<128x128xf32>
    %13 = arith.cmpf oge, %11, %12 : vector<128x128xf32>
    %cst_12 = arith.constant 1.000000e+00 : f32
    %cst_13 = arith.constant -1.000000e+00 : f32
    %14 = vector.broadcast %cst_12 : f32 to vector<128x128xf32>
    %15 = vector.broadcast %cst_13 : f32 to vector<128x128xf32>
    %16 = arith.select %13, %14, %15 : vector<128x128xi1>, vector<128x128xf32>
    %17 = math.absf %11 : vector<128x128xf32>
    %cst_14 = arith.constant 0.327591091 : f32
    %18 = vector.broadcast %cst_14 : f32 to vector<128x128xf32>
    %19 = arith.mulf %18, %17 : vector<128x128xf32>
    %cst_15 = arith.constant 1.000000e+00 : f32
    %20 = vector.broadcast %cst_15 : f32 to vector<128x128xf32>
    %21 = arith.addf %20, %19 : vector<128x128xf32>
    %cst_16 = arith.constant 1.000000e+00 : f32
    %22 = vector.broadcast %cst_16 : f32 to vector<128x128xf32>
    %23 = arith.divf %22, %21 : vector<128x128xf32>
    %cst_17 = arith.constant 1.06140542 : f32
    %24 = vector.broadcast %cst_17 : f32 to vector<128x128xf32>
    %25 = arith.mulf %23, %24 : vector<128x128xf32>
    %cst_18 = arith.constant -1.45315206 : f32
    %26 = vector.broadcast %cst_18 : f32 to vector<128x128xf32>
    %27 = arith.addf %26, %25 : vector<128x128xf32>
    %28 = arith.mulf %23, %27 : vector<128x128xf32>
    %cst_19 = arith.constant 1.42141378 : f32
    %29 = vector.broadcast %cst_19 : f32 to vector<128x128xf32>
    %30 = arith.addf %29, %28 : vector<128x128xf32>
    %31 = arith.mulf %23, %30 : vector<128x128xf32>
    %cst_20 = arith.constant -0.284496725 : f32
    %32 = vector.broadcast %cst_20 : f32 to vector<128x128xf32>
    %33 = arith.addf %32, %31 : vector<128x128xf32>
    %34 = arith.mulf %23, %33 : vector<128x128xf32>
    %cst_21 = arith.constant 0.254829586 : f32
    %35 = vector.broadcast %cst_21 : f32 to vector<128x128xf32>
    %36 = arith.addf %35, %34 : vector<128x128xf32>
    %37 = arith.mulf %23, %36 : vector<128x128xf32>
    %cst_22 = arith.constant 0.000000e+00 : f32
    %38 = vector.broadcast %cst_22 : f32 to vector<128x128xf32>
    %39 = arith.subf %38, %17 : vector<128x128xf32>
    %40 = arith.mulf %39, %17 : vector<128x128xf32>
    %41 = math.exp %40 : vector<128x128xf32>
    %42 = arith.mulf %37, %41 : vector<128x128xf32>
    %cst_23 = arith.constant 1.000000e+00 : f32
    %43 = vector.broadcast %cst_23 : f32 to vector<128x128xf32>
    %44 = arith.subf %43, %42 : vector<128x128xf32>
    %45 = arith.mulf %16, %44 : vector<128x128xf32>
    %cst_24 = arith.constant 1.000000e+00 : f32
    %46 = vector.broadcast %cst_24 : f32 to vector<128x128xf32>
    %47 = arith.addf %46, %45 : vector<128x128xf32>
    %48 = arith.mulf %9, %47 : vector<128x128xf32>
    %cst_25 = arith.constant dense<0.000000e+00> : vector<1x128xf32>
    %49 = tpu.matmul %2, %48, %cst_25 {dimension_numbers = #tpu.dot_dimension_numbers<[1], [0], [0], [1], [0, 0, 1, 1], [], []>} : vector<1x128xf32>, vector<128x128xf32>, vector<1x128xf32> -> vector<1x128xf32>
    %50 = vector.broadcast %3 : vector<1x1xf32> to vector<1x128xf32>
    %51 = arith.addf %49, %50 : vector<1x128xf32>
    %c0_26 = arith.constant 0 : index
    %c0_27 = arith.constant 0 : index
    %52 = vector.load %arg6[%c0_26, %c0_27] : memref<1x512xf32, #tpu.memory_space<vmem>>, vector<1x128xf32>
    tpu.vector_store %arg6[%c0_26, %c0_27], %51 {strides = array<i32>} : memref<1x512xf32, #tpu.memory_space<vmem>>, vector<1x128xf32>,
    %c0_28 = arith.constant 0 : index
    %c128 = arith.constant 128 : index
    %53 = vector.load %arg1[%c0_28, %c128] : memref<8x512xf32, #tpu.memory_space<vmem>>, vector<8x128xf32>
    %cst_29 = arith.constant dense<0.000000e+00> : vector<128x128xf32>
    %54 = tpu.matmul %0, %53, %cst_29 {dimension_numbers = #tpu.dot_dimension_numbers<[1], [0], [0], [1], [0, 0, 1, 1], [], []>} : vector<128x8xf32>, vector<8x128xf32>, vector<128x128xf32> -> vector<128x128xf32>
    %55 = vector.broadcast %1 : vector<128x1xf32> to vector<128x128xf32>
    %56 = arith.addf %54, %55 : vector<128x128xf32>
    %cst_30 = arith.constant 5.000000e-01 : f32
    %57 = vector.broadcast %cst_30 : f32 to vector<128x128xf32>
    %58 = arith.mulf %57, %56 : vector<128x128xf32>
    %cst_31 = arith.constant 0.707106769 : f32
    %59 = vector.broadcast %cst_31 : f32 to vector<128x128xf32>
    %60 = arith.mulf %56, %59 : vector<128x128xf32>
    %cst_32 = arith.constant 0.000000e+00 : f32
    %61 = vector.broadcast %cst_32 : f32 to vector<128x128xf32>
    %62 = arith.cmpf oge, %60, %61 : vector<128x128xf32>
    %cst_33 = arith.constant 1.000000e+00 : f32
    %cst_34 = arith.constant -1.000000e+00 : f32
    %63 = vector.broadcast %cst_33 : f32 to vector<128x128xf32>
    %64 = vector.broadcast %cst_34 : f32 to vector<128x128xf32>
    %65 = arith.select %62, %63, %64 : vector<128x128xi1>, vector<128x128xf32>
    %66 = math.absf %60 : vector<128x128xf32>
    %cst_35 = arith.constant 0.327591091 : f32
    %67 = vector.broadcast %cst_35 : f32 to vector<128x128xf32>
    %68 = arith.mulf %67, %66 : vector<128x128xf32>
    %cst_36 = arith.constant 1.000000e+00 : f32
    %69 = vector.broadcast %cst_36 : f32 to vector<128x128xf32>
    %70 = arith.addf %69, %68 : vector<128x128xf32>
    %cst_37 = arith.constant 1.000000e+00 : f32
    %71 = vector.broadcast %cst_37 : f32 to vector<128x128xf32>
    %72 = arith.divf %71, %70 : vector<128x128xf32>
    %cst_38 = arith.constant 1.06140542 : f32
    %73 = vector.broadcast %cst_38 : f32 to vector<128x128xf32>
    %74 = arith.mulf %72, %73 : vector<128x128xf32>
    %cst_39 = arith.constant -1.45315206 : f32
    %75 = vector.broadcast %cst_39 : f32 to vector<128x128xf32>
    %76 = arith.addf %75, %74 : vector<128x128xf32>
    %77 = arith.mulf %72, %76 : vector<128x128xf32>
    %cst_40 = arith.constant 1.42141378 : f32
    %78 = vector.broadcast %cst_40 : f32 to vector<128x128xf32>
    %79 = arith.addf %78, %77 : vector<128x128xf32>
    %80 = arith.mulf %72, %79 : vector<128x128xf32>
    %cst_41 = arith.constant -0.284496725 : f32
    %81 = vector.broadcast %cst_41 : f32 to vector<128x128xf32>
    %82 = arith.addf %81, %80 : vector<128x128xf32>
    %83 = arith.mulf %72, %82 : vector<128x128xf32>
    %cst_42 = arith.constant 0.254829586 : f32
    %84 = vector.broadcast %cst_42 : f32 to vector<128x128xf32>
    %85 = arith.addf %84, %83 : vector<128x128xf32>
    %86 = arith.mulf %72, %85 : vector<128x128xf32>
    %cst_43 = arith.constant 0.000000e+00 : f32
    %87 = vector.broadcast %cst_43 : f32 to vector<128x128xf32>
    %88 = arith.subf %87, %66 : vector<128x128xf32>
    %89 = arith.mulf %88, %66 : vector<128x128xf32>
    %90 = math.exp %89 : vector<128x128xf32>
    %91 = arith.mulf %86, %90 : vector<128x128xf32>
    %cst_44 = arith.constant 1.000000e+00 : f32
    %92 = vector.broadcast %cst_44 : f32 to vector<128x128xf32>
    %93 = arith.subf %92, %91 : vector<128x128xf32>
    %94 = arith.mulf %65, %93 : vector<128x128xf32>
    %cst_45 = arith.constant 1.000000e+00 : f32
    %95 = vector.broadcast %cst_45 : f32 to vector<128x128xf32>
    %96 = arith.addf %95, %94 : vector<128x128xf32>
    %97 = arith.mulf %58, %96 : vector<128x128xf32>
    %cst_46 = arith.constant dense<0.000000e+00> : vector<1x128xf32>
    %98 = tpu.matmul %2, %97, %cst_46 {dimension_numbers = #tpu.dot_dimension_numbers<[1], [0], [0], [1], [0, 0, 1, 1], [], []>} : vector<1x128xf32>, vector<128x128xf32>, vector<1x128xf32> -> vector<1x128xf32>
    %99 = vector.broadcast %3 : vector<1x1xf32> to vector<1x128xf32>
    %100 = arith.addf %98, %99 : vector<1x128xf32>
    %c0_47 = arith.constant 0 : index
    %c128_48 = arith.constant 128 : index
    %101 = vector.load %arg6[%c0_47, %c128_48] : memref<1x512xf32, #tpu.memory_space<vmem>>, vector<1x128xf32>
    tpu.vector_store %arg6[%c0_47, %c128_48], %100 {strides = array<i32>} : memref<1x512xf32, #tpu.memory_space<vmem>>, vector<1x128xf32>,
    %c0_49 = arith.constant 0 : index
    %c256 = arith.constant 256 : index
    %102 = vector.load %arg1[%c0_49, %c256] : memref<8x512xf32, #tpu.memory_space<vmem>>, vector<8x128xf32>
    %cst_50 = arith.constant dense<0.000000e+00> : vector<128x128xf32>
    %103 = tpu.matmul %0, %102, %cst_50 {dimension_numbers = #tpu.dot_dimension_numbers<[1], [0], [0], [1], [0, 0, 1, 1], [], []>} : vector<128x8xf32>, vector<8x128xf32>, vector<128x128xf32> -> vector<128x128xf32>
    %104 = vector.broadcast %1 : vector<128x1xf32> to vector<128x128xf32>
    %105 = arith.addf %103, %104 : vector<128x128xf32>
    %cst_51 = arith.constant 5.000000e-01 : f32
    %106 = vector.broadcast %cst_51 : f32 to vector<128x128xf32>
    %107 = arith.mulf %106, %105 : vector<128x128xf32>
    %cst_52 = arith.constant 0.707106769 : f32
    %108 = vector.broadcast %cst_52 : f32 to vector<128x128xf32>
    %109 = arith.mulf %105, %108 : vector<128x128xf32>
    %cst_53 = arith.constant 0.000000e+00 : f32
    %110 = vector.broadcast %cst_53 : f32 to vector<128x128xf32>
    %111 = arith.cmpf oge, %109, %110 : vector<128x128xf32>
    %cst_54 = arith.constant 1.000000e+00 : f32
    %cst_55 = arith.constant -1.000000e+00 : f32
    %112 = vector.broadcast %cst_54 : f32 to vector<128x128xf32>
    %113 = vector.broadcast %cst_55 : f32 to vector<128x128xf32>
    %114 = arith.select %111, %112, %113 : vector<128x128xi1>, vector<128x128xf32>
    %115 = math.absf %109 : vector<128x128xf32>
    %cst_56 = arith.constant 0.327591091 : f32
    %116 = vector.broadcast %cst_56 : f32 to vector<128x128xf32>
    %117 = arith.mulf %116, %115 : vector<128x128xf32>
    %cst_57 = arith.constant 1.000000e+00 : f32
    %118 = vector.broadcast %cst_57 : f32 to vector<128x128xf32>
    %119 = arith.addf %118, %117 : vector<128x128xf32>
    %cst_58 = arith.constant 1.000000e+00 : f32
    %120 = vector.broadcast %cst_58 : f32 to vector<128x128xf32>
    %121 = arith.divf %120, %119 : vector<128x128xf32>
    %cst_59 = arith.constant 1.06140542 : f32
    %122 = vector.broadcast %cst_59 : f32 to vector<128x128xf32>
    %123 = arith.mulf %121, %122 : vector<128x128xf32>
    %cst_60 = arith.constant -1.45315206 : f32
    %124 = vector.broadcast %cst_60 : f32 to vector<128x128xf32>
    %125 = arith.addf %124, %123 : vector<128x128xf32>
    %126 = arith.mulf %121, %125 : vector<128x128xf32>
    %cst_61 = arith.constant 1.42141378 : f32
    %127 = vector.broadcast %cst_61 : f32 to vector<128x128xf32>
    %128 = arith.addf %127, %126 : vector<128x128xf32>
    %129 = arith.mulf %121, %128 : vector<128x128xf32>
    %cst_62 = arith.constant -0.284496725 : f32
    %130 = vector.broadcast %cst_62 : f32 to vector<128x128xf32>
    %131 = arith.addf %130, %129 : vector<128x128xf32>
    %132 = arith.mulf %121, %131 : vector<128x128xf32>
    %cst_63 = arith.constant 0.254829586 : f32
    %133 = vector.broadcast %cst_63 : f32 to vector<128x128xf32>
    %134 = arith.addf %133, %132 : vector<128x128xf32>
    %135 = arith.mulf %121, %134 : vector<128x128xf32>
    %cst_64 = arith.constant 0.000000e+00 : f32
    %136 = vector.broadcast %cst_64 : f32 to vector<128x128xf32>
    %137 = arith.subf %136, %115 : vector<128x128xf32>
    %138 = arith.mulf %137, %115 : vector<128x128xf32>
    %139 = math.exp %138 : vector<128x128xf32>
    %140 = arith.mulf %135, %139 : vector<128x128xf32>
    %cst_65 = arith.constant 1.000000e+00 : f32
    %141 = vector.broadcast %cst_65 : f32 to vector<128x128xf32>
    %142 = arith.subf %141, %140 : vector<128x128xf32>
    %143 = arith.mulf %114, %142 : vector<128x128xf32>
    %cst_66 = arith.constant 1.000000e+00 : f32
    %144 = vector.broadcast %cst_66 : f32 to vector<128x128xf32>
    %145 = arith.addf %144, %143 : vector<128x128xf32>
    %146 = arith.mulf %107, %145 : vector<128x128xf32>
    %cst_67 = arith.constant dense<0.000000e+00> : vector<1x128xf32>
    %147 = tpu.matmul %2, %146, %cst_67 {dimension_numbers = #tpu.dot_dimension_numbers<[1], [0], [0], [1], [0, 0, 1, 1], [], []>} : vector<1x128xf32>, vector<128x128xf32>, vector<1x128xf32> -> vector<1x128xf32>
    %148 = vector.broadcast %3 : vector<1x1xf32> to vector<1x128xf32>
    %149 = arith.addf %147, %148 : vector<1x128xf32>
    %c0_68 = arith.constant 0 : index
    %c256_69 = arith.constant 256 : index
    %150 = vector.load %arg6[%c0_68, %c256_69] : memref<1x512xf32, #tpu.memory_space<vmem>>, vector<1x128xf32>
    tpu.vector_store %arg6[%c0_68, %c256_69], %149 {strides = array<i32>} : memref<1x512xf32, #tpu.memory_space<vmem>>, vector<1x128xf32>,
    %c0_70 = arith.constant 0 : index
    %c384 = arith.constant 384 : index
    %151 = vector.load %arg1[%c0_70, %c384] : memref<8x512xf32, #tpu.memory_space<vmem>>, vector<8x128xf32>
    %cst_71 = arith.constant dense<0.000000e+00> : vector<128x128xf32>
    %152 = tpu.matmul %0, %151, %cst_71 {dimension_numbers = #tpu.dot_dimension_numbers<[1], [0], [0], [1], [0, 0, 1, 1], [], []>} : vector<128x8xf32>, vector<8x128xf32>, vector<128x128xf32> -> vector<128x128xf32>
    %153 = vector.broadcast %1 : vector<128x1xf32> to vector<128x128xf32>
    %154 = arith.addf %152, %153 : vector<128x128xf32>
    %cst_72 = arith.constant 5.000000e-01 : f32
    %155 = vector.broadcast %cst_72 : f32 to vector<128x128xf32>
    %156 = arith.mulf %155, %154 : vector<128x128xf32>
    %cst_73 = arith.constant 0.707106769 : f32
    %157 = vector.broadcast %cst_73 : f32 to vector<128x128xf32>
    %158 = arith.mulf %154, %157 : vector<128x128xf32>
    %cst_74 = arith.constant 0.000000e+00 : f32
    %159 = vector.broadcast %cst_74 : f32 to vector<128x128xf32>
    %160 = arith.cmpf oge, %158, %159 : vector<128x128xf32>
    %cst_75 = arith.constant 1.000000e+00 : f32
    %cst_76 = arith.constant -1.000000e+00 : f32
    %161 = vector.broadcast %cst_75 : f32 to vector<128x128xf32>
    %162 = vector.broadcast %cst_76 : f32 to vector<128x128xf32>
    %163 = arith.select %160, %161, %162 : vector<128x128xi1>, vector<128x128xf32>
    %164 = math.absf %158 : vector<128x128xf32>
    %cst_77 = arith.constant 0.327591091 : f32
    %165 = vector.broadcast %cst_77 : f32 to vector<128x128xf32>
    %166 = arith.mulf %165, %164 : vector<128x128xf32>
    %cst_78 = arith.constant 1.000000e+00 : f32
    %167 = vector.broadcast %cst_78 : f32 to vector<128x128xf32>
    %168 = arith.addf %167, %166 : vector<128x128xf32>
    %cst_79 = arith.constant 1.000000e+00 : f32
    %169 = vector.broadcast %cst_79 : f32 to vector<128x128xf32>
    %170 = arith.divf %169, %168 : vector<128x128xf32>
    %cst_80 = arith.constant 1.06140542 : f32
    %171 = vector.broadcast %cst_80 : f32 to vector<128x128xf32>
    %172 = arith.mulf %170, %171 : vector<128x128xf32>
    %cst_81 = arith.constant -1.45315206 : f32
    %173 = vector.broadcast %cst_81 : f32 to vector<128x128xf32>
    %174 = arith.addf %173, %172 : vector<128x128xf32>
    %175 = arith.mulf %170, %174 : vector<128x128xf32>
    %cst_82 = arith.constant 1.42141378 : f32
    %176 = vector.broadcast %cst_82 : f32 to vector<128x128xf32>
    %177 = arith.addf %176, %175 : vector<128x128xf32>
    %178 = arith.mulf %170, %177 : vector<128x128xf32>
    %cst_83 = arith.constant -0.284496725 : f32
    %179 = vector.broadcast %cst_83 : f32 to vector<128x128xf32>
    %180 = arith.addf %179, %178 : vector<128x128xf32>
    %181 = arith.mulf %170, %180 : vector<128x128xf32>
    %cst_84 = arith.constant 0.254829586 : f32
    %182 = vector.broadcast %cst_84 : f32 to vector<128x128xf32>
    %183 = arith.addf %182, %181 : vector<128x128xf32>
    %184 = arith.mulf %170, %183 : vector<128x128xf32>
    %cst_85 = arith.constant 0.000000e+00 : f32
    %185 = vector.broadcast %cst_85 : f32 to vector<128x128xf32>
    %186 = arith.subf %185, %164 : vector<128x128xf32>
    %187 = arith.mulf %186, %164 : vector<128x128xf32>
    %188 = math.exp %187 : vector<128x128xf32>
    %189 = arith.mulf %184, %188 : vector<128x128xf32>
    %cst_86 = arith.constant 1.000000e+00 : f32
    %190 = vector.broadcast %cst_86 : f32 to vector<128x128xf32>
    %191 = arith.subf %190, %189 : vector<128x128xf32>
    %192 = arith.mulf %163, %191 : vector<128x128xf32>
    %cst_87 = arith.constant 1.000000e+00 : f32
    %193 = vector.broadcast %cst_87 : f32 to vector<128x128xf32>
    %194 = arith.addf %193, %192 : vector<128x128xf32>
    %195 = arith.mulf %156, %194 : vector<128x128xf32>
    %cst_88 = arith.constant dense<0.000000e+00> : vector<1x128xf32>
    %196 = tpu.matmul %2, %195, %cst_88 {dimension_numbers = #tpu.dot_dimension_numbers<[1], [0], [0], [1], [0, 0, 1, 1], [], []>} : vector<1x128xf32>, vector<128x128xf32>, vector<1x128xf32> -> vector<1x128xf32>
    %197 = vector.broadcast %3 : vector<1x1xf32> to vector<1x128xf32>
    %198 = arith.addf %196, %197 : vector<1x128xf32>
    %c0_89 = arith.constant 0 : index
    %c384_90 = arith.constant 384 : index
    %199 = vector.load %arg6[%c0_89, %c384_90] : memref<1x512xf32, #tpu.memory_space<vmem>>, vector<1x128xf32>
    tpu.vector_store %arg6[%c0_89, %c384_90], %198 {strides = array<i32>} : memref<1x512xf32, #tpu.memory_space<vmem>>, vector<1x128xf32>,
    return
  }
  func.func @transform_0(%arg0: i32) -> (i32, i32) {
    %c0_i32 = arith.constant 0 : i32
    %c0_i32_0 = arith.constant 0 : i32
    return %c0_i32, %arg0 : i32, i32
  }
  func.func @transform_1(%arg0: i32) -> (i32, i32) {
    %c0_i32 = arith.constant 0 : i32
    %c0_i32_0 = arith.constant 0 : i32
    %c0_i32_1 = arith.constant 0 : i32
    return %c0_i32, %c0_i32_0 : i32, i32
  }
  func.func @transform_2(%arg0: i32) -> (i32, i32) {
    %c0_i32 = arith.constant 0 : i32
    %c0_i32_0 = arith.constant 0 : i32
    %c0_i32_1 = arith.constant 0 : i32
    return %c0_i32, %c0_i32_0 : i32, i32
  }
  func.func @transform_3(%arg0: i32) -> (i32, i32) {
    %c0_i32 = arith.constant 0 : i32
    %c0_i32_0 = arith.constant 0 : i32
    %c0_i32_1 = arith.constant 0 : i32
    return %c0_i32, %c0_i32_0 : i32, i32
  }
  func.func @transform_4(%arg0: i32) -> (i32, i32) {
    %c0_i32 = arith.constant 0 : i32
    %c0_i32_0 = arith.constant 0 : i32
    %c0_i32_1 = arith.constant 0 : i32
    return %c0_i32, %c0_i32_0 : i32, i32
  }
  func.func @transform_5(%arg0: i32) -> (i32, i32) {
    %c0_i32 = arith.constant 0 : i32
    %c0_i32_0 = arith.constant 0 : i32
    return %c0_i32, %arg0 : i32, i32
  }
}

</mosaic_0001>

<llo_original>
// kernel: fno3d_forward.10
$region0: #{fno3d_forward.10}
  #allocation0 [shape = 'u32[]', space=smem, size = 0x4, offset = 0x4, fixed_abs, tag = 'smem constant byte address 0x4 - core index']
  #allocation1 [shape = 'u32[144,128]{1,0:T(1,128)}', space=vmem, size = 0x12000, scoped, tag = 'internal scratch']
  %s0 = inlined_call_operand.vmem [shape: f32[13,1024], index: 0, kind: input, shape index: {}]
  %s1 = inlined_call_operand.vmem [shape: f32[8,13], index: 1, kind: input, shape index: {}]
  %s2 = inlined_call_operand.vmem [shape: f32[8,1], index: 2, kind: input, shape index: {}]
  %s3 = inlined_call_operand.vmem [shape: f32[8,1024], index: 3, kind: output, shape index: {}]
  %s4 = sld [smem:[#allocation0]]
  $region68: #{fno3d_forward.10} parent=0
    _
  %s6 = ssub.s32 1, %s4
  %s7 = scalar_select 0, %s6, %s4
  $region1: #{fno3d_forward.10} parent=0
    #allocation2 [shape = 'u8[65536]{0}', space=vmem, size = 0x10000, scoped, tag = 'input window, operand 0']
    loop: start=0, step=1, limit=4
    $region2: #{fno3d_forward.10} parent=1 // loop_pre_header
      _
    $region3: #{fno3d_forward.10} parent=1 // loop_header
      %s9 = sphi 0, %s13
      %p10 = scmp.ge.s32.totalorder %s9, 4
      %s19 = sphi 0, %s21
      %s22 = sphi 0, %s19
      %s23 = sphi 0, %s22
      %s39 = sphi 0, %s23
      %s43 = sphi 0, %s43
      %s45 = sphi 0, %s43
      %s46 = sphi 0, %s45
      %s60 = sphi 0, %s46
      %s64 = sphi 0, %s64
      %s66 = sphi 0, %s64
      %s67 = sphi 0, %s66
      %s81 = sphi 0, %s67
      %s87 = sphi 0, %s89
      %s90 = sphi 0, %s87
      %s91 = sphi 0, %s90
      %s107 = sphi 0, %s91
    $region4: #{fno3d_forward.10} parent=1 // loop_header_branch
      %12 = sbr.rel (%p10) target = $region8
    $region5: #{fno3d_forward.10} parent=1 // loop_body
      %s14 = ssub.s32 %s9, 1
      %s15 = ssub.s32 %s9, 2
      %s16 = sadd.s32 %s9, 1
      %s17 = ssub.s32 %s9, %s16
      %p18 = scmp.eq.s32.totalorder %s17, 0
      %s20 = sadd.s32 %s19, 1
      %s21 = scalar_select %p18, %s19, %s20
      %p24 = pneg %p18
      %p25 = scmp.eq.s32.totalorder %s9, 1
      %p26 = por %p24, %p25
      %p27 = scmp.ne.s32.totalorder %s19, %s22
      %p28 = scmp.eq.s32.totalorder %s9, 0
      %p29 = por %p27, %p28
      %p30 = scmp.ne.s32.totalorder %s19, %s22
      %p31 = scmp.eq.s32.totalorder %s14, 1
      %p32 = por %p30, %p31
      %p33 = scmp.ne.s32.totalorder %s22, %s23
      %p34 = scmp.eq.s32.totalorder %s14, 0
      %p35 = por %p33, %p34
      %p36 = scmp.ne.s32.totalorder %s22, %s23
      %p37 = scmp.eq.s32.totalorder %s15, 1
      %p38 = por %p36, %p37
      %p40 = scmp.ne.s32.totalorder %s23, %s39
      %p41 = scmp.eq.s32.totalorder %s15, 0
      %p42 = por %p40, %p41
      %s44 = sadd.s32 %s43, 1
      %p47 = scmp.eq.s32.totalorder %s9, 1
      %p48 = scmp.ne.s32.totalorder %s43, %s45
      %p49 = scmp.eq.s32.totalorder %s9, 0
      %p50 = por %p48, %p49
      %p51 = scmp.ne.s32.totalorder %s43, %s45
      %p52 = scmp.eq.s32.totalorder %s14, 1
      %p53 = por %p51, %p52
      %p54 = scmp.ne.s32.totalorder %s45, %s46
      %p55 = scmp.eq.s32.totalorder %s14, 0
      %p56 = por %p54, %p55
      %p57 = scmp.ne.s32.totalorder %s45, %s46
      %p58 = scmp.eq.s32.totalorder %s15, 1
      %p59 = por %p57, %p58
      %p61 = scmp.ne.s32.totalorder %s46, %s60
      %p62 = scmp.eq.s32.totalorder %s15, 0
      %p63 = por %p61, %p62
      %s65 = sadd.s32 %s64, 1
      %p68 = scmp.eq.s32.totalorder %s9, 1
      %p69 = scmp.ne.s32.totalorder %s64, %s66
      %p70 = scmp.eq.s32.totalorder %s9, 0
      %p71 = por %p69, %p70
      %p72 = scmp.ne.s32.totalorder %s64, %s66
      %p73 = scmp.eq.s32.totalorder %s14, 1
      %p74 = por %p72, %p73
      %p75 = scmp.ne.s32.totalorder %s66, %s67
      %p76 = scmp.eq.s32.totalorder %s14, 0
      %p77 = por %p75, %p76
      %p78 = scmp.ne.s32.totalorder %s66, %s67
      %p79 = scmp.eq.s32.totalorder %s15, 1
      %p80 = por %p78, %p79
      %p82 = scmp.ne.s32.totalorder %s67, %s81
      %p83 = scmp.eq.s32.totalorder %s15, 0
      %p84 = por %p82, %p83
      %s85 = ssub.s32 %s9, %s16
      %p86 = scmp.eq.s32.totalorder %s85, 0
      %s88 = sadd.s32 %s87, 1
      %s89 = scalar_select %p86, %s87, %s88
      %p92 = pneg %p86
      %p93 = scmp.eq.s32.totalorder %s9, 1
      %p94 = por %p92, %p93
      %p95 = scmp.ne.s32.totalorder %s87, %s90
      %p96 = scmp.eq.s32.totalorder %s9, 0
      %p97 = por %p95, %p96
      %p98 = scmp.ne.s32.totalorder %s87, %s90
      %p99 = scmp.eq.s32.totalorder %s14, 1
      %p100 = por %p98, %p99
      %p101 = scmp.ne.s32.totalorder %s90, %s91
      %p102 = scmp.eq.s32.totalorder %s14, 0
      %p103 = por %p101, %p102
      %p104 = scmp.ne.s32.totalorder %s90, %s91
      %p105 = scmp.eq.s32.totalorder %s15, 1
      %p106 = por %p104, %p105
      %p108 = scmp.ne.s32.totalorder %s91, %s107
      %p109 = scmp.eq.s32.totalorder %s15, 0
      %p110 = por %p108, %p109
      %p111 = scmp.le.s32.totalorder 1, %s9
      %p112 = scmp.lt.s32.totalorder %s9, 3
      %p113 = pnand %p111, %p112
      %p114 = pneg %p113
      // Predicated region
      $region9: #{fno3d_forward.10} parent=5 // pred_check
        _
      $region10: #{fno3d_forward.10} parent=5 // pred_check_branch
        %116 = sbr.rel (%p113) target = $region12
      $region11: #{fno3d_forward.10} parent=5 // pred_region
        %s117 = ssub.s32 %s9, 1
        // Predicated region
        $region13: #{fno3d_forward.10} parent=11 // pred_check
          %p118 = pneg %p56
        $region14: #{fno3d_forward.10} parent=11 // pred_check_branch
          %120 = sbr.rel (%p118) target = $region16
        $region15: #{fno3d_forward.10} parent=11 // pred_region
          _
        $region16: #{fno3d_forward.10} parent=11 // pred_fallthru
          _
        // Predicated region
        $region17: #{fno3d_forward.10} parent=11 // pred_check
          %p121 = pneg %p77
        $region18: #{fno3d_forward.10} parent=11 // pred_check_branch
          %123 = sbr.rel (%p121) target = $region20
        $region19: #{fno3d_forward.10} parent=11 // pred_region
          _
        $region20: #{fno3d_forward.10} parent=11 // pred_fallthru
          _
      $region12: #{fno3d_forward.10} parent=5 // pred_fallthru
        _
      %p124 = scmp.lt.s32.totalorder %s9, 2
      // Predicated region
      $region21: #{fno3d_forward.10} parent=5 // pred_check
        %p125 = pneg %p124
      $region22: #{fno3d_forward.10} parent=5 // pred_check_branch
        %127 = sbr.rel (%p125) target = $region24
      $region23: #{fno3d_forward.10} parent=5 // pred_region
        // Predicated region
        $region25: #{fno3d_forward.10} parent=23 // pred_check
          %p128 = pneg %p29
        $region26: #{fno3d_forward.10} parent=23 // pred_check_branch
          %130 = sbr.rel (%p128) target = $region28
        $region27: #{fno3d_forward.10} parent=23 // pred_region
          %s131 = sand.u32 %s19, 1
          %s132 = sand.u32 %s19, 1
          %s133 = smul.addr %s132, 64
          %s134 = scalar_lea.vmem [#allocation2], %s133
          %s135 = smul.u32 4, %s9
          %s136 = smul.addr %s135, 8
          %s137 = scalar_lea.vmem %s0, %s136
          // Predicated region
          $region29: #{fno3d_forward.10} parent=27 // pred_check
            _
          $region30: #{fno3d_forward.10} parent=27 // pred_check_branch
            %139 = sbr.rel (0) target = $region32
          $region31: #{fno3d_forward.10} parent=27 // pred_region
            // Predicated region
            $region33: #{fno3d_forward.10} parent=31 // pred_check
              _
            $region34: #{fno3d_forward.10} parent=31 // pred_check_branch
              %141 = sbr.rel (0) target = $region36
            $region35: #{fno3d_forward.10} parent=31 // pred_region
              loop: start=0, step=1, limit=1
              $region37: #{fno3d_forward.10} parent=35 // loop_pre_header
                _
              $region38: #{fno3d_forward.10} parent=35 // loop_header
                %s143 = sphi 0, %s147
                %p144 = scmp.ge.s32.totalorder %s143, 1
                %s148 = sphi %s137, %s137
                %s149 = sphi %s134, %s134
              $region39: #{fno3d_forward.10} parent=35 // loop_header_branch
                %146 = sbr.rel (%p144) target = $region43
              $region40: #{fno3d_forward.10} parent=35 // loop_body
                %v150 = vld [vmem:[%s148] sm:$0xff]
                %151 = vst [vmem:[%s149] sm:$0xff] %v150
                %v152 = vld [vmem:[%s148 + $0x8] sm:$0xff]
                %153 = vst [vmem:[%s149 + $0x8] sm:$0xff] %v152
                %v154 = vld [vmem:[%s148 + $0x10] sm:$0xff]
                %155 = vst [vmem:[%s149 + $0x10] sm:$0xff] %v154
                %v156 = vld [vmem:[%s148 + $0x18] sm:$0xff]
                %157 = vst [vmem:[%s149 + $0x18] sm:$0xff] %v156
                %v158 = vld [vmem:[%s148 + $0x40] sm:$0xff]
                %159 = vst [vmem:[%s149 + $0x20] sm:$0xff] %v158
                %v160 = vld [vmem:[%s148 + $0x48] sm:$0xff]
                %161 = vst [vmem:[%s149 + $0x28] sm:$0xff] %v160
                %v162 = vld [vmem:[%s148 + $0x50] sm:$0xff]
                %163 = vst [vmem:[%s149 + $0x30] sm:$0xff] %v162
                %v164 = vld [vmem:[%s148 + $0x58] sm:$0xff]
                %165 = vst [vmem:[%s149 + $0x38] sm:$0xff] %v164
              $region41: #{fno3d_forward.10} parent=35 // loop_footer
                %s147 = sadd.s32 1, %s143
              $region42: #{fno3d_forward.10} parent=35 // loop_footer_branch
                %142 = sbr.rel target = $region38
              $region43: #{fno3d_forward.10} parent=35 // loop_exit
                _
            $region36: #{fno3d_forward.10} parent=31 // pred_fallthru
              _
            // Predicated region
            $region44: #{fno3d_forward.10} parent=31 // pred_check
              _
            $region45: #{fno3d_forward.10} parent=31 // pred_check_branch
              %167 = sbr.rel target = $region47
            $region46: #{fno3d_forward.10} parent=31 // pred_region
              _
            $region47: #{fno3d_forward.10} parent=31 // pred_fallthru
              _
          $region32: #{fno3d_forward.10} parent=27 // pred_fallthru
            _
          %168 = vnop
        $region28: #{fno3d_forward.10} parent=23 // pred_fallthru
          _
      $region24: #{fno3d_forward.10} parent=5 // pred_fallthru
        _
      %p169 = scmp.le.s32.totalorder 1, %s9
      %p170 = scmp.lt.s32.totalorder %s9, 3
      %p171 = pnand %p169, %p170
      %p172 = pneg %p171
      // Predicated region
      $region48: #{fno3d_forward.10} parent=5 // pred_check
        _
      $region49: #{fno3d_forward.10} parent=5 // pred_check_branch
        %174 = sbr.rel (%p171) target = $region51
      $region50: #{fno3d_forward.10} parent=5 // pred_region
        %s175 = ssub.s32 %s9, 1
        %s176 = sand.u32 %s22, 1
        %s177 = sand.u32 %s22, 1
        %s178 = smul.addr %s177, 64
        %s179 = scalar_lea.vmem [#allocation2], %s178
        // Predicated region
        $region52: #{fno3d_forward.10} parent=50 // pred_check
          %p180 = pneg %p35
        $region53: #{fno3d_forward.10} parent=50 // pred_check_branch
          %182 = sbr.rel (%p180) target = $region55
        $region54: #{fno3d_forward.10} parent=50 // pred_region
          _
        $region55: #{fno3d_forward.10} parent=50 // pred_fallthru
          _
        %s183 = sand.u32 %s22, 1
        %s184 = sand.u32 %s22, 1
        %s185 = smul.addr %s184, 64
        %s186 = scalar_lea.vmem [#allocation2], %s185
        %p187 = pneg %p35
        %p188 = pneg %p32
        %p189 = pneg %p56
        %p190 = pneg %p53
        %p191 = pneg %p77
        %p192 = pneg %p74
        %p193 = pneg %p103
        %p194 = pneg %p100
        %s195 = smul.u32 4, %s14
        %p196 = scmp.lt.s32.totalorder %s195, 7
        %s197 = scalar_select %p196, %s195, 7
        %s198 = smul.addr %s197, 8
        %s199 = scalar_lea.vmem %s3, %s198
        %s200 = smul.u32 4, %s14
        %s201 = smul.u32 4, %s14
        %p202 = scmp.lt.s32.totalorder %s201, 7
        %s203 = scalar_select %p202, %s201, 7
        %s204 = smul.addr %s203, 8
        %s205 = scalar_lea.vmem %s3, %s204
        %s206 = smul.u32 4, %s14
        %v207 = vld [vmem:[%s1] sm:$0xff]
        %v208 = vld [vmem:[%s179] sm:$0xff]
        %v209 = vld [vmem:[%s179 + $0x8] sm:$0xff]
        %v210 = vld [vmem:[%s179 + $0x10] sm:$0xff]
        %v211 = vld [vmem:[%s179 + $0x18] sm:$0xff]
        %v212 = vld [vmem:[%s179 + $0x20] sm:$0x1f]
        %v213 = vld [vmem:[%s179 + $0x28] sm:$0x1f]
        %v214 = vld [vmem:[%s179 + $0x30] sm:$0x1f]
        %v215 = vld [vmem:[%s179 + $0x38] sm:$0x1f]
        %v216 = vld [vmem:[%s2] sm:$0xff]
        %218 = vset.pattern.permute.xlu0 0
        %219 = vperm.xlu0 %218, %v216
        %v220 = vpop.permute.xlu0 %219
        %vm222 = vcmask 105472
        %v224 = vsel %vm222, %v207, 0
        %vm226 = vcmask 1044480
        %v228 = vsel %vm226, %v212, 0
        %v231 = vsel %vm226, %v213, 0
        %v234 = vsel %vm226, %v214, 0
        %v237 = vsel %vm226, %v215, 0
        %239 = vmatprep.subr.mxu0 0.0
        %240 = vmatpush1.msra.mxu0 0.0
        %241 = vmatprep.subr.mxu0 0.0
        %242 = vmatpush1.msra.mxu0 0.0
        %243 = vmatprep.subr.mxu0 0.0
        %244 = vmatpush1.msra.mxu0 0.0
        %245 = vmatprep.subr.mxu0 0.0
        %246 = vmatpush1.msra.mxu0 0.0
        %247 = vmatprep.subr.mxu0 0.0
        %248 = vmatpush1.msra.mxu0 0.0
        %249 = vmatprep.subr.mxu0 0.0
        %250 = vmatpush1.msra.mxu0 0.0
        %251 = vmatprep.subr.mxu0 0.0
        %252 = vmatpush1.msra.mxu0 0.0
        %253 = vmatprep.subr.mxu0 0.0
        %254 = vmatpush1.msra.mxu0 0.0
        %255 = vmatprep.subr.mxu0 0.0
        %256 = vmatpush1.msra.mxu0 0.0
        %257 = vmatprep.subr.mxu0 0.0
        %258 = vmatpush1.msra.mxu0 0.0
        %259 = vmatprep.subr.mxu0 0.0
        %260 = vmatpush1.msra.mxu0 0.0
        %261 = vmatprep.subr.mxu0 0.0
        %262 = vmatpush1.msra.mxu0 0.0
        %263 = vmatprep.subr.mxu0 0.0
        %264 = vmatpush1.msra.mxu0 0.0
        %265 = vmatprep.subr.mxu0 0.0
        %266 = vmatpush1.msra.mxu0 0.0
        %267 = vmatprep.subr.mxu0 %v231
        %268 = vmatpush1.msra.mxu0 %v228
        %269 = vmatprep.subr.mxu0 %v209
        %270 = vmatpush1.msra.mxu0 %v208
        %271 = vmatprep.subr.mxu0 0.0
        %272 = vmatpush2.msra.mxu0 0.0
        %273 = vmatprep.subr.mxu0 0.0
        %274 = vmatpush2.msra.mxu0 0.0
        %275 = vmatprep.subr.mxu0 0.0
        %276 = vmatpush2.msra.mxu0 0.0
        %277 = vmatprep.subr.mxu0 0.0
        %278 = vmatpush2.msra.mxu0 0.0
        %279 = vmatprep.subr.mxu0 0.0
        %280 = vmatpush2.msra.mxu0 0.0
        %281 = vmatprep.subr.mxu0 0.0
        %282 = vmatpush2.msra.mxu0 0.0
        %283 = vmatprep.subr.mxu0 0.0
        %284 = vmatpush2.msra.mxu0 0.0
        %285 = vmatprep.subr.mxu0 0.0
        %286 = vmatpush2.msra.mxu0 0.0
        %287 = vmatprep.subr.mxu0 0.0
        %288 = vmatpush2.msra.mxu0 0.0
        %289 = vmatprep.subr.mxu0 0.0
        %290 = vmatpush2.msra.mxu0 0.0
        %291 = vmatprep.subr.mxu0 0.0
        %292 = vmatpush2.msra.mxu0 0.0
        %293 = vmatprep.subr.mxu0 0.0
        %294 = vmatpush2.msra.mxu0 0.0
        %295 = vmatprep.subr.mxu0 0.0
        %296 = vmatpush2.msra.mxu0 0.0
        %297 = vmatprep.subr.mxu0 0.0
        %298 = vmatpush2.msra.mxu0 0.0
        %299 = vmatprep.subr.mxu0 0.0
        %300 = vmatpush2.msra.mxu0 0.0
        %301 = vmatprep.subr.mxu0 0.0
        %302 = vmatpush2.msra.mxu0 0.0
        %303 = vmatprep.mubr.f32.mxu0 0.0
        %304 = vmatmul.mubr.f32.gmra.mxu0 %v224
        %v305 = vpop.f32.mrf.mxu0
        %v306 = vadd.f32 %v220, %v305
        %v307 = vpop.f32.mrf.mxu0
        %v308 = vadd.f32 %v220, %v307
        %309 = vdwg.mxu0
        %310 = vmatprep.subr.mxu0 0.0
        %311 = vmatpush1.msra.mxu0 0.0
        %312 = vmatprep.subr.mxu0 0.0
        %313 = vmatpush1.msra.mxu0 0.0
        %314 = vmatprep.subr.mxu0 0.0
        %315 = vmatpush1.msra.mxu0 0.0
        %316 = vmatprep.subr.mxu0 0.0
        %317 = vmatpush1.msra.mxu0 0.0
        %318 = vmatprep.subr.mxu0 0.0
        %319 = vmatpush1.msra.mxu0 0.0
        %320 = vmatprep.subr.mxu0 0.0
        %321 = vmatpush1.msra.mxu0 0.0
        %322 = vmatprep.subr.mxu0 0.0
        %323 = vmatpush1.msra.mxu0 0.0
        %324 = vmatprep.subr.mxu0 0.0
        %325 = vmatpush1.msra.mxu0 0.0
        %326 = vmatprep.subr.mxu0 0.0
        %327 = vmatpush1.msra.mxu0 0.0
        %328 = vmatprep.subr.mxu0 0.0
        %329 = vmatpush1.msra.mxu0 0.0
        %330 = vmatprep.subr.mxu0 0.0
        %331 = vmatpush1.msra.mxu0 0.0
        %332 = vmatprep.subr.mxu0 0.0
        %333 = vmatpush1.msra.mxu0 0.0
        %334 = vmatprep.subr.mxu0 0.0
        %335 = vmatpush1.msra.mxu0 0.0
        %336 = vmatprep.subr.mxu0 0.0
        %337 = vmatpush1.msra.mxu0 0.0
        %338 = vmatprep.subr.mxu0 %v237
        %339 = vmatpush1.msra.mxu0 %v234
        %340 = vmatprep.subr.mxu0 %v211
        %341 = vmatpush1.msra.mxu0 %v210
        %342 = vmatprep.subr.mxu0 0.0
        %343 = vmatpush2.msra.mxu0 0.0
        %344 = vmatprep.subr.mxu0 0.0
        %345 = vmatpush2.msra.mxu0 0.0
        %346 = vmatprep.subr.mxu0 0.0
        %347 = vmatpush2.msra.mxu0 0.0
        %348 = vmatprep.subr.mxu0 0.0
        %349 = vmatpush2.msra.mxu0 0.0
        %350 = vmatprep.subr.mxu0 0.0
        %351 = vmatpush2.msra.mxu0 0.0
        %352 = vmatprep.subr.mxu0 0.0
        %353 = vmatpush2.msra.mxu0 0.0
        %354 = vmatprep.subr.mxu0 0.0
        %355 = vmatpush2.msra.mxu0 0.0
        %356 = vmatprep.subr.mxu0 0.0
        %357 = vmatpush2.msra.mxu0 0.0
        %358 = vmatprep.subr.mxu0 0.0
        %359 = vmatpush2.msra.mxu0 0.0
        %360 = vmatprep.subr.mxu0 0.0
        %361 = vmatpush2.msra.mxu0 0.0
        %362 = vmatprep.subr.mxu0 0.0
        %363 = vmatpush2.msra.mxu0 0.0
        %364 = vmatprep.subr.mxu0 0.0
        %365 = vmatpush2.msra.mxu0 0.0
        %366 = vmatprep.subr.mxu0 0.0
        %367 = vmatpush2.msra.mxu0 0.0
        %368 = vmatprep.subr.mxu0 0.0
        %369 = vmatpush2.msra.mxu0 0.0
        %370 = vmatprep.subr.mxu0 0.0
        %371 = vmatpush2.msra.mxu0 0.0
        %372 = vmatprep.subr.mxu0 0.0
        %373 = vmatpush2.msra.mxu0 0.0
        %374 = vmatprep.mubr.f32.mxu0 0.0
        %375 = vmatmul.mubr.f32.gmra.mxu0 %v224
        %v376 = vpop.f32.mrf.mxu0
        %v377 = vadd.f32 %v220, %v376
        %v378 = vpop.f32.mrf.mxu0
        %v379 = vadd.f32 %v220, %v378
        %380 = vdwg.mxu0
        %381 = vst [vmem:[%s205] sm:$0xff] %v306
        %382 = vst [vmem:[%s205 + $0x8] sm:$0xff] %v308
        %383 = vst [vmem:[%s205 + $0x10] sm:$0xff] %v377
        %384 = vst [vmem:[%s205 + $0x18] sm:$0xff] %v379
        %s385 = smul.u32 4, %s14
        %p386 = scmp.lt.s32.totalorder %s385, 7
        %s387 = scalar_select %p386, %s385, 7
        %s388 = smul.addr %s387, 8
        %s389 = scalar_lea.vmem %s3, %s388
        // Predicated region
        $region56: #{fno3d_forward.10} parent=50 // pred_check
          %p390 = pneg %p100
        $region57: #{fno3d_forward.10} parent=50 // pred_check_branch
          %392 = sbr.rel (%p390) target = $region59
        $region58: #{fno3d_forward.10} parent=50 // pred_region
          %s393 = smul.u32 4, %s14
        $region59: #{fno3d_forward.10} parent=50 // pred_fallthru
          _
      $region51: #{fno3d_forward.10} parent=5 // pred_fallthru
        _
      %p394 = scmp.le.s32.totalorder 2, %s9
      // Predicated region
      $region60: #{fno3d_forward.10} parent=5 // pred_check
        %p395 = pneg %p394
      $region61: #{fno3d_forward.10} parent=5 // pred_check_branch
        %397 = sbr.rel (%p395) target = $region63
      $region62: #{fno3d_forward.10} parent=5 // pred_region
        %s398 = ssub.s32 %s9, 2
        // Predicated region
        $region64: #{fno3d_forward.10} parent=62 // pred_check
          %p399 = pneg %p106
        $region65: #{fno3d_forward.10} parent=62 // pred_check_branch
          %401 = sbr.rel (%p399) target = $region67
        $region66: #{fno3d_forward.10} parent=62 // pred_region
          %s402 = smul.u32 4, %s15
          %p403 = scmp.lt.s32.totalorder %s402, 7
          %s404 = scalar_select %p403, %s402, 7
          %s405 = smul.addr %s404, 8
          %s406 = scalar_lea.vmem %s3, %s405
        $region67: #{fno3d_forward.10} parent=62 // pred_fallthru
          _
      $region63: #{fno3d_forward.10} parent=5 // pred_fallthru
        _
    $region6: #{fno3d_forward.10} parent=1 // loop_footer
      %s13 = sadd.s32 1, %s9
    $region7: #{fno3d_forward.10} parent=1 // loop_footer_branch
      %8 = sbr.rel target = $region3
    $region8: #{fno3d_forward.10} parent=1 // loop_exit
      _

// kernel: fno3d_forward.11
$region0: #{fno3d_forward.11}
  #allocation0 [shape = 'u32[]', space=smem, size = 0x4, offset = 0x4, fixed_abs, tag = 'smem constant byte address 0x4 - core index']
  #allocation1 [shape = 'u32[144,128]{1,0:T(1,128)}', space=vmem, size = 0x12000, scoped, tag = 'internal scratch']
  %s0 = inlined_call_operand.vmem [shape: f32[4,2,8,48], index: 0, kind: input, shape index: {}]
  %s1 = inlined_call_operand.vmem [shape: f32[4,2,8,48], index: 1, kind: input, shape index: {}]
  %s2 = inlined_call_operand.vmem [shape: f32[4,8,8,48], index: 2, kind: input, shape index: {}]
  %s3 = inlined_call_operand.vmem [shape: f32[4,8,8,48], index: 3, kind: input, shape index: {}]
  %s4 = inlined_call_operand.vmem [shape: f32[4,2,8,48], index: 4, kind: output, shape index: {0}]
  %s5 = inlined_call_operand.vmem [shape: f32[4,2,8,48], index: 5, kind: output, shape index: {1}]
  %6 = xla_tuple %s4, %s5
  %s7 = sld [smem:[#allocation0]]
  $region57: #{fno3d_forward.11} parent=0
    _
  %s9 = ssub.s32 1, %s7
  %s10 = scalar_select 0, %s9, %s7
  loop: start=0, step=1, limit=6
  $region2: #{fno3d_forward.11} parent=0 // loop_pre_header
    _
  $region3: #{fno3d_forward.11} parent=0 // loop_header
    %s12 = sphi 0, %s16
    %p13 = scmp.ge.s32.totalorder %s12, 6
    %s22 = sphi 0, %s24
    %s25 = sphi 0, %s22
    %s26 = sphi 0, %s25
    %s42 = sphi 0, %s26
    %s48 = sphi 0, %s50
    %s51 = sphi 0, %s48
    %s52 = sphi 0, %s51
    %s68 = sphi 0, %s52
    %s74 = sphi 0, %s76
    %s77 = sphi 0, %s74
    %s78 = sphi 0, %s77
    %s94 = sphi 0, %s78
    %s100 = sphi 0, %s102
    %s103 = sphi 0, %s100
    %s104 = sphi 0, %s103
    %s120 = sphi 0, %s104
    %s126 = sphi 0, %s128
    %s129 = sphi 0, %s126
    %s130 = sphi 0, %s129
    %s146 = sphi 0, %s130
    %s152 = sphi 0, %s154
    %s155 = sphi 0, %s152
    %s156 = sphi 0, %s155
    %s172 = sphi 0, %s156
  $region4: #{fno3d_forward.11} parent=0 // loop_header_branch
    %15 = sbr.rel (%p13) target = $region8
  $region5: #{fno3d_forward.11} parent=0 // loop_body
    %s17 = ssub.s32 %s12, 1
    %s18 = ssub.s32 %s12, 2
    %s19 = sadd.s32 %s12, 1
    %s20 = ssub.s32 %s12, %s19
    %p21 = scmp.eq.s32.totalorder %s20, 0
    %s23 = sadd.s32 %s22, 1
    %s24 = scalar_select %p21, %s22, %s23
    %p27 = pneg %p21
    %p28 = scmp.eq.s32.totalorder %s12, 3
    %p29 = por %p27, %p28
    %p30 = scmp.ne.s32.totalorder %s22, %s25
    %p31 = scmp.eq.s32.totalorder %s12, 0
    %p32 = por %p30, %p31
    %p33 = scmp.ne.s32.totalorder %s22, %s25
    %p34 = scmp.eq.s32.totalorder %s17, 3
    %p35 = por %p33, %p34
    %p36 = scmp.ne.s32.totalorder %s25, %s26
    %p37 = scmp.eq.s32.totalorder %s17, 0
    %p38 = por %p36, %p37
    %p39 = scmp.ne.s32.totalorder %s25, %s26
    %p40 = scmp.eq.s32.totalorder %s18, 3
    %p41 = por %p39, %p40
    %p43 = scmp.ne.s32.totalorder %s26, %s42
    %p44 = scmp.eq.s32.totalorder %s18, 0
    %p45 = por %p43, %p44
    %s46 = ssub.s32 %s12, %s19
    %p47 = scmp.eq.s32.totalorder %s46, 0
    %s49 = sadd.s32 %s48, 1
    %s50 = scalar_select %p47, %s48, %s49
    %p53 = pneg %p47
    %p54 = scmp.eq.s32.totalorder %s12, 3
    %p55 = por %p53, %p54
    %p56 = scmp.ne.s32.totalorder %s48, %s51
    %p57 = scmp.eq.s32.totalorder %s12, 0
    %p58 = por %p56, %p57
    %p59 = scmp.ne.s32.totalorder %s48, %s51
    %p60 = scmp.eq.s32.totalorder %s17, 3
    %p61 = por %p59, %p60
    %p62 = scmp.ne.s32.totalorder %s51, %s52
    %p63 = scmp.eq.s32.totalorder %s17, 0
    %p64 = por %p62, %p63
    %p65 = scmp.ne.s32.totalorder %s51, %s52
    %p66 = scmp.eq.s32.totalorder %s18, 3
    %p67 = por %p65, %p66
    %p69 = scmp.ne.s32.totalorder %s52, %s68
    %p70 = scmp.eq.s32.totalorder %s18, 0
    %p71 = por %p69, %p70
    %s72 = ssub.s32 %s12, %s19
    %p73 = scmp.eq.s32.totalorder %s72, 0
    %s75 = sadd.s32 %s74, 1
    %s76 = scalar_select %p73, %s74, %s75
    %p79 = pneg %p73
    %p80 = scmp.eq.s32.totalorder %s12, 3
    %p81 = por %p79, %p80
    %p82 = scmp.ne.s32.totalorder %s74, %s77
    %p83 = scmp.eq.s32.totalorder %s12, 0
    %p84 = por %p82, %p83
    %p85 = scmp.ne.s32.totalorder %s74, %s77
    %p86 = scmp.eq.s32.totalorder %s17, 3
    %p87 = por %p85, %p86
    %p88 = scmp.ne.s32.totalorder %s77, %s78
    %p89 = scmp.eq.s32.totalorder %s17, 0
    %p90 = por %p88, %p89
    %p91 = scmp.ne.s32.totalorder %s77, %s78
    %p92 = scmp.eq.s32.totalorder %s18, 3
    %p93 = por %p91, %p92
    %p95 = scmp.ne.s32.totalorder %s78, %s94
    %p96 = scmp.eq.s32.totalorder %s18, 0
    %p97 = por %p95, %p96
    %s98 = ssub.s32 %s12, %s19
    %p99 = scmp.eq.s32.totalorder %s98, 0
    %s101 = sadd.s32 %s100, 1
    %s102 = scalar_select %p99, %s100, %s101
    %p105 = pneg %p99
    %p106 = scmp.eq.s32.totalorder %s12, 3
    %p107 = por %p105, %p106
    %p108 = scmp.ne.s32.totalorder %s100, %s103
    %p109 = scmp.eq.s32.totalorder %s12, 0
    %p110 = por %p108, %p109
    %p111 = scmp.ne.s32.totalorder %s100, %s103
    %p112 = scmp.eq.s32.totalorder %s17, 3
    %p113 = por %p111, %p112
    %p114 = scmp.ne.s32.totalorder %s103, %s104
    %p115 = scmp.eq.s32.totalorder %s17, 0
    %p116 = por %p114, %p115
    %p117 = scmp.ne.s32.totalorder %s103, %s104
    %p118 = scmp.eq.s32.totalorder %s18, 3
    %p119 = por %p117, %p118
    %p121 = scmp.ne.s32.totalorder %s104, %s120
    %p122 = scmp.eq.s32.totalorder %s18, 0
    %p123 = por %p121, %p122
    %s124 = ssub.s32 %s12, %s19
    %p125 = scmp.eq.s32.totalorder %s124, 0
    %s127 = sadd.s32 %s126, 1
    %s128 = scalar_select %p125, %s126, %s127
    %p131 = pneg %p125
    %p132 = scmp.eq.s32.totalorder %s12, 3
    %p133 = por %p131, %p132
    %p134 = scmp.ne.s32.totalorder %s126, %s129
    %p135 = scmp.eq.s32.totalorder %s12, 0
    %p136 = por %p134, %p135
    %p137 = scmp.ne.s32.totalorder %s126, %s129
    %p138 = scmp.eq.s32.totalorder %s17, 3
    %p139 = por %p137, %p138
    %p140 = scmp.ne.s32.totalorder %s129, %s130
    %p141 = scmp.eq.s32.totalorder %s17, 0
    %p142 = por %p140, %p141
    %p143 = scmp.ne.s32.totalorder %s129, %s130
    %p144 = scmp.eq.s32.totalorder %s18, 3
    %p145 = por %p143, %p144
    %p147 = scmp.ne.s32.totalorder %s130, %s146
    %p148 = scmp.eq.s32.totalorder %s18, 0
    %p149 = por %p147, %p148
    %s150 = ssub.s32 %s12, %s19
    %p151 = scmp.eq.s32.totalorder %s150, 0
    %s153 = sadd.s32 %s152, 1
    %s154 = scalar_select %p151, %s152, %s153
    %p157 = pneg %p151
    %p158 = scmp.eq.s32.totalorder %s12, 3
    %p159 = por %p157, %p158
    %p160 = scmp.ne.s32.totalorder %s152, %s155
    %p161 = scmp.eq.s32.totalorder %s12, 0
    %p162 = por %p160, %p161
    %p163 = scmp.ne.s32.totalorder %s152, %s155
    %p164 = scmp.eq.s32.totalorder %s17, 3
    %p165 = por %p163, %p164
    %p166 = scmp.ne.s32.totalorder %s155, %s156
    %p167 = scmp.eq.s32.totalorder %s17, 0
    %p168 = por %p166, %p167
    %p169 = scmp.ne.s32.totalorder %s155, %s156
    %p170 = scmp.eq.s32.totalorder %s18, 3
    %p171 = por %p169, %p170
    %p173 = scmp.ne.s32.totalorder %s156, %s172
    %p174 = scmp.eq.s32.totalorder %s18, 0
    %p175 = por %p173, %p174
    %p176 = scmp.le.s32.totalorder 1, %s12
    %p177 = scmp.lt.s32.totalorder %s12, 5
    %p178 = pnand %p176, %p177
    %p179 = pneg %p178
    // Predicated region
    $region9: #{fno3d_forward.11} parent=5 // pred_check
      _
    $region10: #{fno3d_forward.11} parent=5 // pred_check_branch
      %181 = sbr.rel (%p178) target = $region12
    $region11: #{fno3d_forward.11} parent=5 // pred_region
      %s182 = ssub.s32 %s12, 1
    $region12: #{fno3d_forward.11} parent=5 // pred_fallthru
      _
    %p183 = scmp.lt.s32.totalorder %s12, 4
    // Predicated region
    $region13: #{fno3d_forward.11} parent=5 // pred_check
      %p184 = pneg %p183
    $region14: #{fno3d_forward.11} parent=5 // pred_check_branch
      %186 = sbr.rel (%p184) target = $region16
    $region15: #{fno3d_forward.11} parent=5 // pred_region
      // Predicated region
      $region17: #{fno3d_forward.11} parent=15 // pred_check
        %p187 = pneg %p32
      $region18: #{fno3d_forward.11} parent=15 // pred_check_branch
        %189 = sbr.rel (%p187) target = $region20
      $region19: #{fno3d_forward.11} parent=15 // pred_region
        %p190 = scmp.lt.s32.totalorder %s12, 3
        %s191 = scalar_select %p190, %s12, 3
        %s192 = smul.addr %s191, 2
        %s193 = smul.addr %s192, 8
        %s194 = scalar_lea.vmem %s0, %s193
      $region20: #{fno3d_forward.11} parent=15 // pred_fallthru
        _
      // Predicated region
      $region21: #{fno3d_forward.11} parent=15 // pred_check
        %p195 = pneg %p58
      $region22: #{fno3d_forward.11} parent=15 // pred_check_branch
        %197 = sbr.rel (%p195) target = $region24
      $region23: #{fno3d_forward.11} parent=15 // pred_region
        %p198 = scmp.lt.s32.totalorder %s12, 3
        %s199 = scalar_select %p198, %s12, 3
        %s200 = smul.addr %s199, 2
        %s201 = smul.addr %s200, 8
        %s202 = scalar_lea.vmem %s1, %s201
      $region24: #{fno3d_forward.11} parent=15 // pred_fallthru
        _
      // Predicated region
      $region25: #{fno3d_forward.11} parent=15 // pred_check
        %p203 = pneg %p84
      $region26: #{fno3d_forward.11} parent=15 // pred_check_branch
        %205 = sbr.rel (%p203) target = $region28
      $region27: #{fno3d_forward.11} parent=15 // pred_region
        %p206 = scmp.lt.s32.totalorder %s12, 3
        %s207 = scalar_select %p206, %s12, 3
        %s208 = smul.addr %s207, 8
        %s209 = smul.addr %s208, 8
        %s210 = scalar_lea.vmem %s2, %s209
      $region28: #{fno3d_forward.11} parent=15 // pred_fallthru
        _
      // Predicated region
      $region29: #{fno3d_forward.11} parent=15 // pred_check
        %p211 = pneg %p110
      $region30: #{fno3d_forward.11} parent=15 // pred_check_branch
        %213 = sbr.rel (%p211) target = $region32
      $region31: #{fno3d_forward.11} parent=15 // pred_region
        %p214 = scmp.lt.s32.totalorder %s12, 3
        %s215 = scalar_select %p214, %s12, 3
        %s216 = smul.addr %s215, 8
        %s217 = smul.addr %s216, 8
        %s218 = scalar_lea.vmem %s3, %s217
      $region32: #{fno3d_forward.11} parent=15 // pred_fallthru
        _
    $region16: #{fno3d_forward.11} parent=5 // pred_fallthru
      _
    %p219 = scmp.le.s32.totalorder 1, %s12
    %p220 = scmp.lt.s32.totalorder %s12, 5
    %p221 = pnand %p219, %p220
    %p222 = pneg %p221
    // Predicated region
    $region33: #{fno3d_forward.11} parent=5 // pred_check
      _
    $region34: #{fno3d_forward.11} parent=5 // pred_check_branch
      %224 = sbr.rel (%p221) target = $region36
    $region35: #{fno3d_forward.11} parent=5 // pred_region
      %s225 = ssub.s32 %s12, 1
      %p226 = scmp.lt.s32.totalorder %s17, 3
      %s227 = scalar_select %p226, %s17, 3
      %s228 = smul.addr %s227, 2
      %s229 = smul.addr %s228, 8
      %s230 = scalar_lea.vmem %s0, %s229
      %p231 = pneg %p38
      %p232 = pneg %p35
      %p233 = scmp.lt.s32.totalorder %s17, 3
      %s234 = scalar_select %p233, %s17, 3
      %s235 = smul.addr %s234, 2
      %s236 = smul.addr %s235, 8
      %s237 = scalar_lea.vmem %s1, %s236
      %p238 = pneg %p64
      %p239 = pneg %p61
      %p240 = scmp.lt.s32.totalorder %s17, 3
      %s241 = scalar_select %p240, %s17, 3
      %s242 = smul.addr %s241, 8
      %s243 = smul.addr %s242, 8
      %s244 = scalar_lea.vmem %s2, %s243
      %p245 = pneg %p90
      %p246 = pneg %p87
      %p247 = scmp.lt.s32.totalorder %s17, 3
      %s248 = scalar_select %p247, %s17, 3
      %s249 = smul.addr %s248, 8
      %s250 = smul.addr %s249, 8
      %s251 = scalar_lea.vmem %s3, %s250
      %p252 = pneg %p116
      %p253 = pneg %p113
      %p254 = pneg %p142
      %p255 = pneg %p139
      %p256 = scmp.lt.s32.totalorder %s17, 3
      %s257 = scalar_select %p256, %s17, 3
      %s258 = smul.addr %s257, 2
      %s259 = smul.addr %s258, 8
      %s260 = scalar_lea.vmem %s4, %s259
      %p261 = pneg %p168
      %p262 = pneg %p165
      %p263 = scmp.lt.s32.totalorder %s17, 3
      %s264 = scalar_select %p263, %s17, 3
      %s265 = smul.addr %s264, 2
      %s266 = smul.addr %s265, 8
      %s267 = scalar_lea.vmem %s5, %s266
      %p268 = scmp.lt.s32.totalorder %s17, 3
      %s269 = scalar_select %p268, %s17, 3
      %s270 = smul.addr %s269, 2
      %s271 = smul.addr %s270, 8
      %s272 = scalar_lea.vmem %s0, %s271
      %p273 = scmp.lt.s32.totalorder %s17, 3
      %s274 = scalar_select %p273, %s17, 3
      %s275 = smul.addr %s274, 2
      %s276 = smul.addr %s275, 8
      %s277 = scalar_lea.vmem %s1, %s276
      %p278 = scmp.lt.s32.totalorder %s17, 3
      %s279 = scalar_select %p278, %s17, 3
      %s280 = smul.addr %s279, 8
      %s281 = smul.addr %s280, 8
      %s282 = scalar_lea.vmem %s2, %s281
      %p283 = scmp.lt.s32.totalorder %s17, 3
      %s284 = scalar_select %p283, %s17, 3
      %s285 = smul.addr %s284, 8
      %s286 = smul.addr %s285, 8
      %s287 = scalar_lea.vmem %s3, %s286
      %p288 = scmp.lt.s32.totalorder %s17, 3
      %s289 = scalar_select %p288, %s17, 3
      %s290 = smul.addr %s289, 2
      %s291 = smul.addr %s290, 8
      %s292 = scalar_lea.vmem %s4, %s291
      %p293 = scmp.lt.s32.totalorder %s17, 3
      %s294 = scalar_select %p293, %s17, 3
      %s295 = smul.addr %s294, 2
      %s296 = smul.addr %s295, 8
      %s297 = scalar_lea.vmem %s5, %s296
      %v298 = vld [vmem:[%s272] sm:$0xff]
      %v299 = vld [vmem:[%s272 + $0x8] sm:$0xff]
      %v300 = vld [vmem:[%s277] sm:$0xff]
      %v301 = vld [vmem:[%s277 + $0x8] sm:$0xff]
      %v302 = vld [vmem:[%s282] sm:$0xff]
      %v303 = vld [vmem:[%s282 + $0x8] sm:$0xff]
      %v304 = vld [vmem:[%s282 + $0x10] sm:$0xff]
      %v305 = vld [vmem:[%s282 + $0x18] sm:$0xff]
      %v306 = vld [vmem:[%s282 + $0x20] sm:$0xff]
      %v307 = vld [vmem:[%s282 + $0x28] sm:$0xff]
      %v308 = vld [vmem:[%s282 + $0x30] sm:$0xff]
      %v309 = vld [vmem:[%s282 + $0x38] sm:$0xff]
      %v310 = vld [vmem:[%s287] sm:$0xff]
      %v311 = vld [vmem:[%s287 + $0x8] sm:$0xff]
      %v312 = vld [vmem:[%s287 + $0x10] sm:$0xff]
      %v313 = vld [vmem:[%s287 + $0x18] sm:$0xff]
      %v314 = vld [vmem:[%s287 + $0x20] sm:$0xff]
      %v315 = vld [vmem:[%s287 + $0x28] sm:$0xff]
      %v316 = vld [vmem:[%s287 + $0x30] sm:$0xff]
      %v317 = vld [vmem:[%s287 + $0x38] sm:$0xff]
      %v318 = vlaneseq
      %v319 = vshrl.u32 %v318, 7
      %v320 = vsub.s32 0, %v319
      %v321 = vrot.slane %v298, %v320
      %v322 = vlaneseq
      %v323 = vshrl.u32 %v322, 7
      %v324 = vsub.s32 0, %v323
      %v325 = vrot.slane %v299, %v324
      %v326 = vmul.f32 %v321, %v302
      %v327 = vmul.f32 %v325, %v302
      %v328 = vadd.f32 %v326, 0.0
      %v329 = vadd.f32 %v327, 0.0
      %v330 = vlaneseq
      %v331 = vshrl.u32 %v330, 7
      %v332 = vsub.s32 0, %v331
      %v333 = vrot.slane %v300, %v332
      %v334 = vlaneseq
      %v335 = vshrl.u32 %v334, 7
      %v336 = vsub.s32 0, %v335
      %v337 = vrot.slane %v301, %v336
      %v338 = vmul.f32 %v333, %v310
      %v339 = vmul.f32 %v337, %v310
      %v340 = vsub.f32 %v328, %v338
      %v341 = vsub.f32 %v329, %v339
      %v342 = vmul.f32 %v321, %v310
      %v343 = vmul.f32 %v325, %v310
      %v344 = vadd.f32 %v342, 0.0
      %v345 = vadd.f32 %v343, 0.0
      %v346 = vmul.f32 %v333, %v302
      %v347 = vmul.f32 %v337, %v302
      %v348 = vadd.f32 %v344, %v346
      %v349 = vadd.f32 %v345, %v347
      %v350 = vlaneseq
      %v351 = vshrl.u32 %v350, 7
      %v352 = vsub.s32 1, %v351
      %v353 = vrot.slane %v298, %v352
      %v354 = vlaneseq
      %v355 = vshrl.u32 %v354, 7
      %v356 = vsub.s32 1, %v355
      %v357 = vrot.slane %v299, %v356
      %v358 = vmul.f32 %v353, %v303
      %v359 = vmul.f32 %v357, %v303
      %v360 = vadd.f32 %v340, %v358
      %v361 = vadd.f32 %v341, %v359
      %v362 = vlaneseq
      %v363 = vshrl.u32 %v362, 7
      %v364 = vsub.s32 1, %v363
      %v365 = vrot.slane %v300, %v364
      %v366 = vlaneseq
      %v367 = vshrl.u32 %v366, 7
      %v368 = vsub.s32 1, %v367
      %v369 = vrot.slane %v301, %v368
      %v370 = vmul.f32 %v365, %v311
      %v371 = vmul.f32 %v369, %v311
      %v372 = vsub.f32 %v360, %v370
      %v373 = vsub.f32 %v361, %v371
      %v374 = vmul.f32 %v353, %v311
      %v375 = vmul.f32 %v357, %v311
      %v376 = vadd.f32 %v348, %v374
      %v377 = vadd.f32 %v349, %v375
      %v378 = vmul.f32 %v365, %v303
      %v379 = vmul.f32 %v369, %v303
      %v380 = vadd.f32 %v376, %v378
      %v381 = vadd.f32 %v377, %v379
      %v382 = vlaneseq
      %v383 = vshrl.u32 %v382, 7
      %v384 = vsub.s32 2, %v383
      %v385 = vrot.slane %v298, %v384
      %v386 = vlaneseq
      %v387 = vshrl.u32 %v386, 7
      %v388 = vsub.s32 2, %v387
      %v389 = vrot.slane %v299, %v388
      %v390 = vmul.f32 %v385, %v304
      %v391 = vmul.f32 %v389, %v304
      %v392 = vadd.f32 %v372, %v390
      %v393 = vadd.f32 %v373, %v391
      %v394 = vlaneseq
      %v395 = vshrl.u32 %v394, 7
      %v396 = vsub.s32 2, %v395
      %v397 = vrot.slane %v300, %v396
      %v398 = vlaneseq
      %v399 = vshrl.u32 %v398, 7
      %v400 = vsub.s32 2, %v399
      %v401 = vrot.slane %v301, %v400
      %v402 = vmul.f32 %v397, %v312
      %v403 = vmul.f32 %v401, %v312
      %v404 = vsub.f32 %v392, %v402
      %v405 = vsub.f32 %v393, %v403
      %v406 = vmul.f32 %v385, %v312
      %v407 = vmul.f32 %v389, %v312
      %v408 = vadd.f32 %v380, %v406
      %v409 = vadd.f32 %v381, %v407
      %v410 = vmul.f32 %v397, %v304
      %v411 = vmul.f32 %v401, %v304
      %v412 = vadd.f32 %v408, %v410
      %v413 = vadd.f32 %v409, %v411
      %v414 = vlaneseq
      %v415 = vshrl.u32 %v414, 7
      %v416 = vsub.s32 3, %v415
      %v417 = vrot.slane %v298, %v416
      %v418 = vlaneseq
      %v419 = vshrl.u32 %v418, 7
      %v420 = vsub.s32 3, %v419
      %v421 = vrot.slane %v299, %v420
      %v422 = vmul.f32 %v417, %v305
      %v423 = vmul.f32 %v421, %v305
      %v424 = vadd.f32 %v404, %v422
      %v425 = vadd.f32 %v405, %v423
      %v426 = vlaneseq
      %v427 = vshrl.u32 %v426, 7
      %v428 = vsub.s32 3, %v427
      %v429 = vrot.slane %v300, %v428
      %v430 = vlaneseq
      %v431 = vshrl.u32 %v430, 7
      %v432 = vsub.s32 3, %v431
      %v433 = vrot.slane %v301, %v432
      %v434 = vmul.f32 %v429, %v313
      %v435 = vmul.f32 %v433, %v313
      %v436 = vsub.f32 %v424, %v434
      %v437 = vsub.f32 %v425, %v435
      %v438 = vmul.f32 %v417, %v313
      %v439 = vmul.f32 %v421, %v313
      %v440 = vadd.f32 %v412, %v438
      %v441 = vadd.f32 %v413, %v439
      %v442 = vmul.f32 %v429, %v305
      %v443 = vmul.f32 %v433, %v305
      %v444 = vadd.f32 %v440, %v442
      %v445 = vadd.f32 %v441, %v443
      %v446 = vlaneseq
      %v447 = vshrl.u32 %v446, 7
      %v448 = vsub.s32 4, %v447
      %v449 = vrot.slane %v298, %v448
      %v450 = vlaneseq
      %v451 = vshrl.u32 %v450, 7
      %v452 = vsub.s32 4, %v451
      %v453 = vrot.slane %v299, %v452
      %v454 = vmul.f32 %v449, %v306
      %v455 = vmul.f32 %v453, %v306
      %v456 = vadd.f32 %v436, %v454
      %v457 = vadd.f32 %v437, %v455
      %v458 = vlaneseq
      %v459 = vshrl.u32 %v458, 7
      %v460 = vsub.s32 4, %v459
      %v461 = vrot.slane %v300, %v460
      %v462 = vlaneseq
      %v463 = vshrl.u32 %v462, 7
      %v464 = vsub.s32 4, %v463
      %v465 = vrot.slane %v301, %v464
      %v466 = vmul.f32 %v461, %v314
      %v467 = vmul.f32 %v465, %v314
      %v468 = vsub.f32 %v456, %v466
      %v469 = vsub.f32 %v457, %v467
      %v470 = vmul.f32 %v449, %v314
      %v471 = vmul.f32 %v453, %v314
      %v472 = vadd.f32 %v444, %v470
      %v473 = vadd.f32 %v445, %v471
      %v474 = vmul.f32 %v461, %v306
      %v475 = vmul.f32 %v465, %v306
      %v476 = vadd.f32 %v472, %v474
      %v477 = vadd.f32 %v473, %v475
      %v478 = vlaneseq
      %v479 = vshrl.u32 %v478, 7
      %v480 = vsub.s32 5, %v479
      %v481 = vrot.slane %v298, %v480
      %v482 = vlaneseq
      %v483 = vshrl.u32 %v482, 7
      %v484 = vsub.s32 5, %v483
      %v485 = vrot.slane %v299, %v484
      %v486 = vmul.f32 %v481, %v307
      %v487 = vmul.f32 %v485, %v307
      %v488 = vadd.f32 %v468, %v486
      %v489 = vadd.f32 %v469, %v487
      %v490 = vlaneseq
      %v491 = vshrl.u32 %v490, 7
      %v492 = vsub.s32 5, %v491
      %v493 = vrot.slane %v300, %v492
      %v494 = vlaneseq
      %v495 = vshrl.u32 %v494, 7
      %v496 = vsub.s32 5, %v495
      %v497 = vrot.slane %v301, %v496
      %v498 = vmul.f32 %v493, %v315
      %v499 = vmul.f32 %v497, %v315
      %v500 = vsub.f32 %v488, %v498
      %v501 = vsub.f32 %v489, %v499
      %v502 = vmul.f32 %v481, %v315
      %v503 = vmul.f32 %v485, %v315
      %v504 = vadd.f32 %v476, %v502
      %v505 = vadd.f32 %v477, %v503
      %v506 = vmul.f32 %v493, %v307
      %v507 = vmul.f32 %v497, %v307
      %v508 = vadd.f32 %v504, %v506
      %v509 = vadd.f32 %v505, %v507
      %v510 = vlaneseq
      %v511 = vshrl.u32 %v510, 7
      %v512 = vsub.s32 6, %v511
      %v513 = vrot.slane %v298, %v512
      %v514 = vlaneseq
      %v515 = vshrl.u32 %v514, 7
      %v516 = vsub.s32 6, %v515
      %v517 = vrot.slane %v299, %v516
      %v518 = vmul.f32 %v513, %v308
      %v519 = vmul.f32 %v517, %v308
      %v520 = vadd.f32 %v500, %v518
      %v521 = vadd.f32 %v501, %v519
      %v522 = vlaneseq
      %v523 = vshrl.u32 %v522, 7
      %v524 = vsub.s32 6, %v523
      %v525 = vrot.slane %v300, %v524
      %v526 = vlaneseq
      %v527 = vshrl.u32 %v526, 7
      %v528 = vsub.s32 6, %v527
      %v529 = vrot.slane %v301, %v528
      %v530 = vmul.f32 %v525, %v316
      %v531 = vmul.f32 %v529, %v316
      %v532 = vsub.f32 %v520, %v530
      %v533 = vsub.f32 %v521, %v531
      %v534 = vmul.f32 %v513, %v316
      %v535 = vmul.f32 %v517, %v316
      %v536 = vadd.f32 %v508, %v534
      %v537 = vadd.f32 %v509, %v535
      %v538 = vmul.f32 %v525, %v308
      %v539 = vmul.f32 %v529, %v308
      %v540 = vadd.f32 %v536, %v538
      %v541 = vadd.f32 %v537, %v539
      %v542 = vlaneseq
      %v543 = vshrl.u32 %v542, 7
      %v544 = vsub.s32 7, %v543
      %v545 = vrot.slane %v298, %v544
      %v546 = vlaneseq
      %v547 = vshrl.u32 %v546, 7
      %v548 = vsub.s32 7, %v547
      %v549 = vrot.slane %v299, %v548
      %v550 = vmul.f32 %v545, %v309
      %v551 = vmul.f32 %v549, %v309
      %v552 = vadd.f32 %v532, %v550
      %v553 = vadd.f32 %v533, %v551
      %v554 = vlaneseq
      %v555 = vshrl.u32 %v554, 7
      %v556 = vsub.s32 7, %v555
      %v557 = vrot.slane %v300, %v556
      %v558 = vlaneseq
      %v559 = vshrl.u32 %v558, 7
      %v560 = vsub.s32 7, %v559
      %v561 = vrot.slane %v301, %v560
      %v562 = vmul.f32 %v557, %v317
      %v563 = vmul.f32 %v561, %v317
      %v564 = vsub.f32 %v552, %v562
      %v565 = vsub.f32 %v553, %v563
      %v566 = vmul.f32 %v545, %v317
      %v567 = vmul.f32 %v549, %v317
      %v568 = vadd.f32 %v540, %v566
      %v569 = vadd.f32 %v541, %v567
      %v570 = vmul.f32 %v557, %v309
      %v571 = vmul.f32 %v561, %v309
      %v572 = vadd.f32 %v568, %v570
      %v573 = vadd.f32 %v569, %v571
      %vm574 = vcmask 392192
      %575 = vst.msk [vmem:[%s292] sm:$0xff] %vm574, %v564
      %576 = vst.msk [vmem:[%s292 + $0x8] sm:$0xff] %vm574, %v565
      %577 = vst.msk [vmem:[%s297] sm:$0xff] %vm574, %v572
      %578 = vst.msk [vmem:[%s297 + $0x8] sm:$0xff] %vm574, %v573
      %p579 = scmp.lt.s32.totalorder %s17, 3
      %s580 = scalar_select %p579, %s17, 3
      %s581 = smul.addr %s580, 2
      %s582 = smul.addr %s581, 8
      %s583 = scalar_lea.vmem %s4, %s582
      %p584 = scmp.lt.s32.totalorder %s17, 3
      %s585 = scalar_select %p584, %s17, 3
      %s586 = smul.addr %s585, 2
      %s587 = smul.addr %s586, 8
      %s588 = scalar_lea.vmem %s5, %s587
      // Predicated region
      $region37: #{fno3d_forward.11} parent=35 // pred_check
        %p589 = pneg %p139
      $region38: #{fno3d_forward.11} parent=35 // pred_check_branch
        %591 = sbr.rel (%p589) target = $region40
      $region39: #{fno3d_forward.11} parent=35 // pred_region
        _
      $region40: #{fno3d_forward.11} parent=35 // pred_fallthru
        _
      // Predicated region
      $region41: #{fno3d_forward.11} parent=35 // pred_check
        %p592 = pneg %p165
      $region42: #{fno3d_forward.11} parent=35 // pred_check_branch
        %594 = sbr.rel (%p592) target = $region44
      $region43: #{fno3d_forward.11} parent=35 // pred_region
        _
      $region44: #{fno3d_forward.11} parent=35 // pred_fallthru
        _
    $region36: #{fno3d_forward.11} parent=5 // pred_fallthru
      _
    %p595 = scmp.le.s32.totalorder 2, %s12
    // Predicated region
    $region45: #{fno3d_forward.11} parent=5 // pred_check
      %p596 = pneg %p595
    $region46: #{fno3d_forward.11} parent=5 // pred_check_branch
      %598 = sbr.rel (%p596) target = $region48
    $region47: #{fno3d_forward.11} parent=5 // pred_region
      %s599 = ssub.s32 %s12, 2
      // Predicated region
      $region49: #{fno3d_forward.11} parent=47 // pred_check
        %p600 = pneg %p145
      $region50: #{fno3d_forward.11} parent=47 // pred_check_branch
        %602 = sbr.rel (%p600) target = $region52
      $region51: #{fno3d_forward.11} parent=47 // pred_region
        %p603 = scmp.lt.s32.totalorder %s18, 3
        %s604 = scalar_select %p603, %s18, 3
        %s605 = smul.addr %s604, 2
        %s606 = smul.addr %s605, 8
        %s607 = scalar_lea.vmem %s4, %s606
      $region52: #{fno3d_forward.11} parent=47 // pred_fallthru
        _
      // Predicated region
      $region53: #{fno3d_forward.11} parent=47 // pred_check
        %p608 = pneg %p171
      $region54: #{fno3d_forward.11} parent=47 // pred_check_branch
        %610 = sbr.rel (%p608) target = $region56
      $region55: #{fno3d_forward.11} parent=47 // pred_region
        %p611 = scmp.lt.s32.totalorder %s18, 3
        %s612 = scalar_select %p611, %s18, 3
        %s613 = smul.addr %s612, 2
        %s614 = smul.addr %s613, 8
        %s615 = scalar_lea.vmem %s5, %s614
      $region56: #{fno3d_forward.11} parent=47 // pred_fallthru
        _
    $region48: #{fno3d_forward.11} parent=5 // pred_fallthru
      _
  $region6: #{fno3d_forward.11} parent=0 // loop_footer
    %s16 = sadd.s32 1, %s12
  $region7: #{fno3d_forward.11} parent=0 // loop_footer_branch
    %11 = sbr.rel target = $region3
  $region8: #{fno3d_forward.11} parent=0 // loop_exit
    _

// kernel: reverse.8
$region0: #{reverse.8}
  #allocation0 [shape = 's32[1]{0}', space=sflag, size = 0x4, scoped, tag = 'scoped memory for reverse.8']
  %s0 = inlined_call_operand.vmem [shape: f32[8,2,8,8,6], index: 0, kind: input, shape index: {}]
  %s1 = inlined_call_operand.vmem [shape: f32[8,2,8,8,6], index: 1, kind: output, shape index: {}]
  %s2 = scalar_lea.vmem %s0, 40
  %v3 = vld [vmem:[%s2] sm:$0xff]
  %4 = vst [vmem:[%s1] sm:$0xff] %v3
  %s5 = scalar_lea.vmem %s0, 136
  %v6 = vld [vmem:[%s5] sm:$0xff]
  %s7 = scalar_lea.vmem %s1, 96
  %8 = vst [vmem:[%s7] sm:$0xff] %v6
  %s9 = scalar_lea.vmem %s0, 232
  %v10 = vld [vmem:[%s9] sm:$0xff]
  %s11 = scalar_lea.vmem %s1, 192
  %12 = vst [vmem:[%s11] sm:$0xff] %v10
  %s13 = scalar_lea.vmem %s0, 328
  %v14 = vld [vmem:[%s13] sm:$0xff]
  %s15 = scalar_lea.vmem %s1, 288
  %16 = vst [vmem:[%s15] sm:$0xff] %v14
  %s17 = scalar_lea.vmem %s0, 424
  %v18 = vld [vmem:[%s17] sm:$0xff]
  %s19 = scalar_lea.vmem %s1, 384
  %20 = vst [vmem:[%s19] sm:$0xff] %v18
  %s21 = scalar_lea.vmem %s0, 520
  %v22 = vld [vmem:[%s21] sm:$0xff]
  %s23 = scalar_lea.vmem %s1, 480
  %24 = vst [vmem:[%s23] sm:$0xff] %v22
  %s25 = scalar_lea.vmem %s0, 616
  %v26 = vld [vmem:[%s25] sm:$0xff]
  %s27 = scalar_lea.vmem %s1, 576
  %28 = vst [vmem:[%s27] sm:$0xff] %v26
  %s29 = scalar_lea.vmem %s0, 712
  %v30 = vld [vmem:[%s29] sm:$0xff]
  %s31 = scalar_lea.vmem %s1, 672
  %32 = vst [vmem:[%s31] sm:$0xff] %v30
  %s33 = scalar_lea.vmem %s0, 88
  %v34 = vld [vmem:[%s33] sm:$0xff]
  %s35 = scalar_lea.vmem %s1, 48
  %36 = vst [vmem:[%s35] sm:$0xff] %v34
  %s37 = scalar_lea.vmem %s0, 184
  %v38 = vld [vmem:[%s37] sm:$0xff]
  %s39 = scalar_lea.vmem %s1, 144
  %40 = vst [vmem:[%s39] sm:$0xff] %v38
  %s41 = scalar_lea.vmem %s0, 280
  %v42 = vld [vmem:[%s41] sm:$0xff]
  %s43 = scalar_lea.vmem %s1, 240
  %44 = vst [vmem:[%s43] sm:$0xff] %v42
  %s45 = scalar_lea.vmem %s0, 376
  %v46 = vld [vmem:[%s45] sm:$0xff]
  %s47 = scalar_lea.vmem %s1, 336
  %48 = vst [vmem:[%s47] sm:$0xff] %v46
  %s49 = scalar_lea.vmem %s0, 472
  %v50 = vld [vmem:[%s49] sm:$0xff]
  %s51 = scalar_lea.vmem %s1, 432
  %52 = vst [vmem:[%s51] sm:$0xff] %v50
  %s53 = scalar_lea.vmem %s0, 568
  %v54 = vld [vmem:[%s53] sm:$0xff]
  %s55 = scalar_lea.vmem %s1, 528
  %56 = vst [vmem:[%s55] sm:$0xff] %v54
  %s57 = scalar_lea.vmem %s0, 664
  %v58 = vld [vmem:[%s57] sm:$0xff]
  %s59 = scalar_lea.vmem %s1, 624
  %60 = vst [vmem:[%s59] sm:$0xff] %v58
  %s61 = scalar_lea.vmem %s0, 760
  %v62 = vld [vmem:[%s61] sm:$0xff]
  %s63 = scalar_lea.vmem %s1, 720
  %64 = vst [vmem:[%s63] sm:$0xff] %v62
  %s65 = scalar_lea.vmem %s0, 32
  %v66 = vld [vmem:[%s65] sm:$0xff]
  %s67 = scalar_lea.vmem %s1, 8
  %68 = vst [vmem:[%s67] sm:$0xff] %v66
  %s69 = scalar_lea.vmem %s0, 128
  %v70 = vld [vmem:[%s69] sm:$0xff]
  %s71 = scalar_lea.vmem %s1, 104
  %72 = vst [vmem:[%s71] sm:$0xff] %v70
  %s73 = scalar_lea.vmem %s0, 224
  %v74 = vld [vmem:[%s73] sm:$0xff]
  %s75 = scalar_lea.vmem %s1, 200
  %76 = vst [vmem:[%s75] sm:$0xff] %v74
  %s77 = scalar_lea.vmem %s0, 320
  %v78 = vld [vmem:[%s77] sm:$0xff]
  %s79 = scalar_lea.vmem %s1, 296
  %80 = vst [vmem:[%s79] sm:$0xff] %v78
  %s81 = scalar_lea.vmem %s0, 416
  %v82 = vld [vmem:[%s81] sm:$0xff]
  %s83 = scalar_lea.vmem %s1, 392
  %84 = vst [vmem:[%s83] sm:$0xff] %v82
  %s85 = scalar_lea.vmem %s0, 512
  %v86 = vld [vmem:[%s85] sm:$0xff]
  %s87 = scalar_lea.vmem %s1, 488
  %88 = vst [vmem:[%s87] sm:$0xff] %v86
  %s89 = scalar_lea.vmem %s0, 608
  %v90 = vld [vmem:[%s89] sm:$0xff]
  %s91 = scalar_lea.vmem %s1, 584
  %92 = vst [vmem:[%s91] sm:$0xff] %v90
  %s93 = scalar_lea.vmem %s0, 704
  %v94 = vld [vmem:[%s93] sm:$0xff]
  %s95 = scalar_lea.vmem %s1, 680
  %96 = vst [vmem:[%s95] sm:$0xff] %v94
  %s97 = scalar_lea.vmem %s0, 80
  %v98 = vld [vmem:[%s97] sm:$0xff]
  %s99 = scalar_lea.vmem %s1, 56
  %100 = vst [vmem:[%s99] sm:$0xff] %v98
  %s101 = scalar_lea.vmem %s0, 176
  %v102 = vld [vmem:[%s101] sm:$0xff]
  %s103 = scalar_lea.vmem %s1, 152
  %104 = vst [vmem:[%s103] sm:$0xff] %v102
  %s105 = scalar_lea.vmem %s0, 272
  %v106 = vld [vmem:[%s105] sm:$0xff]
  %s107 = scalar_lea.vmem %s1, 248
  %108 = vst [vmem:[%s107] sm:$0xff] %v106
  %s109 = scalar_lea.vmem %s0, 368
  %v110 = vld [vmem:[%s109] sm:$0xff]
  %s111 = scalar_lea.vmem %s1, 344
  %112 = vst [vmem:[%s111] sm:$0xff] %v110
  %s113 = scalar_lea.vmem %s0, 464
  %v114 = vld [vmem:[%s113] sm:$0xff]
  %s115 = scalar_lea.vmem %s1, 440
  %116 = vst [vmem:[%s115] sm:$0xff] %v114
  %s117 = scalar_lea.vmem %s0, 560
  %v118 = vld [vmem:[%s117] sm:$0xff]
  %s119 = scalar_lea.vmem %s1, 536
  %120 = vst [vmem:[%s119] sm:$0xff] %v118
  %s121 = scalar_lea.vmem %s0, 656
  %v122 = vld [vmem:[%s121] sm:$0xff]
  %s123 = scalar_lea.vmem %s1, 632
  %124 = vst [vmem:[%s123] sm:$0xff] %v122
  %s125 = scalar_lea.vmem %s0, 752
  %v126 = vld [vmem:[%s125] sm:$0xff]
  %s127 = scalar_lea.vmem %s1, 728
  %128 = vst [vmem:[%s127] sm:$0xff] %v126
  %s129 = scalar_lea.vmem %s0, 24
  %v130 = vld [vmem:[%s129] sm:$0xff]
  %s131 = scalar_lea.vmem %s1, 16
  %132 = vst [vmem:[%s131] sm:$0xff] %v130
  %s133 = scalar_lea.vmem %s0, 120
  %v134 = vld [vmem:[%s133] sm:$0xff]
  %s135 = scalar_lea.vmem %s1, 112
  %136 = vst [vmem:[%s135] sm:$0xff] %v134
  %s137 = scalar_lea.vmem %s0, 216
  %v138 = vld [vmem:[%s137] sm:$0xff]
  %s139 = scalar_lea.vmem %s1, 208
  %140 = vst [vmem:[%s139] sm:$0xff] %v138
  %s141 = scalar_lea.vmem %s0, 312
  %v142 = vld [vmem:[%s141] sm:$0xff]
  %s143 = scalar_lea.vmem %s1, 304
  %144 = vst [vmem:[%s143] sm:$0xff] %v142
  %s145 = scalar_lea.vmem %s0, 408
  %v146 = vld [vmem:[%s145] sm:$0xff]
  %s147 = scalar_lea.vmem %s1, 400
  %148 = vst [vmem:[%s147] sm:$0xff] %v146
  %s149 = scalar_lea.vmem %s0, 504
  %v150 = vld [vmem:[%s149] sm:$0xff]
  %s151 = scalar_lea.vmem %s1, 496
  %152 = vst [vmem:[%s151] sm:$0xff] %v150
  %s153 = scalar_lea.vmem %s0, 600
  %v154 = vld [vmem:[%s153] sm:$0xff]
  %s155 = scalar_lea.vmem %s1, 592
  %156 = vst [vmem:[%s155] sm:$0xff] %v154
  %s157 = scalar_lea.vmem %s0, 696
  %v158 = vld [vmem:[%s157] sm:$0xff]
  %s159 = scalar_lea.vmem %s1, 688
  %160 = vst [vmem:[%s159] sm:$0xff] %v158
  %s161 = scalar_lea.vmem %s0, 72
  %v162 = vld [vmem:[%s161] sm:$0xff]
  %s163 = scalar_lea.vmem %s1, 64
  %164 = vst [vmem:[%s163] sm:$0xff] %v162
  %s165 = scalar_lea.vmem %s0, 168
  %v166 = vld [vmem:[%s165] sm:$0xff]
  %s167 = scalar_lea.vmem %s1, 160
  %168 = vst [vmem:[%s167] sm:$0xff] %v166
  %s169 = scalar_lea.vmem %s0, 264
  %v170 = vld [vmem:[%s169] sm:$0xff]
  %s171 = scalar_lea.vmem %s1, 256
  %172 = vst [vmem:[%s171] sm:$0xff] %v170
  %s173 = scalar_lea.vmem %s0, 360
  %v174 = vld [vmem:[%s173] sm:$0xff]
  %s175 = scalar_lea.vmem %s1, 352
  %176 = vst [vmem:[%s175] sm:$0xff] %v174
  %s177 = scalar_lea.vmem %s0, 456
  %v178 = vld [vmem:[%s177] sm:$0xff]
  %s179 = scalar_lea.vmem %s1, 448
  %180 = vst [vmem:[%s179] sm:$0xff] %v178
  %s181 = scalar_lea.vmem %s0, 552
  %v182 = vld [vmem:[%s181] sm:$0xff]
  %s183 = scalar_lea.vmem %s1, 544
  %184 = vst [vmem:[%s183] sm:$0xff] %v182
  %s185 = scalar_lea.vmem %s0, 648
  %v186 = vld [vmem:[%s185] sm:$0xff]
  %s187 = scalar_lea.vmem %s1, 640
  %188 = vst [vmem:[%s187] sm:$0xff] %v186
  %s189 = scalar_lea.vmem %s0, 744
  %v190 = vld [vmem:[%s189] sm:$0xff]
  %s191 = scalar_lea.vmem %s1, 736
  %192 = vst [vmem:[%s191] sm:$0xff] %v190
  %s193 = scalar_lea.vmem %s0, 16
  %v194 = vld [vmem:[%s193] sm:$0xff]
  %s195 = scalar_lea.vmem %s1, 24
  %196 = vst [vmem:[%s195] sm:$0xff] %v194
  %s197 = scalar_lea.vmem %s0, 112
  %v198 = vld [vmem:[%s197] sm:$0xff]
  %s199 = scalar_lea.vmem %s1, 120
  %200 = vst [vmem:[%s199] sm:$0xff] %v198
  %s201 = scalar_lea.vmem %s0, 208
  %v202 = vld [vmem:[%s201] sm:$0xff]
  %s203 = scalar_lea.vmem %s1, 216
  %204 = vst [vmem:[%s203] sm:$0xff] %v202
  %s205 = scalar_lea.vmem %s0, 304
  %v206 = vld [vmem:[%s205] sm:$0xff]
  %s207 = scalar_lea.vmem %s1, 312
  %208 = vst [vmem:[%s207] sm:$0xff] %v206
  %s209 = scalar_lea.vmem %s0, 400
  %v210 = vld [vmem:[%s209] sm:$0xff]
  %s211 = scalar_lea.vmem %s1, 408
  %212 = vst [vmem:[%s211] sm:$0xff] %v210
  %s213 = scalar_lea.vmem %s0, 496
  %v214 = vld [vmem:[%s213] sm:$0xff]
  %s215 = scalar_lea.vmem %s1, 504
  %216 = vst [vmem:[%s215] sm:$0xff] %v214
  %s217 = scalar_lea.vmem %s0, 592
  %v218 = vld [vmem:[%s217] sm:$0xff]
  %s219 = scalar_lea.vmem %s1, 600
  %220 = vst [vmem:[%s219] sm:$0xff] %v218
  %s221 = scalar_lea.vmem %s0, 688
  %v222 = vld [vmem:[%s221] sm:$0xff]
  %s223 = scalar_lea.vmem %s1, 696
  %224 = vst [vmem:[%s223] sm:$0xff] %v222
  %s225 = scalar_lea.vmem %s0, 64
  %v226 = vld [vmem:[%s225] sm:$0xff]
  %s227 = scalar_lea.vmem %s1, 72
  %228 = vst [vmem:[%s227] sm:$0xff] %v226
  %s229 = scalar_lea.vmem %s0, 160
  %v230 = vld [vmem:[%s229] sm:$0xff]
  %s231 = scalar_lea.vmem %s1, 168
  %232 = vst [vmem:[%s231] sm:$0xff] %v230
  %s233 = scalar_lea.vmem %s0, 256
  %v234 = vld [vmem:[%s233] sm:$0xff]
  %s235 = scalar_lea.vmem %s1, 264
  %236 = vst [vmem:[%s235] sm:$0xff] %v234
  %s237 = scalar_lea.vmem %s0, 352
  %v238 = vld [vmem:[%s237] sm:$0xff]
  %s239 = scalar_lea.vmem %s1, 360
  %240 = vst [vmem:[%s239] sm:$0xff] %v238
  %s241 = scalar_lea.vmem %s0, 448
  %v242 = vld [vmem:[%s241] sm:$0xff]
  %s243 = scalar_lea.vmem %s1, 456
  %244 = vst [vmem:[%s243] sm:$0xff] %v242
  %s245 = scalar_lea.vmem %s0, 544
  %v246 = vld [vmem:[%s245] sm:$0xff]
  %s247 = scalar_lea.vmem %s1, 552
  %248 = vst [vmem:[%s247] sm:$0xff] %v246
  %s249 = scalar_lea.vmem %s0, 640
  %v250 = vld [vmem:[%s249] sm:$0xff]
  %s251 = scalar_lea.vmem %s1, 648
  %252 = vst [vmem:[%s251] sm:$0xff] %v250
  %s253 = scalar_lea.vmem %s0, 736
  %v254 = vld [vmem:[%s253] sm:$0xff]
  %s255 = scalar_lea.vmem %s1, 744
  %256 = vst [vmem:[%s255] sm:$0xff] %v254
  %s257 = scalar_lea.vmem %s0, 8
  %v258 = vld [vmem:[%s257] sm:$0xff]
  %s259 = scalar_lea.vmem %s1, 32
  %260 = vst [vmem:[%s259] sm:$0xff] %v258
  %s261 = scalar_lea.vmem %s0, 104
  %v262 = vld [vmem:[%s261] sm:$0xff]
  %s263 = scalar_lea.vmem %s1, 128
  %264 = vst [vmem:[%s263] sm:$0xff] %v262
  %s265 = scalar_lea.vmem %s0, 200
  %v266 = vld [vmem:[%s265] sm:$0xff]
  %s267 = scalar_lea.vmem %s1, 224
  %268 = vst [vmem:[%s267] sm:$0xff] %v266
  %s269 = scalar_lea.vmem %s0, 296
  %v270 = vld [vmem:[%s269] sm:$0xff]
  %s271 = scalar_lea.vmem %s1, 320
  %272 = vst [vmem:[%s271] sm:$0xff] %v270
  %s273 = scalar_lea.vmem %s0, 392
  %v274 = vld [vmem:[%s273] sm:$0xff]
  %s275 = scalar_lea.vmem %s1, 416
  %276 = vst [vmem:[%s275] sm:$0xff] %v274
  %s277 = scalar_lea.vmem %s0, 488
  %v278 = vld [vmem:[%s277] sm:$0xff]
  %s279 = scalar_lea.vmem %s1, 512
  %280 = vst [vmem:[%s279] sm:$0xff] %v278
  %s281 = scalar_lea.vmem %s0, 584
  %v282 = vld [vmem:[%s281] sm:$0xff]
  %s283 = scalar_lea.vmem %s1, 608
  %284 = vst [vmem:[%s283] sm:$0xff] %v282
  %s285 = scalar_lea.vmem %s0, 680
  %v286 = vld [vmem:[%s285] sm:$0xff]
  %s287 = scalar_lea.vmem %s1, 704
  %288 = vst [vmem:[%s287] sm:$0xff] %v286
  %s289 = scalar_lea.vmem %s0, 56
  %v290 = vld [vmem:[%s289] sm:$0xff]
  %s291 = scalar_lea.vmem %s1, 80
  %292 = vst [vmem:[%s291] sm:$0xff] %v290
  %s293 = scalar_lea.vmem %s0, 152
  %v294 = vld [vmem:[%s293] sm:$0xff]
  %s295 = scalar_lea.vmem %s1, 176
  %296 = vst [vmem:[%s295] sm:$0xff] %v294
  %s297 = scalar_lea.vmem %s0, 248
  %v298 = vld [vmem:[%s297] sm:$0xff]
  %s299 = scalar_lea.vmem %s1, 272
  %300 = vst [vmem:[%s299] sm:$0xff] %v298
  %s301 = scalar_lea.vmem %s0, 344
  %v302 = vld [vmem:[%s301] sm:$0xff]
  %s303 = scalar_lea.vmem %s1, 368
  %304 = vst [vmem:[%s303] sm:$0xff] %v302
  %s305 = scalar_lea.vmem %s0, 440
  %v306 = vld [vmem:[%s305] sm:$0xff]
  %s307 = scalar_lea.vmem %s1, 464
  %308 = vst [vmem:[%s307] sm:$0xff] %v306
  %s309 = scalar_lea.vmem %s0, 536
  %v310 = vld [vmem:[%s309] sm:$0xff]
  %s311 = scalar_lea.vmem %s1, 560
  %312 = vst [vmem:[%s311] sm:$0xff] %v310
  %s313 = scalar_lea.vmem %s0, 632
  %v314 = vld [vmem:[%s313] sm:$0xff]
  %s315 = scalar_lea.vmem %s1, 656
  %316 = vst [vmem:[%s315] sm:$0xff] %v314
  %s317 = scalar_lea.vmem %s0, 728
  %v318 = vld [vmem:[%s317] sm:$0xff]
  %s319 = scalar_lea.vmem %s1, 752
  %320 = vst [vmem:[%s319] sm:$0xff] %v318
  %v321 = vld [vmem:[%s0] sm:$0xff]
  %s322 = scalar_lea.vmem %s1, 40
  %323 = vst [vmem:[%s322] sm:$0xff] %v321
  %s324 = scalar_lea.vmem %s0, 96
  %v325 = vld [vmem:[%s324] sm:$0xff]
  %s326 = scalar_lea.vmem %s1, 136
  %327 = vst [vmem:[%s326] sm:$0xff] %v325
  %s328 = scalar_lea.vmem %s0, 192
  %v329 = vld [vmem:[%s328] sm:$0xff]
  %s330 = scalar_lea.vmem %s1, 232
  %331 = vst [vmem:[%s330] sm:$0xff] %v329
  %s332 = scalar_lea.vmem %s0, 288
  %v333 = vld [vmem:[%s332] sm:$0xff]
  %s334 = scalar_lea.vmem %s1, 328
  %335 = vst [vmem:[%s334] sm:$0xff] %v333
  %s336 = scalar_lea.vmem %s0, 384
  %v337 = vld [vmem:[%s336] sm:$0xff]
  %s338 = scalar_lea.vmem %s1, 424
  %339 = vst [vmem:[%s338] sm:$0xff] %v337
  %s340 = scalar_lea.vmem %s0, 480
  %v341 = vld [vmem:[%s340] sm:$0xff]
  %s342 = scalar_lea.vmem %s1, 520
  %343 = vst [vmem:[%s342] sm:$0xff] %v341
  %s344 = scalar_lea.vmem %s0, 576
  %v345 = vld [vmem:[%s344] sm:$0xff]
  %s346 = scalar_lea.vmem %s1, 616
  %347 = vst [vmem:[%s346] sm:$0xff] %v345
  %s348 = scalar_lea.vmem %s0, 672
  %v349 = vld [vmem:[%s348] sm:$0xff]
  %s350 = scalar_lea.vmem %s1, 712
  %351 = vst [vmem:[%s350] sm:$0xff] %v349
  %s352 = scalar_lea.vmem %s0, 48
  %v353 = vld [vmem:[%s352] sm:$0xff]
  %s354 = scalar_lea.vmem %s1, 88
  %355 = vst [vmem:[%s354] sm:$0xff] %v353
  %s356 = scalar_lea.vmem %s0, 144
  %v357 = vld [vmem:[%s356] sm:$0xff]
  %s358 = scalar_lea.vmem %s1, 184
  %359 = vst [vmem:[%s358] sm:$0xff] %v357
  %s360 = scalar_lea.vmem %s0, 240
  %v361 = vld [vmem:[%s360] sm:$0xff]
  %s362 = scalar_lea.vmem %s1, 280
  %363 = vst [vmem:[%s362] sm:$0xff] %v361
  %s364 = scalar_lea.vmem %s0, 336
  %v365 = vld [vmem:[%s364] sm:$0xff]
  %s366 = scalar_lea.vmem %s1, 376
  %367 = vst [vmem:[%s366] sm:$0xff] %v365
  %s368 = scalar_lea.vmem %s0, 432
  %v369 = vld [vmem:[%s368] sm:$0xff]
  %s370 = scalar_lea.vmem %s1, 472
  %371 = vst [vmem:[%s370] sm:$0xff] %v369
  %s372 = scalar_lea.vmem %s0, 528
  %v373 = vld [vmem:[%s372] sm:$0xff]
  %s374 = scalar_lea.vmem %s1, 568
  %375 = vst [vmem:[%s374] sm:$0xff] %v373
  %s376 = scalar_lea.vmem %s0, 624
  %v377 = vld [vmem:[%s376] sm:$0xff]
  %s378 = scalar_lea.vmem %s1, 664
  %379 = vst [vmem:[%s378] sm:$0xff] %v377
  %s380 = scalar_lea.vmem %s0, 720
  %v381 = vld [vmem:[%s380] sm:$0xff]
  %s382 = scalar_lea.vmem %s1, 760
  %383 = vst [vmem:[%s382] sm:$0xff] %v381

// kernel: fno3d_forward.12
$region0: #{fno3d_forward.12}
  #allocation0 [shape = 'u32[]', space=smem, size = 0x4, offset = 0x4, fixed_abs, tag = 'smem constant byte address 0x4 - core index']
  #allocation1 [shape = 'u32[144,128]{1,0:T(1,128)}', space=vmem, size = 0x12000, scoped, tag = 'internal scratch']
  %s0 = inlined_call_operand.vmem [shape: f32[8,1792], index: 0, kind: input, shape index: {}]
  %s1 = inlined_call_operand.vmem [shape: f32[8,1792], index: 1, kind: input, shape index: {}]
  %s2 = inlined_call_operand.vmem [shape: f32[8,8], index: 2, kind: input, shape index: {}]
  %s3 = inlined_call_operand.vmem [shape: f32[8,1], index: 3, kind: input, shape index: {}]
  %s4 = inlined_call_operand.vmem [shape: f32[8,1792], index: 4, kind: output, shape index: {}]
  %s5 = sld [smem:[#allocation0]]
  $region49: #{fno3d_forward.12} parent=0
    _
  %s7 = ssub.s32 1, %s5
  %s8 = scalar_select 0, %s7, %s5
  loop: start=0, step=1, limit=4
  $region2: #{fno3d_forward.12} parent=0 // loop_pre_header
    _
  $region3: #{fno3d_forward.12} parent=0 // loop_header
    %s10 = sphi 0, %s14
    %p11 = scmp.ge.s32.totalorder %s10, 4
    %s20 = sphi 0, %s22
    %s23 = sphi 0, %s20
    %s24 = sphi 0, %s23
    %s40 = sphi 0, %s24
    %s46 = sphi 0, %s48
    %s49 = sphi 0, %s46
    %s50 = sphi 0, %s49
    %s66 = sphi 0, %s50
    %s70 = sphi 0, %s70
    %s72 = sphi 0, %s70
    %s73 = sphi 0, %s72
    %s87 = sphi 0, %s73
    %s91 = sphi 0, %s91
    %s93 = sphi 0, %s91
    %s94 = sphi 0, %s93
    %s108 = sphi 0, %s94
    %s114 = sphi 0, %s116
    %s117 = sphi 0, %s114
    %s118 = sphi 0, %s117
    %s134 = sphi 0, %s118
  $region4: #{fno3d_forward.12} parent=0 // loop_header_branch
    %13 = sbr.rel (%p11) target = $region8
  $region5: #{fno3d_forward.12} parent=0 // loop_body
    %s15 = ssub.s32 %s10, 1
    %s16 = ssub.s32 %s10, 2
    %s17 = sadd.s32 %s10, 1
    %s18 = ssub.s32 %s10, %s17
    %p19 = scmp.eq.s32.totalorder %s18, 0
    %s21 = sadd.s32 %s20, 1
    %s22 = scalar_select %p19, %s20, %s21
    %p25 = pneg %p19
    %p26 = scmp.eq.s32.totalorder %s10, 1
    %p27 = por %p25, %p26
    %p28 = scmp.ne.s32.totalorder %s20, %s23
    %p29 = scmp.eq.s32.totalorder %s10, 0
    %p30 = por %p28, %p29
    %p31 = scmp.ne.s32.totalorder %s20, %s23
    %p32 = scmp.eq.s32.totalorder %s15, 1
    %p33 = por %p31, %p32
    %p34 = scmp.ne.s32.totalorder %s23, %s24
    %p35 = scmp.eq.s32.totalorder %s15, 0
    %p36 = por %p34, %p35
    %p37 = scmp.ne.s32.totalorder %s23, %s24
    %p38 = scmp.eq.s32.totalorder %s16, 1
    %p39 = por %p37, %p38
    %p41 = scmp.ne.s32.totalorder %s24, %s40
    %p42 = scmp.eq.s32.totalorder %s16, 0
    %p43 = por %p41, %p42
    %s44 = ssub.s32 %s10, %s17
    %p45 = scmp.eq.s32.totalorder %s44, 0
    %s47 = sadd.s32 %s46, 1
    %s48 = scalar_select %p45, %s46, %s47
    %p51 = pneg %p45
    %p52 = scmp.eq.s32.totalorder %s10, 1
    %p53 = por %p51, %p52
    %p54 = scmp.ne.s32.totalorder %s46, %s49
    %p55 = scmp.eq.s32.totalorder %s10, 0
    %p56 = por %p54, %p55
    %p57 = scmp.ne.s32.totalorder %s46, %s49
    %p58 = scmp.eq.s32.totalorder %s15, 1
    %p59 = por %p57, %p58
    %p60 = scmp.ne.s32.totalorder %s49, %s50
    %p61 = scmp.eq.s32.totalorder %s15, 0
    %p62 = por %p60, %p61
    %p63 = scmp.ne.s32.totalorder %s49, %s50
    %p64 = scmp.eq.s32.totalorder %s16, 1
    %p65 = por %p63, %p64
    %p67 = scmp.ne.s32.totalorder %s50, %s66
    %p68 = scmp.eq.s32.totalorder %s16, 0
    %p69 = por %p67, %p68
    %s71 = sadd.s32 %s70, 1
    %p74 = scmp.eq.s32.totalorder %s10, 1
    %p75 = scmp.ne.s32.totalorder %s70, %s72
    %p76 = scmp.eq.s32.totalorder %s10, 0
    %p77 = por %p75, %p76
    %p78 = scmp.ne.s32.totalorder %s70, %s72
    %p79 = scmp.eq.s32.totalorder %s15, 1
    %p80 = por %p78, %p79
    %p81 = scmp.ne.s32.totalorder %s72, %s73
    %p82 = scmp.eq.s32.totalorder %s15, 0
    %p83 = por %p81, %p82
    %p84 = scmp.ne.s32.totalorder %s72, %s73
    %p85 = scmp.eq.s32.totalorder %s16, 1
    %p86 = por %p84, %p85
    %p88 = scmp.ne.s32.totalorder %s73, %s87
    %p89 = scmp.eq.s32.totalorder %s16, 0
    %p90 = por %p88, %p89
    %s92 = sadd.s32 %s91, 1
    %p95 = scmp.eq.s32.totalorder %s10, 1
    %p96 = scmp.ne.s32.totalorder %s91, %s93
    %p97 = scmp.eq.s32.totalorder %s10, 0
    %p98 = por %p96, %p97
    %p99 = scmp.ne.s32.totalorder %s91, %s93
    %p100 = scmp.eq.s32.totalorder %s15, 1
    %p101 = por %p99, %p100
    %p102 = scmp.ne.s32.totalorder %s93, %s94
    %p103 = scmp.eq.s32.totalorder %s15, 0
    %p104 = por %p102, %p103
    %p105 = scmp.ne.s32.totalorder %s93, %s94
    %p106 = scmp.eq.s32.totalorder %s16, 1
    %p107 = por %p105, %p106
    %p109 = scmp.ne.s32.totalorder %s94, %s108
    %p110 = scmp.eq.s32.totalorder %s16, 0
    %p111 = por %p109, %p110
    %s112 = ssub.s32 %s10, %s17
    %p113 = scmp.eq.s32.totalorder %s112, 0
    %s115 = sadd.s32 %s114, 1
    %s116 = scalar_select %p113, %s114, %s115
    %p119 = pneg %p113
    %p120 = scmp.eq.s32.totalorder %s10, 1
    %p121 = por %p119, %p120
    %p122 = scmp.ne.s32.totalorder %s114, %s117
    %p123 = scmp.eq.s32.totalorder %s10, 0
    %p124 = por %p122, %p123
    %p125 = scmp.ne.s32.totalorder %s114, %s117
    %p126 = scmp.eq.s32.totalorder %s15, 1
    %p127 = por %p125, %p126
    %p128 = scmp.ne.s32.totalorder %s117, %s118
    %p129 = scmp.eq.s32.totalorder %s15, 0
    %p130 = por %p128, %p129
    %p131 = scmp.ne.s32.totalorder %s117, %s118
    %p132 = scmp.eq.s32.totalorder %s16, 1
    %p133 = por %p131, %p132
    %p135 = scmp.ne.s32.totalorder %s118, %s134
    %p136 = scmp.eq.s32.totalorder %s16, 0
    %p137 = por %p135, %p136
    %p138 = scmp.le.s32.totalorder 1, %s10
    %p139 = scmp.lt.s32.totalorder %s10, 3
    %p140 = pnand %p138, %p139
    %p141 = pneg %p140
    // Predicated region
    $region9: #{fno3d_forward.12} parent=5 // pred_check
      _
    $region10: #{fno3d_forward.12} parent=5 // pred_check_branch
      %143 = sbr.rel (%p140) target = $region12
    $region11: #{fno3d_forward.12} parent=5 // pred_region
      %s144 = ssub.s32 %s10, 1
      // Predicated region
      $region13: #{fno3d_forward.12} parent=11 // pred_check
        %p145 = pneg %p83
      $region14: #{fno3d_forward.12} parent=11 // pred_check_branch
        %147 = sbr.rel (%p145) target = $region16
      $region15: #{fno3d_forward.12} parent=11 // pred_region
        _
      $region16: #{fno3d_forward.12} parent=11 // pred_fallthru
        _
      // Predicated region
      $region17: #{fno3d_forward.12} parent=11 // pred_check
        %p148 = pneg %p104
      $region18: #{fno3d_forward.12} parent=11 // pred_check_branch
        %150 = sbr.rel (%p148) target = $region20
      $region19: #{fno3d_forward.12} parent=11 // pred_region
        _
      $region20: #{fno3d_forward.12} parent=11 // pred_fallthru
        _
    $region12: #{fno3d_forward.12} parent=5 // pred_fallthru
      _
    %p151 = scmp.lt.s32.totalorder %s10, 2
    // Predicated region
    $region21: #{fno3d_forward.12} parent=5 // pred_check
      %p152 = pneg %p151
    $region22: #{fno3d_forward.12} parent=5 // pred_check_branch
      %154 = sbr.rel (%p152) target = $region24
    $region23: #{fno3d_forward.12} parent=5 // pred_region
      // Predicated region
      $region25: #{fno3d_forward.12} parent=23 // pred_check
        %p155 = pneg %p30
      $region26: #{fno3d_forward.12} parent=23 // pred_check_branch
        %157 = sbr.rel (%p155) target = $region28
      $region27: #{fno3d_forward.12} parent=23 // pred_region
        %s158 = smul.u32 7, %s10
        %p159 = scmp.lt.s32.totalorder %s158, 13
        %s160 = scalar_select %p159, %s158, 13
        %s161 = smul.addr %s160, 8
        %s162 = scalar_lea.vmem %s0, %s161
        %s163 = smul.u32 7, %s10
      $region28: #{fno3d_forward.12} parent=23 // pred_fallthru
        _
      // Predicated region
      $region29: #{fno3d_forward.12} parent=23 // pred_check
        %p164 = pneg %p56
      $region30: #{fno3d_forward.12} parent=23 // pred_check_branch
        %166 = sbr.rel (%p164) target = $region32
      $region31: #{fno3d_forward.12} parent=23 // pred_region
        %s167 = smul.u32 7, %s10
        %p168 = scmp.lt.s32.totalorder %s167, 13
        %s169 = scalar_select %p168, %s167, 13
        %s170 = smul.addr %s169, 8
        %s171 = scalar_lea.vmem %s1, %s170
        %s172 = smul.u32 7, %s10
      $region32: #{fno3d_forward.12} parent=23 // pred_fallthru
        _
    $region24: #{fno3d_forward.12} parent=5 // pred_fallthru
      _
    %p173 = scmp.le.s32.totalorder 1, %s10
    %p174 = scmp.lt.s32.totalorder %s10, 3
    %p175 = pnand %p173, %p174
    %p176 = pneg %p175
    // Predicated region
    $region33: #{fno3d_forward.12} parent=5 // pred_check
      _
    $region34: #{fno3d_forward.12} parent=5 // pred_check_branch
      %178 = sbr.rel (%p175) target = $region36
    $region35: #{fno3d_forward.12} parent=5 // pred_region
      %s179 = ssub.s32 %s10, 1
      %s180 = smul.u32 7, %s15
      %p181 = scmp.lt.s32.totalorder %s180, 13
      %s182 = scalar_select %p181, %s180, 13
      %s183 = smul.addr %s182, 8
      %s184 = scalar_lea.vmem %s0, %s183
      %p185 = pneg %p36
      %p186 = pneg %p33
      %s187 = smul.u32 7, %s15
      %p188 = scmp.lt.s32.totalorder %s187, 13
      %s189 = scalar_select %p188, %s187, 13
      %s190 = smul.addr %s189, 8
      %s191 = scalar_lea.vmem %s1, %s190
      %p192 = pneg %p62
      %p193 = pneg %p59
      %p194 = pneg %p83
      %p195 = pneg %p80
      %p196 = pneg %p104
      %p197 = pneg %p101
      %p198 = pneg %p130
      %p199 = pneg %p127
      %s200 = smul.u32 7, %s15
      %p201 = scmp.lt.s32.totalorder %s200, 13
      %s202 = scalar_select %p201, %s200, 13
      %s203 = smul.addr %s202, 8
      %s204 = scalar_lea.vmem %s4, %s203
      %s205 = smul.u32 7, %s15
      %p206 = scmp.lt.s32.totalorder %s205, 13
      %s207 = scalar_select %p206, %s205, 13
      %s208 = smul.addr %s207, 8
      %s209 = scalar_lea.vmem %s0, %s208
      %s210 = smul.u32 7, %s15
      %s211 = smul.u32 7, %s15
      %p212 = scmp.lt.s32.totalorder %s211, 13
      %s213 = scalar_select %p212, %s211, 13
      %s214 = smul.addr %s213, 8
      %s215 = scalar_lea.vmem %s1, %s214
      %s216 = smul.u32 7, %s15
      %s217 = smul.u32 7, %s15
      %p218 = scmp.lt.s32.totalorder %s217, 13
      %s219 = scalar_select %p218, %s217, 13
      %s220 = smul.addr %s219, 8
      %s221 = scalar_lea.vmem %s4, %s220
      %s222 = smul.u32 7, %s15
      %v223 = vld [vmem:[%s2] sm:$0xff]
      %v224 = vld [vmem:[%s209] sm:$0xff]
      %v225 = vld [vmem:[%s209 + $0x8] sm:$0xff]
      %v226 = vld [vmem:[%s209 + $0x10] sm:$0xff]
      %v227 = vld [vmem:[%s209 + $0x18] sm:$0xff]
      %v228 = vld [vmem:[%s209 + $0x20] sm:$0xff]
      %v229 = vld [vmem:[%s209 + $0x28] sm:$0xff]
      %v230 = vld [vmem:[%s209 + $0x30] sm:$0xff]
      %vm231 = vcmask 64512
      %v233 = vsel %vm231, %v223, 0
      %235 = vmatprep.subr.mxu0 0.0
      %236 = vmatpush1.msra.mxu0 0.0
      %237 = vmatprep.subr.mxu0 0.0
      %238 = vmatpush1.msra.mxu0 0.0
      %239 = vmatprep.subr.mxu0 0.0
      %240 = vmatpush1.msra.mxu0 0.0
      %241 = vmatprep.subr.mxu0 0.0
      %242 = vmatpush1.msra.mxu0 0.0
      %243 = vmatprep.subr.mxu0 0.0
      %244 = vmatpush1.msra.mxu0 0.0
      %245 = vmatprep.subr.mxu0 0.0
      %246 = vmatpush1.msra.mxu0 0.0
      %247 = vmatprep.subr.mxu0 0.0
      %248 = vmatpush1.msra.mxu0 0.0
      %249 = vmatprep.subr.mxu0 0.0
      %250 = vmatpush1.msra.mxu0 0.0
      %251 = vmatprep.subr.mxu0 0.0
      %252 = vmatpush1.msra.mxu0 0.0
      %253 = vmatprep.subr.mxu0 0.0
      %254 = vmatpush1.msra.mxu0 0.0
      %255 = vmatprep.subr.mxu0 0.0
      %256 = vmatpush1.msra.mxu0 0.0
      %257 = vmatprep.subr.mxu0 0.0
      %258 = vmatpush1.msra.mxu0 0.0
      %259 = vmatprep.subr.mxu0 0.0
      %260 = vmatpush1.msra.mxu0 0.0
      %261 = vmatprep.subr.mxu0 0.0
      %262 = vmatpush1.msra.mxu0 0.0
      %263 = vmatprep.subr.mxu0 0.0
      %264 = vmatpush1.msra.mxu0 0.0
      %265 = vmatprep.subr.mxu0 %v225
      %266 = vmatpush1.msra.mxu0 %v224
      %267 = vmatprep.subr.mxu0 0.0
      %268 = vmatpush2.msra.mxu0 0.0
      %269 = vmatprep.subr.mxu0 0.0
      %270 = vmatpush2.msra.mxu0 0.0
      %271 = vmatprep.subr.mxu0 0.0
      %272 = vmatpush2.msra.mxu0 0.0
      %273 = vmatprep.subr.mxu0 0.0
      %274 = vmatpush2.msra.mxu0 0.0
      %275 = vmatprep.subr.mxu0 0.0
      %276 = vmatpush2.msra.mxu0 0.0
      %277 = vmatprep.subr.mxu0 0.0
      %278 = vmatpush2.msra.mxu0 0.0
      %279 = vmatprep.subr.mxu0 0.0
      %280 = vmatpush2.msra.mxu0 0.0
      %281 = vmatprep.subr.mxu0 0.0
      %282 = vmatpush2.msra.mxu0 0.0
      %283 = vmatprep.subr.mxu0 0.0
      %284 = vmatpush2.msra.mxu0 0.0
      %285 = vmatprep.subr.mxu0 0.0
      %286 = vmatpush2.msra.mxu0 0.0
      %287 = vmatprep.subr.mxu0 0.0
      %288 = vmatpush2.msra.mxu0 0.0
      %289 = vmatprep.subr.mxu0 0.0
      %290 = vmatpush2.msra.mxu0 0.0
      %291 = vmatprep.subr.mxu0 0.0
      %292 = vmatpush2.msra.mxu0 0.0
      %293 = vmatprep.subr.mxu0 0.0
      %294 = vmatpush2.msra.mxu0 0.0
      %295 = vmatprep.subr.mxu0 0.0
      %296 = vmatpush2.msra.mxu0 0.0
      %297 = vmatprep.subr.mxu0 0.0
      %298 = vmatpush2.msra.mxu0 0.0
      %299 = vmatprep.mubr.f32.mxu0 0.0
      %300 = vmatmul.mubr.f32.gmra.mxu0 %v233
      %v301 = vpop.f32.mrf.mxu0
      %v302 = vadd.f32 0.0, %v301
      %v303 = vpop.f32.mrf.mxu0
      %v304 = vadd.f32 0.0, %v303
      %305 = vdwg.mxu0
      %306 = vmatprep.subr.mxu0 0.0
      %307 = vmatpush1.msra.mxu0 0.0
      %308 = vmatprep.subr.mxu0 0.0
      %309 = vmatpush1.msra.mxu0 0.0
      %310 = vmatprep.subr.mxu0 0.0
      %311 = vmatpush1.msra.mxu0 0.0
      %312 = vmatprep.subr.mxu0 0.0
      %313 = vmatpush1.msra.mxu0 0.0
      %314 = vmatprep.subr.mxu0 0.0
      %315 = vmatpush1.msra.mxu0 0.0
      %316 = vmatprep.subr.mxu0 0.0
      %317 = vmatpush1.msra.mxu0 0.0
      %318 = vmatprep.subr.mxu0 0.0
      %319 = vmatpush1.msra.mxu0 0.0
      %320 = vmatprep.subr.mxu0 0.0
      %321 = vmatpush1.msra.mxu0 0.0
      %322 = vmatprep.subr.mxu0 0.0
      %323 = vmatpush1.msra.mxu0 0.0
      %324 = vmatprep.subr.mxu0 0.0
      %325 = vmatpush1.msra.mxu0 0.0
      %326 = vmatprep.subr.mxu0 0.0
      %327 = vmatpush1.msra.mxu0 0.0
      %328 = vmatprep.subr.mxu0 0.0
      %329 = vmatpush1.msra.mxu0 0.0
      %330 = vmatprep.subr.mxu0 0.0
      %331 = vmatpush1.msra.mxu0 0.0
      %332 = vmatprep.subr.mxu0 0.0
      %333 = vmatpush1.msra.mxu0 0.0
      %334 = vmatprep.subr.mxu0 0.0
      %335 = vmatpush1.msra.mxu0 0.0
      %336 = vmatprep.subr.mxu0 %v227
      %337 = vmatpush1.msra.mxu0 %v226
      %338 = vmatprep.subr.mxu0 0.0
      %339 = vmatpush2.msra.mxu0 0.0
      %340 = vmatprep.subr.mxu0 0.0
      %341 = vmatpush2.msra.mxu0 0.0
      %342 = vmatprep.subr.mxu0 0.0
      %343 = vmatpush2.msra.mxu0 0.0
      %344 = vmatprep.subr.mxu0 0.0
      %345 = vmatpush2.msra.mxu0 0.0
      %346 = vmatprep.subr.mxu0 0.0
      %347 = vmatpush2.msra.mxu0 0.0
      %348 = vmatprep.subr.mxu0 0.0
      %349 = vmatpush2.msra.mxu0 0.0
      %350 = vmatprep.subr.mxu0 0.0
      %351 = vmatpush2.msra.mxu0 0.0
      %352 = vmatprep.subr.mxu0 0.0
      %353 = vmatpush2.msra.mxu0 0.0
      %354 = vmatprep.subr.mxu0 0.0
      %355 = vmatpush2.msra.mxu0 0.0
      %356 = vmatprep.subr.mxu0 0.0
      %357 = vmatpush2.msra.mxu0 0.0
      %358 = vmatprep.subr.mxu0 0.0
      %359 = vmatpush2.msra.mxu0 0.0
      %360 = vmatprep.subr.mxu0 0.0
      %361 = vmatpush2.msra.mxu0 0.0
      %362 = vmatprep.subr.mxu0 0.0
      %363 = vmatpush2.msra.mxu0 0.0
      %364 = vmatprep.subr.mxu0 0.0
      %365 = vmatpush2.msra.mxu0 0.0
      %366 = vmatprep.subr.mxu0 0.0
      %367 = vmatpush2.msra.mxu0 0.0
      %368 = vmatprep.subr.mxu0 0.0
      %369 = vmatpush2.msra.mxu0 0.0
      %370 = vmatprep.mubr.f32.mxu0 0.0
      %371 = vmatmul.mubr.f32.gmra.mxu0 %v233
      %v372 = vpop.f32.mrf.mxu0
      %v373 = vadd.f32 0.0, %v372
      %v374 = vpop.f32.mrf.mxu0
      %v375 = vadd.f32 0.0, %v374
      %376 = vdwg.mxu0
      %377 = vmatprep.subr.mxu0 0.0
      %378 = vmatpush1.msra.mxu0 0.0
      %379 = vmatprep.subr.mxu0 0.0
      %380 = vmatpush1.msra.mxu0 0.0
      %381 = vmatprep.subr.mxu0 0.0
      %382 = vmatpush1.msra.mxu0 0.0
      %383 = vmatprep.subr.mxu0 0.0
      %384 = vmatpush1.msra.mxu0 0.0
      %385 = vmatprep.subr.mxu0 0.0
      %386 = vmatpush1.msra.mxu0 0.0
      %387 = vmatprep.subr.mxu0 0.0
      %388 = vmatpush1.msra.mxu0 0.0
      %389 = vmatprep.subr.mxu0 0.0
      %390 = vmatpush1.msra.mxu0 0.0
      %391 = vmatprep.subr.mxu0 0.0
      %392 = vmatpush1.msra.mxu0 0.0
      %393 = vmatprep.subr.mxu0 0.0
      %394 = vmatpush1.msra.mxu0 0.0
      %395 = vmatprep.subr.mxu0 0.0
      %396 = vmatpush1.msra.mxu0 0.0
      %397 = vmatprep.subr.mxu0 0.0
      %398 = vmatpush1.msra.mxu0 0.0
      %399 = vmatprep.subr.mxu0 0.0
      %400 = vmatpush1.msra.mxu0 0.0
      %401 = vmatprep.subr.mxu0 0.0
      %402 = vmatpush1.msra.mxu0 0.0
      %403 = vmatprep.subr.mxu0 0.0
      %404 = vmatpush1.msra.mxu0 0.0
      %405 = vmatprep.subr.mxu0 0.0
      %406 = vmatpush1.msra.mxu0 0.0
      %407 = vmatprep.subr.mxu0 %v229
      %408 = vmatpush1.msra.mxu0 %v228
      %409 = vmatprep.subr.mxu0 0.0
      %410 = vmatpush2.msra.mxu0 0.0
      %411 = vmatprep.subr.mxu0 0.0
      %412 = vmatpush2.msra.mxu0 0.0
      %413 = vmatprep.subr.mxu0 0.0
      %414 = vmatpush2.msra.mxu0 0.0
      %415 = vmatprep.subr.mxu0 0.0
      %416 = vmatpush2.msra.mxu0 0.0
      %417 = vmatprep.subr.mxu0 0.0
      %418 = vmatpush2.msra.mxu0 0.0
      %419 = vmatprep.subr.mxu0 0.0
      %420 = vmatpush2.msra.mxu0 0.0
      %421 = vmatprep.subr.mxu0 0.0
      %422 = vmatpush2.msra.mxu0 0.0
      %423 = vmatprep.subr.mxu0 0.0
      %424 = vmatpush2.msra.mxu0 0.0
      %425 = vmatprep.subr.mxu0 0.0
      %426 = vmatpush2.msra.mxu0 0.0
      %427 = vmatprep.subr.mxu0 0.0
      %428 = vmatpush2.msra.mxu0 0.0
      %429 = vmatprep.subr.mxu0 0.0
      %430 = vmatpush2.msra.mxu0 0.0
      %431 = vmatprep.subr.mxu0 0.0
      %432 = vmatpush2.msra.mxu0 0.0
      %433 = vmatprep.subr.mxu0 0.0
      %434 = vmatpush2.msra.mxu0 0.0
      %435 = vmatprep.subr.mxu0 0.0
      %436 = vmatpush2.msra.mxu0 0.0
      %437 = vmatprep.subr.mxu0 0.0
      %438 = vmatpush2.msra.mxu0 0.0
      %439 = vmatprep.subr.mxu0 0.0
      %440 = vmatpush2.msra.mxu0 0.0
      %441 = vmatprep.mubr.f32.mxu0 0.0
      %442 = vmatmul.mubr.f32.gmra.mxu0 %v233
      %v443 = vpop.f32.mrf.mxu0
      %v444 = vadd.f32 0.0, %v443
      %v445 = vpop.f32.mrf.mxu0
      %v446 = vadd.f32 0.0, %v445
      %447 = vdwg.mxu0
      %448 = vmatprep.subr.mxu0 0.0
      %449 = vmatpush1.msra.mxu0 0.0
      %450 = vmatprep.subr.mxu0 0.0
      %451 = vmatpush1.msra.mxu0 0.0
      %452 = vmatprep.subr.mxu0 0.0
      %453 = vmatpush1.msra.mxu0 0.0
      %454 = vmatprep.subr.mxu0 0.0
      %455 = vmatpush1.msra.mxu0 0.0
      %456 = vmatprep.subr.mxu0 0.0
      %457 = vmatpush1.msra.mxu0 0.0
      %458 = vmatprep.subr.mxu0 0.0
      %459 = vmatpush1.msra.mxu0 0.0
      %460 = vmatprep.subr.mxu0 0.0
      %461 = vmatpush1.msra.mxu0 0.0
      %462 = vmatprep.subr.mxu0 0.0
      %463 = vmatpush1.msra.mxu0 0.0
      %464 = vmatprep.subr.mxu0 0.0
      %465 = vmatpush1.msra.mxu0 0.0
      %466 = vmatprep.subr.mxu0 0.0
      %467 = vmatpush1.msra.mxu0 0.0
      %468 = vmatprep.subr.mxu0 0.0
      %469 = vmatpush1.msra.mxu0 0.0
      %470 = vmatprep.subr.mxu0 0.0
      %471 = vmatpush1.msra.mxu0 0.0
      %472 = vmatprep.subr.mxu0 0.0
      %473 = vmatpush1.msra.mxu0 0.0
      %474 = vmatprep.subr.mxu0 0.0
      %475 = vmatpush1.msra.mxu0 0.0
      %476 = vmatprep.subr.mxu0 0.0
      %477 = vmatpush1.msra.mxu0 0.0
      %478 = vmatprep.subr.mxu0 0.0
      %479 = vmatpush1.msra.mxu0 %v230
      %480 = vmatprep.subr.mxu0 0.0
      %481 = vmatpush2.msra.mxu0 0.0
      %482 = vmatprep.subr.mxu0 0.0
      %483 = vmatpush2.msra.mxu0 0.0
      %484 = vmatprep.subr.mxu0 0.0
      %485 = vmatpush2.msra.mxu0 0.0
      %486 = vmatprep.subr.mxu0 0.0
      %487 = vmatpush2.msra.mxu0 0.0
      %488 = vmatprep.subr.mxu0 0.0
      %489 = vmatpush2.msra.mxu0 0.0
      %490 = vmatprep.subr.mxu0 0.0
      %491 = vmatpush2.msra.mxu0 0.0
      %492 = vmatprep.subr.mxu0 0.0
      %493 = vmatpush2.msra.mxu0 0.0
      %494 = vmatprep.subr.mxu0 0.0
      %495 = vmatpush2.msra.mxu0 0.0
      %496 = vmatprep.subr.mxu0 0.0
      %497 = vmatpush2.msra.mxu0 0.0
      %498 = vmatprep.subr.mxu0 0.0
      %499 = vmatpush2.msra.mxu0 0.0
      %500 = vmatprep.subr.mxu0 0.0
      %501 = vmatpush2.msra.mxu0 0.0
      %502 = vmatprep.subr.mxu0 0.0
      %503 = vmatpush2.msra.mxu0 0.0
      %504 = vmatprep.subr.mxu0 0.0
      %505 = vmatpush2.msra.mxu0 0.0
      %506 = vmatprep.subr.mxu0 0.0
      %507 = vmatpush2.msra.mxu0 0.0
      %508 = vmatprep.subr.mxu0 0.0
      %509 = vmatpush2.msra.mxu0 0.0
      %510 = vmatprep.subr.mxu0 0.0
      %511 = vmatpush2.msra.mxu0 0.0
      %512 = vmatprep.mubr.f32.mxu0 0.0
      %513 = vmatmul.mubr.f32.gmra.mxu0 %v233
      %v514 = vpop.f32.mrf.mxu0
      %v515 = vadd.f32 0.0, %v514
      %v516 = vpop.f32.mrf.mxu0
      %517 = vdwg.mxu0
      %v518 = vld [vmem:[%s215] sm:$0xff]
      %v519 = vld [vmem:[%s215 + $0x8] sm:$0xff]
      %v520 = vld [vmem:[%s215 + $0x10] sm:$0xff]
      %v521 = vld [vmem:[%s215 + $0x18] sm:$0xff]
      %v522 = vld [vmem:[%s215 + $0x20] sm:$0xff]
      %v523 = vld [vmem:[%s215 + $0x28] sm:$0xff]
      %v524 = vld [vmem:[%s215 + $0x30] sm:$0xff]
      %v525 = vadd.f32 %v518, %v302
      %v526 = vadd.f32 %v519, %v304
      %v527 = vadd.f32 %v520, %v373
      %v528 = vadd.f32 %v521, %v375
      %v529 = vadd.f32 %v522, %v444
      %v530 = vadd.f32 %v523, %v446
      %v531 = vadd.f32 %v524, %v515
      %v532 = vld [vmem:[%s3] sm:$0xff]
      %534 = vset.pattern.permute.xlu0 0
      %535 = vperm.xlu0 %534, %v532
      %v536 = vpop.permute.xlu0 %535
      %v538 = vadd.f32 %v525, %v536
      %v539 = vadd.f32 %v526, %v536
      %v540 = vadd.f32 %v527, %v536
      %v541 = vadd.f32 %v528, %v536
      %v542 = vadd.f32 %v529, %v536
      %v543 = vadd.f32 %v530, %v536
      %v544 = vadd.f32 %v531, %v536
      %v545 = vmul.f32 %v538, 0.5
      %v546 = vmul.f32 %v539, 0.5
      %v547 = vmul.f32 %v540, 0.5
      %v548 = vmul.f32 %v541, 0.5
      %v549 = vmul.f32 %v542, 0.5
      %v550 = vmul.f32 %v543, 0.5
      %v551 = vmul.f32 %v544, 0.5
      %v552 = vmul.f32 %v538, 0.70710677
      %v553 = vmul.f32 %v539, 0.70710677
      %v554 = vmul.f32 %v540, 0.70710677
      %v555 = vmul.f32 %v541, 0.70710677
      %v556 = vmul.f32 %v542, 0.70710677
      %v557 = vmul.f32 %v543, 0.70710677
      %v558 = vmul.f32 %v544, 0.70710677
      %vm559 = vcmp.ge.f32.partialorder %v552, 0.0
      %vm560 = vcmp.ge.f32.partialorder %v553, 0.0
      %vm561 = vcmp.ge.f32.partialorder %v554, 0.0
      %vm562 = vcmp.ge.f32.partialorder %v555, 0.0
      %vm563 = vcmp.ge.f32.partialorder %v556, 0.0
      %vm564 = vcmp.ge.f32.partialorder %v557, 0.0
      %vm565 = vcmp.ge.f32.partialorder %v558, 0.0
      %v566 = vsel %vm559, 1.0, -1.0
      %v567 = vsel %vm560, 1.0, -1.0
      %v568 = vsel %vm561, 1.0, -1.0
      %v569 = vsel %vm562, 1.0, -1.0
      %v570 = vsel %vm563, 1.0, -1.0
      %v571 = vsel %vm564, 1.0, -1.0
      %v572 = vsel %vm565, 1.0, -1.0
      %v573 = vand.u32 2147483647, %v552
      %v574 = vand.u32 2147483647, %v553
      %v575 = vand.u32 2147483647, %v554
      %v576 = vand.u32 2147483647, %v555
      %v577 = vand.u32 2147483647, %v556
      %v578 = vand.u32 2147483647, %v557
      %v579 = vand.u32 2147483647, %v558
      %v580 = vmul.f32 %v573, 0.3275911
      %v581 = vmul.f32 %v574, 0.3275911
      %v582 = vmul.f32 %v575, 0.3275911
      %v583 = vmul.f32 %v576, 0.3275911
      %v584 = vmul.f32 %v577, 0.3275911
      %v585 = vmul.f32 %v578, 0.3275911
      %v586 = vmul.f32 %v579, 0.3275911
      %v587 = vadd.f32 %v580, 1.0
      %v588 = vadd.f32 %v581, 1.0
      %v589 = vadd.f32 %v582, 1.0
      %v590 = vadd.f32 %v583, 1.0
      %v591 = vadd.f32 %v584, 1.0
      %v592 = vadd.f32 %v585, 1.0
      %v593 = vadd.f32 %v586, 1.0
      %v594 = vrcp.pop %v587
      %v595 = vmul.f32 1.0, %v594
      %v596 = vrcp.pop %v588
      %v597 = vmul.f32 1.0, %v596
      %v598 = vrcp.pop %v589
      %v599 = vmul.f32 1.0, %v598
      %v600 = vrcp.pop %v590
      %v601 = vmul.f32 1.0, %v600
      %v602 = vrcp.pop %v591
      %v603 = vmul.f32 1.0, %v602
      %v604 = vrcp.pop %v592
      %v605 = vmul.f32 1.0, %v604
      %v606 = vrcp.pop %v593
      %v607 = vmul.f32 1.0, %v606
      %v608 = vmul.f32 %v595, 1.0614054
      %v609 = vmul.f32 %v597, 1.0614054
      %v610 = vmul.f32 %v599, 1.0614054
      %v611 = vmul.f32 %v601, 1.0614054
      %v612 = vmul.f32 %v603, 1.0614054
      %v613 = vmul.f32 %v605, 1.0614054
      %v614 = vmul.f32 %v607, 1.0614054
      %v615 = vadd.f32 %v608, -1.4531521
      %v616 = vadd.f32 %v609, -1.4531521
      %v617 = vadd.f32 %v610, -1.4531521
      %v618 = vadd.f32 %v611, -1.4531521
      %v619 = vadd.f32 %v612, -1.4531521
      %v620 = vadd.f32 %v613, -1.4531521
      %v621 = vadd.f32 %v614, -1.4531521
      %v622 = vmul.f32 %v595, %v615
      %v623 = vmul.f32 %v597, %v616
      %v624 = vmul.f32 %v599, %v617
      %v625 = vmul.f32 %v601, %v618
      %v626 = vmul.f32 %v603, %v619
      %v627 = vmul.f32 %v605, %v620
      %v628 = vmul.f32 %v607, %v621
      %v629 = vadd.f32 %v622, 1.4214138
      %v630 = vadd.f32 %v623, 1.4214138
      %v631 = vadd.f32 %v624, 1.4214138
      %v632 = vadd.f32 %v625, 1.4214138
      %v633 = vadd.f32 %v626, 1.4214138
      %v634 = vadd.f32 %v627, 1.4214138
      %v635 = vadd.f32 %v628, 1.4214138
      %v636 = vmul.f32 %v595, %v629
      %v637 = vmul.f32 %v597, %v630
      %v638 = vmul.f32 %v599, %v631
      %v639 = vmul.f32 %v601, %v632
      %v640 = vmul.f32 %v603, %v633
      %v641 = vmul.f32 %v605, %v634
      %v642 = vmul.f32 %v607, %v635
      %v643 = vadd.f32 %v636, -0.28449672
      %v644 = vadd.f32 %v637, -0.28449672
      %v645 = vadd.f32 %v638, -0.28449672
      %v646 = vadd.f32 %v639, -0.28449672
      %v647 = vadd.f32 %v640, -0.28449672
      %v648 = vadd.f32 %v641, -0.28449672
      %v649 = vadd.f32 %v642, -0.28449672
      %v650 = vmul.f32 %v595, %v643
      %v651 = vmul.f32 %v597, %v644
      %v652 = vmul.f32 %v599, %v645
      %v653 = vmul.f32 %v601, %v646
      %v654 = vmul.f32 %v603, %v647
      %v655 = vmul.f32 %v605, %v648
      %v656 = vmul.f32 %v607, %v649
      %v657 = vadd.f32 %v650, 0.2548296
      %v658 = vadd.f32 %v651, 0.2548296
      %v659 = vadd.f32 %v652, 0.2548296
      %v660 = vadd.f32 %v653, 0.2548296
      %v661 = vadd.f32 %v654, 0.2548296
      %v662 = vadd.f32 %v655, 0.2548296
      %v663 = vadd.f32 %v656, 0.2548296
      %v664 = vmul.f32 %v595, %v657
      %v665 = vmul.f32 %v597, %v658
      %v666 = vmul.f32 %v599, %v659
      %v667 = vmul.f32 %v601, %v660
      %v668 = vmul.f32 %v603, %v661
      %v669 = vmul.f32 %v605, %v662
      %v670 = vmul.f32 %v607, %v663
      %v671 = vsub.f32 0.0, %v573
      %v672 = vsub.f32 0.0, %v574
      %v673 = vsub.f32 0.0, %v575
      %v674 = vsub.f32 0.0, %v576
      %v675 = vsub.f32 0.0, %v577
      %v676 = vsub.f32 0.0, %v578
      %v677 = vsub.f32 0.0, %v579
      %v678 = vmul.f32 %v671, %v573
      %v679 = vmul.f32 %v672, %v574
      %v680 = vmul.f32 %v673, %v575
      %v681 = vmul.f32 %v674, %v576
      %v682 = vmul.f32 %v675, %v577
      %v683 = vmul.f32 %v676, %v578
      %v684 = vmul.f32 %v677, %v579
      %v685 = vmul.f32 %v678, 1.442695
      %v686 = vpow.pop %v685
      %v687 = vmul.f32 %v679, 1.442695
      %v688 = vpow.pop %v687
      %v689 = vmul.f32 %v680, 1.442695
      %v690 = vpow.pop %v689
      %v691 = vmul.f32 %v681, 1.442695
      %v692 = vpow.pop %v691
      %v693 = vmul.f32 %v682, 1.442695
      %v694 = vpow.pop %v693
      %v695 = vmul.f32 %v683, 1.442695
      %v696 = vpow.pop %v695
      %v697 = vmul.f32 %v684, 1.442695
      %v698 = vpow.pop %v697
      %v699 = vmul.f32 %v664, %v686
      %v700 = vmul.f32 %v665, %v688
      %v701 = vmul.f32 %v666, %v690
      %v702 = vmul.f32 %v667, %v692
      %v703 = vmul.f32 %v668, %v694
      %v704 = vmul.f32 %v669, %v696
      %v705 = vmul.f32 %v670, %v698
      %v706 = vsub.f32 1.0, %v699
      %v707 = vsub.f32 1.0, %v700
      %v708 = vsub.f32 1.0, %v701
      %v709 = vsub.f32 1.0, %v702
      %v710 = vsub.f32 1.0, %v703
      %v711 = vsub.f32 1.0, %v704
      %v712 = vsub.f32 1.0, %v705
      %v713 = vmul.f32 %v566, %v706
      %v714 = vmul.f32 %v567, %v707
      %v715 = vmul.f32 %v568, %v708
      %v716 = vmul.f32 %v569, %v709
      %v717 = vmul.f32 %v570, %v710
      %v718 = vmul.f32 %v571, %v711
      %v719 = vmul.f32 %v572, %v712
      %v720 = vadd.f32 %v713, 1.0
      %v721 = vadd.f32 %v714, 1.0
      %v722 = vadd.f32 %v715, 1.0
      %v723 = vadd.f32 %v716, 1.0
      %v724 = vadd.f32 %v717, 1.0
      %v725 = vadd.f32 %v718, 1.0
      %v726 = vadd.f32 %v719, 1.0
      %v727 = vmul.f32 %v545, %v720
      %v728 = vmul.f32 %v546, %v721
      %v729 = vmul.f32 %v547, %v722
      %v730 = vmul.f32 %v548, %v723
      %v731 = vmul.f32 %v549, %v724
      %v732 = vmul.f32 %v550, %v725
      %v733 = vmul.f32 %v551, %v726
      %734 = vst [vmem:[%s221] sm:$0xff] %v727
      %735 = vst [vmem:[%s221 + $0x8] sm:$0xff] %v728
      %736 = vst [vmem:[%s221 + $0x10] sm:$0xff] %v729
      %737 = vst [vmem:[%s221 + $0x18] sm:$0xff] %v730
      %738 = vst [vmem:[%s221 + $0x20] sm:$0xff] %v731
      %739 = vst [vmem:[%s221 + $0x28] sm:$0xff] %v732
      %740 = vst [vmem:[%s221 + $0x30] sm:$0xff] %v733
      %s741 = smul.u32 7, %s15
      %p742 = scmp.lt.s32.totalorder %s741, 13
      %s743 = scalar_select %p742, %s741, 13
      %s744 = smul.addr %s743, 8
      %s745 = scalar_lea.vmem %s4, %s744
      // Predicated region
      $region37: #{fno3d_forward.12} parent=35 // pred_check
        %p746 = pneg %p127
      $region38: #{fno3d_forward.12} parent=35 // pred_check_branch
        %748 = sbr.rel (%p746) target = $region40
      $region39: #{fno3d_forward.12} parent=35 // pred_region
        %s749 = smul.u32 7, %s15
      $region40: #{fno3d_forward.12} parent=35 // pred_fallthru
        _
    $region36: #{fno3d_forward.12} parent=5 // pred_fallthru
      _
    %p750 = scmp.le.s32.totalorder 2, %s10
    // Predicated region
    $region41: #{fno3d_forward.12} parent=5 // pred_check
      %p751 = pneg %p750
    $region42: #{fno3d_forward.12} parent=5 // pred_check_branch
      %753 = sbr.rel (%p751) target = $region44
    $region43: #{fno3d_forward.12} parent=5 // pred_region
      %s754 = ssub.s32 %s10, 2
      // Predicated region
      $region45: #{fno3d_forward.12} parent=43 // pred_check
        %p755 = pneg %p133
      $region46: #{fno3d_forward.12} parent=43 // pred_check_branch
        %757 = sbr.rel (%p755) target = $region48
      $region47: #{fno3d_forward.12} parent=43 // pred_region
        %s758 = smul.u32 7, %s16
        %p759 = scmp.lt.s32.totalorder %s758, 13
        %s760 = scalar_select %p759, %s758, 13
        %s761 = smul.addr %s760, 8
        %s762 = scalar_lea.vmem %s4, %s761
      $region48: #{fno3d_forward.12} parent=43 // pred_fallthru
        _
    $region44: #{fno3d_forward.12} parent=5 // pred_fallthru
      _
  $region6: #{fno3d_forward.12} parent=0 // loop_footer
    %s14 = sadd.s32 1, %s10
  $region7: #{fno3d_forward.12} parent=0 // loop_footer_branch
    %9 = sbr.rel target = $region3
  $region8: #{fno3d_forward.12} parent=0 // loop_exit
    _

// kernel: fno3d_forward.18
$region0: #{fno3d_forward.18}
  #allocation0 [shape = 'u32[]', space=smem, size = 0x4, offset = 0x4, fixed_abs, tag = 'smem constant byte address 0x4 - core index']
  #allocation1 [shape = 'u32[144,128]{1,0:T(1,128)}', space=vmem, size = 0x12000, scoped, tag = 'internal scratch']
  %s0 = inlined_call_operand.vmem [shape: f32[8,1792], index: 0, kind: input, shape index: {}]
  %s1 = inlined_call_operand.vmem [shape: f32[8,1792], index: 1, kind: input, shape index: {}]
  %s2 = inlined_call_operand.vmem [shape: f32[8,8], index: 2, kind: input, shape index: {}]
  %s3 = inlined_call_operand.vmem [shape: f32[8,1], index: 3, kind: input, shape index: {}]
  %s4 = inlined_call_operand.vmem [shape: f32[8,1792], index: 4, kind: output, shape index: {}]
  %s5 = sld [smem:[#allocation0]]
  $region49: #{fno3d_forward.18} parent=0
    _
  %s7 = ssub.s32 1, %s5
  %s8 = scalar_select 0, %s7, %s5
  loop: start=0, step=1, limit=4
  $region2: #{fno3d_forward.18} parent=0 // loop_pre_header
    _
  $region3: #{fno3d_forward.18} parent=0 // loop_header
    %s10 = sphi 0, %s14
    %p11 = scmp.ge.s32.totalorder %s10, 4
    %s20 = sphi 0, %s22
    %s23 = sphi 0, %s20
    %s24 = sphi 0, %s23
    %s40 = sphi 0, %s24
    %s46 = sphi 0, %s48
    %s49 = sphi 0, %s46
    %s50 = sphi 0, %s49
    %s66 = sphi 0, %s50
    %s70 = sphi 0, %s70
    %s72 = sphi 0, %s70
    %s73 = sphi 0, %s72
    %s87 = sphi 0, %s73
    %s91 = sphi 0, %s91
    %s93 = sphi 0, %s91
    %s94 = sphi 0, %s93
    %s108 = sphi 0, %s94
    %s114 = sphi 0, %s116
    %s117 = sphi 0, %s114
    %s118 = sphi 0, %s117
    %s134 = sphi 0, %s118
  $region4: #{fno3d_forward.18} parent=0 // loop_header_branch
    %13 = sbr.rel (%p11) target = $region8
  $region5: #{fno3d_forward.18} parent=0 // loop_body
    %s15 = ssub.s32 %s10, 1
    %s16 = ssub.s32 %s10, 2
    %s17 = sadd.s32 %s10, 1
    %s18 = ssub.s32 %s10, %s17
    %p19 = scmp.eq.s32.totalorder %s18, 0
    %s21 = sadd.s32 %s20, 1
    %s22 = scalar_select %p19, %s20, %s21
    %p25 = pneg %p19
    %p26 = scmp.eq.s32.totalorder %s10, 1
    %p27 = por %p25, %p26
    %p28 = scmp.ne.s32.totalorder %s20, %s23
    %p29 = scmp.eq.s32.totalorder %s10, 0
    %p30 = por %p28, %p29
    %p31 = scmp.ne.s32.totalorder %s20, %s23
    %p32 = scmp.eq.s32.totalorder %s15, 1
    %p33 = por %p31, %p32
    %p34 = scmp.ne.s32.totalorder %s23, %s24
    %p35 = scmp.eq.s32.totalorder %s15, 0
    %p36 = por %p34, %p35
    %p37 = scmp.ne.s32.totalorder %s23, %s24
    %p38 = scmp.eq.s32.totalorder %s16, 1
    %p39 = por %p37, %p38
    %p41 = scmp.ne.s32.totalorder %s24, %s40
    %p42 = scmp.eq.s32.totalorder %s16, 0
    %p43 = por %p41, %p42
    %s44 = ssub.s32 %s10, %s17
    %p45 = scmp.eq.s32.totalorder %s44, 0
    %s47 = sadd.s32 %s46, 1
    %s48 = scalar_select %p45, %s46, %s47
    %p51 = pneg %p45
    %p52 = scmp.eq.s32.totalorder %s10, 1
    %p53 = por %p51, %p52
    %p54 = scmp.ne.s32.totalorder %s46, %s49
    %p55 = scmp.eq.s32.totalorder %s10, 0
    %p56 = por %p54, %p55
    %p57 = scmp.ne.s32.totalorder %s46, %s49
    %p58 = scmp.eq.s32.totalorder %s15, 1
    %p59 = por %p57, %p58
    %p60 = scmp.ne.s32.totalorder %s49, %s50
    %p61 = scmp.eq.s32.totalorder %s15, 0
    %p62 = por %p60, %p61
    %p63 = scmp.ne.s32.totalorder %s49, %s50
    %p64 = scmp.eq.s32.totalorder %s16, 1
    %p65 = por %p63, %p64
    %p67 = scmp.ne.s32.totalorder %s50, %s66
    %p68 = scmp.eq.s32.totalorder %s16, 0
    %p69 = por %p67, %p68
    %s71 = sadd.s32 %s70, 1
    %p74 = scmp.eq.s32.totalorder %s10, 1
    %p75 = scmp.ne.s32.totalorder %s70, %s72
    %p76 = scmp.eq.s32.totalorder %s10, 0
    %p77 = por %p75, %p76
    %p78 = scmp.ne.s32.totalorder %s70, %s72
    %p79 = scmp.eq.s32.totalorder %s15, 1
    %p80 = por %p78, %p79
    %p81 = scmp.ne.s32.totalorder %s72, %s73
    %p82 = scmp.eq.s32.totalorder %s15, 0
    %p83 = por %p81, %p82
    %p84 = scmp.ne.s32.totalorder %s72, %s73
    %p85 = scmp.eq.s32.totalorder %s16, 1
    %p86 = por %p84, %p85
    %p88 = scmp.ne.s32.totalorder %s73, %s87
    %p89 = scmp.eq.s32.totalorder %s16, 0
    %p90 = por %p88, %p89
    %s92 = sadd.s32 %s91, 1
    %p95 = scmp.eq.s32.totalorder %s10, 1
    %p96 = scmp.ne.s32.totalorder %s91, %s93
    %p97 = scmp.eq.s32.totalorder %s10, 0
    %p98 = por %p96, %p97
    %p99 = scmp.ne.s32.totalorder %s91, %s93
    %p100 = scmp.eq.s32.totalorder %s15, 1
    %p101 = por %p99, %p100
    %p102 = scmp.ne.s32.totalorder %s93, %s94
    %p103 = scmp.eq.s32.totalorder %s15, 0
    %p104 = por %p102, %p103
    %p105 = scmp.ne.s32.totalorder %s93, %s94
    %p106 = scmp.eq.s32.totalorder %s16, 1
    %p107 = por %p105, %p106
    %p109 = scmp.ne.s32.totalorder %s94, %s108
    %p110 = scmp.eq.s32.totalorder %s16, 0
    %p111 = por %p109, %p110
    %s112 = ssub.s32 %s10, %s17
    %p113 = scmp.eq.s32.totalorder %s112, 0
    %s115 = sadd.s32 %s114, 1
    %s116 = scalar_select %p113, %s114, %s115
    %p119 = pneg %p113
    %p120 = scmp.eq.s32.totalorder %s10, 1
    %p121 = por %p119, %p120
    %p122 = scmp.ne.s32.totalorder %s114, %s117
    %p123 = scmp.eq.s32.totalorder %s10, 0
    %p124 = por %p122, %p123
    %p125 = scmp.ne.s32.totalorder %s114, %s117
    %p126 = scmp.eq.s32.totalorder %s15, 1
    %p127 = por %p125, %p126
    %p128 = scmp.ne.s32.totalorder %s117, %s118
    %p129 = scmp.eq.s32.totalorder %s15, 0
    %p130 = por %p128, %p129
    %p131 = scmp.ne.s32.totalorder %s117, %s118
    %p132 = scmp.eq.s32.totalorder %s16, 1
    %p133 = por %p131, %p132
    %p135 = scmp.ne.s32.totalorder %s118, %s134
    %p136 = scmp.eq.s32.totalorder %s16, 0
    %p137 = por %p135, %p136
    %p138 = scmp.le.s32.totalorder 1, %s10
    %p139 = scmp.lt.s32.totalorder %s10, 3
    %p140 = pnand %p138, %p139
    %p141 = pneg %p140
    // Predicated region
    $region9: #{fno3d_forward.18} parent=5 // pred_check
      _
    $region10: #{fno3d_forward.18} parent=5 // pred_check_branch
      %143 = sbr.rel (%p140) target = $region12
    $region11: #{fno3d_forward.18} parent=5 // pred_region
      %s144 = ssub.s32 %s10, 1
      // Predicated region
      $region13: #{fno3d_forward.18} parent=11 // pred_check
        %p145 = pneg %p83
      $region14: #{fno3d_forward.18} parent=11 // pred_check_branch
        %147 = sbr.rel (%p145) target = $region16
      $region15: #{fno3d_forward.18} parent=11 // pred_region
        _
      $region16: #{fno3d_forward.18} parent=11 // pred_fallthru
        _
      // Predicated region
      $region17: #{fno3d_forward.18} parent=11 // pred_check
        %p148 = pneg %p104
      $region18: #{fno3d_forward.18} parent=11 // pred_check_branch
        %150 = sbr.rel (%p148) target = $region20
      $region19: #{fno3d_forward.18} parent=11 // pred_region
        _
      $region20: #{fno3d_forward.18} parent=11 // pred_fallthru
        _
    $region12: #{fno3d_forward.18} parent=5 // pred_fallthru
      _
    %p151 = scmp.lt.s32.totalorder %s10, 2
    // Predicated region
    $region21: #{fno3d_forward.18} parent=5 // pred_check
      %p152 = pneg %p151
    $region22: #{fno3d_forward.18} parent=5 // pred_check_branch
      %154 = sbr.rel (%p152) target = $region24
    $region23: #{fno3d_forward.18} parent=5 // pred_region
      // Predicated region
      $region25: #{fno3d_forward.18} parent=23 // pred_check
        %p155 = pneg %p30
      $region26: #{fno3d_forward.18} parent=23 // pred_check_branch
        %157 = sbr.rel (%p155) target = $region28
      $region27: #{fno3d_forward.18} parent=23 // pred_region
        %s158 = smul.u32 7, %s10
        %p159 = scmp.lt.s32.totalorder %s158, 13
        %s160 = scalar_select %p159, %s158, 13
        %s161 = smul.addr %s160, 8
        %s162 = scalar_lea.vmem %s0, %s161
        %s163 = smul.u32 7, %s10
      $region28: #{fno3d_forward.18} parent=23 // pred_fallthru
        _
      // Predicated region
      $region29: #{fno3d_forward.18} parent=23 // pred_check
        %p164 = pneg %p56
      $region30: #{fno3d_forward.18} parent=23 // pred_check_branch
        %166 = sbr.rel (%p164) target = $region32
      $region31: #{fno3d_forward.18} parent=23 // pred_region
        %s167 = smul.u32 7, %s10
        %p168 = scmp.lt.s32.totalorder %s167, 13
        %s169 = scalar_select %p168, %s167, 13
        %s170 = smul.addr %s169, 8
        %s171 = scalar_lea.vmem %s1, %s170
        %s172 = smul.u32 7, %s10
      $region32: #{fno3d_forward.18} parent=23 // pred_fallthru
        _
    $region24: #{fno3d_forward.18} parent=5 // pred_fallthru
      _
    %p173 = scmp.le.s32.totalorder 1, %s10
    %p174 = scmp.lt.s32.totalorder %s10, 3
    %p175 = pnand %p173, %p174
    %p176 = pneg %p175
    // Predicated region
    $region33: #{fno3d_forward.18} parent=5 // pred_check
      _
    $region34: #{fno3d_forward.18} parent=5 // pred_check_branch
      %178 = sbr.rel (%p175) target = $region36
    $region35: #{fno3d_forward.18} parent=5 // pred_region
      %s179 = ssub.s32 %s10, 1
      %s180 = smul.u32 7, %s15
      %p181 = scmp.lt.s32.totalorder %s180, 13
      %s182 = scalar_select %p181, %s180, 13
      %s183 = smul.addr %s182, 8
      %s184 = scalar_lea.vmem %s0, %s183
      %p185 = pneg %p36
      %p186 = pneg %p33
      %s187 = smul.u32 7, %s15
      %p188 = scmp.lt.s32.totalorder %s187, 13
      %s189 = scalar_select %p188, %s187, 13
      %s190 = smul.addr %s189, 8
      %s191 = scalar_lea.vmem %s1, %s190
      %p192 = pneg %p62
      %p193 = pneg %p59
      %p194 = pneg %p83
      %p195 = pneg %p80
      %p196 = pneg %p104
      %p197 = pneg %p101
      %p198 = pneg %p130
      %p199 = pneg %p127
      %s200 = smul.u32 7, %s15
      %p201 = scmp.lt.s32.totalorder %s200, 13
      %s202 = scalar_select %p201, %s200, 13
      %s203 = smul.addr %s202, 8
      %s204 = scalar_lea.vmem %s4, %s203
      %s205 = smul.u32 7, %s15
      %p206 = scmp.lt.s32.totalorder %s205, 13
      %s207 = scalar_select %p206, %s205, 13
      %s208 = smul.addr %s207, 8
      %s209 = scalar_lea.vmem %s0, %s208
      %s210 = smul.u32 7, %s15
      %s211 = smul.u32 7, %s15
      %p212 = scmp.lt.s32.totalorder %s211, 13
      %s213 = scalar_select %p212, %s211, 13
      %s214 = smul.addr %s213, 8
      %s215 = scalar_lea.vmem %s1, %s214
      %s216 = smul.u32 7, %s15
      %s217 = smul.u32 7, %s15
      %p218 = scmp.lt.s32.totalorder %s217, 13
      %s219 = scalar_select %p218, %s217, 13
      %s220 = smul.addr %s219, 8
      %s221 = scalar_lea.vmem %s4, %s220
      %s222 = smul.u32 7, %s15
      %v223 = vld [vmem:[%s2] sm:$0xff]
      %v224 = vld [vmem:[%s209] sm:$0xff]
      %v225 = vld [vmem:[%s209 + $0x8] sm:$0xff]
      %v226 = vld [vmem:[%s209 + $0x10] sm:$0xff]
      %v227 = vld [vmem:[%s209 + $0x18] sm:$0xff]
      %v228 = vld [vmem:[%s209 + $0x20] sm:$0xff]
      %v229 = vld [vmem:[%s209 + $0x28] sm:$0xff]
      %v230 = vld [vmem:[%s209 + $0x30] sm:$0xff]
      %vm231 = vcmask 64512
      %v233 = vsel %vm231, %v223, 0
      %235 = vmatprep.subr.mxu0 0.0
      %236 = vmatpush1.msra.mxu0 0.0
      %237 = vmatprep.subr.mxu0 0.0
      %238 = vmatpush1.msra.mxu0 0.0
      %239 = vmatprep.subr.mxu0 0.0
      %240 = vmatpush1.msra.mxu0 0.0
      %241 = vmatprep.subr.mxu0 0.0
      %242 = vmatpush1.msra.mxu0 0.0
      %243 = vmatprep.subr.mxu0 0.0
      %244 = vmatpush1.msra.mxu0 0.0
      %245 = vmatprep.subr.mxu0 0.0
      %246 = vmatpush1.msra.mxu0 0.0
      %247 = vmatprep.subr.mxu0 0.0
      %248 = vmatpush1.msra.mxu0 0.0
      %249 = vmatprep.subr.mxu0 0.0
      %250 = vmatpush1.msra.mxu0 0.0
      %251 = vmatprep.subr.mxu0 0.0
      %252 = vmatpush1.msra.mxu0 0.0
      %253 = vmatprep.subr.mxu0 0.0
      %254 = vmatpush1.msra.mxu0 0.0
      %255 = vmatprep.subr.mxu0 0.0
      %256 = vmatpush1.msra.mxu0 0.0
      %257 = vmatprep.subr.mxu0 0.0
      %258 = vmatpush1.msra.mxu0 0.0
      %259 = vmatprep.subr.mxu0 0.0
      %260 = vmatpush1.msra.mxu0 0.0
      %261 = vmatprep.subr.mxu0 0.0
      %262 = vmatpush1.msra.mxu0 0.0
      %263 = vmatprep.subr.mxu0 0.0
      %264 = vmatpush1.msra.mxu0 0.0
      %265 = vmatprep.subr.mxu0 %v225
      %266 = vmatpush1.msra.mxu0 %v224
      %267 = vmatprep.subr.mxu0 0.0
      %268 = vmatpush2.msra.mxu0 0.0
      %269 = vmatprep.subr.mxu0 0.0
      %270 = vmatpush2.msra.mxu0 0.0
      %271 = vmatprep.subr.mxu0 0.0
      %272 = vmatpush2.msra.mxu0 0.0
      %273 = vmatprep.subr.mxu0 0.0
      %274 = vmatpush2.msra.mxu0 0.0
      %275 = vmatprep.subr.mxu0 0.0
      %276 = vmatpush2.msra.mxu0 0.0
      %277 = vmatprep.subr.mxu0 0.0
      %278 = vmatpush2.msra.mxu0 0.0
      %279 = vmatprep.subr.mxu0 0.0
      %280 = vmatpush2.msra.mxu0 0.0
      %281 = vmatprep.subr.mxu0 0.0
      %282 = vmatpush2.msra.mxu0 0.0
      %283 = vmatprep.subr.mxu0 0.0
      %284 = vmatpush2.msra.mxu0 0.0
      %285 = vmatprep.subr.mxu0 0.0
      %286 = vmatpush2.msra.mxu0 0.0
      %287 = vmatprep.subr.mxu0 0.0
      %288 = vmatpush2.msra.mxu0 0.0
      %289 = vmatprep.subr.mxu0 0.0
      %290 = vmatpush2.msra.mxu0 0.0
      %291 = vmatprep.subr.mxu0 0.0
      %292 = vmatpush2.msra.mxu0 0.0
      %293 = vmatprep.subr.mxu0 0.0
      %294 = vmatpush2.msra.mxu0 0.0
      %295 = vmatprep.subr.mxu0 0.0
      %296 = vmatpush2.msra.mxu0 0.0
      %297 = vmatprep.subr.mxu0 0.0
      %298 = vmatpush2.msra.mxu0 0.0
      %299 = vmatprep.mubr.f32.mxu0 0.0
      %300 = vmatmul.mubr.f32.gmra.mxu0 %v233
      %v301 = vpop.f32.mrf.mxu0
      %v302 = vadd.f32 0.0, %v301
      %v303 = vpop.f32.mrf.mxu0
      %v304 = vadd.f32 0.0, %v303
      %305 = vdwg.mxu0
      %306 = vmatprep.subr.mxu0 0.0
      %307 = vmatpush1.msra.mxu0 0.0
      %308 = vmatprep.subr.mxu0 0.0
      %309 = vmatpush1.msra.mxu0 0.0
      %310 = vmatprep.subr.mxu0 0.0
      %311 = vmatpush1.msra.mxu0 0.0
      %312 = vmatprep.subr.mxu0 0.0
      %313 = vmatpush1.msra.mxu0 0.0
      %314 = vmatprep.subr.mxu0 0.0
      %315 = vmatpush1.msra.mxu0 0.0
      %316 = vmatprep.subr.mxu0 0.0
      %317 = vmatpush1.msra.mxu0 0.0
      %318 = vmatprep.subr.mxu0 0.0
      %319 = vmatpush1.msra.mxu0 0.0
      %320 = vmatprep.subr.mxu0 0.0
      %321 = vmatpush1.msra.mxu0 0.0
      %322 = vmatprep.subr.mxu0 0.0
      %323 = vmatpush1.msra.mxu0 0.0
      %324 = vmatprep.subr.mxu0 0.0
      %325 = vmatpush1.msra.mxu0 0.0
      %326 = vmatprep.subr.mxu0 0.0
      %327 = vmatpush1.msra.mxu0 0.0
      %328 = vmatprep.subr.mxu0 0.0
      %329 = vmatpush1.msra.mxu0 0.0
      %330 = vmatprep.subr.mxu0 0.0
      %331 = vmatpush1.msra.mxu0 0.0
      %332 = vmatprep.subr.mxu0 0.0
      %333 = vmatpush1.msra.mxu0 0.0
      %334 = vmatprep.subr.mxu0 0.0
      %335 = vmatpush1.msra.mxu0 0.0
      %336 = vmatprep.subr.mxu0 %v227
      %337 = vmatpush1.msra.mxu0 %v226
      %338 = vmatprep.subr.mxu0 0.0
      %339 = vmatpush2.msra.mxu0 0.0
      %340 = vmatprep.subr.mxu0 0.0
      %341 = vmatpush2.msra.mxu0 0.0
      %342 = vmatprep.subr.mxu0 0.0
      %343 = vmatpush2.msra.mxu0 0.0
      %344 = vmatprep.subr.mxu0 0.0
      %345 = vmatpush2.msra.mxu0 0.0
      %346 = vmatprep.subr.mxu0 0.0
      %347 = vmatpush2.msra.mxu0 0.0
      %348 = vmatprep.subr.mxu0 0.0
      %349 = vmatpush2.msra.mxu0 0.0
      %350 = vmatprep.subr.mxu0 0.0
      %351 = vmatpush2.msra.mxu0 0.0
      %352 = vmatprep.subr.mxu0 0.0
      %353 = vmatpush2.msra.mxu0 0.0
      %354 = vmatprep.subr.mxu0 0.0
      %355 = vmatpush2.msra.mxu0 0.0
      %356 = vmatprep.subr.mxu0 0.0
      %357 = vmatpush2.msra.mxu0 0.0
      %358 = vmatprep.subr.mxu0 0.0
      %359 = vmatpush2.msra.mxu0 0.0
      %360 = vmatprep.subr.mxu0 0.0
      %361 = vmatpush2.msra.mxu0 0.0
      %362 = vmatprep.subr.mxu0 0.0
      %363 = vmatpush2.msra.mxu0 0.0
      %364 = vmatprep.subr.mxu0 0.0
      %365 = vmatpush2.msra.mxu0 0.0
      %366 = vmatprep.subr.mxu0 0.0
      %367 = vmatpush2.msra.mxu0 0.0
      %368 = vmatprep.subr.mxu0 0.0
      %369 = vmatpush2.msra.mxu0 0.0
      %370 = vmatprep.mubr.f32.mxu0 0.0
      %371 = vmatmul.mubr.f32.gmra.mxu0 %v233
      %v372 = vpop.f32.mrf.mxu0
      %v373 = vadd.f32 0.0, %v372
      %v374 = vpop.f32.mrf.mxu0
      %v375 = vadd.f32 0.0, %v374
      %376 = vdwg.mxu0
      %377 = vmatprep.subr.mxu0 0.0
      %378 = vmatpush1.msra.mxu0 0.0
      %379 = vmatprep.subr.mxu0 0.0
      %380 = vmatpush1.msra.mxu0 0.0
      %381 = vmatprep.subr.mxu0 0.0
      %382 = vmatpush1.msra.mxu0 0.0
      %383 = vmatprep.subr.mxu0 0.0
      %384 = vmatpush1.msra.mxu0 0.0
      %385 = vmatprep.subr.mxu0 0.0
      %386 = vmatpush1.msra.mxu0 0.0
      %387 = vmatprep.subr.mxu0 0.0
      %388 = vmatpush1.msra.mxu0 0.0
      %389 = vmatprep.subr.mxu0 0.0
      %390 = vmatpush1.msra.mxu0 0.0
      %391 = vmatprep.subr.mxu0 0.0
      %392 = vmatpush1.msra.mxu0 0.0
      %393 = vmatprep.subr.mxu0 0.0
      %394 = vmatpush1.msra.mxu0 0.0
      %395 = vmatprep.subr.mxu0 0.0
      %396 = vmatpush1.msra.mxu0 0.0
      %397 = vmatprep.subr.mxu0 0.0
      %398 = vmatpush1.msra.mxu0 0.0
      %399 = vmatprep.subr.mxu0 0.0
      %400 = vmatpush1.msra.mxu0 0.0
      %401 = vmatprep.subr.mxu0 0.0
      %402 = vmatpush1.msra.mxu0 0.0
      %403 = vmatprep.subr.mxu0 0.0
      %404 = vmatpush1.msra.mxu0 0.0
      %405 = vmatprep.subr.mxu0 0.0
      %406 = vmatpush1.msra.mxu0 0.0
      %407 = vmatprep.subr.mxu0 %v229
      %408 = vmatpush1.msra.mxu0 %v228
      %409 = vmatprep.subr.mxu0 0.0
      %410 = vmatpush2.msra.mxu0 0.0
      %411 = vmatprep.subr.mxu0 0.0
      %412 = vmatpush2.msra.mxu0 0.0
      %413 = vmatprep.subr.mxu0 0.0
      %414 = vmatpush2.msra.mxu0 0.0
      %415 = vmatprep.subr.mxu0 0.0
      %416 = vmatpush2.msra.mxu0 0.0
      %417 = vmatprep.subr.mxu0 0.0
      %418 = vmatpush2.msra.mxu0 0.0
      %419 = vmatprep.subr.mxu0 0.0
      %420 = vmatpush2.msra.mxu0 0.0
      %421 = vmatprep.subr.mxu0 0.0
      %422 = vmatpush2.msra.mxu0 0.0
      %423 = vmatprep.subr.mxu0 0.0
      %424 = vmatpush2.msra.mxu0 0.0
      %425 = vmatprep.subr.mxu0 0.0
      %426 = vmatpush2.msra.mxu0 0.0
      %427 = vmatprep.subr.mxu0 0.0
      %428 = vmatpush2.msra.mxu0 0.0
      %429 = vmatprep.subr.mxu0 0.0
      %430 = vmatpush2.msra.mxu0 0.0
      %431 = vmatprep.subr.mxu0 0.0
      %432 = vmatpush2.msra.mxu0 0.0
      %433 = vmatprep.subr.mxu0 0.0
      %434 = vmatpush2.msra.mxu0 0.0
      %435 = vmatprep.subr.mxu0 0.0
      %436 = vmatpush2.msra.mxu0 0.0
      %437 = vmatprep.subr.mxu0 0.0
      %438 = vmatpush2.msra.mxu0 0.0
      %439 = vmatprep.subr.mxu0 0.0
      %440 = vmatpush2.msra.mxu0 0.0
      %441 = vmatprep.mubr.f32.mxu0 0.0
      %442 = vmatmul.mubr.f32.gmra.mxu0 %v233
      %v443 = vpop.f32.mrf.mxu0
      %v444 = vadd.f32 0.0, %v443
      %v445 = vpop.f32.mrf.mxu0
      %v446 = vadd.f32 0.0, %v445
      %447 = vdwg.mxu0
      %448 = vmatprep.subr.mxu0 0.0
      %449 = vmatpush1.msra.mxu0 0.0
      %450 = vmatprep.subr.mxu0 0.0
      %451 = vmatpush1.msra.mxu0 0.0
      %452 = vmatprep.subr.mxu0 0.0
      %453 = vmatpush1.msra.mxu0 0.0
      %454 = vmatprep.subr.mxu0 0.0
      %455 = vmatpush1.msra.mxu0 0.0
      %456 = vmatprep.subr.mxu0 0.0
      %457 = vmatpush1.msra.mxu0 0.0
      %458 = vmatprep.subr.mxu0 0.0
      %459 = vmatpush1.msra.mxu0 0.0
      %460 = vmatprep.subr.mxu0 0.0
      %461 = vmatpush1.msra.mxu0 0.0
      %462 = vmatprep.subr.mxu0 0.0
      %463 = vmatpush1.msra.mxu0 0.0
      %464 = vmatprep.subr.mxu0 0.0
      %465 = vmatpush1.msra.mxu0 0.0
      %466 = vmatprep.subr.mxu0 0.0
      %467 = vmatpush1.msra.mxu0 0.0
      %468 = vmatprep.subr.mxu0 0.0
      %469 = vmatpush1.msra.mxu0 0.0
      %470 = vmatprep.subr.mxu0 0.0
      %471 = vmatpush1.msra.mxu0 0.0
      %472 = vmatprep.subr.mxu0 0.0
      %473 = vmatpush1.msra.mxu0 0.0
      %474 = vmatprep.subr.mxu0 0.0
      %475 = vmatpush1.msra.mxu0 0.0
      %476 = vmatprep.subr.mxu0 0.0
      %477 = vmatpush1.msra.mxu0 0.0
      %478 = vmatprep.subr.mxu0 0.0
      %479 = vmatpush1.msra.mxu0 %v230
      %480 = vmatprep.subr.mxu0 0.0
      %481 = vmatpush2.msra.mxu0 0.0
      %482 = vmatprep.subr.mxu0 0.0
      %483 = vmatpush2.msra.mxu0 0.0
      %484 = vmatprep.subr.mxu0 0.0
      %485 = vmatpush2.msra.mxu0 0.0
      %486 = vmatprep.subr.mxu0 0.0
      %487 = vmatpush2.msra.mxu0 0.0
      %488 = vmatprep.subr.mxu0 0.0
      %489 = vmatpush2.msra.mxu0 0.0
      %490 = vmatprep.subr.mxu0 0.0
      %491 = vmatpush2.msra.mxu0 0.0
      %492 = vmatprep.subr.mxu0 0.0
      %493 = vmatpush2.msra.mxu0 0.0
      %494 = vmatprep.subr.mxu0 0.0
      %495 = vmatpush2.msra.mxu0 0.0
      %496 = vmatprep.subr.mxu0 0.0
      %497 = vmatpush2.msra.mxu0 0.0
      %498 = vmatprep.subr.mxu0 0.0
      %499 = vmatpush2.msra.mxu0 0.0
      %500 = vmatprep.subr.mxu0 0.0
      %501 = vmatpush2.msra.mxu0 0.0
      %502 = vmatprep.subr.mxu0 0.0
      %503 = vmatpush2.msra.mxu0 0.0
      %504 = vmatprep.subr.mxu0 0.0
      %505 = vmatpush2.msra.mxu0 0.0
      %506 = vmatprep.subr.mxu0 0.0
      %507 = vmatpush2.msra.mxu0 0.0
      %508 = vmatprep.subr.mxu0 0.0
      %509 = vmatpush2.msra.mxu0 0.0
      %510 = vmatprep.subr.mxu0 0.0
      %511 = vmatpush2.msra.mxu0 0.0
      %512 = vmatprep.mubr.f32.mxu0 0.0
      %513 = vmatmul.mubr.f32.gmra.mxu0 %v233
      %v514 = vpop.f32.mrf.mxu0
      %v515 = vadd.f32 0.0, %v514
      %v516 = vpop.f32.mrf.mxu0
      %517 = vdwg.mxu0
      %v518 = vld [vmem:[%s215] sm:$0xff]
      %v519 = vld [vmem:[%s215 + $0x8] sm:$0xff]
      %v520 = vld [vmem:[%s215 + $0x10] sm:$0xff]
      %v521 = vld [vmem:[%s215 + $0x18] sm:$0xff]
      %v522 = vld [vmem:[%s215 + $0x20] sm:$0xff]
      %v523 = vld [vmem:[%s215 + $0x28] sm:$0xff]
      %v524 = vld [vmem:[%s215 + $0x30] sm:$0xff]
      %v525 = vadd.f32 %v518, %v302
      %v526 = vadd.f32 %v519, %v304
      %v527 = vadd.f32 %v520, %v373
      %v528 = vadd.f32 %v521, %v375
      %v529 = vadd.f32 %v522, %v444
      %v530 = vadd.f32 %v523, %v446
      %v531 = vadd.f32 %v524, %v515
      %v532 = vld [vmem:[%s3] sm:$0xff]
      %534 = vset.pattern.permute.xlu0 0
      %535 = vperm.xlu0 %534, %v532
      %v536 = vpop.permute.xlu0 %535
      %v538 = vadd.f32 %v525, %v536
      %v539 = vadd.f32 %v526, %v536
      %v540 = vadd.f32 %v527, %v536
      %v541 = vadd.f32 %v528, %v536
      %v542 = vadd.f32 %v529, %v536
      %v543 = vadd.f32 %v530, %v536
      %v544 = vadd.f32 %v531, %v536
      %545 = vst [vmem:[%s221] sm:$0xff] %v538
      %546 = vst [vmem:[%s221 + $0x8] sm:$0xff] %v539
      %547 = vst [vmem:[%s221 + $0x10] sm:$0xff] %v540
      %548 = vst [vmem:[%s221 + $0x18] sm:$0xff] %v541
      %549 = vst [vmem:[%s221 + $0x20] sm:$0xff] %v542
      %550 = vst [vmem:[%s221 + $0x28] sm:$0xff] %v543
      %551 = vst [vmem:[%s221 + $0x30] sm:$0xff] %v544
      %s552 = smul.u32 7, %s15
      %p553 = scmp.lt.s32.totalorder %s552, 13
      %s554 = scalar_select %p553, %s552, 13
      %s555 = smul.addr %s554, 8
      %s556 = scalar_lea.vmem %s4, %s555
      // Predicated region
      $region37: #{fno3d_forward.18} parent=35 // pred_check
        %p557 = pneg %p127
      $region38: #{fno3d_forward.18} parent=35 // pred_check_branch
        %559 = sbr.rel (%p557) target = $region40
      $region39: #{fno3d_forward.18} parent=35 // pred_region
        %s560 = smul.u32 7, %s15
      $region40: #{fno3d_forward.18} parent=35 // pred_fallthru
        _
    $region36: #{fno3d_forward.18} parent=5 // pred_fallthru
      _
    %p561 = scmp.le.s32.totalorder 2, %s10
    // Predicated region
    $region41: #{fno3d_forward.18} parent=5 // pred_check
      %p562 = pneg %p561
    $region42: #{fno3d_forward.18} parent=5 // pred_check_branch
      %564 = sbr.rel (%p562) target = $region44
    $region43: #{fno3d_forward.18} parent=5 // pred_region
      %s565 = ssub.s32 %s10, 2
      // Predicated region
      $region45: #{fno3d_forward.18} parent=43 // pred_check
        %p566 = pneg %p133
      $region46: #{fno3d_forward.18} parent=43 // pred_check_branch
        %568 = sbr.rel (%p566) target = $region48
      $region47: #{fno3d_forward.18} parent=43 // pred_region
        %s569 = smul.u32 7, %s16
        %p570 = scmp.lt.s32.totalorder %s569, 13
        %s571 = scalar_select %p570, %s569, 13
        %s572 = smul.addr %s571, 8
        %s573 = scalar_lea.vmem %s4, %s572
      $region48: #{fno3d_forward.18} parent=43 // pred_fallthru
        _
    $region44: #{fno3d_forward.18} parent=5 // pred_fallthru
      _
  $region6: #{fno3d_forward.18} parent=0 // loop_footer
    %s14 = sadd.s32 1, %s10
  $region7: #{fno3d_forward.18} parent=0 // loop_footer_branch
    %9 = sbr.rel target = $region3
  $region8: #{fno3d_forward.18} parent=0 // loop_exit
    _

// kernel: fno3d_forward.19
$region0: #{fno3d_forward.19}
  #allocation0 [shape = 'u32[]', space=smem, size = 0x4, offset = 0x4, fixed_abs, tag = 'smem constant byte address 0x4 - core index']
  #allocation1 [shape = 'u32[144,128]{1,0:T(1,128)}', space=vmem, size = 0x12000, scoped, tag = 'internal scratch']
  #allocation2 [shape = 'f32[1,1]{1,0:T(1,128)S(1)}', space=vmem, size = 0x200, scoped, tag = 'scoped memory for fno3d_forward.19']
  %s0 = inlined_call_operand.vmem [shape: f32[8,1024], index: 0, kind: input, shape index: {}]
  %s1 = inlined_call_operand.vmem [shape: f32[128,8], index: 1, kind: input, shape index: {}]
  %s2 = inlined_call_operand.vmem [shape: f32[128,1], index: 2, kind: input, shape index: {}]
  %s3 = inlined_call_operand.vmem [shape: f32[1,128], index: 3, kind: input, shape index: {}]
  %s4 = inlined_call_operand.<no memory space> [shape: f32[1,1], index: 4, kind: input, shape index: {}]
  %s5 = inlined_call_operand.vmem [shape: f32[1,1024], index: 5, kind: output, shape index: {}]
  %s6 = sld [smem:[#allocation0]]
  $region53: #{fno3d_forward.19} parent=0
    _
  %s8 = ssub.s32 1, %s6
  %s9 = scalar_select 0, %s8, %s6
  %v10 = vstv %s4
  %11 = vst [vmem:[#allocation2] sm:$0x1] %v10
  loop: start=0, step=1, limit=4
  $region2: #{fno3d_forward.19} parent=0 // loop_pre_header
    _
  $region3: #{fno3d_forward.19} parent=0 // loop_header
    %s13 = sphi 0, %s17
    %p14 = scmp.ge.s32.totalorder %s13, 4
    %s23 = sphi 0, %s25
    %s26 = sphi 0, %s23
    %s27 = sphi 0, %s26
    %s43 = sphi 0, %s27
    %s47 = sphi 0, %s47
    %s49 = sphi 0, %s47
    %s50 = sphi 0, %s49
    %s64 = sphi 0, %s50
    %s68 = sphi 0, %s68
    %s70 = sphi 0, %s68
    %s71 = sphi 0, %s70
    %s85 = sphi 0, %s71
    %s89 = sphi 0, %s89
    %s91 = sphi 0, %s89
    %s92 = sphi 0, %s91
    %s106 = sphi 0, %s92
    %s110 = sphi 0, %s110
    %s112 = sphi 0, %s110
    %s113 = sphi 0, %s112
    %s127 = sphi 0, %s113
    %s133 = sphi 0, %s135
    %s136 = sphi 0, %s133
    %s137 = sphi 0, %s136
    %s153 = sphi 0, %s137
  $region4: #{fno3d_forward.19} parent=0 // loop_header_branch
    %16 = sbr.rel (%p14) target = $region8
  $region5: #{fno3d_forward.19} parent=0 // loop_body
    %s18 = ssub.s32 %s13, 1
    %s19 = ssub.s32 %s13, 2
    %s20 = sadd.s32 %s13, 1
    %s21 = ssub.s32 %s13, %s20
    %p22 = scmp.eq.s32.totalorder %s21, 0
    %s24 = sadd.s32 %s23, 1
    %s25 = scalar_select %p22, %s23, %s24
    %p28 = pneg %p22
    %p29 = scmp.eq.s32.totalorder %s13, 1
    %p30 = por %p28, %p29
    %p31 = scmp.ne.s32.totalorder %s23, %s26
    %p32 = scmp.eq.s32.totalorder %s13, 0
    %p33 = por %p31, %p32
    %p34 = scmp.ne.s32.totalorder %s23, %s26
    %p35 = scmp.eq.s32.totalorder %s18, 1
    %p36 = por %p34, %p35
    %p37 = scmp.ne.s32.totalorder %s26, %s27
    %p38 = scmp.eq.s32.totalorder %s18, 0
    %p39 = por %p37, %p38
    %p40 = scmp.ne.s32.totalorder %s26, %s27
    %p41 = scmp.eq.s32.totalorder %s19, 1
    %p42 = por %p40, %p41
    %p44 = scmp.ne.s32.totalorder %s27, %s43
    %p45 = scmp.eq.s32.totalorder %s19, 0
    %p46 = por %p44, %p45
    %s48 = sadd.s32 %s47, 1
    %p51 = scmp.eq.s32.totalorder %s13, 1
    %p52 = scmp.ne.s32.totalorder %s47, %s49
    %p53 = scmp.eq.s32.totalorder %s13, 0
    %p54 = por %p52, %p53
    %p55 = scmp.ne.s32.totalorder %s47, %s49
    %p56 = scmp.eq.s32.totalorder %s18, 1
    %p57 = por %p55, %p56
    %p58 = scmp.ne.s32.totalorder %s49, %s50
    %p59 = scmp.eq.s32.totalorder %s18, 0
    %p60 = por %p58, %p59
    %p61 = scmp.ne.s32.totalorder %s49, %s50
    %p62 = scmp.eq.s32.totalorder %s19, 1
    %p63 = por %p61, %p62
    %p65 = scmp.ne.s32.totalorder %s50, %s64
    %p66 = scmp.eq.s32.totalorder %s19, 0
    %p67 = por %p65, %p66
    %s69 = sadd.s32 %s68, 1
    %p72 = scmp.eq.s32.totalorder %s13, 1
    %p73 = scmp.ne.s32.totalorder %s68, %s70
    %p74 = scmp.eq.s32.totalorder %s13, 0
    %p75 = por %p73, %p74
    %p76 = scmp.ne.s32.totalorder %s68, %s70
    %p77 = scmp.eq.s32.totalorder %s18, 1
    %p78 = por %p76, %p77
    %p79 = scmp.ne.s32.totalorder %s70, %s71
    %p80 = scmp.eq.s32.totalorder %s18, 0
    %p81 = por %p79, %p80
    %p82 = scmp.ne.s32.totalorder %s70, %s71
    %p83 = scmp.eq.s32.totalorder %s19, 1
    %p84 = por %p82, %p83
    %p86 = scmp.ne.s32.totalorder %s71, %s85
    %p87 = scmp.eq.s32.totalorder %s19, 0
    %p88 = por %p86, %p87
    %s90 = sadd.s32 %s89, 1
    %p93 = scmp.eq.s32.totalorder %s13, 1
    %p94 = scmp.ne.s32.totalorder %s89, %s91
    %p95 = scmp.eq.s32.totalorder %s13, 0
    %p96 = por %p94, %p95
    %p97 = scmp.ne.s32.totalorder %s89, %s91
    %p98 = scmp.eq.s32.totalorder %s18, 1
    %p99 = por %p97, %p98
    %p100 = scmp.ne.s32.totalorder %s91, %s92
    %p101 = scmp.eq.s32.totalorder %s18, 0
    %p102 = por %p100, %p101
    %p103 = scmp.ne.s32.totalorder %s91, %s92
    %p104 = scmp.eq.s32.totalorder %s19, 1
    %p105 = por %p103, %p104
    %p107 = scmp.ne.s32.totalorder %s92, %s106
    %p108 = scmp.eq.s32.totalorder %s19, 0
    %p109 = por %p107, %p108
    %s111 = sadd.s32 %s110, 1
    %p114 = scmp.eq.s32.totalorder %s13, 1
    %p115 = scmp.ne.s32.totalorder %s110, %s112
    %p116 = scmp.eq.s32.totalorder %s13, 0
    %p117 = por %p115, %p116
    %p118 = scmp.ne.s32.totalorder %s110, %s112
    %p119 = scmp.eq.s32.totalorder %s18, 1
    %p120 = por %p118, %p119
    %p121 = scmp.ne.s32.totalorder %s112, %s113
    %p122 = scmp.eq.s32.totalorder %s18, 0
    %p123 = por %p121, %p122
    %p124 = scmp.ne.s32.totalorder %s112, %s113
    %p125 = scmp.eq.s32.totalorder %s19, 1
    %p126 = por %p124, %p125
    %p128 = scmp.ne.s32.totalorder %s113, %s127
    %p129 = scmp.eq.s32.totalorder %s19, 0
    %p130 = por %p128, %p129
    %s131 = ssub.s32 %s13, %s20
    %p132 = scmp.eq.s32.totalorder %s131, 0
    %s134 = sadd.s32 %s133, 1
    %s135 = scalar_select %p132, %s133, %s134
    %p138 = pneg %p132
    %p139 = scmp.eq.s32.totalorder %s13, 1
    %p140 = por %p138, %p139
    %p141 = scmp.ne.s32.totalorder %s133, %s136
    %p142 = scmp.eq.s32.totalorder %s13, 0
    %p143 = por %p141, %p142
    %p144 = scmp.ne.s32.totalorder %s133, %s136
    %p145 = scmp.eq.s32.totalorder %s18, 1
    %p146 = por %p144, %p145
    %p147 = scmp.ne.s32.totalorder %s136, %s137
    %p148 = scmp.eq.s32.totalorder %s18, 0
    %p149 = por %p147, %p148
    %p150 = scmp.ne.s32.totalorder %s136, %s137
    %p151 = scmp.eq.s32.totalorder %s19, 1
    %p152 = por %p150, %p151
    %p154 = scmp.ne.s32.totalorder %s137, %s153
    %p155 = scmp.eq.s32.totalorder %s19, 0
    %p156 = por %p154, %p155
    %p157 = scmp.le.s32.totalorder 1, %s13
    %p158 = scmp.lt.s32.totalorder %s13, 3
    %p159 = pnand %p157, %p158
    %p160 = pneg %p159
    // Predicated region
    $region9: #{fno3d_forward.19} parent=5 // pred_check
      _
    $region10: #{fno3d_forward.19} parent=5 // pred_check_branch
      %162 = sbr.rel (%p159) target = $region12
    $region11: #{fno3d_forward.19} parent=5 // pred_region
      %s163 = ssub.s32 %s13, 1
      // Predicated region
      $region13: #{fno3d_forward.19} parent=11 // pred_check
        %p164 = pneg %p60
      $region14: #{fno3d_forward.19} parent=11 // pred_check_branch
        %166 = sbr.rel (%p164) target = $region16
      $region15: #{fno3d_forward.19} parent=11 // pred_region
        _
      $region16: #{fno3d_forward.19} parent=11 // pred_fallthru
        _
      // Predicated region
      $region17: #{fno3d_forward.19} parent=11 // pred_check
        %p167 = pneg %p81
      $region18: #{fno3d_forward.19} parent=11 // pred_check_branch
        %169 = sbr.rel (%p167) target = $region20
      $region19: #{fno3d_forward.19} parent=11 // pred_region
        _
      $region20: #{fno3d_forward.19} parent=11 // pred_fallthru
        _
      // Predicated region
      $region21: #{fno3d_forward.19} parent=11 // pred_check
        %p170 = pneg %p102
      $region22: #{fno3d_forward.19} parent=11 // pred_check_branch
        %172 = sbr.rel (%p170) target = $region24
      $region23: #{fno3d_forward.19} parent=11 // pred_region
        _
      $region24: #{fno3d_forward.19} parent=11 // pred_fallthru
        _
      // Predicated region
      $region25: #{fno3d_forward.19} parent=11 // pred_check
        %p173 = pneg %p123
      $region26: #{fno3d_forward.19} parent=11 // pred_check_branch
        %175 = sbr.rel (%p173) target = $region28
      $region27: #{fno3d_forward.19} parent=11 // pred_region
        _
      $region28: #{fno3d_forward.19} parent=11 // pred_fallthru
        _
    $region12: #{fno3d_forward.19} parent=5 // pred_fallthru
      _
    %p176 = scmp.lt.s32.totalorder %s13, 2
    // Predicated region
    $region29: #{fno3d_forward.19} parent=5 // pred_check
      %p177 = pneg %p176
    $region30: #{fno3d_forward.19} parent=5 // pred_check_branch
      %179 = sbr.rel (%p177) target = $region32
    $region31: #{fno3d_forward.19} parent=5 // pred_region
      // Predicated region
      $region33: #{fno3d_forward.19} parent=31 // pred_check
        %p180 = pneg %p33
      $region34: #{fno3d_forward.19} parent=31 // pred_check_branch
        %182 = sbr.rel (%p180) target = $region36
      $region35: #{fno3d_forward.19} parent=31 // pred_region
        %s183 = smul.u32 4, %s13
        %p184 = scmp.lt.s32.totalorder %s183, 7
        %s185 = scalar_select %p184, %s183, 7
        %s186 = smul.addr %s185, 8
        %s187 = scalar_lea.vmem %s0, %s186
        %s188 = smul.u32 4, %s13
      $region36: #{fno3d_forward.19} parent=31 // pred_fallthru
        _
    $region32: #{fno3d_forward.19} parent=5 // pred_fallthru
      _
    %p189 = scmp.le.s32.totalorder 1, %s13
    %p190 = scmp.lt.s32.totalorder %s13, 3
    %p191 = pnand %p189, %p190
    %p192 = pneg %p191
    // Predicated region
    $region37: #{fno3d_forward.19} parent=5 // pred_check
      _
    $region38: #{fno3d_forward.19} parent=5 // pred_check_branch
      %194 = sbr.rel (%p191) target = $region40
    $region39: #{fno3d_forward.19} parent=5 // pred_region
      %s195 = ssub.s32 %s13, 1
      %s196 = smul.u32 4, %s18
      %p197 = scmp.lt.s32.totalorder %s196, 7
      %s198 = scalar_select %p197, %s196, 7
      %s199 = smul.addr %s198, 8
      %s200 = scalar_lea.vmem %s0, %s199
      %p201 = pneg %p39
      %p202 = pneg %p36
      %p203 = pneg %p60
      %p204 = pneg %p57
      %p205 = pneg %p81
      %p206 = pneg %p78
      %p207 = pneg %p102
      %p208 = pneg %p99
      %p209 = pneg %p123
      %p210 = pneg %p120
      %p211 = pneg %p149
      %p212 = pneg %p146
      %s213 = smul.u32 4, %s18
      %p214 = scmp.lt.s32.totalorder %s213, 7
      %s215 = scalar_select %p214, %s213, 7
      %s216 = scalar_lea.vmem %s5, %s215
      %s217 = smul.u32 4, %s18
      %p218 = scmp.lt.s32.totalorder %s217, 7
      %s219 = scalar_select %p218, %s217, 7
      %s220 = smul.addr %s219, 8
      %s221 = scalar_lea.vmem %s0, %s220
      %s222 = smul.u32 4, %s18
      %s223 = smul.u32 4, %s18
      %p224 = scmp.lt.s32.totalorder %s223, 7
      %s225 = scalar_select %p224, %s223, 7
      %s226 = scalar_lea.vmem %s5, %s225
      %s227 = smul.u32 4, %s18
      %v228 = vld [vmem:[%s1] sm:$0xff]
      %v229 = vld [vmem:[%s1 + $0x8] sm:$0xff]
      %v230 = vld [vmem:[%s1 + $0x10] sm:$0xff]
      %v231 = vld [vmem:[%s1 + $0x18] sm:$0xff]
      %v232 = vld [vmem:[%s1 + $0x20] sm:$0xff]
      %v233 = vld [vmem:[%s1 + $0x28] sm:$0xff]
      %v234 = vld [vmem:[%s1 + $0x30] sm:$0xff]
      %v235 = vld [vmem:[%s1 + $0x38] sm:$0xff]
      %v236 = vld [vmem:[%s1 + $0x40] sm:$0xff]
      %v237 = vld [vmem:[%s1 + $0x48] sm:$0xff]
      %v238 = vld [vmem:[%s1 + $0x50] sm:$0xff]
      %v239 = vld [vmem:[%s1 + $0x58] sm:$0xff]
      %v240 = vld [vmem:[%s1 + $0x60] sm:$0xff]
      %v241 = vld [vmem:[%s1 + $0x68] sm:$0xff]
      %v242 = vld [vmem:[%s1 + $0x70] sm:$0xff]
      %v243 = vld [vmem:[%s1 + $0x78] sm:$0xff]
      %v244 = vld [vmem:[%s2] sm:$0xff]
      %v245 = vld [vmem:[%s2 + $0x8] sm:$0xff]
      %v246 = vld [vmem:[%s2 + $0x10] sm:$0xff]
      %v247 = vld [vmem:[%s2 + $0x18] sm:$0xff]
      %v248 = vld [vmem:[%s2 + $0x20] sm:$0xff]
      %v249 = vld [vmem:[%s2 + $0x28] sm:$0xff]
      %v250 = vld [vmem:[%s2 + $0x30] sm:$0xff]
      %v251 = vld [vmem:[%s2 + $0x38] sm:$0xff]
      %v252 = vld [vmem:[%s2 + $0x40] sm:$0xff]
      %v253 = vld [vmem:[%s2 + $0x48] sm:$0xff]
      %v254 = vld [vmem:[%s2 + $0x50] sm:$0xff]
      %v255 = vld [vmem:[%s2 + $0x58] sm:$0xff]
      %v256 = vld [vmem:[%s2 + $0x60] sm:$0xff]
      %v257 = vld [vmem:[%s2 + $0x68] sm:$0xff]
      %v258 = vld [vmem:[%s2 + $0x70] sm:$0xff]
      %v259 = vld [vmem:[%s2 + $0x78] sm:$0xff]
      %v260 = vld [vmem:[%s3] sm:$0x1]
      %v261 = vld [vmem:[#allocation2] sm:$0x1]
      %v262 = vld [vmem:[%s221] sm:$0xff]
      %264 = vset.pattern.permute.xlu0 0
      %265 = vperm.xlu0 %264, %v244
      %v266 = vpop.permute.xlu0 %265
      %269 = vset.pattern.permute.xlu0 0
      %270 = vperm.xlu0 %269, %v245
      %v271 = vpop.permute.xlu0 %270
      %274 = vset.pattern.permute.xlu0 0
      %275 = vperm.xlu0 %274, %v246
      %v276 = vpop.permute.xlu0 %275
      %279 = vset.pattern.permute.xlu0 0
      %280 = vperm.xlu0 %279, %v247
      %v281 = vpop.permute.xlu0 %280
      %284 = vset.pattern.permute.xlu0 0
      %285 = vperm.xlu0 %284, %v248
      %v286 = vpop.permute.xlu0 %285
      %289 = vset.pattern.permute.xlu0 0
      %290 = vperm.xlu0 %289, %v249
      %v291 = vpop.permute.xlu0 %290
      %294 = vset.pattern.permute.xlu0 0
      %295 = vperm.xlu0 %294, %v250
      %v296 = vpop.permute.xlu0 %295
      %299 = vset.pattern.permute.xlu0 0
      %300 = vperm.xlu0 %299, %v251
      %v301 = vpop.permute.xlu0 %300
      %304 = vset.pattern.permute.xlu0 0
      %305 = vperm.xlu0 %304, %v252
      %v306 = vpop.permute.xlu0 %305
      %309 = vset.pattern.permute.xlu0 0
      %310 = vperm.xlu0 %309, %v253
      %v311 = vpop.permute.xlu0 %310
      %314 = vset.pattern.permute.xlu0 0
      %315 = vperm.xlu0 %314, %v254
      %v316 = vpop.permute.xlu0 %315
      %319 = vset.pattern.permute.xlu0 0
      %320 = vperm.xlu0 %319, %v255
      %v321 = vpop.permute.xlu0 %320
      %324 = vset.pattern.permute.xlu0 0
      %325 = vperm.xlu0 %324, %v256
      %v326 = vpop.permute.xlu0 %325
      %329 = vset.pattern.permute.xlu0 0
      %330 = vperm.xlu0 %329, %v257
      %v331 = vpop.permute.xlu0 %330
      %334 = vset.pattern.permute.xlu0 0
      %335 = vperm.xlu0 %334, %v258
      %v336 = vpop.permute.xlu0 %335
      %339 = vset.pattern.permute.xlu0 0
      %340 = vperm.xlu0 %339, %v259
      %v341 = vpop.permute.xlu0 %340
      %vm343 = vcmask 64512
      %v345 = vsel %vm343, %v228, 0
      %v348 = vsel %vm343, %v229, 0
      %v351 = vsel %vm343, %v230, 0
      %v354 = vsel %vm343, %v231, 0
      %v357 = vsel %vm343, %v232, 0
      %v360 = vsel %vm343, %v233, 0
      %v363 = vsel %vm343, %v234, 0
      %v366 = vsel %vm343, %v235, 0
      %v369 = vsel %vm343, %v236, 0
      %v372 = vsel %vm343, %v237, 0
      %v375 = vsel %vm343, %v238, 0
      %v378 = vsel %vm343, %v239, 0
      %v381 = vsel %vm343, %v240, 0
      %v384 = vsel %vm343, %v241, 0
      %v387 = vsel %vm343, %v242, 0
      %v390 = vsel %vm343, %v243, 0
      %392 = vmatprep.subr.mxu0 0.0
      %393 = vmatpush1.msra.mxu0 0.0
      %394 = vmatprep.subr.mxu0 0.0
      %395 = vmatpush1.msra.mxu0 0.0
      %396 = vmatprep.subr.mxu0 0.0
      %397 = vmatpush1.msra.mxu0 0.0
      %398 = vmatprep.subr.mxu0 0.0
      %399 = vmatpush1.msra.mxu0 0.0
      %400 = vmatprep.subr.mxu0 0.0
      %401 = vmatpush1.msra.mxu0 0.0
      %402 = vmatprep.subr.mxu0 0.0
      %403 = vmatpush1.msra.mxu0 0.0
      %404 = vmatprep.subr.mxu0 0.0
      %405 = vmatpush1.msra.mxu0 0.0
      %406 = vmatprep.subr.mxu0 0.0
      %407 = vmatpush1.msra.mxu0 0.0
      %408 = vmatprep.subr.mxu0 0.0
      %409 = vmatpush1.msra.mxu0 0.0
      %410 = vmatprep.subr.mxu0 0.0
      %411 = vmatpush1.msra.mxu0 0.0
      %412 = vmatprep.subr.mxu0 0.0
      %413 = vmatpush1.msra.mxu0 0.0
      %414 = vmatprep.subr.mxu0 0.0
      %415 = vmatpush1.msra.mxu0 0.0
      %416 = vmatprep.subr.mxu0 0.0
      %417 = vmatpush1.msra.mxu0 0.0
      %418 = vmatprep.subr.mxu0 0.0
      %419 = vmatpush1.msra.mxu0 0.0
      %420 = vmatprep.subr.mxu0 0.0
      %421 = vmatpush1.msra.mxu0 0.0
      %422 = vmatprep.subr.mxu0 0.0
      %423 = vmatpush1.msra.mxu0 %v262
      %424 = vmatprep.subr.mxu0 0.0
      %425 = vmatpush2.msra.mxu0 0.0
      %426 = vmatprep.subr.mxu0 0.0
      %427 = vmatpush2.msra.mxu0 0.0
      %428 = vmatprep.subr.mxu0 0.0
      %429 = vmatpush2.msra.mxu0 0.0
      %430 = vmatprep.subr.mxu0 0.0
      %431 = vmatpush2.msra.mxu0 0.0
      %432 = vmatprep.subr.mxu0 0.0
      %433 = vmatpush2.msra.mxu0 0.0
      %434 = vmatprep.subr.mxu0 0.0
      %435 = vmatpush2.msra.mxu0 0.0
      %436 = vmatprep.subr.mxu0 0.0
      %437 = vmatpush2.msra.mxu0 0.0
      %438 = vmatprep.subr.mxu0 0.0
      %439 = vmatpush2.msra.mxu0 0.0
      %440 = vmatprep.subr.mxu0 0.0
      %441 = vmatpush2.msra.mxu0 0.0
      %442 = vmatprep.subr.mxu0 0.0
      %443 = vmatpush2.msra.mxu0 0.0
      %444 = vmatprep.subr.mxu0 0.0
      %445 = vmatpush2.msra.mxu0 0.0
      %446 = vmatprep.subr.mxu0 0.0
      %447 = vmatpush2.msra.mxu0 0.0
      %448 = vmatprep.subr.mxu0 0.0
      %449 = vmatpush2.msra.mxu0 0.0
      %450 = vmatprep.subr.mxu0 0.0
      %451 = vmatpush2.msra.mxu0 0.0
      %452 = vmatprep.subr.mxu0 0.0
      %453 = vmatpush2.msra.mxu0 0.0
      %454 = vmatprep.subr.mxu0 0.0
      %455 = vmatpush2.msra.mxu0 0.0
      %456 = vmatprep.mubr.f32.mxu0 0.0
      %457 = vmatmul.mubr.f32.gmra.mxu0 %v345
      %v458 = vpop.f32.mrf.mxu0
      %v459 = vadd.f32 %v266, %v458
      %v460 = vpop.f32.mrf.mxu0
      %461 = vmatprep.mubr.f32.mxu0 0.0
      %462 = vmatmul.mubr.f32.gmra.mxu0 %v348
      %v463 = vpop.f32.mrf.mxu0
      %v464 = vadd.f32 %v271, %v463
      %v465 = vpop.f32.mrf.mxu0
      %466 = vmatprep.mubr.f32.mxu0 0.0
      %467 = vmatmul.mubr.f32.gmra.mxu0 %v351
      %v468 = vpop.f32.mrf.mxu0
      %v469 = vadd.f32 %v276, %v468
      %v470 = vpop.f32.mrf.mxu0
      %471 = vmatprep.mubr.f32.mxu0 0.0
      %472 = vmatmul.mubr.f32.gmra.mxu0 %v354
      %v473 = vpop.f32.mrf.mxu0
      %v474 = vadd.f32 %v281, %v473
      %v475 = vpop.f32.mrf.mxu0
      %476 = vmatprep.mubr.f32.mxu0 0.0
      %477 = vmatmul.mubr.f32.gmra.mxu0 %v357
      %v478 = vpop.f32.mrf.mxu0
      %v479 = vadd.f32 %v286, %v478
      %v480 = vpop.f32.mrf.mxu0
      %481 = vmatprep.mubr.f32.mxu0 0.0
      %482 = vmatmul.mubr.f32.gmra.mxu0 %v360
      %v483 = vpop.f32.mrf.mxu0
      %v484 = vadd.f32 %v291, %v483
      %v485 = vpop.f32.mrf.mxu0
      %486 = vmatprep.mubr.f32.mxu0 0.0
      %487 = vmatmul.mubr.f32.gmra.mxu0 %v363
      %v488 = vpop.f32.mrf.mxu0
      %v489 = vadd.f32 %v296, %v488
      %v490 = vpop.f32.mrf.mxu0
      %491 = vmatprep.mubr.f32.mxu0 0.0
      %492 = vmatmul.mubr.f32.gmra.mxu0 %v366
      %v493 = vpop.f32.mrf.mxu0
      %v494 = vadd.f32 %v301, %v493
      %v495 = vpop.f32.mrf.mxu0
      %496 = vmatprep.mubr.f32.mxu0 0.0
      %497 = vmatmul.mubr.f32.gmra.mxu0 %v369
      %v498 = vpop.f32.mrf.mxu0
      %v499 = vadd.f32 %v306, %v498
      %v500 = vpop.f32.mrf.mxu0
      %501 = vmatprep.mubr.f32.mxu0 0.0
      %502 = vmatmul.mubr.f32.gmra.mxu0 %v372
      %v503 = vpop.f32.mrf.mxu0
      %v504 = vadd.f32 %v311, %v503
      %v505 = vpop.f32.mrf.mxu0
      %506 = vmatprep.mubr.f32.mxu0 0.0
      %507 = vmatmul.mubr.f32.gmra.mxu0 %v375
      %v508 = vpop.f32.mrf.mxu0
      %v509 = vadd.f32 %v316, %v508
      %v510 = vpop.f32.mrf.mxu0
      %511 = vmatprep.mubr.f32.mxu0 0.0
      %512 = vmatmul.mubr.f32.gmra.mxu0 %v378
      %v513 = vpop.f32.mrf.mxu0
      %v514 = vadd.f32 %v321, %v513
      %v515 = vpop.f32.mrf.mxu0
      %516 = vmatprep.mubr.f32.mxu0 0.0
      %517 = vmatmul.mubr.f32.gmra.mxu0 %v381
      %v518 = vpop.f32.mrf.mxu0
      %v519 = vadd.f32 %v326, %v518
      %v520 = vpop.f32.mrf.mxu0
      %521 = vmatprep.mubr.f32.mxu0 0.0
      %522 = vmatmul.mubr.f32.gmra.mxu0 %v384
      %v523 = vpop.f32.mrf.mxu0
      %v524 = vadd.f32 %v331, %v523
      %v525 = vpop.f32.mrf.mxu0
      %526 = vmatprep.mubr.f32.mxu0 0.0
      %527 = vmatmul.mubr.f32.gmra.mxu0 %v387
      %v528 = vpop.f32.mrf.mxu0
      %v529 = vadd.f32 %v336, %v528
      %v530 = vpop.f32.mrf.mxu0
      %531 = vmatprep.mubr.f32.mxu0 0.0
      %532 = vmatmul.mubr.f32.gmra.mxu0 %v390
      %v533 = vpop.f32.mrf.mxu0
      %v534 = vadd.f32 %v341, %v533
      %v535 = vpop.f32.mrf.mxu0
      %536 = vdwg.mxu0
      %v537 = vmul.f32 %v459, 0.5
      %v538 = vmul.f32 %v464, 0.5
      %v539 = vmul.f32 %v469, 0.5
      %v540 = vmul.f32 %v474, 0.5
      %v541 = vmul.f32 %v479, 0.5
      %v542 = vmul.f32 %v484, 0.5
      %v543 = vmul.f32 %v489, 0.5
      %v544 = vmul.f32 %v494, 0.5
      %v545 = vmul.f32 %v499, 0.5
      %v546 = vmul.f32 %v504, 0.5
      %v547 = vmul.f32 %v509, 0.5
      %v548 = vmul.f32 %v514, 0.5
      %v549 = vmul.f32 %v519, 0.5
      %v550 = vmul.f32 %v524, 0.5
      %v551 = vmul.f32 %v529, 0.5
      %v552 = vmul.f32 %v534, 0.5
      %v553 = vmul.f32 %v459, 0.70710677
      %v554 = vmul.f32 %v464, 0.70710677
      %v555 = vmul.f32 %v469, 0.70710677
      %v556 = vmul.f32 %v474, 0.70710677
      %v557 = vmul.f32 %v479, 0.70710677
      %v558 = vmul.f32 %v484, 0.70710677
      %v559 = vmul.f32 %v489, 0.70710677
      %v560 = vmul.f32 %v494, 0.70710677
      %v561 = vmul.f32 %v499, 0.70710677
      %v562 = vmul.f32 %v504, 0.70710677
      %v563 = vmul.f32 %v509, 0.70710677
      %v564 = vmul.f32 %v514, 0.70710677
      %v565 = vmul.f32 %v519, 0.70710677
      %v566 = vmul.f32 %v524, 0.70710677
      %v567 = vmul.f32 %v529, 0.70710677
      %v568 = vmul.f32 %v534, 0.70710677
      %vm569 = vcmp.ge.f32.partialorder %v553, 0.0
      %vm570 = vcmp.ge.f32.partialorder %v554, 0.0
      %vm571 = vcmp.ge.f32.partialorder %v555, 0.0
      %vm572 = vcmp.ge.f32.partialorder %v556, 0.0
      %vm573 = vcmp.ge.f32.partialorder %v557, 0.0
      %vm574 = vcmp.ge.f32.partialorder %v558, 0.0
      %vm575 = vcmp.ge.f32.partialorder %v559, 0.0
      %vm576 = vcmp.ge.f32.partialorder %v560, 0.0
      %vm577 = vcmp.ge.f32.partialorder %v561, 0.0
      %vm578 = vcmp.ge.f32.partialorder %v562, 0.0
      %vm579 = vcmp.ge.f32.partialorder %v563, 0.0
      %vm580 = vcmp.ge.f32.partialorder %v564, 0.0
      %vm581 = vcmp.ge.f32.partialorder %v565, 0.0
      %vm582 = vcmp.ge.f32.partialorder %v566, 0.0
      %vm583 = vcmp.ge.f32.partialorder %v567, 0.0
      %vm584 = vcmp.ge.f32.partialorder %v568, 0.0
      %v585 = vsel %vm569, 1.0, -1.0
      %v586 = vsel %vm570, 1.0, -1.0
      %v587 = vsel %vm571, 1.0, -1.0
      %v588 = vsel %vm572, 1.0, -1.0
      %v589 = vsel %vm573, 1.0, -1.0
      %v590 = vsel %vm574, 1.0, -1.0
      %v591 = vsel %vm575, 1.0, -1.0
      %v592 = vsel %vm576, 1.0, -1.0
      %v593 = vsel %vm577, 1.0, -1.0
      %v594 = vsel %vm578, 1.0, -1.0
      %v595 = vsel %vm579, 1.0, -1.0
      %v596 = vsel %vm580, 1.0, -1.0
      %v597 = vsel %vm581, 1.0, -1.0
      %v598 = vsel %vm582, 1.0, -1.0
      %v599 = vsel %vm583, 1.0, -1.0
      %v600 = vsel %vm584, 1.0, -1.0
      %v601 = vand.u32 2147483647, %v553
      %v602 = vand.u32 2147483647, %v554
      %v603 = vand.u32 2147483647, %v555
      %v604 = vand.u32 2147483647, %v556
      %v605 = vand.u32 2147483647, %v557
      %v606 = vand.u32 2147483647, %v558
      %v607 = vand.u32 2147483647, %v559
      %v608 = vand.u32 2147483647, %v560
      %v609 = vand.u32 2147483647, %v561
      %v610 = vand.u32 2147483647, %v562
      %v611 = vand.u32 2147483647, %v563
      %v612 = vand.u32 2147483647, %v564
      %v613 = vand.u32 2147483647, %v565
      %v614 = vand.u32 2147483647, %v566
      %v615 = vand.u32 2147483647, %v567
      %v616 = vand.u32 2147483647, %v568
      %v617 = vmul.f32 %v601, 0.3275911
      %v618 = vmul.f32 %v602, 0.3275911
      %v619 = vmul.f32 %v603, 0.3275911
      %v620 = vmul.f32 %v604, 0.3275911
      %v621 = vmul.f32 %v605, 0.3275911
      %v622 = vmul.f32 %v606, 0.3275911
      %v623 = vmul.f32 %v607, 0.3275911
      %v624 = vmul.f32 %v608, 0.3275911
      %v625 = vmul.f32 %v609, 0.3275911
      %v626 = vmul.f32 %v610, 0.3275911
      %v627 = vmul.f32 %v611, 0.3275911
      %v628 = vmul.f32 %v612, 0.3275911
      %v629 = vmul.f32 %v613, 0.3275911
      %v630 = vmul.f32 %v614, 0.3275911
      %v631 = vmul.f32 %v615, 0.3275911
      %v632 = vmul.f32 %v616, 0.3275911
      %v633 = vadd.f32 %v617, 1.0
      %v634 = vadd.f32 %v618, 1.0
      %v635 = vadd.f32 %v619, 1.0
      %v636 = vadd.f32 %v620, 1.0
      %v637 = vadd.f32 %v621, 1.0
      %v638 = vadd.f32 %v622, 1.0
      %v639 = vadd.f32 %v623, 1.0
      %v640 = vadd.f32 %v624, 1.0
      %v641 = vadd.f32 %v625, 1.0
      %v642 = vadd.f32 %v626, 1.0
      %v643 = vadd.f32 %v627, 1.0
      %v644 = vadd.f32 %v628, 1.0
      %v645 = vadd.f32 %v629, 1.0
      %v646 = vadd.f32 %v630, 1.0
      %v647 = vadd.f32 %v631, 1.0
      %v648 = vadd.f32 %v632, 1.0
      %v649 = vrcp.pop %v633
      %v650 = vmul.f32 1.0, %v649
      %v651 = vrcp.pop %v634
      %v652 = vmul.f32 1.0, %v651
      %v653 = vrcp.pop %v635
      %v654 = vmul.f32 1.0, %v653
      %v655 = vrcp.pop %v636
      %v656 = vmul.f32 1.0, %v655
      %v657 = vrcp.pop %v637
      %v658 = vmul.f32 1.0, %v657
      %v659 = vrcp.pop %v638
      %v660 = vmul.f32 1.0, %v659
      %v661 = vrcp.pop %v639
      %v662 = vmul.f32 1.0, %v661
      %v663 = vrcp.pop %v640
      %v664 = vmul.f32 1.0, %v663
      %v665 = vrcp.pop %v641
      %v666 = vmul.f32 1.0, %v665
      %v667 = vrcp.pop %v642
      %v668 = vmul.f32 1.0, %v667
      %v669 = vrcp.pop %v643
      %v670 = vmul.f32 1.0, %v669
      %v671 = vrcp.pop %v644
      %v672 = vmul.f32 1.0, %v671
      %v673 = vrcp.pop %v645
      %v674 = vmul.f32 1.0, %v673
      %v675 = vrcp.pop %v646
      %v676 = vmul.f32 1.0, %v675
      %v677 = vrcp.pop %v647
      %v678 = vmul.f32 1.0, %v677
      %v679 = vrcp.pop %v648
      %v680 = vmul.f32 1.0, %v679
      %v681 = vmul.f32 %v650, 1.0614054
      %v682 = vmul.f32 %v652, 1.0614054
      %v683 = vmul.f32 %v654, 1.0614054
      %v684 = vmul.f32 %v656, 1.0614054
      %v685 = vmul.f32 %v658, 1.0614054
      %v686 = vmul.f32 %v660, 1.0614054
      %v687 = vmul.f32 %v662, 1.0614054
      %v688 = vmul.f32 %v664, 1.0614054
      %v689 = vmul.f32 %v666, 1.0614054
      %v690 = vmul.f32 %v668, 1.0614054
      %v691 = vmul.f32 %v670, 1.0614054
      %v692 = vmul.f32 %v672, 1.0614054
      %v693 = vmul.f32 %v674, 1.0614054
      %v694 = vmul.f32 %v676, 1.0614054
      %v695 = vmul.f32 %v678, 1.0614054
      %v696 = vmul.f32 %v680, 1.0614054
      %v697 = vadd.f32 %v681, -1.4531521
      %v698 = vadd.f32 %v682, -1.4531521
      %v699 = vadd.f32 %v683, -1.4531521
      %v700 = vadd.f32 %v684, -1.4531521
      %v701 = vadd.f32 %v685, -1.4531521
      %v702 = vadd.f32 %v686, -1.4531521
      %v703 = vadd.f32 %v687, -1.4531521
      %v704 = vadd.f32 %v688, -1.4531521
      %v705 = vadd.f32 %v689, -1.4531521
      %v706 = vadd.f32 %v690, -1.4531521
      %v707 = vadd.f32 %v691, -1.4531521
      %v708 = vadd.f32 %v692, -1.4531521
      %v709 = vadd.f32 %v693, -1.4531521
      %v710 = vadd.f32 %v694, -1.4531521
      %v711 = vadd.f32 %v695, -1.4531521
      %v712 = vadd.f32 %v696, -1.4531521
      %v713 = vmul.f32 %v650, %v697
      %v714 = vmul.f32 %v652, %v698
      %v715 = vmul.f32 %v654, %v699
      %v716 = vmul.f32 %v656, %v700
      %v717 = vmul.f32 %v658, %v701
      %v718 = vmul.f32 %v660, %v702
      %v719 = vmul.f32 %v662, %v703
      %v720 = vmul.f32 %v664, %v704
      %v721 = vmul.f32 %v666, %v705
      %v722 = vmul.f32 %v668, %v706
      %v723 = vmul.f32 %v670, %v707
      %v724 = vmul.f32 %v672, %v708
      %v725 = vmul.f32 %v674, %v709
      %v726 = vmul.f32 %v676, %v710
      %v727 = vmul.f32 %v678, %v711
      %v728 = vmul.f32 %v680, %v712
      %v729 = vadd.f32 %v713, 1.4214138
      %v730 = vadd.f32 %v714, 1.4214138
      %v731 = vadd.f32 %v715, 1.4214138
      %v732 = vadd.f32 %v716, 1.4214138
      %v733 = vadd.f32 %v717, 1.4214138
      %v734 = vadd.f32 %v718, 1.4214138
      %v735 = vadd.f32 %v719, 1.4214138
      %v736 = vadd.f32 %v720, 1.4214138
      %v737 = vadd.f32 %v721, 1.4214138
      %v738 = vadd.f32 %v722, 1.4214138
      %v739 = vadd.f32 %v723, 1.4214138
      %v740 = vadd.f32 %v724, 1.4214138
      %v741 = vadd.f32 %v725, 1.4214138
      %v742 = vadd.f32 %v726, 1.4214138
      %v743 = vadd.f32 %v727, 1.4214138
      %v744 = vadd.f32 %v728, 1.4214138
      %v745 = vmul.f32 %v650, %v729
      %v746 = vmul.f32 %v652, %v730
      %v747 = vmul.f32 %v654, %v731
      %v748 = vmul.f32 %v656, %v732
      %v749 = vmul.f32 %v658, %v733
      %v750 = vmul.f32 %v660, %v734
      %v751 = vmul.f32 %v662, %v735
      %v752 = vmul.f32 %v664, %v736
      %v753 = vmul.f32 %v666, %v737
      %v754 = vmul.f32 %v668, %v738
      %v755 = vmul.f32 %v670, %v739
      %v756 = vmul.f32 %v672, %v740
      %v757 = vmul.f32 %v674, %v741
      %v758 = vmul.f32 %v676, %v742
      %v759 = vmul.f32 %v678, %v743
      %v760 = vmul.f32 %v680, %v744
      %v761 = vadd.f32 %v745, -0.28449672
      %v762 = vadd.f32 %v746, -0.28449672
      %v763 = vadd.f32 %v747, -0.28449672
      %v764 = vadd.f32 %v748, -0.28449672
      %v765 = vadd.f32 %v749, -0.28449672
      %v766 = vadd.f32 %v750, -0.28449672
      %v767 = vadd.f32 %v751, -0.28449672
      %v768 = vadd.f32 %v752, -0.28449672
      %v769 = vadd.f32 %v753, -0.28449672
      %v770 = vadd.f32 %v754, -0.28449672
      %v771 = vadd.f32 %v755, -0.28449672
      %v772 = vadd.f32 %v756, -0.28449672
      %v773 = vadd.f32 %v757, -0.28449672
      %v774 = vadd.f32 %v758, -0.28449672
      %v775 = vadd.f32 %v759, -0.28449672
      %v776 = vadd.f32 %v760, -0.28449672
      %v777 = vmul.f32 %v650, %v761
      %v778 = vmul.f32 %v652, %v762
      %v779 = vmul.f32 %v654, %v763
      %v780 = vmul.f32 %v656, %v764
      %v781 = vmul.f32 %v658, %v765
      %v782 = vmul.f32 %v660, %v766
      %v783 = vmul.f32 %v662, %v767
      %v784 = vmul.f32 %v664, %v768
      %v785 = vmul.f32 %v666, %v769
      %v786 = vmul.f32 %v668, %v770
      %v787 = vmul.f32 %v670, %v771
      %v788 = vmul.f32 %v672, %v772
      %v789 = vmul.f32 %v674, %v773
      %v790 = vmul.f32 %v676, %v774
      %v791 = vmul.f32 %v678, %v775
      %v792 = vmul.f32 %v680, %v776
      %v793 = vadd.f32 %v777, 0.2548296
      %v794 = vadd.f32 %v778, 0.2548296
      %v795 = vadd.f32 %v779, 0.2548296
      %v796 = vadd.f32 %v780, 0.2548296
      %v797 = vadd.f32 %v781, 0.2548296
      %v798 = vadd.f32 %v782, 0.2548296
      %v799 = vadd.f32 %v783, 0.2548296
      %v800 = vadd.f32 %v784, 0.2548296
      %v801 = vadd.f32 %v785, 0.2548296
      %v802 = vadd.f32 %v786, 0.2548296
      %v803 = vadd.f32 %v787, 0.2548296
      %v804 = vadd.f32 %v788, 0.2548296
      %v805 = vadd.f32 %v789, 0.2548296
      %v806 = vadd.f32 %v790, 0.2548296
      %v807 = vadd.f32 %v791, 0.2548296
      %v808 = vadd.f32 %v792, 0.2548296
      %v809 = vmul.f32 %v650, %v793
      %v810 = vmul.f32 %v652, %v794
      %v811 = vmul.f32 %v654, %v795
      %v812 = vmul.f32 %v656, %v796
      %v813 = vmul.f32 %v658, %v797
      %v814 = vmul.f32 %v660, %v798
      %v815 = vmul.f32 %v662, %v799
      %v816 = vmul.f32 %v664, %v800
      %v817 = vmul.f32 %v666, %v801
      %v818 = vmul.f32 %v668, %v802
      %v819 = vmul.f32 %v670, %v803
      %v820 = vmul.f32 %v672, %v804
      %v821 = vmul.f32 %v674, %v805
      %v822 = vmul.f32 %v676, %v806
      %v823 = vmul.f32 %v678, %v807
      %v824 = vmul.f32 %v680, %v808
      %v825 = vsub.f32 0.0, %v601
      %v826 = vsub.f32 0.0, %v602
      %v827 = vsub.f32 0.0, %v603
      %v828 = vsub.f32 0.0, %v604
      %v829 = vsub.f32 0.0, %v605
      %v830 = vsub.f32 0.0, %v606
      %v831 = vsub.f32 0.0, %v607
      %v832 = vsub.f32 0.0, %v608
      %v833 = vsub.f32 0.0, %v609
      %v834 = vsub.f32 0.0, %v610
      %v835 = vsub.f32 0.0, %v611
      %v836 = vsub.f32 0.0, %v612
      %v837 = vsub.f32 0.0, %v613
      %v838 = vsub.f32 0.0, %v614
      %v839 = vsub.f32 0.0, %v615
      %v840 = vsub.f32 0.0, %v616
      %v841 = vmul.f32 %v825, %v601
      %v842 = vmul.f32 %v826, %v602
      %v843 = vmul.f32 %v827, %v603
      %v844 = vmul.f32 %v828, %v604
      %v845 = vmul.f32 %v829, %v605
      %v846 = vmul.f32 %v830, %v606
      %v847 = vmul.f32 %v831, %v607
      %v848 = vmul.f32 %v832, %v608
      %v849 = vmul.f32 %v833, %v609
      %v850 = vmul.f32 %v834, %v610
      %v851 = vmul.f32 %v835, %v611
      %v852 = vmul.f32 %v836, %v612
      %v853 = vmul.f32 %v837, %v613
      %v854 = vmul.f32 %v838, %v614
      %v855 = vmul.f32 %v839, %v615
      %v856 = vmul.f32 %v840, %v616
      %v857 = vmul.f32 %v841, 1.442695
      %v858 = vpow.pop %v857
      %v859 = vmul.f32 %v842, 1.442695
      %v860 = vpow.pop %v859
      %v861 = vmul.f32 %v843, 1.442695
      %v862 = vpow.pop %v861
      %v863 = vmul.f32 %v844, 1.442695
      %v864 = vpow.pop %v863
      %v865 = vmul.f32 %v845, 1.442695
      %v866 = vpow.pop %v865
      %v867 = vmul.f32 %v846, 1.442695
      %v868 = vpow.pop %v867
      %v869 = vmul.f32 %v847, 1.442695
      %v870 = vpow.pop %v869
      %v871 = vmul.f32 %v848, 1.442695
      %v872 = vpow.pop %v871
      %v873 = vmul.f32 %v849, 1.442695
      %v874 = vpow.pop %v873
      %v875 = vmul.f32 %v850, 1.442695
      %v876 = vpow.pop %v875
      %v877 = vmul.f32 %v851, 1.442695
      %v878 = vpow.pop %v877
      %v879 = vmul.f32 %v852, 1.442695
      %v880 = vpow.pop %v879
      %v881 = vmul.f32 %v853, 1.442695
      %v882 = vpow.pop %v881
      %v883 = vmul.f32 %v854, 1.442695
      %v884 = vpow.pop %v883
      %v885 = vmul.f32 %v855, 1.442695
      %v886 = vpow.pop %v885
      %v887 = vmul.f32 %v856, 1.442695
      %v888 = vpow.pop %v887
      %v889 = vmul.f32 %v809, %v858
      %v890 = vmul.f32 %v810, %v860
      %v891 = vmul.f32 %v811, %v862
      %v892 = vmul.f32 %v812, %v864
      %v893 = vmul.f32 %v813, %v866
      %v894 = vmul.f32 %v814, %v868
      %v895 = vmul.f32 %v815, %v870
      %v896 = vmul.f32 %v816, %v872
      %v897 = vmul.f32 %v817, %v874
      %v898 = vmul.f32 %v818, %v876
      %v899 = vmul.f32 %v819, %v878
      %v900 = vmul.f32 %v820, %v880
      %v901 = vmul.f32 %v821, %v882
      %v902 = vmul.f32 %v822, %v884
      %v903 = vmul.f32 %v823, %v886
      %v904 = vmul.f32 %v824, %v888
      %v905 = vsub.f32 1.0, %v889
      %v906 = vsub.f32 1.0, %v890
      %v907 = vsub.f32 1.0, %v891
      %v908 = vsub.f32 1.0, %v892
      %v909 = vsub.f32 1.0, %v893
      %v910 = vsub.f32 1.0, %v894
      %v911 = vsub.f32 1.0, %v895
      %v912 = vsub.f32 1.0, %v896
      %v913 = vsub.f32 1.0, %v897
      %v914 = vsub.f32 1.0, %v898
      %v915 = vsub.f32 1.0, %v899
      %v916 = vsub.f32 1.0, %v900
      %v917 = vsub.f32 1.0, %v901
      %v918 = vsub.f32 1.0, %v902
      %v919 = vsub.f32 1.0, %v903
      %v920 = vsub.f32 1.0, %v904
      %v921 = vmul.f32 %v585, %v905
      %v922 = vmul.f32 %v586, %v906
      %v923 = vmul.f32 %v587, %v907
      %v924 = vmul.f32 %v588, %v908
      %v925 = vmul.f32 %v589, %v909
      %v926 = vmul.f32 %v590, %v910
      %v927 = vmul.f32 %v591, %v911
      %v928 = vmul.f32 %v592, %v912
      %v929 = vmul.f32 %v593, %v913
      %v930 = vmul.f32 %v594, %v914
      %v931 = vmul.f32 %v595, %v915
      %v932 = vmul.f32 %v596, %v916
      %v933 = vmul.f32 %v597, %v917
      %v934 = vmul.f32 %v598, %v918
      %v935 = vmul.f32 %v599, %v919
      %v936 = vmul.f32 %v600, %v920
      %v937 = vadd.f32 %v921, 1.0
      %v938 = vadd.f32 %v922, 1.0
      %v939 = vadd.f32 %v923, 1.0
      %v940 = vadd.f32 %v924, 1.0
      %v941 = vadd.f32 %v925, 1.0
      %v942 = vadd.f32 %v926, 1.0
      %v943 = vadd.f32 %v927, 1.0
      %v944 = vadd.f32 %v928, 1.0
      %v945 = vadd.f32 %v929, 1.0
      %v946 = vadd.f32 %v930, 1.0
      %v947 = vadd.f32 %v931, 1.0
      %v948 = vadd.f32 %v932, 1.0
      %v949 = vadd.f32 %v933, 1.0
      %v950 = vadd.f32 %v934, 1.0
      %v951 = vadd.f32 %v935, 1.0
      %v952 = vadd.f32 %v936, 1.0
      %v953 = vmul.f32 %v537, %v937
      %v954 = vmul.f32 %v538, %v938
      %v955 = vmul.f32 %v539, %v939
      %v956 = vmul.f32 %v540, %v940
      %v957 = vmul.f32 %v541, %v941
      %v958 = vmul.f32 %v542, %v942
      %v959 = vmul.f32 %v543, %v943
      %v960 = vmul.f32 %v544, %v944
      %v961 = vmul.f32 %v545, %v945
      %v962 = vmul.f32 %v546, %v946
      %v963 = vmul.f32 %v547, %v947
      %v964 = vmul.f32 %v548, %v948
      %v965 = vmul.f32 %v549, %v949
      %v966 = vmul.f32 %v550, %v950
      %v967 = vmul.f32 %v551, %v951
      %v968 = vmul.f32 %v552, %v952
      %970 = vset.pattern.permute.xlu0 0
      %971 = vperm.xlu0 %970, %v261
      %v972 = vpop.permute.xlu0 %971
      %v974 = vlaneseq
      %v975 = vshrl.u32 %v974, 7
      %v976 = vsub.s32 0, %v975
      %v977 = vrot.slane %v972, %v976
      %978 = vmatprep.subr.mxu0 0.0
      %979 = vmatpush1.msra.mxu0 %v968
      %980 = vmatprep.subr.mxu0 0.0
      %981 = vmatpush1.msra.mxu0 %v967
      %982 = vmatprep.subr.mxu0 0.0
      %983 = vmatpush1.msra.mxu0 %v966
      %984 = vmatprep.subr.mxu0 0.0
      %985 = vmatpush1.msra.mxu0 %v965
      %986 = vmatprep.subr.mxu0 0.0
      %987 = vmatpush1.msra.mxu0 %v964
      %988 = vmatprep.subr.mxu0 0.0
      %989 = vmatpush1.msra.mxu0 %v963
      %990 = vmatprep.subr.mxu0 0.0
      %991 = vmatpush1.msra.mxu0 %v962
      %992 = vmatprep.subr.mxu0 0.0
      %993 = vmatpush1.msra.mxu0 %v961
      %994 = vmatprep.subr.mxu0 0.0
      %995 = vmatpush1.msra.mxu0 %v960
      %996 = vmatprep.subr.mxu0 0.0
      %997 = vmatpush1.msra.mxu0 %v959
      %998 = vmatprep.subr.mxu0 0.0
      %999 = vmatpush1.msra.mxu0 %v958
      %1000 = vmatprep.subr.mxu0 0.0
      %1001 = vmatpush1.msra.mxu0 %v957
      %1002 = vmatprep.subr.mxu0 0.0
      %1003 = vmatpush1.msra.mxu0 %v956
      %1004 = vmatprep.subr.mxu0 0.0
      %1005 = vmatpush1.msra.mxu0 %v955
      %1006 = vmatprep.subr.mxu0 0.0
      %1007 = vmatpush1.msra.mxu0 %v954
      %1008 = vmatprep.subr.mxu0 0.0
      %1009 = vmatpush1.msra.mxu0 %v953
      %1010 = vmatprep.subr.mxu0 0.0
      %1011 = vmatpush2.msra.mxu0 0.0
      %1012 = vmatprep.subr.mxu0 0.0
      %1013 = vmatpush2.msra.mxu0 0.0
      %1014 = vmatprep.subr.mxu0 0.0
      %1015 = vmatpush2.msra.mxu0 0.0
      %1016 = vmatprep.subr.mxu0 0.0
      %1017 = vmatpush2.msra.mxu0 0.0
      %1018 = vmatprep.subr.mxu0 0.0
      %1019 = vmatpush2.msra.mxu0 0.0
      %1020 = vmatprep.subr.mxu0 0.0
      %1021 = vmatpush2.msra.mxu0 0.0
      %1022 = vmatprep.subr.mxu0 0.0
      %1023 = vmatpush2.msra.mxu0 0.0
      %1024 = vmatprep.subr.mxu0 0.0
      %1025 = vmatpush2.msra.mxu0 0.0
      %1026 = vmatprep.subr.mxu0 0.0
      %1027 = vmatpush2.msra.mxu0 0.0
      %1028 = vmatprep.subr.mxu0 0.0
      %1029 = vmatpush2.msra.mxu0 0.0
      %1030 = vmatprep.subr.mxu0 0.0
      %1031 = vmatpush2.msra.mxu0 0.0
      %1032 = vmatprep.subr.mxu0 0.0
      %1033 = vmatpush2.msra.mxu0 0.0
      %1034 = vmatprep.subr.mxu0 0.0
      %1035 = vmatpush2.msra.mxu0 0.0
      %1036 = vmatprep.subr.mxu0 0.0
      %1037 = vmatpush2.msra.mxu0 0.0
      %1038 = vmatprep.subr.mxu0 0.0
      %1039 = vmatpush2.msra.mxu0 0.0
      %1040 = vmatprep.subr.mxu0 0.0
      %1041 = vmatpush2.msra.mxu0 0.0
      %1042 = vmatprep.mubr.f32.mxu0 0.0
      %1043 = vmatmul.mubr.f32.gmra.mxu0 %v260
      %v1044 = vpop.f32.mrf.mxu0
      %v1045 = vadd.f32 %v977, %v1044
      %v1046 = vpop.f32.mrf.mxu0
      %1047 = vdwg.mxu0
      %v1048 = vlaneseq
      %vm1049 = vcmp.ge.s32.totalorder %v1048, 0
      %vm1050 = vcmp.lt.s32.totalorder %v1048, 128
      %vm1051 = vmand %vm1049, %vm1050
      %1052 = vst.msk [vmem:[%s226] sm:$0x1] %vm1051, %v1045
      %v1053 = vld [vmem:[%s221 + $0x8] sm:$0xff]
      %1054 = vmatprep.subr.mxu0 0.0
      %1055 = vmatpush1.msra.mxu0 0.0
      %1056 = vmatprep.subr.mxu0 0.0
      %1057 = vmatpush1.msra.mxu0 0.0
      %1058 = vmatprep.subr.mxu0 0.0
      %1059 = vmatpush1.msra.mxu0 0.0
      %1060 = vmatprep.subr.mxu0 0.0
      %1061 = vmatpush1.msra.mxu0 0.0
      %1062 = vmatprep.subr.mxu0 0.0
      %1063 = vmatpush1.msra.mxu0 0.0
      %1064 = vmatprep.subr.mxu0 0.0
      %1065 = vmatpush1.msra.mxu0 0.0
      %1066 = vmatprep.subr.mxu0 0.0
      %1067 = vmatpush1.msra.mxu0 0.0
      %1068 = vmatprep.subr.mxu0 0.0
      %1069 = vmatpush1.msra.mxu0 0.0
      %1070 = vmatprep.subr.mxu0 0.0
      %1071 = vmatpush1.msra.mxu0 0.0
      %1072 = vmatprep.subr.mxu0 0.0
      %1073 = vmatpush1.msra.mxu0 0.0
      %1074 = vmatprep.subr.mxu0 0.0
      %1075 = vmatpush1.msra.mxu0 0.0
      %1076 = vmatprep.subr.mxu0 0.0
      %1077 = vmatpush1.msra.mxu0 0.0
      %1078 = vmatprep.subr.mxu0 0.0
      %1079 = vmatpush1.msra.mxu0 0.0
      %1080 = vmatprep.subr.mxu0 0.0
      %1081 = vmatpush1.msra.mxu0 0.0
      %1082 = vmatprep.subr.mxu0 0.0
      %1083 = vmatpush1.msra.mxu0 0.0
      %1084 = vmatprep.subr.mxu0 0.0
      %1085 = vmatpush1.msra.mxu0 %v1053
      %1086 = vmatprep.subr.mxu0 0.0
      %1087 = vmatpush2.msra.mxu0 0.0
      %1088 = vmatprep.subr.mxu0 0.0
      %1089 = vmatpush2.msra.mxu0 0.0
      %1090 = vmatprep.subr.mxu0 0.0
      %1091 = vmatpush2.msra.mxu0 0.0
      %1092 = vmatprep.subr.mxu0 0.0
      %1093 = vmatpush2.msra.mxu0 0.0
      %1094 = vmatprep.subr.mxu0 0.0
      %1095 = vmatpush2.msra.mxu0 0.0
      %1096 = vmatprep.subr.mxu0 0.0
      %1097 = vmatpush2.msra.mxu0 0.0
      %1098 = vmatprep.subr.mxu0 0.0
      %1099 = vmatpush2.msra.mxu0 0.0
      %1100 = vmatprep.subr.mxu0 0.0
      %1101 = vmatpush2.msra.mxu0 0.0
      %1102 = vmatprep.subr.mxu0 0.0
      %1103 = vmatpush2.msra.mxu0 0.0
      %1104 = vmatprep.subr.mxu0 0.0
      %1105 = vmatpush2.msra.mxu0 0.0
      %1106 = vmatprep.subr.mxu0 0.0
      %1107 = vmatpush2.msra.mxu0 0.0
      %1108 = vmatprep.subr.mxu0 0.0
      %1109 = vmatpush2.msra.mxu0 0.0
      %1110 = vmatprep.subr.mxu0 0.0
      %1111 = vmatpush2.msra.mxu0 0.0
      %1112 = vmatprep.subr.mxu0 0.0
      %1113 = vmatpush2.msra.mxu0 0.0
      %1114 = vmatprep.subr.mxu0 0.0
      %1115 = vmatpush2.msra.mxu0 0.0
      %1116 = vmatprep.subr.mxu0 0.0
      %1117 = vmatpush2.msra.mxu0 0.0
      %1118 = vmatprep.mubr.f32.mxu0 0.0
      %1119 = vmatmul.mubr.f32.gmra.mxu0 %v345
      %v1120 = vpop.f32.mrf.mxu0
      %v1121 = vadd.f32 %v266, %v1120
      %v1122 = vpop.f32.mrf.mxu0
      %1123 = vmatprep.mubr.f32.mxu0 0.0
      %1124 = vmatmul.mubr.f32.gmra.mxu0 %v348
      %v1125 = vpop.f32.mrf.mxu0
      %v1126 = vadd.f32 %v271, %v1125
      %v1127 = vpop.f32.mrf.mxu0
      %1128 = vmatprep.mubr.f32.mxu0 0.0
      %1129 = vmatmul.mubr.f32.gmra.mxu0 %v351
      %v1130 = vpop.f32.mrf.mxu0
      %v1131 = vadd.f32 %v276, %v1130
      %v1132 = vpop.f32.mrf.mxu0
      %1133 = vmatprep.mubr.f32.mxu0 0.0
      %1134 = vmatmul.mubr.f32.gmra.mxu0 %v354
      %v1135 = vpop.f32.mrf.mxu0
      %v1136 = vadd.f32 %v281, %v1135
      %v1137 = vpop.f32.mrf.mxu0
      %1138 = vmatprep.mubr.f32.mxu0 0.0
      %1139 = vmatmul.mubr.f32.gmra.mxu0 %v357
      %v1140 = vpop.f32.mrf.mxu0
      %v1141 = vadd.f32 %v286, %v1140
      %v1142 = vpop.f32.mrf.mxu0
      %1143 = vmatprep.mubr.f32.mxu0 0.0
      %1144 = vmatmul.mubr.f32.gmra.mxu0 %v360
      %v1145 = vpop.f32.mrf.mxu0
      %v1146 = vadd.f32 %v291, %v1145
      %v1147 = vpop.f32.mrf.mxu0
      %1148 = vmatprep.mubr.f32.mxu0 0.0
      %1149 = vmatmul.mubr.f32.gmra.mxu0 %v363
      %v1150 = vpop.f32.mrf.mxu0
      %v1151 = vadd.f32 %v296, %v1150
      %v1152 = vpop.f32.mrf.mxu0
      %1153 = vmatprep.mubr.f32.mxu0 0.0
      %1154 = vmatmul.mubr.f32.gmra.mxu0 %v366
      %v1155 = vpop.f32.mrf.mxu0
      %v1156 = vadd.f32 %v301, %v1155
      %v1157 = vpop.f32.mrf.mxu0
      %1158 = vmatprep.mubr.f32.mxu0 0.0
      %1159 = vmatmul.mubr.f32.gmra.mxu0 %v369
      %v1160 = vpop.f32.mrf.mxu0
      %v1161 = vadd.f32 %v306, %v1160
      %v1162 = vpop.f32.mrf.mxu0
      %1163 = vmatprep.mubr.f32.mxu0 0.0
      %1164 = vmatmul.mubr.f32.gmra.mxu0 %v372
      %v1165 = vpop.f32.mrf.mxu0
      %v1166 = vadd.f32 %v311, %v1165
      %v1167 = vpop.f32.mrf.mxu0
      %1168 = vmatprep.mubr.f32.mxu0 0.0
      %1169 = vmatmul.mubr.f32.gmra.mxu0 %v375
      %v1170 = vpop.f32.mrf.mxu0
      %v1171 = vadd.f32 %v316, %v1170
      %v1172 = vpop.f32.mrf.mxu0
      %1173 = vmatprep.mubr.f32.mxu0 0.0
      %1174 = vmatmul.mubr.f32.gmra.mxu0 %v378
      %v1175 = vpop.f32.mrf.mxu0
      %v1176 = vadd.f32 %v321, %v1175
      %v1177 = vpop.f32.mrf.mxu0
      %1178 = vmatprep.mubr.f32.mxu0 0.0
      %1179 = vmatmul.mubr.f32.gmra.mxu0 %v381
      %v1180 = vpop.f32.mrf.mxu0
      %v1181 = vadd.f32 %v326, %v1180
      %v1182 = vpop.f32.mrf.mxu0
      %1183 = vmatprep.mubr.f32.mxu0 0.0
      %1184 = vmatmul.mubr.f32.gmra.mxu0 %v384
      %v1185 = vpop.f32.mrf.mxu0
      %v1186 = vadd.f32 %v331, %v1185
      %v1187 = vpop.f32.mrf.mxu0
      %1188 = vmatprep.mubr.f32.mxu0 0.0
      %1189 = vmatmul.mubr.f32.gmra.mxu0 %v387
      %v1190 = vpop.f32.mrf.mxu0
      %v1191 = vadd.f32 %v336, %v1190
      %v1192 = vpop.f32.mrf.mxu0
      %1193 = vmatprep.mubr.f32.mxu0 0.0
      %1194 = vmatmul.mubr.f32.gmra.mxu0 %v390
      %v1195 = vpop.f32.mrf.mxu0
      %v1196 = vadd.f32 %v341, %v1195
      %v1197 = vpop.f32.mrf.mxu0
      %1198 = vdwg.mxu0
      %v1199 = vmul.f32 %v1121, 0.5
      %v1200 = vmul.f32 %v1126, 0.5
      %v1201 = vmul.f32 %v1131, 0.5
      %v1202 = vmul.f32 %v1136, 0.5
      %v1203 = vmul.f32 %v1141, 0.5
      %v1204 = vmul.f32 %v1146, 0.5
      %v1205 = vmul.f32 %v1151, 0.5
      %v1206 = vmul.f32 %v1156, 0.5
      %v1207 = vmul.f32 %v1161, 0.5
      %v1208 = vmul.f32 %v1166, 0.5
      %v1209 = vmul.f32 %v1171, 0.5
      %v1210 = vmul.f32 %v1176, 0.5
      %v1211 = vmul.f32 %v1181, 0.5
      %v1212 = vmul.f32 %v1186, 0.5
      %v1213 = vmul.f32 %v1191, 0.5
      %v1214 = vmul.f32 %v1196, 0.5
      %v1215 = vmul.f32 %v1121, 0.70710677
      %v1216 = vmul.f32 %v1126, 0.70710677
      %v1217 = vmul.f32 %v1131, 0.70710677
      %v1218 = vmul.f32 %v1136, 0.70710677
      %v1219 = vmul.f32 %v1141, 0.70710677
      %v1220 = vmul.f32 %v1146, 0.70710677
      %v1221 = vmul.f32 %v1151, 0.70710677
      %v1222 = vmul.f32 %v1156, 0.70710677
      %v1223 = vmul.f32 %v1161, 0.70710677
      %v1224 = vmul.f32 %v1166, 0.70710677
      %v1225 = vmul.f32 %v1171, 0.70710677
      %v1226 = vmul.f32 %v1176, 0.70710677
      %v1227 = vmul.f32 %v1181, 0.70710677
      %v1228 = vmul.f32 %v1186, 0.70710677
      %v1229 = vmul.f32 %v1191, 0.70710677
      %v1230 = vmul.f32 %v1196, 0.70710677
      %vm1231 = vcmp.ge.f32.partialorder %v1215, 0.0
      %vm1232 = vcmp.ge.f32.partialorder %v1216, 0.0
      %vm1233 = vcmp.ge.f32.partialorder %v1217, 0.0
      %vm1234 = vcmp.ge.f32.partialorder %v1218, 0.0
      %vm1235 = vcmp.ge.f32.partialorder %v1219, 0.0
      %vm1236 = vcmp.ge.f32.partialorder %v1220, 0.0
      %vm1237 = vcmp.ge.f32.partialorder %v1221, 0.0
      %vm1238 = vcmp.ge.f32.partialorder %v1222, 0.0
      %vm1239 = vcmp.ge.f32.partialorder %v1223, 0.0
      %vm1240 = vcmp.ge.f32.partialorder %v1224, 0.0
      %vm1241 = vcmp.ge.f32.partialorder %v1225, 0.0
      %vm1242 = vcmp.ge.f32.partialorder %v1226, 0.0
      %vm1243 = vcmp.ge.f32.partialorder %v1227, 0.0
      %vm1244 = vcmp.ge.f32.partialorder %v1228, 0.0
      %vm1245 = vcmp.ge.f32.partialorder %v1229, 0.0
      %vm1246 = vcmp.ge.f32.partialorder %v1230, 0.0
      %v1247 = vsel %vm1231, 1.0, -1.0
      %v1248 = vsel %vm1232, 1.0, -1.0
      %v1249 = vsel %vm1233, 1.0, -1.0
      %v1250 = vsel %vm1234, 1.0, -1.0
      %v1251 = vsel %vm1235, 1.0, -1.0
      %v1252 = vsel %vm1236, 1.0, -1.0
      %v1253 = vsel %vm1237, 1.0, -1.0
      %v1254 = vsel %vm1238, 1.0, -1.0
      %v1255 = vsel %vm1239, 1.0, -1.0
      %v1256 = vsel %vm1240, 1.0, -1.0
      %v1257 = vsel %vm1241, 1.0, -1.0
      %v1258 = vsel %vm1242, 1.0, -1.0
      %v1259 = vsel %vm1243, 1.0, -1.0
      %v1260 = vsel %vm1244, 1.0, -1.0
      %v1261 = vsel %vm1245, 1.0, -1.0
      %v1262 = vsel %vm1246, 1.0, -1.0
      %v1263 = vand.u32 2147483647, %v1215
      %v1264 = vand.u32 2147483647, %v1216
      %v1265 = vand.u32 2147483647, %v1217
      %v1266 = vand.u32 2147483647, %v1218
      %v1267 = vand.u32 2147483647, %v1219
      %v1268 = vand.u32 2147483647, %v1220
      %v1269 = vand.u32 2147483647, %v1221
      %v1270 = vand.u32 2147483647, %v1222
      %v1271 = vand.u32 2147483647, %v1223
      %v1272 = vand.u32 2147483647, %v1224
      %v1273 = vand.u32 2147483647, %v1225
      %v1274 = vand.u32 2147483647, %v1226
      %v1275 = vand.u32 2147483647, %v1227
      %v1276 = vand.u32 2147483647, %v1228
      %v1277 = vand.u32 2147483647, %v1229
      %v1278 = vand.u32 2147483647, %v1230
      %v1279 = vmul.f32 %v1263, 0.3275911
      %v1280 = vmul.f32 %v1264, 0.3275911
      %v1281 = vmul.f32 %v1265, 0.3275911
      %v1282 = vmul.f32 %v1266, 0.3275911
      %v1283 = vmul.f32 %v1267, 0.3275911
      %v1284 = vmul.f32 %v1268, 0.3275911
      %v1285 = vmul.f32 %v1269, 0.3275911
      %v1286 = vmul.f32 %v1270, 0.3275911
      %v1287 = vmul.f32 %v1271, 0.3275911
      %v1288 = vmul.f32 %v1272, 0.3275911
      %v1289 = vmul.f32 %v1273, 0.3275911
      %v1290 = vmul.f32 %v1274, 0.3275911
      %v1291 = vmul.f32 %v1275, 0.3275911
      %v1292 = vmul.f32 %v1276, 0.3275911
      %v1293 = vmul.f32 %v1277, 0.3275911
      %v1294 = vmul.f32 %v1278, 0.3275911
      %v1295 = vadd.f32 %v1279, 1.0
      %v1296 = vadd.f32 %v1280, 1.0
      %v1297 = vadd.f32 %v1281, 1.0
      %v1298 = vadd.f32 %v1282, 1.0
      %v1299 = vadd.f32 %v1283, 1.0
      %v1300 = vadd.f32 %v1284, 1.0
      %v1301 = vadd.f32 %v1285, 1.0
      %v1302 = vadd.f32 %v1286, 1.0
      %v1303 = vadd.f32 %v1287, 1.0
      %v1304 = vadd.f32 %v1288, 1.0
      %v1305 = vadd.f32 %v1289, 1.0
      %v1306 = vadd.f32 %v1290, 1.0
      %v1307 = vadd.f32 %v1291, 1.0
      %v1308 = vadd.f32 %v1292, 1.0
      %v1309 = vadd.f32 %v1293, 1.0
      %v1310 = vadd.f32 %v1294, 1.0
      %v1311 = vrcp.pop %v1295
      %v1312 = vmul.f32 1.0, %v1311
      %v1313 = vrcp.pop %v1296
      %v1314 = vmul.f32 1.0, %v1313
      %v1315 = vrcp.pop %v1297
      %v1316 = vmul.f32 1.0, %v1315
      %v1317 = vrcp.pop %v1298
      %v1318 = vmul.f32 1.0, %v1317
      %v1319 = vrcp.pop %v1299
      %v1320 = vmul.f32 1.0, %v1319
      %v1321 = vrcp.pop %v1300
      %v1322 = vmul.f32 1.0, %v1321
      %v1323 = vrcp.pop %v1301
      %v1324 = vmul.f32 1.0, %v1323
      %v1325 = vrcp.pop %v1302
      %v1326 = vmul.f32 1.0, %v1325
      %v1327 = vrcp.pop %v1303
      %v1328 = vmul.f32 1.0, %v1327
      %v1329 = vrcp.pop %v1304
      %v1330 = vmul.f32 1.0, %v1329
      %v1331 = vrcp.pop %v1305
      %v1332 = vmul.f32 1.0, %v1331
      %v1333 = vrcp.pop %v1306
      %v1334 = vmul.f32 1.0, %v1333
      %v1335 = vrcp.pop %v1307
      %v1336 = vmul.f32 1.0, %v1335
      %v1337 = vrcp.pop %v1308
      %v1338 = vmul.f32 1.0, %v1337
      %v1339 = vrcp.pop %v1309
      %v1340 = vmul.f32 1.0, %v1339
      %v1341 = vrcp.pop %v1310
      %v1342 = vmul.f32 1.0, %v1341
      %v1343 = vmul.f32 %v1312, 1.0614054
      %v1344 = vmul.f32 %v1314, 1.0614054
      %v1345 = vmul.f32 %v1316, 1.0614054
      %v1346 = vmul.f32 %v1318, 1.0614054
      %v1347 = vmul.f32 %v1320, 1.0614054
      %v1348 = vmul.f32 %v1322, 1.0614054
      %v1349 = vmul.f32 %v1324, 1.0614054
      %v1350 = vmul.f32 %v1326, 1.0614054
      %v1351 = vmul.f32 %v1328, 1.0614054
      %v1352 = vmul.f32 %v1330, 1.0614054
      %v1353 = vmul.f32 %v1332, 1.0614054
      %v1354 = vmul.f32 %v1334, 1.0614054
      %v1355 = vmul.f32 %v1336, 1.0614054
      %v1356 = vmul.f32 %v1338, 1.0614054
      %v1357 = vmul.f32 %v1340, 1.0614054
      %v1358 = vmul.f32 %v1342, 1.0614054
      %v1359 = vadd.f32 %v1343, -1.4531521
      %v1360 = vadd.f32 %v1344, -1.4531521
      %v1361 = vadd.f32 %v1345, -1.4531521
      %v1362 = vadd.f32 %v1346, -1.4531521
      %v1363 = vadd.f32 %v1347, -1.4531521
      %v1364 = vadd.f32 %v1348, -1.4531521
      %v1365 = vadd.f32 %v1349, -1.4531521
      %v1366 = vadd.f32 %v1350, -1.4531521
      %v1367 = vadd.f32 %v1351, -1.4531521
      %v1368 = vadd.f32 %v1352, -1.4531521
      %v1369 = vadd.f32 %v1353, -1.4531521
      %v1370 = vadd.f32 %v1354, -1.4531521
      %v1371 = vadd.f32 %v1355, -1.4531521
      %v1372 = vadd.f32 %v1356, -1.4531521
      %v1373 = vadd.f32 %v1357, -1.4531521
      %v1374 = vadd.f32 %v1358, -1.4531521
      %v1375 = vmul.f32 %v1312, %v1359
      %v1376 = vmul.f32 %v1314, %v1360
      %v1377 = vmul.f32 %v1316, %v1361
      %v1378 = vmul.f32 %v1318, %v1362
      %v1379 = vmul.f32 %v1320, %v1363
      %v1380 = vmul.f32 %v1322, %v1364
      %v1381 = vmul.f32 %v1324, %v1365
      %v1382 = vmul.f32 %v1326, %v1366
      %v1383 = vmul.f32 %v1328, %v1367
      %v1384 = vmul.f32 %v1330, %v1368
      %v1385 = vmul.f32 %v1332, %v1369
      %v1386 = vmul.f32 %v1334, %v1370
      %v1387 = vmul.f32 %v1336, %v1371
      %v1388 = vmul.f32 %v1338, %v1372
      %v1389 = vmul.f32 %v1340, %v1373
      %v1390 = vmul.f32 %v1342, %v1374
      %v1391 = vadd.f32 %v1375, 1.4214138
      %v1392 = vadd.f32 %v1376, 1.4214138
      %v1393 = vadd.f32 %v1377, 1.4214138
      %v1394 = vadd.f32 %v1378, 1.4214138
      %v1395 = vadd.f32 %v1379, 1.4214138
      %v1396 = vadd.f32 %v1380, 1.4214138
      %v1397 = vadd.f32 %v1381, 1.4214138
      %v1398 = vadd.f32 %v1382, 1.4214138
      %v1399 = vadd.f32 %v1383, 1.4214138
      %v1400 = vadd.f32 %v1384, 1.4214138
      %v1401 = vadd.f32 %v1385, 1.4214138
      %v1402 = vadd.f32 %v1386, 1.4214138
      %v1403 = vadd.f32 %v1387, 1.4214138
      %v1404 = vadd.f32 %v1388, 1.4214138
      %v1405 = vadd.f32 %v1389, 1.4214138
      %v1406 = vadd.f32 %v1390, 1.4214138
      %v1407 = vmul.f32 %v1312, %v1391
      %v1408 = vmul.f32 %v1314, %v1392
      %v1409 = vmul.f32 %v1316, %v1393
      %v1410 = vmul.f32 %v1318, %v1394
      %v1411 = vmul.f32 %v1320, %v1395
      %v1412 = vmul.f32 %v1322, %v1396
      %v1413 = vmul.f32 %v1324, %v1397
      %v1414 = vmul.f32 %v1326, %v1398
      %v1415 = vmul.f32 %v1328, %v1399
      %v1416 = vmul.f32 %v1330, %v1400
      %v1417 = vmul.f32 %v1332, %v1401
      %v1418 = vmul.f32 %v1334, %v1402
      %v1419 = vmul.f32 %v1336, %v1403
      %v1420 = vmul.f32 %v1338, %v1404
      %v1421 = vmul.f32 %v1340, %v1405
      %v1422 = vmul.f32 %v1342, %v1406
      %v1423 = vadd.f32 %v1407, -0.28449672
      %v1424 = vadd.f32 %v1408, -0.28449672
      %v1425 = vadd.f32 %v1409, -0.28449672
      %v1426 = vadd.f32 %v1410, -0.28449672
      %v1427 = vadd.f32 %v1411, -0.28449672
      %v1428 = vadd.f32 %v1412, -0.28449672
      %v1429 = vadd.f32 %v1413, -0.28449672
      %v1430 = vadd.f32 %v1414, -0.28449672
      %v1431 = vadd.f32 %v1415, -0.28449672
      %v1432 = vadd.f32 %v1416, -0.28449672
      %v1433 = vadd.f32 %v1417, -0.28449672
      %v1434 = vadd.f32 %v1418, -0.28449672
      %v1435 = vadd.f32 %v1419, -0.28449672
      %v1436 = vadd.f32 %v1420, -0.28449672
      %v1437 = vadd.f32 %v1421, -0.28449672
      %v1438 = vadd.f32 %v1422, -0.28449672
      %v1439 = vmul.f32 %v1312, %v1423
      %v1440 = vmul.f32 %v1314, %v1424
      %v1441 = vmul.f32 %v1316, %v1425
      %v1442 = vmul.f32 %v1318, %v1426
      %v1443 = vmul.f32 %v1320, %v1427
      %v1444 = vmul.f32 %v1322, %v1428
      %v1445 = vmul.f32 %v1324, %v1429
      %v1446 = vmul.f32 %v1326, %v1430
      %v1447 = vmul.f32 %v1328, %v1431
      %v1448 = vmul.f32 %v1330, %v1432
      %v1449 = vmul.f32 %v1332, %v1433
      %v1450 = vmul.f32 %v1334, %v1434
      %v1451 = vmul.f32 %v1336, %v1435
      %v1452 = vmul.f32 %v1338, %v1436
      %v1453 = vmul.f32 %v1340, %v1437
      %v1454 = vmul.f32 %v1342, %v1438
      %v1455 = vadd.f32 %v1439, 0.2548296
      %v1456 = vadd.f32 %v1440, 0.2548296
      %v1457 = vadd.f32 %v1441, 0.2548296
      %v1458 = vadd.f32 %v1442, 0.2548296
      %v1459 = vadd.f32 %v1443, 0.2548296
      %v1460 = vadd.f32 %v1444, 0.2548296
      %v1461 = vadd.f32 %v1445, 0.2548296
      %v1462 = vadd.f32 %v1446, 0.2548296
      %v1463 = vadd.f32 %v1447, 0.2548296
      %v1464 = vadd.f32 %v1448, 0.2548296
      %v1465 = vadd.f32 %v1449, 0.2548296
      %v1466 = vadd.f32 %v1450, 0.2548296
      %v1467 = vadd.f32 %v1451, 0.2548296
      %v1468 = vadd.f32 %v1452, 0.2548296
      %v1469 = vadd.f32 %v1453, 0.2548296
      %v1470 = vadd.f32 %v1454, 0.2548296
      %v1471 = vmul.f32 %v1312, %v1455
      %v1472 = vmul.f32 %v1314, %v1456
      %v1473 = vmul.f32 %v1316, %v1457
      %v1474 = vmul.f32 %v1318, %v1458
      %v1475 = vmul.f32 %v1320, %v1459
      %v1476 = vmul.f32 %v1322, %v1460
      %v1477 = vmul.f32 %v1324, %v1461
      %v1478 = vmul.f32 %v1326, %v1462
      %v1479 = vmul.f32 %v1328, %v1463
      %v1480 = vmul.f32 %v1330, %v1464
      %v1481 = vmul.f32 %v1332, %v1465
      %v1482 = vmul.f32 %v1334, %v1466
      %v1483 = vmul.f32 %v1336, %v1467
      %v1484 = vmul.f32 %v1338, %v1468
      %v1485 = vmul.f32 %v1340, %v1469
      %v1486 = vmul.f32 %v1342, %v1470
      %v1487 = vsub.f32 0.0, %v1263
      %v1488 = vsub.f32 0.0, %v1264
      %v1489 = vsub.f32 0.0, %v1265
      %v1490 = vsub.f32 0.0, %v1266
      %v1491 = vsub.f32 0.0, %v1267
      %v1492 = vsub.f32 0.0, %v1268
      %v1493 = vsub.f32 0.0, %v1269
      %v1494 = vsub.f32 0.0, %v1270
      %v1495 = vsub.f32 0.0, %v1271
      %v1496 = vsub.f32 0.0, %v1272
      %v1497 = vsub.f32 0.0, %v1273
      %v1498 = vsub.f32 0.0, %v1274
      %v1499 = vsub.f32 0.0, %v1275
      %v1500 = vsub.f32 0.0, %v1276
      %v1501 = vsub.f32 0.0, %v1277
      %v1502 = vsub.f32 0.0, %v1278
      %v1503 = vmul.f32 %v1487, %v1263
      %v1504 = vmul.f32 %v1488, %v1264
      %v1505 = vmul.f32 %v1489, %v1265
      %v1506 = vmul.f32 %v1490, %v1266
      %v1507 = vmul.f32 %v1491, %v1267
      %v1508 = vmul.f32 %v1492, %v1268
      %v1509 = vmul.f32 %v1493, %v1269
      %v1510 = vmul.f32 %v1494, %v1270
      %v1511 = vmul.f32 %v1495, %v1271
      %v1512 = vmul.f32 %v1496, %v1272
      %v1513 = vmul.f32 %v1497, %v1273
      %v1514 = vmul.f32 %v1498, %v1274
      %v1515 = vmul.f32 %v1499, %v1275
      %v1516 = vmul.f32 %v1500, %v1276
      %v1517 = vmul.f32 %v1501, %v1277
      %v1518 = vmul.f32 %v1502, %v1278
      %v1519 = vmul.f32 %v1503, 1.442695
      %v1520 = vpow.pop %v1519
      %v1521 = vmul.f32 %v1504, 1.442695
      %v1522 = vpow.pop %v1521
      %v1523 = vmul.f32 %v1505, 1.442695
      %v1524 = vpow.pop %v1523
      %v1525 = vmul.f32 %v1506, 1.442695
      %v1526 = vpow.pop %v1525
      %v1527 = vmul.f32 %v1507, 1.442695
      %v1528 = vpow.pop %v1527
      %v1529 = vmul.f32 %v1508, 1.442695
      %v1530 = vpow.pop %v1529
      %v1531 = vmul.f32 %v1509, 1.442695
      %v1532 = vpow.pop %v1531
      %v1533 = vmul.f32 %v1510, 1.442695
      %v1534 = vpow.pop %v1533
      %v1535 = vmul.f32 %v1511, 1.442695
      %v1536 = vpow.pop %v1535
      %v1537 = vmul.f32 %v1512, 1.442695
      %v1538 = vpow.pop %v1537
      %v1539 = vmul.f32 %v1513, 1.442695
      %v1540 = vpow.pop %v1539
      %v1541 = vmul.f32 %v1514, 1.442695
      %v1542 = vpow.pop %v1541
      %v1543 = vmul.f32 %v1515, 1.442695
      %v1544 = vpow.pop %v1543
      %v1545 = vmul.f32 %v1516, 1.442695
      %v1546 = vpow.pop %v1545
      %v1547 = vmul.f32 %v1517, 1.442695
      %v1548 = vpow.pop %v1547
      %v1549 = vmul.f32 %v1518, 1.442695
      %v1550 = vpow.pop %v1549
      %v1551 = vmul.f32 %v1471, %v1520
      %v1552 = vmul.f32 %v1472, %v1522
      %v1553 = vmul.f32 %v1473, %v1524
      %v1554 = vmul.f32 %v1474, %v1526
      %v1555 = vmul.f32 %v1475, %v1528
      %v1556 = vmul.f32 %v1476, %v1530
      %v1557 = vmul.f32 %v1477, %v1532
      %v1558 = vmul.f32 %v1478, %v1534
      %v1559 = vmul.f32 %v1479, %v1536
      %v1560 = vmul.f32 %v1480, %v1538
      %v1561 = vmul.f32 %v1481, %v1540
      %v1562 = vmul.f32 %v1482, %v1542
      %v1563 = vmul.f32 %v1483, %v1544
      %v1564 = vmul.f32 %v1484, %v1546
      %v1565 = vmul.f32 %v1485, %v1548
      %v1566 = vmul.f32 %v1486, %v1550
      %v1567 = vsub.f32 1.0, %v1551
      %v1568 = vsub.f32 1.0, %v1552
      %v1569 = vsub.f32 1.0, %v1553
      %v1570 = vsub.f32 1.0, %v1554
      %v1571 = vsub.f32 1.0, %v1555
      %v1572 = vsub.f32 1.0, %v1556
      %v1573 = vsub.f32 1.0, %v1557
      %v1574 = vsub.f32 1.0, %v1558
      %v1575 = vsub.f32 1.0, %v1559
      %v1576 = vsub.f32 1.0, %v1560
      %v1577 = vsub.f32 1.0, %v1561
      %v1578 = vsub.f32 1.0, %v1562
      %v1579 = vsub.f32 1.0, %v1563
      %v1580 = vsub.f32 1.0, %v1564
      %v1581 = vsub.f32 1.0, %v1565
      %v1582 = vsub.f32 1.0, %v1566
      %v1583 = vmul.f32 %v1247, %v1567
      %v1584 = vmul.f32 %v1248, %v1568
      %v1585 = vmul.f32 %v1249, %v1569
      %v1586 = vmul.f32 %v1250, %v1570
      %v1587 = vmul.f32 %v1251, %v1571
      %v1588 = vmul.f32 %v1252, %v1572
      %v1589 = vmul.f32 %v1253, %v1573
      %v1590 = vmul.f32 %v1254, %v1574
      %v1591 = vmul.f32 %v1255, %v1575
      %v1592 = vmul.f32 %v1256, %v1576
      %v1593 = vmul.f32 %v1257, %v1577
      %v1594 = vmul.f32 %v1258, %v1578
      %v1595 = vmul.f32 %v1259, %v1579
      %v1596 = vmul.f32 %v1260, %v1580
      %v1597 = vmul.f32 %v1261, %v1581
      %v1598 = vmul.f32 %v1262, %v1582
      %v1599 = vadd.f32 %v1583, 1.0
      %v1600 = vadd.f32 %v1584, 1.0
      %v1601 = vadd.f32 %v1585, 1.0
      %v1602 = vadd.f32 %v1586, 1.0
      %v1603 = vadd.f32 %v1587, 1.0
      %v1604 = vadd.f32 %v1588, 1.0
      %v1605 = vadd.f32 %v1589, 1.0
      %v1606 = vadd.f32 %v1590, 1.0
      %v1607 = vadd.f32 %v1591, 1.0
      %v1608 = vadd.f32 %v1592, 1.0
      %v1609 = vadd.f32 %v1593, 1.0
      %v1610 = vadd.f32 %v1594, 1.0
      %v1611 = vadd.f32 %v1595, 1.0
      %v1612 = vadd.f32 %v1596, 1.0
      %v1613 = vadd.f32 %v1597, 1.0
      %v1614 = vadd.f32 %v1598, 1.0
      %v1615 = vmul.f32 %v1199, %v1599
      %v1616 = vmul.f32 %v1200, %v1600
      %v1617 = vmul.f32 %v1201, %v1601
      %v1618 = vmul.f32 %v1202, %v1602
      %v1619 = vmul.f32 %v1203, %v1603
      %v1620 = vmul.f32 %v1204, %v1604
      %v1621 = vmul.f32 %v1205, %v1605
      %v1622 = vmul.f32 %v1206, %v1606
      %v1623 = vmul.f32 %v1207, %v1607
      %v1624 = vmul.f32 %v1208, %v1608
      %v1625 = vmul.f32 %v1209, %v1609
      %v1626 = vmul.f32 %v1210, %v1610
      %v1627 = vmul.f32 %v1211, %v1611
      %v1628 = vmul.f32 %v1212, %v1612
      %v1629 = vmul.f32 %v1213, %v1613
      %v1630 = vmul.f32 %v1214, %v1614
      %1631 = vmatprep.subr.mxu0 0.0
      %1632 = vmatpush1.msra.mxu0 %v1630
      %1633 = vmatprep.subr.mxu0 0.0
      %1634 = vmatpush1.msra.mxu0 %v1629
      %1635 = vmatprep.subr.mxu0 0.0
      %1636 = vmatpush1.msra.mxu0 %v1628
      %1637 = vmatprep.subr.mxu0 0.0
      %1638 = vmatpush1.msra.mxu0 %v1627
      %1639 = vmatprep.subr.mxu0 0.0
      %1640 = vmatpush1.msra.mxu0 %v1626
      %1641 = vmatprep.subr.mxu0 0.0
      %1642 = vmatpush1.msra.mxu0 %v1625
      %1643 = vmatprep.subr.mxu0 0.0
      %1644 = vmatpush1.msra.mxu0 %v1624
      %1645 = vmatprep.subr.mxu0 0.0
      %1646 = vmatpush1.msra.mxu0 %v1623
      %1647 = vmatprep.subr.mxu0 0.0
      %1648 = vmatpush1.msra.mxu0 %v1622
      %1649 = vmatprep.subr.mxu0 0.0
      %1650 = vmatpush1.msra.mxu0 %v1621
      %1651 = vmatprep.subr.mxu0 0.0
      %1652 = vmatpush1.msra.mxu0 %v1620
      %1653 = vmatprep.subr.mxu0 0.0
      %1654 = vmatpush1.msra.mxu0 %v1619
      %1655 = vmatprep.subr.mxu0 0.0
      %1656 = vmatpush1.msra.mxu0 %v1618
      %1657 = vmatprep.subr.mxu0 0.0
      %1658 = vmatpush1.msra.mxu0 %v1617
      %1659 = vmatprep.subr.mxu0 0.0
      %1660 = vmatpush1.msra.mxu0 %v1616
      %1661 = vmatprep.subr.mxu0 0.0
      %1662 = vmatpush1.msra.mxu0 %v1615
      %1663 = vmatprep.subr.mxu0 0.0
      %1664 = vmatpush2.msra.mxu0 0.0
      %1665 = vmatprep.subr.mxu0 0.0
      %1666 = vmatpush2.msra.mxu0 0.0
      %1667 = vmatprep.subr.mxu0 0.0
      %1668 = vmatpush2.msra.mxu0 0.0
      %1669 = vmatprep.subr.mxu0 0.0
      %1670 = vmatpush2.msra.mxu0 0.0
      %1671 = vmatprep.subr.mxu0 0.0
      %1672 = vmatpush2.msra.mxu0 0.0
      %1673 = vmatprep.subr.mxu0 0.0
      %1674 = vmatpush2.msra.mxu0 0.0
      %1675 = vmatprep.subr.mxu0 0.0
      %1676 = vmatpush2.msra.mxu0 0.0
      %1677 = vmatprep.subr.mxu0 0.0
      %1678 = vmatpush2.msra.mxu0 0.0
      %1679 = vmatprep.subr.mxu0 0.0
      %1680 = vmatpush2.msra.mxu0 0.0
      %1681 = vmatprep.subr.mxu0 0.0
      %1682 = vmatpush2.msra.mxu0 0.0
      %1683 = vmatprep.subr.mxu0 0.0
      %1684 = vmatpush2.msra.mxu0 0.0
      %1685 = vmatprep.subr.mxu0 0.0
      %1686 = vmatpush2.msra.mxu0 0.0
      %1687 = vmatprep.subr.mxu0 0.0
      %1688 = vmatpush2.msra.mxu0 0.0
      %1689 = vmatprep.subr.mxu0 0.0
      %1690 = vmatpush2.msra.mxu0 0.0
      %1691 = vmatprep.subr.mxu0 0.0
      %1692 = vmatpush2.msra.mxu0 0.0
      %1693 = vmatprep.subr.mxu0 0.0
      %1694 = vmatpush2.msra.mxu0 0.0
      %1695 = vmatprep.mubr.f32.mxu0 0.0
      %1696 = vmatmul.mubr.f32.gmra.mxu0 %v260
      %v1697 = vpop.f32.mrf.mxu0
      %v1698 = vadd.f32 %v977, %v1697
      %v1699 = vpop.f32.mrf.mxu0
      %1700 = vdwg.mxu0
      %1701 = vst.msk [vmem:[%s226 + $0x1] sm:$0x1] %vm1051, %v1698
      %v1702 = vld [vmem:[%s221 + $0x10] sm:$0xff]
      %1703 = vmatprep.subr.mxu0 0.0
      %1704 = vmatpush1.msra.mxu0 0.0
      %1705 = vmatprep.subr.mxu0 0.0
      %1706 = vmatpush1.msra.mxu0 0.0
      %1707 = vmatprep.subr.mxu0 0.0
      %1708 = vmatpush1.msra.mxu0 0.0
      %1709 = vmatprep.subr.mxu0 0.0
      %1710 = vmatpush1.msra.mxu0 0.0
      %1711 = vmatprep.subr.mxu0 0.0
      %1712 = vmatpush1.msra.mxu0 0.0
      %1713 = vmatprep.subr.mxu0 0.0
      %1714 = vmatpush1.msra.mxu0 0.0
      %1715 = vmatprep.subr.mxu0 0.0
      %1716 = vmatpush1.msra.mxu0 0.0
      %1717 = vmatprep.subr.mxu0 0.0
      %1718 = vmatpush1.msra.mxu0 0.0
      %1719 = vmatprep.subr.mxu0 0.0
      %1720 = vmatpush1.msra.mxu0 0.0
      %1721 = vmatprep.subr.mxu0 0.0
      %1722 = vmatpush1.msra.mxu0 0.0
      %1723 = vmatprep.subr.mxu0 0.0
      %1724 = vmatpush1.msra.mxu0 0.0
      %1725 = vmatprep.subr.mxu0 0.0
      %1726 = vmatpush1.msra.mxu0 0.0
      %1727 = vmatprep.subr.mxu0 0.0
      %1728 = vmatpush1.msra.mxu0 0.0
      %1729 = vmatprep.subr.mxu0 0.0
      %1730 = vmatpush1.msra.mxu0 0.0
      %1731 = vmatprep.subr.mxu0 0.0
      %1732 = vmatpush1.msra.mxu0 0.0
      %1733 = vmatprep.subr.mxu0 0.0
      %1734 = vmatpush1.msra.mxu0 %v1702
      %1735 = vmatprep.subr.mxu0 0.0
      %1736 = vmatpush2.msra.mxu0 0.0
      %1737 = vmatprep.subr.mxu0 0.0
      %1738 = vmatpush2.msra.mxu0 0.0
      %1739 = vmatprep.subr.mxu0 0.0
      %1740 = vmatpush2.msra.mxu0 0.0
      %1741 = vmatprep.subr.mxu0 0.0
      %1742 = vmatpush2.msra.mxu0 0.0
      %1743 = vmatprep.subr.mxu0 0.0
      %1744 = vmatpush2.msra.mxu0 0.0
      %1745 = vmatprep.subr.mxu0 0.0
      %1746 = vmatpush2.msra.mxu0 0.0
      %1747 = vmatprep.subr.mxu0 0.0
      %1748 = vmatpush2.msra.mxu0 0.0
      %1749 = vmatprep.subr.mxu0 0.0
      %1750 = vmatpush2.msra.mxu0 0.0
      %1751 = vmatprep.subr.mxu0 0.0
      %1752 = vmatpush2.msra.mxu0 0.0
      %1753 = vmatprep.subr.mxu0 0.0
      %1754 = vmatpush2.msra.mxu0 0.0
      %1755 = vmatprep.subr.mxu0 0.0
      %1756 = vmatpush2.msra.mxu0 0.0
      %1757 = vmatprep.subr.mxu0 0.0
      %1758 = vmatpush2.msra.mxu0 0.0
      %1759 = vmatprep.subr.mxu0 0.0
      %1760 = vmatpush2.msra.mxu0 0.0
      %1761 = vmatprep.subr.mxu0 0.0
      %1762 = vmatpush2.msra.mxu0 0.0
      %1763 = vmatprep.subr.mxu0 0.0
      %1764 = vmatpush2.msra.mxu0 0.0
      %1765 = vmatprep.subr.mxu0 0.0
      %1766 = vmatpush2.msra.mxu0 0.0
      %1767 = vmatprep.mubr.f32.mxu0 0.0
      %1768 = vmatmul.mubr.f32.gmra.mxu0 %v345
      %v1769 = vpop.f32.mrf.mxu0
      %v1770 = vadd.f32 %v266, %v1769
      %v1771 = vpop.f32.mrf.mxu0
      %1772 = vmatprep.mubr.f32.mxu0 0.0
      %1773 = vmatmul.mubr.f32.gmra.mxu0 %v348
      %v1774 = vpop.f32.mrf.mxu0
      %v1775 = vadd.f32 %v271, %v1774
      %v1776 = vpop.f32.mrf.mxu0
      %1777 = vmatprep.mubr.f32.mxu0 0.0
      %1778 = vmatmul.mubr.f32.gmra.mxu0 %v351
      %v1779 = vpop.f32.mrf.mxu0
      %v1780 = vadd.f32 %v276, %v1779
      %v1781 = vpop.f32.mrf.mxu0
      %1782 = vmatprep.mubr.f32.mxu0 0.0
      %1783 = vmatmul.mubr.f32.gmra.mxu0 %v354
      %v1784 = vpop.f32.mrf.mxu0
      %v1785 = vadd.f32 %v281, %v1784
      %v1786 = vpop.f32.mrf.mxu0
      %1787 = vmatprep.mubr.f32.mxu0 0.0
      %1788 = vmatmul.mubr.f32.gmra.mxu0 %v357
      %v1789 = vpop.f32.mrf.mxu0
      %v1790 = vadd.f32 %v286, %v1789
      %v1791 = vpop.f32.mrf.mxu0
      %1792 = vmatprep.mubr.f32.mxu0 0.0
      %1793 = vmatmul.mubr.f32.gmra.mxu0 %v360
      %v1794 = vpop.f32.mrf.mxu0
      %v1795 = vadd.f32 %v291, %v1794
      %v1796 = vpop.f32.mrf.mxu0
      %1797 = vmatprep.mubr.f32.mxu0 0.0
      %1798 = vmatmul.mubr.f32.gmra.mxu0 %v363
      %v1799 = vpop.f32.mrf.mxu0
      %v1800 = vadd.f32 %v296, %v1799
      %v1801 = vpop.f32.mrf.mxu0
      %1802 = vmatprep.mubr.f32.mxu0 0.0
      %1803 = vmatmul.mubr.f32.gmra.mxu0 %v366
      %v1804 = vpop.f32.mrf.mxu0
      %v1805 = vadd.f32 %v301, %v1804
      %v1806 = vpop.f32.mrf.mxu0
      %1807 = vmatprep.mubr.f32.mxu0 0.0
      %1808 = vmatmul.mubr.f32.gmra.mxu0 %v369
      %v1809 = vpop.f32.mrf.mxu0
      %v1810 = vadd.f32 %v306, %v1809
      %v1811 = vpop.f32.mrf.mxu0
      %1812 = vmatprep.mubr.f32.mxu0 0.0
      %1813 = vmatmul.mubr.f32.gmra.mxu0 %v372
      %v1814 = vpop.f32.mrf.mxu0
      %v1815 = vadd.f32 %v311, %v1814
      %v1816 = vpop.f32.mrf.mxu0
      %1817 = vmatprep.mubr.f32.mxu0 0.0
      %1818 = vmatmul.mubr.f32.gmra.mxu0 %v375
      %v1819 = vpop.f32.mrf.mxu0
      %v1820 = vadd.f32 %v316, %v1819
      %v1821 = vpop.f32.mrf.mxu0
      %1822 = vmatprep.mubr.f32.mxu0 0.0
      %1823 = vmatmul.mubr.f32.gmra.mxu0 %v378
      %v1824 = vpop.f32.mrf.mxu0
      %v1825 = vadd.f32 %v321, %v1824
      %v1826 = vpop.f32.mrf.mxu0
      %1827 = vmatprep.mubr.f32.mxu0 0.0
      %1828 = vmatmul.mubr.f32.gmra.mxu0 %v381
      %v1829 = vpop.f32.mrf.mxu0
      %v1830 = vadd.f32 %v326, %v1829
      %v1831 = vpop.f32.mrf.mxu0
      %1832 = vmatprep.mubr.f32.mxu0 0.0
      %1833 = vmatmul.mubr.f32.gmra.mxu0 %v384
      %v1834 = vpop.f32.mrf.mxu0
      %v1835 = vadd.f32 %v331, %v1834
      %v1836 = vpop.f32.mrf.mxu0
      %1837 = vmatprep.mubr.f32.mxu0 0.0
      %1838 = vmatmul.mubr.f32.gmra.mxu0 %v387
      %v1839 = vpop.f32.mrf.mxu0
      %v1840 = vadd.f32 %v336, %v1839
      %v1841 = vpop.f32.mrf.mxu0
      %1842 = vmatprep.mubr.f32.mxu0 0.0
      %1843 = vmatmul.mubr.f32.gmra.mxu0 %v390
      %v1844 = vpop.f32.mrf.mxu0
      %v1845 = vadd.f32 %v341, %v1844
      %v1846 = vpop.f32.mrf.mxu0
      %1847 = vdwg.mxu0
      %v1848 = vmul.f32 %v1770, 0.5
      %v1849 = vmul.f32 %v1775, 0.5
      %v1850 = vmul.f32 %v1780, 0.5
      %v1851 = vmul.f32 %v1785, 0.5
      %v1852 = vmul.f32 %v1790, 0.5
      %v1853 = vmul.f32 %v1795, 0.5
      %v1854 = vmul.f32 %v1800, 0.5
      %v1855 = vmul.f32 %v1805, 0.5
      %v1856 = vmul.f32 %v1810, 0.5
      %v1857 = vmul.f32 %v1815, 0.5
      %v1858 = vmul.f32 %v1820, 0.5
      %v1859 = vmul.f32 %v1825, 0.5
      %v1860 = vmul.f32 %v1830, 0.5
      %v1861 = vmul.f32 %v1835, 0.5
      %v1862 = vmul.f32 %v1840, 0.5
      %v1863 = vmul.f32 %v1845, 0.5
      %v1864 = vmul.f32 %v1770, 0.70710677
      %v1865 = vmul.f32 %v1775, 0.70710677
      %v1866 = vmul.f32 %v1780, 0.70710677
      %v1867 = vmul.f32 %v1785, 0.70710677
      %v1868 = vmul.f32 %v1790, 0.70710677
      %v1869 = vmul.f32 %v1795, 0.70710677
      %v1870 = vmul.f32 %v1800, 0.70710677
      %v1871 = vmul.f32 %v1805, 0.70710677
      %v1872 = vmul.f32 %v1810, 0.70710677
      %v1873 = vmul.f32 %v1815, 0.70710677
      %v1874 = vmul.f32 %v1820, 0.70710677
      %v1875 = vmul.f32 %v1825, 0.70710677
      %v1876 = vmul.f32 %v1830, 0.70710677
      %v1877 = vmul.f32 %v1835, 0.70710677
      %v1878 = vmul.f32 %v1840, 0.70710677
      %v1879 = vmul.f32 %v1845, 0.70710677
      %vm1880 = vcmp.ge.f32.partialorder %v1864, 0.0
      %vm1881 = vcmp.ge.f32.partialorder %v1865, 0.0
      %vm1882 = vcmp.ge.f32.partialorder %v1866, 0.0
      %vm1883 = vcmp.ge.f32.partialorder %v1867, 0.0
      %vm1884 = vcmp.ge.f32.partialorder %v1868, 0.0
      %vm1885 = vcmp.ge.f32.partialorder %v1869, 0.0
      %vm1886 = vcmp.ge.f32.partialorder %v1870, 0.0
      %vm1887 = vcmp.ge.f32.partialorder %v1871, 0.0
      %vm1888 = vcmp.ge.f32.partialorder %v1872, 0.0
      %vm1889 = vcmp.ge.f32.partialorder %v1873, 0.0
      %vm1890 = vcmp.ge.f32.partialorder %v1874, 0.0
      %vm1891 = vcmp.ge.f32.partialorder %v1875, 0.0
      %vm1892 = vcmp.ge.f32.partialorder %v1876, 0.0
      %vm1893 = vcmp.ge.f32.partialorder %v1877, 0.0
      %vm1894 = vcmp.ge.f32.partialorder %v1878, 0.0
      %vm1895 = vcmp.ge.f32.partialorder %v1879, 0.0
      %v1896 = vsel %vm1880, 1.0, -1.0
      %v1897 = vsel %vm1881, 1.0, -1.0
      %v1898 = vsel %vm1882, 1.0, -1.0
      %v1899 = vsel %vm1883, 1.0, -1.0
      %v1900 = vsel %vm1884, 1.0, -1.0
      %v1901 = vsel %vm1885, 1.0, -1.0
      %v1902 = vsel %vm1886, 1.0, -1.0
      %v1903 = vsel %vm1887, 1.0, -1.0
      %v1904 = vsel %vm1888, 1.0, -1.0
      %v1905 = vsel %vm1889, 1.0, -1.0
      %v1906 = vsel %vm1890, 1.0, -1.0
      %v1907 = vsel %vm1891, 1.0, -1.0
      %v1908 = vsel %vm1892, 1.0, -1.0
      %v1909 = vsel %vm1893, 1.0, -1.0
      %v1910 = vsel %vm1894, 1.0, -1.0
      %v1911 = vsel %vm1895, 1.0, -1.0
      %v1912 = vand.u32 2147483647, %v1864
      %v1913 = vand.u32 2147483647, %v1865
      %v1914 = vand.u32 2147483647, %v1866
      %v1915 = vand.u32 2147483647, %v1867
      %v1916 = vand.u32 2147483647, %v1868
      %v1917 = vand.u32 2147483647, %v1869
      %v1918 = vand.u32 2147483647, %v1870
      %v1919 = vand.u32 2147483647, %v1871
      %v1920 = vand.u32 2147483647, %v1872
      %v1921 = vand.u32 2147483647, %v1873
      %v1922 = vand.u32 2147483647, %v1874
      %v1923 = vand.u32 2147483647, %v1875
      %v1924 = vand.u32 2147483647, %v1876
      %v1925 = vand.u32 2147483647, %v1877
      %v1926 = vand.u32 2147483647, %v1878
      %v1927 = vand.u32 2147483647, %v1879
      %v1928 = vmul.f32 %v1912, 0.3275911
      %v1929 = vmul.f32 %v1913, 0.3275911
      %v1930 = vmul.f32 %v1914, 0.3275911
      %v1931 = vmul.f32 %v1915, 0.3275911
      %v1932 = vmul.f32 %v1916, 0.3275911
      %v1933 = vmul.f32 %v1917, 0.3275911
      %v1934 = vmul.f32 %v1918, 0.3275911
      %v1935 = vmul.f32 %v1919, 0.3275911
      %v1936 = vmul.f32 %v1920, 0.3275911
      %v1937 = vmul.f32 %v1921, 0.3275911
      %v1938 = vmul.f32 %v1922, 0.3275911
      %v1939 = vmul.f32 %v1923, 0.3275911
      %v1940 = vmul.f32 %v1924, 0.3275911
      %v1941 = vmul.f32 %v1925, 0.3275911
      %v1942 = vmul.f32 %v1926, 0.3275911
      %v1943 = vmul.f32 %v1927, 0.3275911
      %v1944 = vadd.f32 %v1928, 1.0
      %v1945 = vadd.f32 %v1929, 1.0
      %v1946 = vadd.f32 %v1930, 1.0
      %v1947 = vadd.f32 %v1931, 1.0
      %v1948 = vadd.f32 %v1932, 1.0
      %v1949 = vadd.f32 %v1933, 1.0
      %v1950 = vadd.f32 %v1934, 1.0
      %v1951 = vadd.f32 %v1935, 1.0
      %v1952 = vadd.f32 %v1936, 1.0
      %v1953 = vadd.f32 %v1937, 1.0
      %v1954 = vadd.f32 %v1938, 1.0
      %v1955 = vadd.f32 %v1939, 1.0
      %v1956 = vadd.f32 %v1940, 1.0
      %v1957 = vadd.f32 %v1941, 1.0
      %v1958 = vadd.f32 %v1942, 1.0
      %v1959 = vadd.f32 %v1943, 1.0
      %v1960 = vrcp.pop %v1944
      %v1961 = vmul.f32 1.0, %v1960
      %v1962 = vrcp.pop %v1945
      %v1963 = vmul.f32 1.0, %v1962
      %v1964 = vrcp.pop %v1946
      %v1965 = vmul.f32 1.0, %v1964
      %v1966 = vrcp.pop %v1947
      %v1967 = vmul.f32 1.0, %v1966
      %v1968 = vrcp.pop %v1948
      %v1969 = vmul.f32 1.0, %v1968
      %v1970 = vrcp.pop %v1949
      %v1971 = vmul.f32 1.0, %v1970
      %v1972 = vrcp.pop %v1950
      %v1973 = vmul.f32 1.0, %v1972
      %v1974 = vrcp.pop %v1951
      %v1975 = vmul.f32 1.0, %v1974
      %v1976 = vrcp.pop %v1952
      %v1977 = vmul.f32 1.0, %v1976
      %v1978 = vrcp.pop %v1953
      %v1979 = vmul.f32 1.0, %v1978
      %v1980 = vrcp.pop %v1954
      %v1981 = vmul.f32 1.0, %v1980
      %v1982 = vrcp.pop %v1955
      %v1983 = vmul.f32 1.0, %v1982
      %v1984 = vrcp.pop %v1956
      %v1985 = vmul.f32 1.0, %v1984
      %v1986 = vrcp.pop %v1957
      %v1987 = vmul.f32 1.0, %v1986
      %v1988 = vrcp.pop %v1958
      %v1989 = vmul.f32 1.0, %v1988
      %v1990 = vrcp.pop %v1959
      %v1991 = vmul.f32 1.0, %v1990
      %v1992 = vmul.f32 %v1961, 1.0614054
      %v1993 = vmul.f32 %v1963, 1.0614054
      %v1994 = vmul.f32 %v1965, 1.0614054
      %v1995 = vmul.f32 %v1967, 1.0614054
      %v1996 = vmul.f32 %v1969, 1.0614054
      %v1997 = vmul.f32 %v1971, 1.0614054
      %v1998 = vmul.f32 %v1973, 1.0614054
      %v1999 = vmul.f32 %v1975, 1.0614054
      %v2000 = vmul.f32 %v1977, 1.0614054
      %v2001 = vmul.f32 %v1979, 1.0614054
      %v2002 = vmul.f32 %v1981, 1.0614054
      %v2003 = vmul.f32 %v1983, 1.0614054
      %v2004 = vmul.f32 %v1985, 1.0614054
      %v2005 = vmul.f32 %v1987, 1.0614054
      %v2006 = vmul.f32 %v1989, 1.0614054
      %v2007 = vmul.f32 %v1991, 1.0614054
      %v2008 = vadd.f32 %v1992, -1.4531521
      %v2009 = vadd.f32 %v1993, -1.4531521
      %v2010 = vadd.f32 %v1994, -1.4531521
      %v2011 = vadd.f32 %v1995, -1.4531521
      %v2012 = vadd.f32 %v1996, -1.4531521
      %v2013 = vadd.f32 %v1997, -1.4531521
      %v2014 = vadd.f32 %v1998, -1.4531521
      %v2015 = vadd.f32 %v1999, -1.4531521
      %v2016 = vadd.f32 %v2000, -1.4531521
      %v2017 = vadd.f32 %v2001, -1.4531521
      %v2018 = vadd.f32 %v2002, -1.4531521
      %v2019 = vadd.f32 %v2003, -1.4531521
      %v2020 = vadd.f32 %v2004, -1.4531521
      %v2021 = vadd.f32 %v2005, -1.4531521
      %v2022 = vadd.f32 %v2006, -1.4531521
      %v2023 = vadd.f32 %v2007, -1.4531521
      %v2024 = vmul.f32 %v1961, %v2008
      %v2025 = vmul.f32 %v1963, %v2009
      %v2026 = vmul.f32 %v1965, %v2010
      %v2027 = vmul.f32 %v1967, %v2011
      %v2028 = vmul.f32 %v1969, %v2012
      %v2029 = vmul.f32 %v1971, %v2013
      %v2030 = vmul.f32 %v1973, %v2014
      %v2031 = vmul.f32 %v1975, %v2015
      %v2032 = vmul.f32 %v1977, %v2016
      %v2033 = vmul.f32 %v1979, %v2017
      %v2034 = vmul.f32 %v1981, %v2018
      %v2035 = vmul.f32 %v1983, %v2019
      %v2036 = vmul.f32 %v1985, %v2020
      %v2037 = vmul.f32 %v1987, %v2021
      %v2038 = vmul.f32 %v1989, %v2022
      %v2039 = vmul.f32 %v1991, %v2023
      %v2040 = vadd.f32 %v2024, 1.4214138
      %v2041 = vadd.f32 %v2025, 1.4214138
      %v2042 = vadd.f32 %v2026, 1.4214138
      %v2043 = vadd.f32 %v2027, 1.4214138
      %v2044 = vadd.f32 %v2028, 1.4214138
      %v2045 = vadd.f32 %v2029, 1.4214138
      %v2046 = vadd.f32 %v2030, 1.4214138
      %v2047 = vadd.f32 %v2031, 1.4214138
      %v2048 = vadd.f32 %v2032, 1.4214138
      %v2049 = vadd.f32 %v2033, 1.4214138
      %v2050 = vadd.f32 %v2034, 1.4214138
      %v2051 = vadd.f32 %v2035, 1.4214138
      %v2052 = vadd.f32 %v2036, 1.4214138
      %v2053 = vadd.f32 %v2037, 1.4214138
      %v2054 = vadd.f32 %v2038, 1.4214138
      %v2055 = vadd.f32 %v2039, 1.4214138
      %v2056 = vmul.f32 %v1961, %v2040
      %v2057 = vmul.f32 %v1963, %v2041
      %v2058 = vmul.f32 %v1965, %v2042
      %v2059 = vmul.f32 %v1967, %v2043
      %v2060 = vmul.f32 %v1969, %v2044
      %v2061 = vmul.f32 %v1971, %v2045
      %v2062 = vmul.f32 %v1973, %v2046
      %v2063 = vmul.f32 %v1975, %v2047
      %v2064 = vmul.f32 %v1977, %v2048
      %v2065 = vmul.f32 %v1979, %v2049
      %v2066 = vmul.f32 %v1981, %v2050
      %v2067 = vmul.f32 %v1983, %v2051
      %v2068 = vmul.f32 %v1985, %v2052
      %v2069 = vmul.f32 %v1987, %v2053
      %v2070 = vmul.f32 %v1989, %v2054
      %v2071 = vmul.f32 %v1991, %v2055
      %v2072 = vadd.f32 %v2056, -0.28449672
      %v2073 = vadd.f32 %v2057, -0.28449672
      %v2074 = vadd.f32 %v2058, -0.28449672
      %v2075 = vadd.f32 %v2059, -0.28449672
      %v2076 = vadd.f32 %v2060, -0.28449672
      %v2077 = vadd.f32 %v2061, -0.28449672
      %v2078 = vadd.f32 %v2062, -0.28449672
      %v2079 = vadd.f32 %v2063, -0.28449672
      %v2080 = vadd.f32 %v2064, -0.28449672
      %v2081 = vadd.f32 %v2065, -0.28449672
      %v2082 = vadd.f32 %v2066, -0.28449672
      %v2083 = vadd.f32 %v2067, -0.28449672
      %v2084 = vadd.f32 %v2068, -0.28449672
      %v2085 = vadd.f32 %v2069, -0.28449672
      %v2086 = vadd.f32 %v2070, -0.28449672
      %v2087 = vadd.f32 %v2071, -0.28449672
      %v2088 = vmul.f32 %v1961, %v2072
      %v2089 = vmul.f32 %v1963, %v2073
      %v2090 = vmul.f32 %v1965, %v2074
      %v2091 = vmul.f32 %v1967, %v2075
      %v2092 = vmul.f32 %v1969, %v2076
      %v2093 = vmul.f32 %v1971, %v2077
      %v2094 = vmul.f32 %v1973, %v2078
      %v2095 = vmul.f32 %v1975, %v2079
      %v2096 = vmul.f32 %v1977, %v2080
      %v2097 = vmul.f32 %v1979, %v2081
      %v2098 = vmul.f32 %v1981, %v2082
      %v2099 = vmul.f32 %v1983, %v2083
      %v2100 = vmul.f32 %v1985, %v2084
      %v2101 = vmul.f32 %v1987, %v2085
      %v2102 = vmul.f32 %v1989, %v2086
      %v2103 = vmul.f32 %v1991, %v2087
      %v2104 = vadd.f32 %v2088, 0.2548296
      %v2105 = vadd.f32 %v2089, 0.2548296
      %v2106 = vadd.f32 %v2090, 0.2548296
      %v2107 = vadd.f32 %v2091, 0.2548296
      %v2108 = vadd.f32 %v2092, 0.2548296
      %v2109 = vadd.f32 %v2093, 0.2548296
      %v2110 = vadd.f32 %v2094, 0.2548296
      %v2111 = vadd.f32 %v2095, 0.2548296
      %v2112 = vadd.f32 %v2096, 0.2548296
      %v2113 = vadd.f32 %v2097, 0.2548296
      %v2114 = vadd.f32 %v2098, 0.2548296
      %v2115 = vadd.f32 %v2099, 0.2548296
      %v2116 = vadd.f32 %v2100, 0.2548296
      %v2117 = vadd.f32 %v2101, 0.2548296
      %v2118 = vadd.f32 %v2102, 0.2548296
      %v2119 = vadd.f32 %v2103, 0.2548296
      %v2120 = vmul.f32 %v1961, %v2104
      %v2121 = vmul.f32 %v1963, %v2105
      %v2122 = vmul.f32 %v1965, %v2106
      %v2123 = vmul.f32 %v1967, %v2107
      %v2124 = vmul.f32 %v1969, %v2108
      %v2125 = vmul.f32 %v1971, %v2109
      %v2126 = vmul.f32 %v1973, %v2110
      %v2127 = vmul.f32 %v1975, %v2111
      %v2128 = vmul.f32 %v1977, %v2112
      %v2129 = vmul.f32 %v1979, %v2113
      %v2130 = vmul.f32 %v1981, %v2114
      %v2131 = vmul.f32 %v1983, %v2115
      %v2132 = vmul.f32 %v1985, %v2116
      %v2133 = vmul.f32 %v1987, %v2117
      %v2134 = vmul.f32 %v1989, %v2118
      %v2135 = vmul.f32 %v1991, %v2119
      %v2136 = vsub.f32 0.0, %v1912
      %v2137 = vsub.f32 0.0, %v1913
      %v2138 = vsub.f32 0.0, %v1914
      %v2139 = vsub.f32 0.0, %v1915
      %v2140 = vsub.f32 0.0, %v1916
      %v2141 = vsub.f32 0.0, %v1917
      %v2142 = vsub.f32 0.0, %v1918
      %v2143 = vsub.f32 0.0, %v1919
      %v2144 = vsub.f32 0.0, %v1920
      %v2145 = vsub.f32 0.0, %v1921
      %v2146 = vsub.f32 0.0, %v1922
      %v2147 = vsub.f32 0.0, %v1923
      %v2148 = vsub.f32 0.0, %v1924
      %v2149 = vsub.f32 0.0, %v1925
      %v2150 = vsub.f32 0.0, %v1926
      %v2151 = vsub.f32 0.0, %v1927
      %v2152 = vmul.f32 %v2136, %v1912
      %v2153 = vmul.f32 %v2137, %v1913
      %v2154 = vmul.f32 %v2138, %v1914
      %v2155 = vmul.f32 %v2139, %v1915
      %v2156 = vmul.f32 %v2140, %v1916
      %v2157 = vmul.f32 %v2141, %v1917
      %v2158 = vmul.f32 %v2142, %v1918
      %v2159 = vmul.f32 %v2143, %v1919
      %v2160 = vmul.f32 %v2144, %v1920
      %v2161 = vmul.f32 %v2145, %v1921
      %v2162 = vmul.f32 %v2146, %v1922
      %v2163 = vmul.f32 %v2147, %v1923
      %v2164 = vmul.f32 %v2148, %v1924
      %v2165 = vmul.f32 %v2149, %v1925
      %v2166 = vmul.f32 %v2150, %v1926
      %v2167 = vmul.f32 %v2151, %v1927
      %v2168 = vmul.f32 %v2152, 1.442695
      %v2169 = vpow.pop %v2168
      %v2170 = vmul.f32 %v2153, 1.442695
      %v2171 = vpow.pop %v2170
      %v2172 = vmul.f32 %v2154, 1.442695
      %v2173 = vpow.pop %v2172
      %v2174 = vmul.f32 %v2155, 1.442695
      %v2175 = vpow.pop %v2174
      %v2176 = vmul.f32 %v2156, 1.442695
      %v2177 = vpow.pop %v2176
      %v2178 = vmul.f32 %v2157, 1.442695
      %v2179 = vpow.pop %v2178
      %v2180 = vmul.f32 %v2158, 1.442695
      %v2181 = vpow.pop %v2180
      %v2182 = vmul.f32 %v2159, 1.442695
      %v2183 = vpow.pop %v2182
      %v2184 = vmul.f32 %v2160, 1.442695
      %v2185 = vpow.pop %v2184
      %v2186 = vmul.f32 %v2161, 1.442695
      %v2187 = vpow.pop %v2186
      %v2188 = vmul.f32 %v2162, 1.442695
      %v2189 = vpow.pop %v2188
      %v2190 = vmul.f32 %v2163, 1.442695
      %v2191 = vpow.pop %v2190
      %v2192 = vmul.f32 %v2164, 1.442695
      %v2193 = vpow.pop %v2192
      %v2194 = vmul.f32 %v2165, 1.442695
      %v2195 = vpow.pop %v2194
      %v2196 = vmul.f32 %v2166, 1.442695
      %v2197 = vpow.pop %v2196
      %v2198 = vmul.f32 %v2167, 1.442695
      %v2199 = vpow.pop %v2198
      %v2200 = vmul.f32 %v2120, %v2169
      %v2201 = vmul.f32 %v2121, %v2171
      %v2202 = vmul.f32 %v2122, %v2173
      %v2203 = vmul.f32 %v2123, %v2175
      %v2204 = vmul.f32 %v2124, %v2177
      %v2205 = vmul.f32 %v2125, %v2179
      %v2206 = vmul.f32 %v2126, %v2181
      %v2207 = vmul.f32 %v2127, %v2183
      %v2208 = vmul.f32 %v2128, %v2185
      %v2209 = vmul.f32 %v2129, %v2187
      %v2210 = vmul.f32 %v2130, %v2189
      %v2211 = vmul.f32 %v2131, %v2191
      %v2212 = vmul.f32 %v2132, %v2193
      %v2213 = vmul.f32 %v2133, %v2195
      %v2214 = vmul.f32 %v2134, %v2197
      %v2215 = vmul.f32 %v2135, %v2199
      %v2216 = vsub.f32 1.0, %v2200
      %v2217 = vsub.f32 1.0, %v2201
      %v2218 = vsub.f32 1.0, %v2202
      %v2219 = vsub.f32 1.0, %v2203
      %v2220 = vsub.f32 1.0, %v2204
      %v2221 = vsub.f32 1.0, %v2205
      %v2222 = vsub.f32 1.0, %v2206
      %v2223 = vsub.f32 1.0, %v2207
      %v2224 = vsub.f32 1.0, %v2208
      %v2225 = vsub.f32 1.0, %v2209
      %v2226 = vsub.f32 1.0, %v2210
      %v2227 = vsub.f32 1.0, %v2211
      %v2228 = vsub.f32 1.0, %v2212
      %v2229 = vsub.f32 1.0, %v2213
      %v2230 = vsub.f32 1.0, %v2214
      %v2231 = vsub.f32 1.0, %v2215
      %v2232 = vmul.f32 %v1896, %v2216
      %v2233 = vmul.f32 %v1897, %v2217
      %v2234 = vmul.f32 %v1898, %v2218
      %v2235 = vmul.f32 %v1899, %v2219
      %v2236 = vmul.f32 %v1900, %v2220
      %v2237 = vmul.f32 %v1901, %v2221
      %v2238 = vmul.f32 %v1902, %v2222
      %v2239 = vmul.f32 %v1903, %v2223
      %v2240 = vmul.f32 %v1904, %v2224
      %v2241 = vmul.f32 %v1905, %v2225
      %v2242 = vmul.f32 %v1906, %v2226
      %v2243 = vmul.f32 %v1907, %v2227
      %v2244 = vmul.f32 %v1908, %v2228
      %v2245 = vmul.f32 %v1909, %v2229
      %v2246 = vmul.f32 %v1910, %v2230
      %v2247 = vmul.f32 %v1911, %v2231
      %v2248 = vadd.f32 %v2232, 1.0
      %v2249 = vadd.f32 %v2233, 1.0
      %v2250 = vadd.f32 %v2234, 1.0
      %v2251 = vadd.f32 %v2235, 1.0
      %v2252 = vadd.f32 %v2236, 1.0
      %v2253 = vadd.f32 %v2237, 1.0
      %v2254 = vadd.f32 %v2238, 1.0
      %v2255 = vadd.f32 %v2239, 1.0
      %v2256 = vadd.f32 %v2240, 1.0
      %v2257 = vadd.f32 %v2241, 1.0
      %v2258 = vadd.f32 %v2242, 1.0
      %v2259 = vadd.f32 %v2243, 1.0
      %v2260 = vadd.f32 %v2244, 1.0
      %v2261 = vadd.f32 %v2245, 1.0
      %v2262 = vadd.f32 %v2246, 1.0
      %v2263 = vadd.f32 %v2247, 1.0
      %v2264 = vmul.f32 %v1848, %v2248
      %v2265 = vmul.f32 %v1849, %v2249
      %v2266 = vmul.f32 %v1850, %v2250
      %v2267 = vmul.f32 %v1851, %v2251
      %v2268 = vmul.f32 %v1852, %v2252
      %v2269 = vmul.f32 %v1853, %v2253
      %v2270 = vmul.f32 %v1854, %v2254
      %v2271 = vmul.f32 %v1855, %v2255
      %v2272 = vmul.f32 %v1856, %v2256
      %v2273 = vmul.f32 %v1857, %v2257
      %v2274 = vmul.f32 %v1858, %v2258
      %v2275 = vmul.f32 %v1859, %v2259
      %v2276 = vmul.f32 %v1860, %v2260
      %v2277 = vmul.f32 %v1861, %v2261
      %v2278 = vmul.f32 %v1862, %v2262
      %v2279 = vmul.f32 %v1863, %v2263
      %2280 = vmatprep.subr.mxu0 0.0
      %2281 = vmatpush1.msra.mxu0 %v2279
      %2282 = vmatprep.subr.mxu0 0.0
      %2283 = vmatpush1.msra.mxu0 %v2278
      %2284 = vmatprep.subr.mxu0 0.0
      %2285 = vmatpush1.msra.mxu0 %v2277
      %2286 = vmatprep.subr.mxu0 0.0
      %2287 = vmatpush1.msra.mxu0 %v2276
      %2288 = vmatprep.subr.mxu0 0.0
      %2289 = vmatpush1.msra.mxu0 %v2275
      %2290 = vmatprep.subr.mxu0 0.0
      %2291 = vmatpush1.msra.mxu0 %v2274
      %2292 = vmatprep.subr.mxu0 0.0
      %2293 = vmatpush1.msra.mxu0 %v2273
      %2294 = vmatprep.subr.mxu0 0.0
      %2295 = vmatpush1.msra.mxu0 %v2272
      %2296 = vmatprep.subr.mxu0 0.0
      %2297 = vmatpush1.msra.mxu0 %v2271
      %2298 = vmatprep.subr.mxu0 0.0
      %2299 = vmatpush1.msra.mxu0 %v2270
      %2300 = vmatprep.subr.mxu0 0.0
      %2301 = vmatpush1.msra.mxu0 %v2269
      %2302 = vmatprep.subr.mxu0 0.0
      %2303 = vmatpush1.msra.mxu0 %v2268
      %2304 = vmatprep.subr.mxu0 0.0
      %2305 = vmatpush1.msra.mxu0 %v2267
      %2306 = vmatprep.subr.mxu0 0.0
      %2307 = vmatpush1.msra.mxu0 %v2266
      %2308 = vmatprep.subr.mxu0 0.0
      %2309 = vmatpush1.msra.mxu0 %v2265
      %2310 = vmatprep.subr.mxu0 0.0
      %2311 = vmatpush1.msra.mxu0 %v2264
      %2312 = vmatprep.subr.mxu0 0.0
      %2313 = vmatpush2.msra.mxu0 0.0
      %2314 = vmatprep.subr.mxu0 0.0
      %2315 = vmatpush2.msra.mxu0 0.0
      %2316 = vmatprep.subr.mxu0 0.0
      %2317 = vmatpush2.msra.mxu0 0.0
      %2318 = vmatprep.subr.mxu0 0.0
      %2319 = vmatpush2.msra.mxu0 0.0
      %2320 = vmatprep.subr.mxu0 0.0
      %2321 = vmatpush2.msra.mxu0 0.0
      %2322 = vmatprep.subr.mxu0 0.0
      %2323 = vmatpush2.msra.mxu0 0.0
      %2324 = vmatprep.subr.mxu0 0.0
      %2325 = vmatpush2.msra.mxu0 0.0
      %2326 = vmatprep.subr.mxu0 0.0
      %2327 = vmatpush2.msra.mxu0 0.0
      %2328 = vmatprep.subr.mxu0 0.0
      %2329 = vmatpush2.msra.mxu0 0.0
      %2330 = vmatprep.subr.mxu0 0.0
      %2331 = vmatpush2.msra.mxu0 0.0
      %2332 = vmatprep.subr.mxu0 0.0
      %2333 = vmatpush2.msra.mxu0 0.0
      %2334 = vmatprep.subr.mxu0 0.0
      %2335 = vmatpush2.msra.mxu0 0.0
      %2336 = vmatprep.subr.mxu0 0.0
      %2337 = vmatpush2.msra.mxu0 0.0
      %2338 = vmatprep.subr.mxu0 0.0
      %2339 = vmatpush2.msra.mxu0 0.0
      %2340 = vmatprep.subr.mxu0 0.0
      %2341 = vmatpush2.msra.mxu0 0.0
      %2342 = vmatprep.subr.mxu0 0.0
      %2343 = vmatpush2.msra.mxu0 0.0
      %2344 = vmatprep.mubr.f32.mxu0 0.0
      %2345 = vmatmul.mubr.f32.gmra.mxu0 %v260
      %v2346 = vpop.f32.mrf.mxu0
      %v2347 = vadd.f32 %v977, %v2346
      %v2348 = vpop.f32.mrf.mxu0
      %2349 = vdwg.mxu0
      %2350 = vst.msk [vmem:[%s226 + $0x2] sm:$0x1] %vm1051, %v2347
      %v2351 = vld [vmem:[%s221 + $0x18] sm:$0xff]
      %2352 = vmatprep.subr.mxu0 0.0
      %2353 = vmatpush1.msra.mxu0 0.0
      %2354 = vmatprep.subr.mxu0 0.0
      %2355 = vmatpush1.msra.mxu0 0.0
      %2356 = vmatprep.subr.mxu0 0.0
      %2357 = vmatpush1.msra.mxu0 0.0
      %2358 = vmatprep.subr.mxu0 0.0
      %2359 = vmatpush1.msra.mxu0 0.0
      %2360 = vmatprep.subr.mxu0 0.0
      %2361 = vmatpush1.msra.mxu0 0.0
      %2362 = vmatprep.subr.mxu0 0.0
      %2363 = vmatpush1.msra.mxu0 0.0
      %2364 = vmatprep.subr.mxu0 0.0
      %2365 = vmatpush1.msra.mxu0 0.0
      %2366 = vmatprep.subr.mxu0 0.0
      %2367 = vmatpush1.msra.mxu0 0.0
      %2368 = vmatprep.subr.mxu0 0.0
      %2369 = vmatpush1.msra.mxu0 0.0
      %2370 = vmatprep.subr.mxu0 0.0
      %2371 = vmatpush1.msra.mxu0 0.0
      %2372 = vmatprep.subr.mxu0 0.0
      %2373 = vmatpush1.msra.mxu0 0.0
      %2374 = vmatprep.subr.mxu0 0.0
      %2375 = vmatpush1.msra.mxu0 0.0
      %2376 = vmatprep.subr.mxu0 0.0
      %2377 = vmatpush1.msra.mxu0 0.0
      %2378 = vmatprep.subr.mxu0 0.0
      %2379 = vmatpush1.msra.mxu0 0.0
      %2380 = vmatprep.subr.mxu0 0.0
      %2381 = vmatpush1.msra.mxu0 0.0
      %2382 = vmatprep.subr.mxu0 0.0
      %2383 = vmatpush1.msra.mxu0 %v2351
      %2384 = vmatprep.subr.mxu0 0.0
      %2385 = vmatpush2.msra.mxu0 0.0
      %2386 = vmatprep.subr.mxu0 0.0
      %2387 = vmatpush2.msra.mxu0 0.0
      %2388 = vmatprep.subr.mxu0 0.0
      %2389 = vmatpush2.msra.mxu0 0.0
      %2390 = vmatprep.subr.mxu0 0.0
      %2391 = vmatpush2.msra.mxu0 0.0
      %2392 = vmatprep.subr.mxu0 0.0
      %2393 = vmatpush2.msra.mxu0 0.0
      %2394 = vmatprep.subr.mxu0 0.0
      %2395 = vmatpush2.msra.mxu0 0.0
      %2396 = vmatprep.subr.mxu0 0.0
      %2397 = vmatpush2.msra.mxu0 0.0
      %2398 = vmatprep.subr.mxu0 0.0
      %2399 = vmatpush2.msra.mxu0 0.0
      %2400 = vmatprep.subr.mxu0 0.0
      %2401 = vmatpush2.msra.mxu0 0.0
      %2402 = vmatprep.subr.mxu0 0.0
      %2403 = vmatpush2.msra.mxu0 0.0
      %2404 = vmatprep.subr.mxu0 0.0
      %2405 = vmatpush2.msra.mxu0 0.0
      %2406 = vmatprep.subr.mxu0 0.0
      %2407 = vmatpush2.msra.mxu0 0.0
      %2408 = vmatprep.subr.mxu0 0.0
      %2409 = vmatpush2.msra.mxu0 0.0
      %2410 = vmatprep.subr.mxu0 0.0
      %2411 = vmatpush2.msra.mxu0 0.0
      %2412 = vmatprep.subr.mxu0 0.0
      %2413 = vmatpush2.msra.mxu0 0.0
      %2414 = vmatprep.subr.mxu0 0.0
      %2415 = vmatpush2.msra.mxu0 0.0
      %2416 = vmatprep.mubr.f32.mxu0 0.0
      %2417 = vmatmul.mubr.f32.gmra.mxu0 %v345
      %v2418 = vpop.f32.mrf.mxu0
      %v2419 = vadd.f32 %v266, %v2418
      %v2420 = vpop.f32.mrf.mxu0
      %2421 = vmatprep.mubr.f32.mxu0 0.0
      %2422 = vmatmul.mubr.f32.gmra.mxu0 %v348
      %v2423 = vpop.f32.mrf.mxu0
      %v2424 = vadd.f32 %v271, %v2423
      %v2425 = vpop.f32.mrf.mxu0
      %2426 = vmatprep.mubr.f32.mxu0 0.0
      %2427 = vmatmul.mubr.f32.gmra.mxu0 %v351
      %v2428 = vpop.f32.mrf.mxu0
      %v2429 = vadd.f32 %v276, %v2428
      %v2430 = vpop.f32.mrf.mxu0
      %2431 = vmatprep.mubr.f32.mxu0 0.0
      %2432 = vmatmul.mubr.f32.gmra.mxu0 %v354
      %v2433 = vpop.f32.mrf.mxu0
      %v2434 = vadd.f32 %v281, %v2433
      %v2435 = vpop.f32.mrf.mxu0
      %2436 = vmatprep.mubr.f32.mxu0 0.0
      %2437 = vmatmul.mubr.f32.gmra.mxu0 %v357
      %v2438 = vpop.f32.mrf.mxu0
      %v2439 = vadd.f32 %v286, %v2438
      %v2440 = vpop.f32.mrf.mxu0
      %2441 = vmatprep.mubr.f32.mxu0 0.0
      %2442 = vmatmul.mubr.f32.gmra.mxu0 %v360
      %v2443 = vpop.f32.mrf.mxu0
      %v2444 = vadd.f32 %v291, %v2443
      %v2445 = vpop.f32.mrf.mxu0
      %2446 = vmatprep.mubr.f32.mxu0 0.0
      %2447 = vmatmul.mubr.f32.gmra.mxu0 %v363
      %v2448 = vpop.f32.mrf.mxu0
      %v2449 = vadd.f32 %v296, %v2448
      %v2450 = vpop.f32.mrf.mxu0
      %2451 = vmatprep.mubr.f32.mxu0 0.0
      %2452 = vmatmul.mubr.f32.gmra.mxu0 %v366
      %v2453 = vpop.f32.mrf.mxu0
      %v2454 = vadd.f32 %v301, %v2453
      %v2455 = vpop.f32.mrf.mxu0
      %2456 = vmatprep.mubr.f32.mxu0 0.0
      %2457 = vmatmul.mubr.f32.gmra.mxu0 %v369
      %v2458 = vpop.f32.mrf.mxu0
      %v2459 = vadd.f32 %v306, %v2458
      %v2460 = vpop.f32.mrf.mxu0
      %2461 = vmatprep.mubr.f32.mxu0 0.0
      %2462 = vmatmul.mubr.f32.gmra.mxu0 %v372
      %v2463 = vpop.f32.mrf.mxu0
      %v2464 = vadd.f32 %v311, %v2463
      %v2465 = vpop.f32.mrf.mxu0
      %2466 = vmatprep.mubr.f32.mxu0 0.0
      %2467 = vmatmul.mubr.f32.gmra.mxu0 %v375
      %v2468 = vpop.f32.mrf.mxu0
      %v2469 = vadd.f32 %v316, %v2468
      %v2470 = vpop.f32.mrf.mxu0
      %2471 = vmatprep.mubr.f32.mxu0 0.0
      %2472 = vmatmul.mubr.f32.gmra.mxu0 %v378
      %v2473 = vpop.f32.mrf.mxu0
      %v2474 = vadd.f32 %v321, %v2473
      %v2475 = vpop.f32.mrf.mxu0
      %2476 = vmatprep.mubr.f32.mxu0 0.0
      %2477 = vmatmul.mubr.f32.gmra.mxu0 %v381
      %v2478 = vpop.f32.mrf.mxu0
      %v2479 = vadd.f32 %v326, %v2478
      %v2480 = vpop.f32.mrf.mxu0
      %2481 = vmatprep.mubr.f32.mxu0 0.0
      %2482 = vmatmul.mubr.f32.gmra.mxu0 %v384
      %v2483 = vpop.f32.mrf.mxu0
      %v2484 = vadd.f32 %v331, %v2483
      %v2485 = vpop.f32.mrf.mxu0
      %2486 = vmatprep.mubr.f32.mxu0 0.0
      %2487 = vmatmul.mubr.f32.gmra.mxu0 %v387
      %v2488 = vpop.f32.mrf.mxu0
      %v2489 = vadd.f32 %v336, %v2488
      %v2490 = vpop.f32.mrf.mxu0
      %2491 = vmatprep.mubr.f32.mxu0 0.0
      %2492 = vmatmul.mubr.f32.gmra.mxu0 %v390
      %v2493 = vpop.f32.mrf.mxu0
      %v2494 = vadd.f32 %v341, %v2493
      %v2495 = vpop.f32.mrf.mxu0
      %2496 = vdwg.mxu0
      %v2497 = vmul.f32 %v2419, 0.5
      %v2498 = vmul.f32 %v2424, 0.5
      %v2499 = vmul.f32 %v2429, 0.5
      %v2500 = vmul.f32 %v2434, 0.5
      %v2501 = vmul.f32 %v2439, 0.5
      %v2502 = vmul.f32 %v2444, 0.5
      %v2503 = vmul.f32 %v2449, 0.5
      %v2504 = vmul.f32 %v2454, 0.5
      %v2505 = vmul.f32 %v2459, 0.5
      %v2506 = vmul.f32 %v2464, 0.5
      %v2507 = vmul.f32 %v2469, 0.5
      %v2508 = vmul.f32 %v2474, 0.5
      %v2509 = vmul.f32 %v2479, 0.5
      %v2510 = vmul.f32 %v2484, 0.5
      %v2511 = vmul.f32 %v2489, 0.5
      %v2512 = vmul.f32 %v2494, 0.5
      %v2513 = vmul.f32 %v2419, 0.70710677
      %v2514 = vmul.f32 %v2424, 0.70710677
      %v2515 = vmul.f32 %v2429, 0.70710677
      %v2516 = vmul.f32 %v2434, 0.70710677
      %v2517 = vmul.f32 %v2439, 0.70710677
      %v2518 = vmul.f32 %v2444, 0.70710677
      %v2519 = vmul.f32 %v2449, 0.70710677
      %v2520 = vmul.f32 %v2454, 0.70710677
      %v2521 = vmul.f32 %v2459, 0.70710677
      %v2522 = vmul.f32 %v2464, 0.70710677
      %v2523 = vmul.f32 %v2469, 0.70710677
      %v2524 = vmul.f32 %v2474, 0.70710677
      %v2525 = vmul.f32 %v2479, 0.70710677
      %v2526 = vmul.f32 %v2484, 0.70710677
      %v2527 = vmul.f32 %v2489, 0.70710677
      %v2528 = vmul.f32 %v2494, 0.70710677
      %vm2529 = vcmp.ge.f32.partialorder %v2513, 0.0
      %vm2530 = vcmp.ge.f32.partialorder %v2514, 0.0
      %vm2531 = vcmp.ge.f32.partialorder %v2515, 0.0
      %vm2532 = vcmp.ge.f32.partialorder %v2516, 0.0
      %vm2533 = vcmp.ge.f32.partialorder %v2517, 0.0
      %vm2534 = vcmp.ge.f32.partialorder %v2518, 0.0
      %vm2535 = vcmp.ge.f32.partialorder %v2519, 0.0
      %vm2536 = vcmp.ge.f32.partialorder %v2520, 0.0
      %vm2537 = vcmp.ge.f32.partialorder %v2521, 0.0
      %vm2538 = vcmp.ge.f32.partialorder %v2522, 0.0
      %vm2539 = vcmp.ge.f32.partialorder %v2523, 0.0
      %vm2540 = vcmp.ge.f32.partialorder %v2524, 0.0
      %vm2541 = vcmp.ge.f32.partialorder %v2525, 0.0
      %vm2542 = vcmp.ge.f32.partialorder %v2526, 0.0
      %vm2543 = vcmp.ge.f32.partialorder %v2527, 0.0
      %vm2544 = vcmp.ge.f32.partialorder %v2528, 0.0
      %v2545 = vsel %vm2529, 1.0, -1.0
      %v2546 = vsel %vm2530, 1.0, -1.0
      %v2547 = vsel %vm2531, 1.0, -1.0
      %v2548 = vsel %vm2532, 1.0, -1.0
      %v2549 = vsel %vm2533, 1.0, -1.0
      %v2550 = vsel %vm2534, 1.0, -1.0
      %v2551 = vsel %vm2535, 1.0, -1.0
      %v2552 = vsel %vm2536, 1.0, -1.0
      %v2553 = vsel %vm2537, 1.0, -1.0
      %v2554 = vsel %vm2538, 1.0, -1.0
      %v2555 = vsel %vm2539, 1.0, -1.0
      %v2556 = vsel %vm2540, 1.0, -1.0
      %v2557 = vsel %vm2541, 1.0, -1.0
      %v2558 = vsel %vm2542, 1.0, -1.0
      %v2559 = vsel %vm2543, 1.0, -1.0
      %v2560 = vsel %vm2544, 1.0, -1.0
      %v2561 = vand.u32 2147483647, %v2513
      %v2562 = vand.u32 2147483647, %v2514
      %v2563 = vand.u32 2147483647, %v2515
      %v2564 = vand.u32 2147483647, %v2516
      %v2565 = vand.u32 2147483647, %v2517
      %v2566 = vand.u32 2147483647, %v2518
      %v2567 = vand.u32 2147483647, %v2519
      %v2568 = vand.u32 2147483647, %v2520
      %v2569 = vand.u32 2147483647, %v2521
      %v2570 = vand.u32 2147483647, %v2522
      %v2571 = vand.u32 2147483647, %v2523
      %v2572 = vand.u32 2147483647, %v2524
      %v2573 = vand.u32 2147483647, %v2525
      %v2574 = vand.u32 2147483647, %v2526
      %v2575 = vand.u32 2147483647, %v2527
      %v2576 = vand.u32 2147483647, %v2528
      %v2577 = vmul.f32 %v2561, 0.3275911
      %v2578 = vmul.f32 %v2562, 0.3275911
      %v2579 = vmul.f32 %v2563, 0.3275911
      %v2580 = vmul.f32 %v2564, 0.3275911
      %v2581 = vmul.f32 %v2565, 0.3275911
      %v2582 = vmul.f32 %v2566, 0.3275911
      %v2583 = vmul.f32 %v2567, 0.3275911
      %v2584 = vmul.f32 %v2568, 0.3275911
      %v2585 = vmul.f32 %v2569, 0.3275911
      %v2586 = vmul.f32 %v2570, 0.3275911
      %v2587 = vmul.f32 %v2571, 0.3275911
      %v2588 = vmul.f32 %v2572, 0.3275911
      %v2589 = vmul.f32 %v2573, 0.3275911
      %v2590 = vmul.f32 %v2574, 0.3275911
      %v2591 = vmul.f32 %v2575, 0.3275911
      %v2592 = vmul.f32 %v2576, 0.3275911
      %v2593 = vadd.f32 %v2577, 1.0
      %v2594 = vadd.f32 %v2578, 1.0
      %v2595 = vadd.f32 %v2579, 1.0
      %v2596 = vadd.f32 %v2580, 1.0
      %v2597 = vadd.f32 %v2581, 1.0
      %v2598 = vadd.f32 %v2582, 1.0
      %v2599 = vadd.f32 %v2583, 1.0
      %v2600 = vadd.f32 %v2584, 1.0
      %v2601 = vadd.f32 %v2585, 1.0
      %v2602 = vadd.f32 %v2586, 1.0
      %v2603 = vadd.f32 %v2587, 1.0
      %v2604 = vadd.f32 %v2588, 1.0
      %v2605 = vadd.f32 %v2589, 1.0
      %v2606 = vadd.f32 %v2590, 1.0
      %v2607 = vadd.f32 %v2591, 1.0
      %v2608 = vadd.f32 %v2592, 1.0
      %v2609 = vrcp.pop %v2593
      %v2610 = vmul.f32 1.0, %v2609
      %v2611 = vrcp.pop %v2594
      %v2612 = vmul.f32 1.0, %v2611
      %v2613 = vrcp.pop %v2595
      %v2614 = vmul.f32 1.0, %v2613
      %v2615 = vrcp.pop %v2596
      %v2616 = vmul.f32 1.0, %v2615
      %v2617 = vrcp.pop %v2597
      %v2618 = vmul.f32 1.0, %v2617
      %v2619 = vrcp.pop %v2598
      %v2620 = vmul.f32 1.0, %v2619
      %v2621 = vrcp.pop %v2599
      %v2622 = vmul.f32 1.0, %v2621
      %v2623 = vrcp.pop %v2600
      %v2624 = vmul.f32 1.0, %v2623
      %v2625 = vrcp.pop %v2601
      %v2626 = vmul.f32 1.0, %v2625
      %v2627 = vrcp.pop %v2602
      %v2628 = vmul.f32 1.0, %v2627
      %v2629 = vrcp.pop %v2603
      %v2630 = vmul.f32 1.0, %v2629
      %v2631 = vrcp.pop %v2604
      %v2632 = vmul.f32 1.0, %v2631
      %v2633 = vrcp.pop %v2605
      %v2634 = vmul.f32 1.0, %v2633
      %v2635 = vrcp.pop %v2606
      %v2636 = vmul.f32 1.0, %v2635
      %v2637 = vrcp.pop %v2607
      %v2638 = vmul.f32 1.0, %v2637
      %v2639 = vrcp.pop %v2608
      %v2640 = vmul.f32 1.0, %v2639
      %v2641 = vmul.f32 %v2610, 1.0614054
      %v2642 = vmul.f32 %v2612, 1.0614054
      %v2643 = vmul.f32 %v2614, 1.0614054
      %v2644 = vmul.f32 %v2616, 1.0614054
      %v2645 = vmul.f32 %v2618, 1.0614054
      %v2646 = vmul.f32 %v2620, 1.0614054
      %v2647 = vmul.f32 %v2622, 1.0614054
      %v2648 = vmul.f32 %v2624, 1.0614054
      %v2649 = vmul.f32 %v2626, 1.0614054
      %v2650 = vmul.f32 %v2628, 1.0614054
      %v2651 = vmul.f32 %v2630, 1.0614054
      %v2652 = vmul.f32 %v2632, 1.0614054
      %v2653 = vmul.f32 %v2634, 1.0614054
      %v2654 = vmul.f32 %v2636, 1.0614054
      %v2655 = vmul.f32 %v2638, 1.0614054
      %v2656 = vmul.f32 %v2640, 1.0614054
      %v2657 = vadd.f32 %v2641, -1.4531521
      %v2658 = vadd.f32 %v2642, -1.4531521
      %v2659 = vadd.f32 %v2643, -1.4531521
      %v2660 = vadd.f32 %v2644, -1.4531521
      %v2661 = vadd.f32 %v2645, -1.4531521
      %v2662 = vadd.f32 %v2646, -1.4531521
      %v2663 = vadd.f32 %v2647, -1.4531521
      %v2664 = vadd.f32 %v2648, -1.4531521
      %v2665 = vadd.f32 %v2649, -1.4531521
      %v2666 = vadd.f32 %v2650, -1.4531521
      %v2667 = vadd.f32 %v2651, -1.4531521
      %v2668 = vadd.f32 %v2652, -1.4531521
      %v2669 = vadd.f32 %v2653, -1.4531521
      %v2670 = vadd.f32 %v2654, -1.4531521
      %v2671 = vadd.f32 %v2655, -1.4531521
      %v2672 = vadd.f32 %v2656, -1.4531521
      %v2673 = vmul.f32 %v2610, %v2657
      %v2674 = vmul.f32 %v2612, %v2658
      %v2675 = vmul.f32 %v2614, %v2659
      %v2676 = vmul.f32 %v2616, %v2660
      %v2677 = vmul.f32 %v2618, %v2661
      %v2678 = vmul.f32 %v2620, %v2662
      %v2679 = vmul.f32 %v2622, %v2663
      %v2680 = vmul.f32 %v2624, %v2664
      %v2681 = vmul.f32 %v2626, %v2665
      %v2682 = vmul.f32 %v2628, %v2666
      %v2683 = vmul.f32 %v2630, %v2667
      %v2684 = vmul.f32 %v2632, %v2668
      %v2685 = vmul.f32 %v2634, %v2669
      %v2686 = vmul.f32 %v2636, %v2670
      %v2687 = vmul.f32 %v2638, %v2671
      %v2688 = vmul.f32 %v2640, %v2672
      %v2689 = vadd.f32 %v2673, 1.4214138
      %v2690 = vadd.f32 %v2674, 1.4214138
      %v2691 = vadd.f32 %v2675, 1.4214138
      %v2692 = vadd.f32 %v2676, 1.4214138
      %v2693 = vadd.f32 %v2677, 1.4214138
      %v2694 = vadd.f32 %v2678, 1.4214138
      %v2695 = vadd.f32 %v2679, 1.4214138
      %v2696 = vadd.f32 %v2680, 1.4214138
      %v2697 = vadd.f32 %v2681, 1.4214138
      %v2698 = vadd.f32 %v2682, 1.4214138
      %v2699 = vadd.f32 %v2683, 1.4214138
      %v2700 = vadd.f32 %v2684, 1.4214138
      %v2701 = vadd.f32 %v2685, 1.4214138
      %v2702 = vadd.f32 %v2686, 1.4214138
      %v2703 = vadd.f32 %v2687, 1.4214138
      %v2704 = vadd.f32 %v2688, 1.4214138
      %v2705 = vmul.f32 %v2610, %v2689
      %v2706 = vmul.f32 %v2612, %v2690
      %v2707 = vmul.f32 %v2614, %v2691
      %v2708 = vmul.f32 %v2616, %v2692
      %v2709 = vmul.f32 %v2618, %v2693
      %v2710 = vmul.f32 %v2620, %v2694
      %v2711 = vmul.f32 %v2622, %v2695
      %v2712 = vmul.f32 %v2624, %v2696
      %v2713 = vmul.f32 %v2626, %v2697
      %v2714 = vmul.f32 %v2628, %v2698
      %v2715 = vmul.f32 %v2630, %v2699
      %v2716 = vmul.f32 %v2632, %v2700
      %v2717 = vmul.f32 %v2634, %v2701
      %v2718 = vmul.f32 %v2636, %v2702
      %v2719 = vmul.f32 %v2638, %v2703
      %v2720 = vmul.f32 %v2640, %v2704
      %v2721 = vadd.f32 %v2705, -0.28449672
      %v2722 = vadd.f32 %v2706, -0.28449672
      %v2723 = vadd.f32 %v2707, -0.28449672
      %v2724 = vadd.f32 %v2708, -0.28449672
      %v2725 = vadd.f32 %v2709, -0.28449672
      %v2726 = vadd.f32 %v2710, -0.28449672
      %v2727 = vadd.f32 %v2711, -0.28449672
      %v2728 = vadd.f32 %v2712, -0.28449672
      %v2729 = vadd.f32 %v2713, -0.28449672
      %v2730 = vadd.f32 %v2714, -0.28449672
      %v2731 = vadd.f32 %v2715, -0.28449672
      %v2732 = vadd.f32 %v2716, -0.28449672
      %v2733 = vadd.f32 %v2717, -0.28449672
      %v2734 = vadd.f32 %v2718, -0.28449672
      %v2735 = vadd.f32 %v2719, -0.28449672
      %v2736 = vadd.f32 %v2720, -0.28449672
      %v2737 = vmul.f32 %v2610, %v2721
      %v2738 = vmul.f32 %v2612, %v2722
      %v2739 = vmul.f32 %v2614, %v2723
      %v2740 = vmul.f32 %v2616, %v2724
      %v2741 = vmul.f32 %v2618, %v2725
      %v2742 = vmul.f32 %v2620, %v2726
      %v2743 = vmul.f32 %v2622, %v2727
      %v2744 = vmul.f32 %v2624, %v2728
      %v2745 = vmul.f32 %v2626, %v2729
      %v2746 = vmul.f32 %v2628, %v2730
      %v2747 = vmul.f32 %v2630, %v2731
      %v2748 = vmul.f32 %v2632, %v2732
      %v2749 = vmul.f32 %v2634, %v2733
      %v2750 = vmul.f32 %v2636, %v2734
      %v2751 = vmul.f32 %v2638, %v2735
      %v2752 = vmul.f32 %v2640, %v2736
      %v2753 = vadd.f32 %v2737, 0.2548296
      %v2754 = vadd.f32 %v2738, 0.2548296
      %v2755 = vadd.f32 %v2739, 0.2548296
      %v2756 = vadd.f32 %v2740, 0.2548296
      %v2757 = vadd.f32 %v2741, 0.2548296
      %v2758 = vadd.f32 %v2742, 0.2548296
      %v2759 = vadd.f32 %v2743, 0.2548296
      %v2760 = vadd.f32 %v2744, 0.2548296
      %v2761 = vadd.f32 %v2745, 0.2548296
      %v2762 = vadd.f32 %v2746, 0.2548296
      %v2763 = vadd.f32 %v2747, 0.2548296
      %v2764 = vadd.f32 %v2748, 0.2548296
      %v2765 = vadd.f32 %v2749, 0.2548296
      %v2766 = vadd.f32 %v2750, 0.2548296
      %v2767 = vadd.f32 %v2751, 0.2548296
      %v2768 = vadd.f32 %v2752, 0.2548296
      %v2769 = vmul.f32 %v2610, %v2753
      %v2770 = vmul.f32 %v2612, %v2754
      %v2771 = vmul.f32 %v2614, %v2755
      %v2772 = vmul.f32 %v2616, %v2756
      %v2773 = vmul.f32 %v2618, %v2757
      %v2774 = vmul.f32 %v2620, %v2758
      %v2775 = vmul.f32 %v2622, %v2759
      %v2776 = vmul.f32 %v2624, %v2760
      %v2777 = vmul.f32 %v2626, %v2761
      %v2778 = vmul.f32 %v2628, %v2762
      %v2779 = vmul.f32 %v2630, %v2763
      %v2780 = vmul.f32 %v2632, %v2764
      %v2781 = vmul.f32 %v2634, %v2765
      %v2782 = vmul.f32 %v2636, %v2766
      %v2783 = vmul.f32 %v2638, %v2767
      %v2784 = vmul.f32 %v2640, %v2768
      %v2785 = vsub.f32 0.0, %v2561
      %v2786 = vsub.f32 0.0, %v2562
      %v2787 = vsub.f32 0.0, %v2563
      %v2788 = vsub.f32 0.0, %v2564
      %v2789 = vsub.f32 0.0, %v2565
      %v2790 = vsub.f32 0.0, %v2566
      %v2791 = vsub.f32 0.0, %v2567
      %v2792 = vsub.f32 0.0, %v2568
      %v2793 = vsub.f32 0.0, %v2569
      %v2794 = vsub.f32 0.0, %v2570
      %v2795 = vsub.f32 0.0, %v2571
      %v2796 = vsub.f32 0.0, %v2572
      %v2797 = vsub.f32 0.0, %v2573
      %v2798 = vsub.f32 0.0, %v2574
      %v2799 = vsub.f32 0.0, %v2575
      %v2800 = vsub.f32 0.0, %v2576
      %v2801 = vmul.f32 %v2785, %v2561
      %v2802 = vmul.f32 %v2786, %v2562
      %v2803 = vmul.f32 %v2787, %v2563
      %v2804 = vmul.f32 %v2788, %v2564
      %v2805 = vmul.f32 %v2789, %v2565
      %v2806 = vmul.f32 %v2790, %v2566
      %v2807 = vmul.f32 %v2791, %v2567
      %v2808 = vmul.f32 %v2792, %v2568
      %v2809 = vmul.f32 %v2793, %v2569
      %v2810 = vmul.f32 %v2794, %v2570
      %v2811 = vmul.f32 %v2795, %v2571
      %v2812 = vmul.f32 %v2796, %v2572
      %v2813 = vmul.f32 %v2797, %v2573
      %v2814 = vmul.f32 %v2798, %v2574
      %v2815 = vmul.f32 %v2799, %v2575
      %v2816 = vmul.f32 %v2800, %v2576
      %v2817 = vmul.f32 %v2801, 1.442695
      %v2818 = vpow.pop %v2817
      %v2819 = vmul.f32 %v2802, 1.442695
      %v2820 = vpow.pop %v2819
      %v2821 = vmul.f32 %v2803, 1.442695
      %v2822 = vpow.pop %v2821
      %v2823 = vmul.f32 %v2804, 1.442695
      %v2824 = vpow.pop %v2823
      %v2825 = vmul.f32 %v2805, 1.442695
      %v2826 = vpow.pop %v2825
      %v2827 = vmul.f32 %v2806, 1.442695
      %v2828 = vpow.pop %v2827
      %v2829 = vmul.f32 %v2807, 1.442695
      %v2830 = vpow.pop %v2829
      %v2831 = vmul.f32 %v2808, 1.442695
      %v2832 = vpow.pop %v2831
      %v2833 = vmul.f32 %v2809, 1.442695
      %v2834 = vpow.pop %v2833
      %v2835 = vmul.f32 %v2810, 1.442695
      %v2836 = vpow.pop %v2835
      %v2837 = vmul.f32 %v2811, 1.442695
      %v2838 = vpow.pop %v2837
      %v2839 = vmul.f32 %v2812, 1.442695
      %v2840 = vpow.pop %v2839
      %v2841 = vmul.f32 %v2813, 1.442695
      %v2842 = vpow.pop %v2841
      %v2843 = vmul.f32 %v2814, 1.442695
      %v2844 = vpow.pop %v2843
      %v2845 = vmul.f32 %v2815, 1.442695
      %v2846 = vpow.pop %v2845
      %v2847 = vmul.f32 %v2816, 1.442695
      %v2848 = vpow.pop %v2847
      %v2849 = vmul.f32 %v2769, %v2818
      %v2850 = vmul.f32 %v2770, %v2820
      %v2851 = vmul.f32 %v2771, %v2822
      %v2852 = vmul.f32 %v2772, %v2824
      %v2853 = vmul.f32 %v2773, %v2826
      %v2854 = vmul.f32 %v2774, %v2828
      %v2855 = vmul.f32 %v2775, %v2830
      %v2856 = vmul.f32 %v2776, %v2832
      %v2857 = vmul.f32 %v2777, %v2834
      %v2858 = vmul.f32 %v2778, %v2836
      %v2859 = vmul.f32 %v2779, %v2838
      %v2860 = vmul.f32 %v2780, %v2840
      %v2861 = vmul.f32 %v2781, %v2842
      %v2862 = vmul.f32 %v2782, %v2844
      %v2863 = vmul.f32 %v2783, %v2846
      %v2864 = vmul.f32 %v2784, %v2848
      %v2865 = vsub.f32 1.0, %v2849
      %v2866 = vsub.f32 1.0, %v2850
      %v2867 = vsub.f32 1.0, %v2851
      %v2868 = vsub.f32 1.0, %v2852
      %v2869 = vsub.f32 1.0, %v2853
      %v2870 = vsub.f32 1.0, %v2854
      %v2871 = vsub.f32 1.0, %v2855
      %v2872 = vsub.f32 1.0, %v2856
      %v2873 = vsub.f32 1.0, %v2857
      %v2874 = vsub.f32 1.0, %v2858
      %v2875 = vsub.f32 1.0, %v2859
      %v2876 = vsub.f32 1.0, %v2860
      %v2877 = vsub.f32 1.0, %v2861
      %v2878 = vsub.f32 1.0, %v2862
      %v2879 = vsub.f32 1.0, %v2863
      %v2880 = vsub.f32 1.0, %v2864
      %v2881 = vmul.f32 %v2545, %v2865
      %v2882 = vmul.f32 %v2546, %v2866
      %v2883 = vmul.f32 %v2547, %v2867
      %v2884 = vmul.f32 %v2548, %v2868
      %v2885 = vmul.f32 %v2549, %v2869
      %v2886 = vmul.f32 %v2550, %v2870
      %v2887 = vmul.f32 %v2551, %v2871
      %v2888 = vmul.f32 %v2552, %v2872
      %v2889 = vmul.f32 %v2553, %v2873
      %v2890 = vmul.f32 %v2554, %v2874
      %v2891 = vmul.f32 %v2555, %v2875
      %v2892 = vmul.f32 %v2556, %v2876
      %v2893 = vmul.f32 %v2557, %v2877
      %v2894 = vmul.f32 %v2558, %v2878
      %v2895 = vmul.f32 %v2559, %v2879
      %v2896 = vmul.f32 %v2560, %v2880
      %v2897 = vadd.f32 %v2881, 1.0
      %v2898 = vadd.f32 %v2882, 1.0
      %v2899 = vadd.f32 %v2883, 1.0
      %v2900 = vadd.f32 %v2884, 1.0
      %v2901 = vadd.f32 %v2885, 1.0
      %v2902 = vadd.f32 %v2886, 1.0
      %v2903 = vadd.f32 %v2887, 1.0
      %v2904 = vadd.f32 %v2888, 1.0
      %v2905 = vadd.f32 %v2889, 1.0
      %v2906 = vadd.f32 %v2890, 1.0
      %v2907 = vadd.f32 %v2891, 1.0
      %v2908 = vadd.f32 %v2892, 1.0
      %v2909 = vadd.f32 %v2893, 1.0
      %v2910 = vadd.f32 %v2894, 1.0
      %v2911 = vadd.f32 %v2895, 1.0
      %v2912 = vadd.f32 %v2896, 1.0
      %v2913 = vmul.f32 %v2497, %v2897
      %v2914 = vmul.f32 %v2498, %v2898
      %v2915 = vmul.f32 %v2499, %v2899
      %v2916 = vmul.f32 %v2500, %v2900
      %v2917 = vmul.f32 %v2501, %v2901
      %v2918 = vmul.f32 %v2502, %v2902
      %v2919 = vmul.f32 %v2503, %v2903
      %v2920 = vmul.f32 %v2504, %v2904
      %v2921 = vmul.f32 %v2505, %v2905
      %v2922 = vmul.f32 %v2506, %v2906
      %v2923 = vmul.f32 %v2507, %v2907
      %v2924 = vmul.f32 %v2508, %v2908
      %v2925 = vmul.f32 %v2509, %v2909
      %v2926 = vmul.f32 %v2510, %v2910
      %v2927 = vmul.f32 %v2511, %v2911
      %v2928 = vmul.f32 %v2512, %v2912
      %2929 = vmatprep.subr.mxu0 0.0
      %2930 = vmatpush1.msra.mxu0 %v2928
      %2931 = vmatprep.subr.mxu0 0.0
      %2932 = vmatpush1.msra.mxu0 %v2927
      %2933 = vmatprep.subr.mxu0 0.0
      %2934 = vmatpush1.msra.mxu0 %v2926
      %2935 = vmatprep.subr.mxu0 0.0
      %2936 = vmatpush1.msra.mxu0 %v2925
      %2937 = vmatprep.subr.mxu0 0.0
      %2938 = vmatpush1.msra.mxu0 %v2924
      %2939 = vmatprep.subr.mxu0 0.0
      %2940 = vmatpush1.msra.mxu0 %v2923
      %2941 = vmatprep.subr.mxu0 0.0
      %2942 = vmatpush1.msra.mxu0 %v2922
      %2943 = vmatprep.subr.mxu0 0.0
      %2944 = vmatpush1.msra.mxu0 %v2921
      %2945 = vmatprep.subr.mxu0 0.0
      %2946 = vmatpush1.msra.mxu0 %v2920
      %2947 = vmatprep.subr.mxu0 0.0
      %2948 = vmatpush1.msra.mxu0 %v2919
      %2949 = vmatprep.subr.mxu0 0.0
      %2950 = vmatpush1.msra.mxu0 %v2918
      %2951 = vmatprep.subr.mxu0 0.0
      %2952 = vmatpush1.msra.mxu0 %v2917
      %2953 = vmatprep.subr.mxu0 0.0
      %2954 = vmatpush1.msra.mxu0 %v2916
      %2955 = vmatprep.subr.mxu0 0.0
      %2956 = vmatpush1.msra.mxu0 %v2915
      %2957 = vmatprep.subr.mxu0 0.0
      %2958 = vmatpush1.msra.mxu0 %v2914
      %2959 = vmatprep.subr.mxu0 0.0
      %2960 = vmatpush1.msra.mxu0 %v2913
      %2961 = vmatprep.subr.mxu0 0.0
      %2962 = vmatpush2.msra.mxu0 0.0
      %2963 = vmatprep.subr.mxu0 0.0
      %2964 = vmatpush2.msra.mxu0 0.0
      %2965 = vmatprep.subr.mxu0 0.0
      %2966 = vmatpush2.msra.mxu0 0.0
      %2967 = vmatprep.subr.mxu0 0.0
      %2968 = vmatpush2.msra.mxu0 0.0
      %2969 = vmatprep.subr.mxu0 0.0
      %2970 = vmatpush2.msra.mxu0 0.0
      %2971 = vmatprep.subr.mxu0 0.0
      %2972 = vmatpush2.msra.mxu0 0.0
      %2973 = vmatprep.subr.mxu0 0.0
      %2974 = vmatpush2.msra.mxu0 0.0
      %2975 = vmatprep.subr.mxu0 0.0
      %2976 = vmatpush2.msra.mxu0 0.0
      %2977 = vmatprep.subr.mxu0 0.0
      %2978 = vmatpush2.msra.mxu0 0.0
      %2979 = vmatprep.subr.mxu0 0.0
      %2980 = vmatpush2.msra.mxu0 0.0
      %2981 = vmatprep.subr.mxu0 0.0
      %2982 = vmatpush2.msra.mxu0 0.0
      %2983 = vmatprep.subr.mxu0 0.0
      %2984 = vmatpush2.msra.mxu0 0.0
      %2985 = vmatprep.subr.mxu0 0.0
      %2986 = vmatpush2.msra.mxu0 0.0
      %2987 = vmatprep.subr.mxu0 0.0
      %2988 = vmatpush2.msra.mxu0 0.0
      %2989 = vmatprep.subr.mxu0 0.0
      %2990 = vmatpush2.msra.mxu0 0.0
      %2991 = vmatprep.subr.mxu0 0.0
      %2992 = vmatpush2.msra.mxu0 0.0
      %2993 = vmatprep.mubr.f32.mxu0 0.0
      %2994 = vmatmul.mubr.f32.gmra.mxu0 %v260
      %v2995 = vpop.f32.mrf.mxu0
      %v2996 = vadd.f32 %v977, %v2995
      %v2997 = vpop.f32.mrf.mxu0
      %2998 = vdwg.mxu0
      %2999 = vst.msk [vmem:[%s226 + $0x3] sm:$0x1] %vm1051, %v2996
      %s3000 = smul.u32 4, %s18
      %p3001 = scmp.lt.s32.totalorder %s3000, 7
      %s3002 = scalar_select %p3001, %s3000, 7
      %s3003 = scalar_lea.vmem %s5, %s3002
      // Predicated region
      $region41: #{fno3d_forward.19} parent=39 // pred_check
        %p3004 = pneg %p146
      $region42: #{fno3d_forward.19} parent=39 // pred_check_branch
        %3006 = sbr.rel (%p3004) target = $region44
      $region43: #{fno3d_forward.19} parent=39 // pred_region
        %s3007 = smul.u32 4, %s18
      $region44: #{fno3d_forward.19} parent=39 // pred_fallthru
        _
    $region40: #{fno3d_forward.19} parent=5 // pred_fallthru
      _
    %p3008 = scmp.le.s32.totalorder 2, %s13
    // Predicated region
    $region45: #{fno3d_forward.19} parent=5 // pred_check
      %p3009 = pneg %p3008
    $region46: #{fno3d_forward.19} parent=5 // pred_check_branch
      %3011 = sbr.rel (%p3009) target = $region48
    $region47: #{fno3d_forward.19} parent=5 // pred_region
      %s3012 = ssub.s32 %s13, 2
      // Predicated region
      $region49: #{fno3d_forward.19} parent=47 // pred_check
        %p3013 = pneg %p152
      $region50: #{fno3d_forward.19} parent=47 // pred_check_branch
        %3015 = sbr.rel (%p3013) target = $region52
      $region51: #{fno3d_forward.19} parent=47 // pred_region
        %s3016 = smul.u32 4, %s19
        %p3017 = scmp.lt.s32.totalorder %s3016, 7
        %s3018 = scalar_select %p3017, %s3016, 7
        %s3019 = scalar_lea.vmem %s5, %s3018
      $region52: #{fno3d_forward.19} parent=47 // pred_fallthru
        _
    $region48: #{fno3d_forward.19} parent=5 // pred_fallthru
      _
  $region6: #{fno3d_forward.19} parent=0 // loop_footer
    %s17 = sadd.s32 1, %s13
  $region7: #{fno3d_forward.19} parent=0 // loop_footer_branch
    %12 = sbr.rel target = $region3
  $region8: #{fno3d_forward.19} parent=0 // loop_exit
    _

</llo_original>
